<compile_context>
chip_gen: v5e
topology: v5e:2x2
jax: 0.10.0
libtpu: 0.0.40
codegen_flags: <defaults>
</compile_context>

<pallas_src>
import functools

import jax
import jax.numpy as jnp
from jax.experimental import pallas as pl
from jax.experimental.pallas import tpu as pltpu

_VMEM_LIMIT = 32 * 1024 * 1024  # safe on v5e/v6e/v7x; kernels here use ~1-2 MiB


# ---------------------------------------------------------------------------
# Kernels
# ---------------------------------------------------------------------------
def conv_bn_relu_kernel(p_ref, w_ref, b_ref, o_ref):
    """p_ref: (TM, K) bf16 im2col patches; w_ref: (K, Cout) bf16 (BN-scale folded);
    b_ref: (1, Cout) f32 folded bias; o_ref: (TM, Cout) bf16."""
    acc = jnp.dot(p_ref[...], w_ref[...], preferred_element_type=jnp.float32)
    y = jnp.maximum(acc + b_ref[...], 0.0)          # epilogue stays f32
    o_ref[...] = y.astype(o_ref.dtype)


def maxpool2_kernel(x_ref, o_ref):
    """x_ref: (1, Ho, 2, Wo, 2, C); o_ref: (1, Ho, Wo, C). Max over the 2x2 window."""
    v = x_ref[0]                                    # (Ho, 2, Wo, 2, C)
    a = jnp.maximum(v[:, 0], v[:, 1])               # (Ho, Wo, 2, C)
    o_ref[0] = jnp.maximum(a[:, :, 0], a[:, :, 1])  # (Ho, Wo, C)


def linear_kernel(x_ref, w_ref, b_ref, o_ref):
    """x_ref: (TN, Din) bf16; w_ref: (Din, Dp) bf16; b_ref: (1, Dp) f32."""
    acc = jnp.dot(x_ref[...], w_ref[...], preferred_element_type=jnp.float32)
    o_ref[...] = (acc + b_ref[...]).astype(o_ref.dtype)


# ---------------------------------------------------------------------------
# Layer wrappers
# ---------------------------------------------------------------------------
def _pick_tile(m, cap=512):
    for t in (512, 256, 128, 64, 32, 16, 8):
        if t <= cap and m % t == 0:
            return t
    return m if m <= cap else cap


def conv_bn_relu(x_nhwc, w_folded, bias):
    """x_nhwc: (N, H, W, Cin) bf16; w_folded: (3,3,Cin,Cout) f32 (BN scale folded);
    bias: (Cout,) f32 folded conv-bias + BN shift."""
    N, H, W, Cin = x_nhwc.shape
    Cout = w_folded.shape[-1]
    M = N * H * W

    xp = jnp.pad(x_nhwc, ((0, 0), (1, 1), (1, 1), (0, 0)))       # padding=1
    # im2col: concatenate the 9 taps along the channel (lane) axis -> (M, 9*Cin)
    patches = jnp.concatenate(
        [xp[:, kh:kh + H, kw:kw + W, :].reshape(M, Cin)
         for kh in range(3) for kw in range(3)], axis=-1)
    wf = w_folded.reshape(9 * Cin, Cout)
    K = 9 * Cin
    if K % 8:                                # first layer: Cin=1 -> K=9 -> pad to 16
        padk = 8 - (K % 8)
        patches = jnp.pad(patches, ((0, 0), (0, padk)))
        wf = jnp.pad(wf, ((0, padk), (0, 0)))
        K += padk

    patches = patches.astype(jnp.bfloat16)
    wf = wf.astype(jnp.bfloat16)
    b2 = bias.reshape(1, Cout).astype(jnp.float32)

    tm = _pick_tile(M)
    out = pl.pallas_call(
        conv_bn_relu_kernel,
        out_shape=jax.ShapeDtypeStruct((M, Cout), jnp.bfloat16),
        grid=(pl.cdiv(M, tm),),
        in_specs=[pl.BlockSpec((tm, K), lambda i: (i, 0)),
                  pl.BlockSpec((K, Cout), lambda i: (0, 0)),   # weights resident
                  pl.BlockSpec((1, Cout), lambda i: (0, 0))],  # bias resident
        out_specs=pl.BlockSpec((tm, Cout), lambda i: (i, 0)),
        compiler_params=pltpu.CompilerParams(
            dimension_semantics=("parallel",),
            vmem_limit_bytes=_VMEM_LIMIT),
    )(patches, wf, b2)
    return out.reshape(N, H, W, Cout)


def maxpool2(x_nhwc):
    N, H, W, C = x_nhwc.shape
    Ho, Wo = H // 2, W // 2
    xr = x_nhwc.reshape(N, Ho, 2, Wo, 2, C)   # metadata-only reshape (no copy)
    out = pl.pallas_call(
        maxpool2_kernel,
        out_shape=jax.ShapeDtypeStruct((N, Ho, Wo, C), x_nhwc.dtype),
        grid=(N,),
        in_specs=[pl.BlockSpec((1, Ho, 2, Wo, 2, C),
                               lambda n: (n, 0, 0, 0, 0, 0))],
        out_specs=pl.BlockSpec((1, Ho, Wo, C), lambda n: (n, 0, 0, 0)),
        compiler_params=pltpu.CompilerParams(
            dimension_semantics=("parallel",),
            vmem_limit_bytes=_VMEM_LIMIT),
    )(xr)
    return out


def linear(x, w, b):
    N, Din = x.shape
    Dout = w.shape[1]
    Dp = max(128, ((Dout + 127) // 128) * 128)          # lane-dense output
    wp = jnp.pad(w, ((0, 0), (0, Dp - Dout))).astype(jnp.bfloat16)
    bp = jnp.pad(b, (0, Dp - Dout)).reshape(1, Dp).astype(jnp.float32)
    xb = x.astype(jnp.bfloat16)

    tn = N if N < 256 else 256
    out = pl.pallas_call(
        linear_kernel,
        out_shape=jax.ShapeDtypeStruct((N, Dp), jnp.float32),
        grid=(pl.cdiv(N, tn),),
        in_specs=[pl.BlockSpec((tn, Din), lambda i: (i, 0)),
                  pl.BlockSpec((Din, Dp), lambda i: (0, 0)),
                  pl.BlockSpec((1, Dp), lambda i: (0, 0))],
        out_specs=pl.BlockSpec((tn, Dp), lambda i: (i, 0)),
        compiler_params=pltpu.CompilerParams(
            dimension_semantics=("parallel",),
            vmem_limit_bytes=_VMEM_LIMIT),
    )(xb, wp, bp)
    return out[:, :Dout]


# ---------------------------------------------------------------------------
# Parameters (static layer config kept OUT of the jit-traced pytree)
# ---------------------------------------------------------------------------
_LAYERS = ((1, 32, False), (32, 32, True),
           (32, 64, False), (64, 64, True),
           (64, 128, False), (128, 128, True),
           (128, 256, True))           # (Cin, Cout, followed_by_MaxPool2)
_BN_EPS = 1e-5


def init_params(key):
    conv_params = []
    for cin, cout, _ in _LAYERS:
        key, k1, k2, k3, k4, k5, k6 = jax.random.split(key, 7)
        w = 0.1 * jax.random.normal(k1, (3, 3, cin, cout), jnp.float32)
        conv_b = 0.1 * jax.random.normal(k2, (cout,), jnp.float32)
        gamma = 1.0 + 0.1 * jax.random.normal(k3, (cout,), jnp.float32)
        beta = 0.1 * jax.random.normal(k4, (cout,), jnp.float32)
        rmean = 0.1 * jax.random.normal(k5, (cout,), jnp.float32)
        rvar = 1.0 + 0.1 * jax.random.uniform(k6, (cout,), jnp.float32)
        scale = gamma / jnp.sqrt(rvar + _BN_EPS)
        w_folded = w * scale                             # fold BN scale into weights
        bias = scale * (conv_b - rmean) + beta           # fold conv bias + BN shift
        conv_params.append((w_folded, bias))
    key, k1, k2 = jax.random.split(key, 3)
    fc_w = 0.05 * jax.random.normal(k1, (256, 62), jnp.float32)
    fc_b = 0.05 * jax.random.normal(k2, (62,), jnp.float32)
    return conv_params, fc_w, fc_b


# ---------------------------------------------------------------------------
# Full forward pass
# ---------------------------------------------------------------------------
@jax.jit
def cnn_forward(x_nchw, conv_params, fc_w, fc_b):
    x = jnp.transpose(x_nchw, (0, 2, 3, 1)).astype(jnp.bfloat16)  # NCHW -> NHWC
    for (w, bias), (_, _, pooled) in zip(conv_params, _LAYERS):
        x = conv_bn_relu(x, w, bias)
        if pooled:                      # static Python bool (from _LAYERS), not traced
            x = maxpool2(x)
    n = x.shape[0]
    # NOTE: NHWC flatten == NCHW flatten here because spatial dims collapse to 1x1.
    x = x.reshape(n, -1)                # (N, 256)
    return linear(x, fc_w, fc_b)        # (N, 62) f32


if __name__ == "__main__":
    key = jax.random.PRNGKey(0)
    key, kx, kp = jax.random.split(key, 3)
    x = jax.random.normal(kx, (2, 1, 16, 16), jnp.float32)   # NCHW, like PyTorch
    params, fc_w, fc_b = init_params(kp)
    out = cnn_forward(x, params, fc_w, fc_b)
    out = jax.block_until_ready(out)
    assert out.shape == (2, 62), out.shape
    assert bool(jnp.all(jnp.isfinite(out)))
    print("KERNEL_OK")
</pallas_src>

<mosaic_0001>
module attributes {stable_mosaic.version = 11 : i64} {
  func.func @conv_bn_relu_kernel(%arg0: i32, %arg1: memref<512x16xbf16, #tpu.memory_space<vmem>>, %arg2: memref<16x32xbf16, #tpu.memory_space<vmem>>, %arg3: memref<1x32xf32, #tpu.memory_space<vmem>>, %arg4: memref<512x32xbf16, #tpu.memory_space<vmem>>) attributes {dimension_semantics = [#tpu.dimension_semantics<parallel>], iteration_bounds = array<i64: 1>, scalar_prefetch = 0 : i64, scratch_operands = 0 : i64, tpu.core_type = #tpu.core_type<tc>, window_params = [{transform_indices = @transform_0, window_bounds = array<i64: 512, 16>}, {pipeline_mode = #tpu.pipeline_mode<synchronous>, transform_indices = @transform_1, window_bounds = array<i64: 16, 32>}, {pipeline_mode = #tpu.pipeline_mode<synchronous>, transform_indices = @transform_2, window_bounds = array<i64: 1, 32>}, {transform_indices = @transform_3, window_bounds = array<i64: 512, 32>}]} {
    %c0 = arith.constant 0 : index
    %c0_0 = arith.constant 0 : index
    %0 = vector.load %arg1[%c0, %c0_0] : memref<512x16xbf16, #tpu.memory_space<vmem>>, vector<512x16xbf16>
    %c0_1 = arith.constant 0 : index
    %c0_2 = arith.constant 0 : index
    %1 = vector.load %arg2[%c0_1, %c0_2] : memref<16x32xbf16, #tpu.memory_space<vmem>>, vector<16x32xbf16>
    %cst = arith.constant dense<0.000000e+00> : vector<512x32xf32>
    %2 = tpu.matmul %0, %1, %cst {dimension_numbers = #tpu.dot_dimension_numbers<[1], [0], [0], [1], [0, 0, 1, 1], [], []>} : vector<512x16xbf16>, vector<16x32xbf16>, vector<512x32xf32> -> vector<512x32xf32>
    %c0_3 = arith.constant 0 : index
    %c0_4 = arith.constant 0 : index
    %3 = vector.load %arg3[%c0_3, %c0_4] : memref<1x32xf32, #tpu.memory_space<vmem>>, vector<1x32xf32>
    %4 = vector.broadcast %3 : vector<1x32xf32> to vector<512x32xf32>
    %5 = arith.addf %2, %4 : vector<512x32xf32>
    %cst_5 = arith.constant 0.000000e+00 : f32
    %6 = vector.broadcast %cst_5 : f32 to vector<512x32xf32>
    %7 = arith.maximumf %5, %6 : vector<512x32xf32>
    %8 = arith.truncf %7 : vector<512x32xf32> to vector<512x32xbf16>
    %c0_6 = arith.constant 0 : index
    %c0_7 = arith.constant 0 : index
    %9 = vector.load %arg4[%c0_6, %c0_7] : memref<512x32xbf16, #tpu.memory_space<vmem>>, vector<512x32xbf16>
    tpu.vector_store %arg4[%c0_6, %c0_7], %8 {strides = array<i32>} : memref<512x32xbf16, #tpu.memory_space<vmem>>, vector<512x32xbf16>,
    return
  }
  func.func @transform_0(%arg0: i32) -> (i32, i32) {
    %c0_i32 = arith.constant 0 : i32
    %c0_i32_0 = arith.constant 0 : i32
    return %arg0, %c0_i32 : i32, i32
  }
  func.func @transform_1(%arg0: i32) -> (i32, i32) {
    %c0_i32 = arith.constant 0 : i32
    %c0_i32_0 = arith.constant 0 : i32
    %c0_i32_1 = arith.constant 0 : i32
    return %c0_i32, %c0_i32_0 : i32, i32
  }
  func.func @transform_2(%arg0: i32) -> (i32, i32) {
    %c0_i32 = arith.constant 0 : i32
    %c0_i32_0 = arith.constant 0 : i32
    %c0_i32_1 = arith.constant 0 : i32
    return %c0_i32, %c0_i32_0 : i32, i32
  }
  func.func @transform_3(%arg0: i32) -> (i32, i32) {
    %c0_i32 = arith.constant 0 : i32
    %c0_i32_0 = arith.constant 0 : i32
    return %arg0, %c0_i32 : i32, i32
  }
}

module attributes {stable_mosaic.version = 11 : i64} {
  func.func @conv_bn_relu_kernel(%arg0: i32, %arg1: memref<512x288xbf16, #tpu.memory_space<vmem>>, %arg2: memref<288x32xbf16, #tpu.memory_space<vmem>>, %arg3: memref<1x32xf32, #tpu.memory_space<vmem>>, %arg4: memref<512x32xbf16, #tpu.memory_space<vmem>>) attributes {dimension_semantics = [#tpu.dimension_semantics<parallel>], iteration_bounds = array<i64: 1>, scalar_prefetch = 0 : i64, scratch_operands = 0 : i64, tpu.core_type = #tpu.core_type<tc>, window_params = [{transform_indices = @transform_0, window_bounds = array<i64: 512, 288>}, {pipeline_mode = #tpu.pipeline_mode<synchronous>, transform_indices = @transform_1, window_bounds = array<i64: 288, 32>}, {pipeline_mode = #tpu.pipeline_mode<synchronous>, transform_indices = @transform_2, window_bounds = array<i64: 1, 32>}, {transform_indices = @transform_3, window_bounds = array<i64: 512, 32>}]} {
    %c0 = arith.constant 0 : index
    %c0_0 = arith.constant 0 : index
    %0 = vector.load %arg1[%c0, %c0_0] : memref<512x288xbf16, #tpu.memory_space<vmem>>, vector<512x288xbf16>
    %c0_1 = arith.constant 0 : index
    %c0_2 = arith.constant 0 : index
    %1 = vector.load %arg2[%c0_1, %c0_2] : memref<288x32xbf16, #tpu.memory_space<vmem>>, vector<288x32xbf16>
    %cst = arith.constant dense<0.000000e+00> : vector<512x32xf32>
    %2 = tpu.matmul %0, %1, %cst {dimension_numbers = #tpu.dot_dimension_numbers<[1], [0], [0], [1], [0, 0, 1, 1], [], []>} : vector<512x288xbf16>, vector<288x32xbf16>, vector<512x32xf32> -> vector<512x32xf32>
    %c0_3 = arith.constant 0 : index
    %c0_4 = arith.constant 0 : index
    %3 = vector.load %arg3[%c0_3, %c0_4] : memref<1x32xf32, #tpu.memory_space<vmem>>, vector<1x32xf32>
    %4 = vector.broadcast %3 : vector<1x32xf32> to vector<512x32xf32>
    %5 = arith.addf %2, %4 : vector<512x32xf32>
    %cst_5 = arith.constant 0.000000e+00 : f32
    %6 = vector.broadcast %cst_5 : f32 to vector<512x32xf32>
    %7 = arith.maximumf %5, %6 : vector<512x32xf32>
    %8 = arith.truncf %7 : vector<512x32xf32> to vector<512x32xbf16>
    %c0_6 = arith.constant 0 : index
    %c0_7 = arith.constant 0 : index
    %9 = vector.load %arg4[%c0_6, %c0_7] : memref<512x32xbf16, #tpu.memory_space<vmem>>, vector<512x32xbf16>
    tpu.vector_store %arg4[%c0_6, %c0_7], %8 {strides = array<i32>} : memref<512x32xbf16, #tpu.memory_space<vmem>>, vector<512x32xbf16>,
    return
  }
  func.func @transform_0(%arg0: i32) -> (i32, i32) {
    %c0_i32 = arith.constant 0 : i32
    %c0_i32_0 = arith.constant 0 : i32
    return %arg0, %c0_i32 : i32, i32
  }
  func.func @transform_1(%arg0: i32) -> (i32, i32) {
    %c0_i32 = arith.constant 0 : i32
    %c0_i32_0 = arith.constant 0 : i32
    %c0_i32_1 = arith.constant 0 : i32
    return %c0_i32, %c0_i32_0 : i32, i32
  }
  func.func @transform_2(%arg0: i32) -> (i32, i32) {
    %c0_i32 = arith.constant 0 : i32
    %c0_i32_0 = arith.constant 0 : i32
    %c0_i32_1 = arith.constant 0 : i32
    return %c0_i32, %c0_i32_0 : i32, i32
  }
  func.func @transform_3(%arg0: i32) -> (i32, i32) {
    %c0_i32 = arith.constant 0 : i32
    %c0_i32_0 = arith.constant 0 : i32
    return %arg0, %c0_i32 : i32, i32
  }
}

module attributes {stable_mosaic.version = 11 : i64} {
  func.func @maxpool2_kernel(%arg0: i32, %arg1: memref<1x8x2x8x2x32xbf16, #tpu.memory_space<vmem>>, %arg2: memref<1x8x8x32xbf16, #tpu.memory_space<vmem>>) attributes {dimension_semantics = [#tpu.dimension_semantics<parallel>], iteration_bounds = array<i64: 2>, scalar_prefetch = 0 : i64, scratch_operands = 0 : i64, tpu.core_type = #tpu.core_type<tc>, window_params = [{transform_indices = @transform_0, window_bounds = array<i64: 1, 8, 2, 8, 2, 32>}, {transform_indices = @transform_1, window_bounds = array<i64: 1, 8, 8, 32>}]} {
    %c0 = arith.constant 0 : index
    %c0_0 = arith.constant 0 : index
    %c0_1 = arith.constant 0 : index
    %c0_2 = arith.constant 0 : index
    %c0_3 = arith.constant 0 : index
    %c0_4 = arith.constant 0 : index
    %0 = vector.load %arg1[%c0, %c0_0, %c0_1, %c0_2, %c0_3, %c0_4] : memref<1x8x2x8x2x32xbf16, #tpu.memory_space<vmem>>, vector<1x8x2x8x2x32xbf16>
    %1 = vector.shape_cast %0 : vector<1x8x2x8x2x32xbf16> to vector<8x2x8x2x32xbf16>
    %2 = vector.extract_strided_slice %1 {offsets = [0, 0, 0, 0, 0], sizes = [8, 1, 8, 2, 32], strides = [1, 1, 1, 1, 1]} : vector<8x2x8x2x32xbf16> to vector<8x1x8x2x32xbf16>
    %3 = vector.shape_cast %2 : vector<8x1x8x2x32xbf16> to vector<8x8x2x32xbf16>
    %4 = vector.extract_strided_slice %1 {offsets = [0, 1, 0, 0, 0], sizes = [8, 1, 8, 2, 32], strides = [1, 1, 1, 1, 1]} : vector<8x2x8x2x32xbf16> to vector<8x1x8x2x32xbf16>
    %5 = vector.shape_cast %4 : vector<8x1x8x2x32xbf16> to vector<8x8x2x32xbf16>
    %6 = arith.maximumf %3, %5 : vector<8x8x2x32xbf16>
    %7 = vector.extract_strided_slice %6 {offsets = [0, 0, 0, 0], sizes = [8, 8, 1, 32], strides = [1, 1, 1, 1]} : vector<8x8x2x32xbf16> to vector<8x8x1x32xbf16>
    %8 = vector.shape_cast %7 : vector<8x8x1x32xbf16> to vector<8x8x32xbf16>
    %9 = vector.extract_strided_slice %6 {offsets = [0, 0, 1, 0], sizes = [8, 8, 1, 32], strides = [1, 1, 1, 1]} : vector<8x8x2x32xbf16> to vector<8x8x1x32xbf16>
    %10 = vector.shape_cast %9 : vector<8x8x1x32xbf16> to vector<8x8x32xbf16>
    %11 = arith.maximumf %8, %10 : vector<8x8x32xbf16>
    %c0_5 = arith.constant 0 : index
    %c0_6 = arith.constant 0 : index
    %c0_7 = arith.constant 0 : index
    %c0_8 = arith.constant 0 : index
    %12 = vector.load %arg2[%c0_5, %c0_6, %c0_7, %c0_8] : memref<1x8x8x32xbf16, #tpu.memory_space<vmem>>, vector<1x8x8x32xbf16>
    %13 = vector.shape_cast %12 : vector<1x8x8x32xbf16> to vector<8x8x32xbf16>
    %14 = vector.shape_cast %11 : vector<8x8x32xbf16> to vector<1x8x8x32xbf16>
    tpu.vector_store %arg2[%c0_5, %c0_6, %c0_7, %c0_8], %14 {strides = array<i32>} : memref<1x8x8x32xbf16, #tpu.memory_space<vmem>>, vector<1x8x8x32xbf16>,
    return
  }
  func.func @transform_0(%arg0: i32) -> (i32, i32, i32, i32, i32, i32) {
    %c0_i32 = arith.constant 0 : i32
    %c0_i32_0 = arith.constant 0 : i32
    %c0_i32_1 = arith.constant 0 : i32
    %c0_i32_2 = arith.constant 0 : i32
    %c0_i32_3 = arith.constant 0 : i32
    %c0_i32_4 = arith.constant 0 : i32
    return %arg0, %c0_i32, %c0_i32_0, %c0_i32_1, %c0_i32_2, %c0_i32_3 : i32, i32, i32, i32, i32, i32
  }
  func.func @transform_1(%arg0: i32) -> (i32, i32, i32, i32) {
    %c0_i32 = arith.constant 0 : i32
    %c0_i32_0 = arith.constant 0 : i32
    %c0_i32_1 = arith.constant 0 : i32
    %c0_i32_2 = arith.constant 0 : i32
    return %arg0, %c0_i32, %c0_i32_0, %c0_i32_1 : i32, i32, i32, i32
  }
}

module attributes {stable_mosaic.version = 11 : i64} {
  func.func @conv_bn_relu_kernel(%arg0: i32, %arg1: memref<128x288xbf16, #tpu.memory_space<vmem>>, %arg2: memref<288x64xbf16, #tpu.memory_space<vmem>>, %arg3: memref<1x64xf32, #tpu.memory_space<vmem>>, %arg4: memref<128x64xbf16, #tpu.memory_space<vmem>>) attributes {dimension_semantics = [#tpu.dimension_semantics<parallel>], iteration_bounds = array<i64: 1>, scalar_prefetch = 0 : i64, scratch_operands = 0 : i64, tpu.core_type = #tpu.core_type<tc>, window_params = [{transform_indices = @transform_0, window_bounds = array<i64: 128, 288>}, {pipeline_mode = #tpu.pipeline_mode<synchronous>, transform_indices = @transform_1, window_bounds = array<i64: 288, 64>}, {pipeline_mode = #tpu.pipeline_mode<synchronous>, transform_indices = @transform_2, window_bounds = array<i64: 1, 64>}, {transform_indices = @transform_3, window_bounds = array<i64: 128, 64>}]} {
    %c0 = arith.constant 0 : index
    %c0_0 = arith.constant 0 : index
    %0 = vector.load %arg1[%c0, %c0_0] : memref<128x288xbf16, #tpu.memory_space<vmem>>, vector<128x288xbf16>
    %c0_1 = arith.constant 0 : index
    %c0_2 = arith.constant 0 : index
    %1 = vector.load %arg2[%c0_1, %c0_2] : memref<288x64xbf16, #tpu.memory_space<vmem>>, vector<288x64xbf16>
    %cst = arith.constant dense<0.000000e+00> : vector<128x64xf32>
    %2 = tpu.matmul %0, %1, %cst {dimension_numbers = #tpu.dot_dimension_numbers<[1], [0], [0], [1], [0, 0, 1, 1], [], []>} : vector<128x288xbf16>, vector<288x64xbf16>, vector<128x64xf32> -> vector<128x64xf32>
    %c0_3 = arith.constant 0 : index
    %c0_4 = arith.constant 0 : index
    %3 = vector.load %arg3[%c0_3, %c0_4] : memref<1x64xf32, #tpu.memory_space<vmem>>, vector<1x64xf32>
    %4 = vector.broadcast %3 : vector<1x64xf32> to vector<128x64xf32>
    %5 = arith.addf %2, %4 : vector<128x64xf32>
    %cst_5 = arith.constant 0.000000e+00 : f32
    %6 = vector.broadcast %cst_5 : f32 to vector<128x64xf32>
    %7 = arith.maximumf %5, %6 : vector<128x64xf32>
    %8 = arith.truncf %7 : vector<128x64xf32> to vector<128x64xbf16>
    %c0_6 = arith.constant 0 : index
    %c0_7 = arith.constant 0 : index
    %9 = vector.load %arg4[%c0_6, %c0_7] : memref<128x64xbf16, #tpu.memory_space<vmem>>, vector<128x64xbf16>
    tpu.vector_store %arg4[%c0_6, %c0_7], %8 {strides = array<i32>} : memref<128x64xbf16, #tpu.memory_space<vmem>>, vector<128x64xbf16>,
    return
  }
  func.func @transform_0(%arg0: i32) -> (i32, i32) {
    %c0_i32 = arith.constant 0 : i32
    %c0_i32_0 = arith.constant 0 : i32
    return %arg0, %c0_i32 : i32, i32
  }
  func.func @transform_1(%arg0: i32) -> (i32, i32) {
    %c0_i32 = arith.constant 0 : i32
    %c0_i32_0 = arith.constant 0 : i32
    %c0_i32_1 = arith.constant 0 : i32
    return %c0_i32, %c0_i32_0 : i32, i32
  }
  func.func @transform_2(%arg0: i32) -> (i32, i32) {
    %c0_i32 = arith.constant 0 : i32
    %c0_i32_0 = arith.constant 0 : i32
    %c0_i32_1 = arith.constant 0 : i32
    return %c0_i32, %c0_i32_0 : i32, i32
  }
  func.func @transform_3(%arg0: i32) -> (i32, i32) {
    %c0_i32 = arith.constant 0 : i32
    %c0_i32_0 = arith.constant 0 : i32
    return %arg0, %c0_i32 : i32, i32
  }
}

module attributes {stable_mosaic.version = 11 : i64} {
  func.func @conv_bn_relu_kernel(%arg0: i32, %arg1: memref<128x576xbf16, #tpu.memory_space<vmem>>, %arg2: memref<576x64xbf16, #tpu.memory_space<vmem>>, %arg3: memref<1x64xf32, #tpu.memory_space<vmem>>, %arg4: memref<128x64xbf16, #tpu.memory_space<vmem>>) attributes {dimension_semantics = [#tpu.dimension_semantics<parallel>], iteration_bounds = array<i64: 1>, scalar_prefetch = 0 : i64, scratch_operands = 0 : i64, tpu.core_type = #tpu.core_type<tc>, window_params = [{transform_indices = @transform_0, window_bounds = array<i64: 128, 576>}, {pipeline_mode = #tpu.pipeline_mode<synchronous>, transform_indices = @transform_1, window_bounds = array<i64: 576, 64>}, {pipeline_mode = #tpu.pipeline_mode<synchronous>, transform_indices = @transform_2, window_bounds = array<i64: 1, 64>}, {transform_indices = @transform_3, window_bounds = array<i64: 128, 64>}]} {
    %c0 = arith.constant 0 : index
    %c0_0 = arith.constant 0 : index
    %0 = vector.load %arg1[%c0, %c0_0] : memref<128x576xbf16, #tpu.memory_space<vmem>>, vector<128x576xbf16>
    %c0_1 = arith.constant 0 : index
    %c0_2 = arith.constant 0 : index
    %1 = vector.load %arg2[%c0_1, %c0_2] : memref<576x64xbf16, #tpu.memory_space<vmem>>, vector<576x64xbf16>
    %cst = arith.constant dense<0.000000e+00> : vector<128x64xf32>
    %2 = tpu.matmul %0, %1, %cst {dimension_numbers = #tpu.dot_dimension_numbers<[1], [0], [0], [1], [0, 0, 1, 1], [], []>} : vector<128x576xbf16>, vector<576x64xbf16>, vector<128x64xf32> -> vector<128x64xf32>
    %c0_3 = arith.constant 0 : index
    %c0_4 = arith.constant 0 : index
    %3 = vector.load %arg3[%c0_3, %c0_4] : memref<1x64xf32, #tpu.memory_space<vmem>>, vector<1x64xf32>
    %4 = vector.broadcast %3 : vector<1x64xf32> to vector<128x64xf32>
    %5 = arith.addf %2, %4 : vector<128x64xf32>
    %cst_5 = arith.constant 0.000000e+00 : f32
    %6 = vector.broadcast %cst_5 : f32 to vector<128x64xf32>
    %7 = arith.maximumf %5, %6 : vector<128x64xf32>
    %8 = arith.truncf %7 : vector<128x64xf32> to vector<128x64xbf16>
    %c0_6 = arith.constant 0 : index
    %c0_7 = arith.constant 0 : index
    %9 = vector.load %arg4[%c0_6, %c0_7] : memref<128x64xbf16, #tpu.memory_space<vmem>>, vector<128x64xbf16>
    tpu.vector_store %arg4[%c0_6, %c0_7], %8 {strides = array<i32>} : memref<128x64xbf16, #tpu.memory_space<vmem>>, vector<128x64xbf16>,
    return
  }
  func.func @transform_0(%arg0: i32) -> (i32, i32) {
    %c0_i32 = arith.constant 0 : i32
    %c0_i32_0 = arith.constant 0 : i32
    return %arg0, %c0_i32 : i32, i32
  }
  func.func @transform_1(%arg0: i32) -> (i32, i32) {
    %c0_i32 = arith.constant 0 : i32
    %c0_i32_0 = arith.constant 0 : i32
    %c0_i32_1 = arith.constant 0 : i32
    return %c0_i32, %c0_i32_0 : i32, i32
  }
  func.func @transform_2(%arg0: i32) -> (i32, i32) {
    %c0_i32 = arith.constant 0 : i32
    %c0_i32_0 = arith.constant 0 : i32
    %c0_i32_1 = arith.constant 0 : i32
    return %c0_i32, %c0_i32_0 : i32, i32
  }
  func.func @transform_3(%arg0: i32) -> (i32, i32) {
    %c0_i32 = arith.constant 0 : i32
    %c0_i32_0 = arith.constant 0 : i32
    return %arg0, %c0_i32 : i32, i32
  }
}

module attributes {stable_mosaic.version = 11 : i64} {
  func.func @maxpool2_kernel(%arg0: i32, %arg1: memref<1x4x2x4x2x64xbf16, #tpu.memory_space<vmem>>, %arg2: memref<1x4x4x64xbf16, #tpu.memory_space<vmem>>) attributes {dimension_semantics = [#tpu.dimension_semantics<parallel>], iteration_bounds = array<i64: 2>, scalar_prefetch = 0 : i64, scratch_operands = 0 : i64, tpu.core_type = #tpu.core_type<tc>, window_params = [{transform_indices = @transform_0, window_bounds = array<i64: 1, 4, 2, 4, 2, 64>}, {transform_indices = @transform_1, window_bounds = array<i64: 1, 4, 4, 64>}]} {
    %c0 = arith.constant 0 : index
    %c0_0 = arith.constant 0 : index
    %c0_1 = arith.constant 0 : index
    %c0_2 = arith.constant 0 : index
    %c0_3 = arith.constant 0 : index
    %c0_4 = arith.constant 0 : index
    %0 = vector.load %arg1[%c0, %c0_0, %c0_1, %c0_2, %c0_3, %c0_4] : memref<1x4x2x4x2x64xbf16, #tpu.memory_space<vmem>>, vector<1x4x2x4x2x64xbf16>
    %1 = vector.shape_cast %0 : vector<1x4x2x4x2x64xbf16> to vector<4x2x4x2x64xbf16>
    %2 = vector.extract_strided_slice %1 {offsets = [0, 0, 0, 0, 0], sizes = [4, 1, 4, 2, 64], strides = [1, 1, 1, 1, 1]} : vector<4x2x4x2x64xbf16> to vector<4x1x4x2x64xbf16>
    %3 = vector.shape_cast %2 : vector<4x1x4x2x64xbf16> to vector<4x4x2x64xbf16>
    %4 = vector.extract_strided_slice %1 {offsets = [0, 1, 0, 0, 0], sizes = [4, 1, 4, 2, 64], strides = [1, 1, 1, 1, 1]} : vector<4x2x4x2x64xbf16> to vector<4x1x4x2x64xbf16>
    %5 = vector.shape_cast %4 : vector<4x1x4x2x64xbf16> to vector<4x4x2x64xbf16>
    %6 = arith.maximumf %3, %5 : vector<4x4x2x64xbf16>
    %7 = vector.extract_strided_slice %6 {offsets = [0, 0, 0, 0], sizes = [4, 4, 1, 64], strides = [1, 1, 1, 1]} : vector<4x4x2x64xbf16> to vector<4x4x1x64xbf16>
    %8 = vector.shape_cast %7 : vector<4x4x1x64xbf16> to vector<4x4x64xbf16>
    %9 = vector.extract_strided_slice %6 {offsets = [0, 0, 1, 0], sizes = [4, 4, 1, 64], strides = [1, 1, 1, 1]} : vector<4x4x2x64xbf16> to vector<4x4x1x64xbf16>
    %10 = vector.shape_cast %9 : vector<4x4x1x64xbf16> to vector<4x4x64xbf16>
    %11 = arith.maximumf %8, %10 : vector<4x4x64xbf16>
    %c0_5 = arith.constant 0 : index
    %c0_6 = arith.constant 0 : index
    %c0_7 = arith.constant 0 : index
    %c0_8 = arith.constant 0 : index
    %12 = vector.load %arg2[%c0_5, %c0_6, %c0_7, %c0_8] : memref<1x4x4x64xbf16, #tpu.memory_space<vmem>>, vector<1x4x4x64xbf16>
    %13 = vector.shape_cast %12 : vector<1x4x4x64xbf16> to vector<4x4x64xbf16>
    %14 = vector.shape_cast %11 : vector<4x4x64xbf16> to vector<1x4x4x64xbf16>
    tpu.vector_store %arg2[%c0_5, %c0_6, %c0_7, %c0_8], %14 {strides = array<i32>} : memref<1x4x4x64xbf16, #tpu.memory_space<vmem>>, vector<1x4x4x64xbf16>,
    return
  }
  func.func @transform_0(%arg0: i32) -> (i32, i32, i32, i32, i32, i32) {
    %c0_i32 = arith.constant 0 : i32
    %c0_i32_0 = arith.constant 0 : i32
    %c0_i32_1 = arith.constant 0 : i32
    %c0_i32_2 = arith.constant 0 : i32
    %c0_i32_3 = arith.constant 0 : i32
    %c0_i32_4 = arith.constant 0 : i32
    return %arg0, %c0_i32, %c0_i32_0, %c0_i32_1, %c0_i32_2, %c0_i32_3 : i32, i32, i32, i32, i32, i32
  }
  func.func @transform_1(%arg0: i32) -> (i32, i32, i32, i32) {
    %c0_i32 = arith.constant 0 : i32
    %c0_i32_0 = arith.constant 0 : i32
    %c0_i32_1 = arith.constant 0 : i32
    %c0_i32_2 = arith.constant 0 : i32
    return %arg0, %c0_i32, %c0_i32_0, %c0_i32_1 : i32, i32, i32, i32
  }
}

module attributes {stable_mosaic.version = 11 : i64} {
  func.func @conv_bn_relu_kernel(%arg0: i32, %arg1: memref<32x576xbf16, #tpu.memory_space<vmem>>, %arg2: memref<576x128xbf16, #tpu.memory_space<vmem>>, %arg3: memref<1x128xf32, #tpu.memory_space<vmem>>, %arg4: memref<32x128xbf16, #tpu.memory_space<vmem>>) attributes {dimension_semantics = [#tpu.dimension_semantics<parallel>], iteration_bounds = array<i64: 1>, scalar_prefetch = 0 : i64, scratch_operands = 0 : i64, tpu.core_type = #tpu.core_type<tc>, window_params = [{transform_indices = @transform_0, window_bounds = array<i64: 32, 576>}, {pipeline_mode = #tpu.pipeline_mode<synchronous>, transform_indices = @transform_1, window_bounds = array<i64: 576, 128>}, {pipeline_mode = #tpu.pipeline_mode<synchronous>, transform_indices = @transform_2, window_bounds = array<i64: 1, 128>}, {transform_indices = @transform_3, window_bounds = array<i64: 32, 128>}]} {
    %c0 = arith.constant 0 : index
    %c0_0 = arith.constant 0 : index
    %0 = vector.load %arg1[%c0, %c0_0] : memref<32x576xbf16, #tpu.memory_space<vmem>>, vector<32x576xbf16>
    %c0_1 = arith.constant 0 : index
    %c0_2 = arith.constant 0 : index
    %1 = vector.load %arg2[%c0_1, %c0_2] : memref<576x128xbf16, #tpu.memory_space<vmem>>, vector<576x128xbf16>
    %cst = arith.constant dense<0.000000e+00> : vector<32x128xf32>
    %2 = tpu.matmul %0, %1, %cst {dimension_numbers = #tpu.dot_dimension_numbers<[1], [0], [0], [1], [0, 0, 1, 1], [], []>} : vector<32x576xbf16>, vector<576x128xbf16>, vector<32x128xf32> -> vector<32x128xf32>
    %c0_3 = arith.constant 0 : index
    %c0_4 = arith.constant 0 : index
    %3 = vector.load %arg3[%c0_3, %c0_4] : memref<1x128xf32, #tpu.memory_space<vmem>>, vector<1x128xf32>
    %4 = vector.broadcast %3 : vector<1x128xf32> to vector<32x128xf32>
    %5 = arith.addf %2, %4 : vector<32x128xf32>
    %cst_5 = arith.constant 0.000000e+00 : f32
    %6 = vector.broadcast %cst_5 : f32 to vector<32x128xf32>
    %7 = arith.maximumf %5, %6 : vector<32x128xf32>
    %8 = arith.truncf %7 : vector<32x128xf32> to vector<32x128xbf16>
    %c0_6 = arith.constant 0 : index
    %c0_7 = arith.constant 0 : index
    %9 = vector.load %arg4[%c0_6, %c0_7] : memref<32x128xbf16, #tpu.memory_space<vmem>>, vector<32x128xbf16>
    tpu.vector_store %arg4[%c0_6, %c0_7], %8 {strides = array<i32>} : memref<32x128xbf16, #tpu.memory_space<vmem>>, vector<32x128xbf16>,
    return
  }
  func.func @transform_0(%arg0: i32) -> (i32, i32) {
    %c0_i32 = arith.constant 0 : i32
    %c0_i32_0 = arith.constant 0 : i32
    return %arg0, %c0_i32 : i32, i32
  }
  func.func @transform_1(%arg0: i32) -> (i32, i32) {
    %c0_i32 = arith.constant 0 : i32
    %c0_i32_0 = arith.constant 0 : i32
    %c0_i32_1 = arith.constant 0 : i32
    return %c0_i32, %c0_i32_0 : i32, i32
  }
  func.func @transform_2(%arg0: i32) -> (i32, i32) {
    %c0_i32 = arith.constant 0 : i32
    %c0_i32_0 = arith.constant 0 : i32
    %c0_i32_1 = arith.constant 0 : i32
    return %c0_i32, %c0_i32_0 : i32, i32
  }
  func.func @transform_3(%arg0: i32) -> (i32, i32) {
    %c0_i32 = arith.constant 0 : i32
    %c0_i32_0 = arith.constant 0 : i32
    return %arg0, %c0_i32 : i32, i32
  }
}

module attributes {stable_mosaic.version = 11 : i64} {
  func.func @conv_bn_relu_kernel(%arg0: i32, %arg1: memref<32x1152xbf16, #tpu.memory_space<vmem>>, %arg2: memref<1152x128xbf16, #tpu.memory_space<vmem>>, %arg3: memref<1x128xf32, #tpu.memory_space<vmem>>, %arg4: memref<32x128xbf16, #tpu.memory_space<vmem>>) attributes {dimension_semantics = [#tpu.dimension_semantics<parallel>], iteration_bounds = array<i64: 1>, scalar_prefetch = 0 : i64, scratch_operands = 0 : i64, tpu.core_type = #tpu.core_type<tc>, window_params = [{transform_indices = @transform_0, window_bounds = array<i64: 32, 1152>}, {pipeline_mode = #tpu.pipeline_mode<synchronous>, transform_indices = @transform_1, window_bounds = array<i64: 1152, 128>}, {pipeline_mode = #tpu.pipeline_mode<synchronous>, transform_indices = @transform_2, window_bounds = array<i64: 1, 128>}, {transform_indices = @transform_3, window_bounds = array<i64: 32, 128>}]} {
    %c0 = arith.constant 0 : index
    %c0_0 = arith.constant 0 : index
    %0 = vector.load %arg1[%c0, %c0_0] : memref<32x1152xbf16, #tpu.memory_space<vmem>>, vector<32x1152xbf16>
    %c0_1 = arith.constant 0 : index
    %c0_2 = arith.constant 0 : index
    %1 = vector.load %arg2[%c0_1, %c0_2] : memref<1152x128xbf16, #tpu.memory_space<vmem>>, vector<1152x128xbf16>
    %cst = arith.constant dense<0.000000e+00> : vector<32x128xf32>
    %2 = tpu.matmul %0, %1, %cst {dimension_numbers = #tpu.dot_dimension_numbers<[1], [0], [0], [1], [0, 0, 1, 1], [], []>} : vector<32x1152xbf16>, vector<1152x128xbf16>, vector<32x128xf32> -> vector<32x128xf32>
    %c0_3 = arith.constant 0 : index
    %c0_4 = arith.constant 0 : index
    %3 = vector.load %arg3[%c0_3, %c0_4] : memref<1x128xf32, #tpu.memory_space<vmem>>, vector<1x128xf32>
    %4 = vector.broadcast %3 : vector<1x128xf32> to vector<32x128xf32>
    %5 = arith.addf %2, %4 : vector<32x128xf32>
    %cst_5 = arith.constant 0.000000e+00 : f32
    %6 = vector.broadcast %cst_5 : f32 to vector<32x128xf32>
    %7 = arith.maximumf %5, %6 : vector<32x128xf32>
    %8 = arith.truncf %7 : vector<32x128xf32> to vector<32x128xbf16>
    %c0_6 = arith.constant 0 : index
    %c0_7 = arith.constant 0 : index
    %9 = vector.load %arg4[%c0_6, %c0_7] : memref<32x128xbf16, #tpu.memory_space<vmem>>, vector<32x128xbf16>
    tpu.vector_store %arg4[%c0_6, %c0_7], %8 {strides = array<i32>} : memref<32x128xbf16, #tpu.memory_space<vmem>>, vector<32x128xbf16>,
    return
  }
  func.func @transform_0(%arg0: i32) -> (i32, i32) {
    %c0_i32 = arith.constant 0 : i32
    %c0_i32_0 = arith.constant 0 : i32
    return %arg0, %c0_i32 : i32, i32
  }
  func.func @transform_1(%arg0: i32) -> (i32, i32) {
    %c0_i32 = arith.constant 0 : i32
    %c0_i32_0 = arith.constant 0 : i32
    %c0_i32_1 = arith.constant 0 : i32
    return %c0_i32, %c0_i32_0 : i32, i32
  }
  func.func @transform_2(%arg0: i32) -> (i32, i32) {
    %c0_i32 = arith.constant 0 : i32
    %c0_i32_0 = arith.constant 0 : i32
    %c0_i32_1 = arith.constant 0 : i32
    return %c0_i32, %c0_i32_0 : i32, i32
  }
  func.func @transform_3(%arg0: i32) -> (i32, i32) {
    %c0_i32 = arith.constant 0 : i32
    %c0_i32_0 = arith.constant 0 : i32
    return %arg0, %c0_i32 : i32, i32
  }
}

module attributes {stable_mosaic.version = 11 : i64} {
  func.func @maxpool2_kernel(%arg0: i32, %arg1: memref<1x2x2x2x2x128xbf16, #tpu.memory_space<vmem>>, %arg2: memref<1x2x2x128xbf16, #tpu.memory_space<vmem>>) attributes {dimension_semantics = [#tpu.dimension_semantics<parallel>], iteration_bounds = array<i64: 2>, scalar_prefetch = 0 : i64, scratch_operands = 0 : i64, tpu.core_type = #tpu.core_type<tc>, window_params = [{transform_indices = @transform_0, window_bounds = array<i64: 1, 2, 2, 2, 2, 128>}, {transform_indices = @transform_1, window_bounds = array<i64: 1, 2, 2, 128>}]} {
    %c0 = arith.constant 0 : index
    %c0_0 = arith.constant 0 : index
    %c0_1 = arith.constant 0 : index
    %c0_2 = arith.constant 0 : index
    %c0_3 = arith.constant 0 : index
    %c0_4 = arith.constant 0 : index
    %0 = vector.load %arg1[%c0, %c0_0, %c0_1, %c0_2, %c0_3, %c0_4] : memref<1x2x2x2x2x128xbf16, #tpu.memory_space<vmem>>, vector<1x2x2x2x2x128xbf16>
    %1 = vector.shape_cast %0 : vector<1x2x2x2x2x128xbf16> to vector<2x2x2x2x128xbf16>
    %2 = vector.extract_strided_slice %1 {offsets = [0, 0, 0, 0, 0], sizes = [2, 1, 2, 2, 128], strides = [1, 1, 1, 1, 1]} : vector<2x2x2x2x128xbf16> to vector<2x1x2x2x128xbf16>
    %3 = vector.shape_cast %2 : vector<2x1x2x2x128xbf16> to vector<2x2x2x128xbf16>
    %4 = vector.extract_strided_slice %1 {offsets = [0, 1, 0, 0, 0], sizes = [2, 1, 2, 2, 128], strides = [1, 1, 1, 1, 1]} : vector<2x2x2x2x128xbf16> to vector<2x1x2x2x128xbf16>
    %5 = vector.shape_cast %4 : vector<2x1x2x2x128xbf16> to vector<2x2x2x128xbf16>
    %6 = arith.maximumf %3, %5 : vector<2x2x2x128xbf16>
    %7 = vector.extract_strided_slice %6 {offsets = [0, 0, 0, 0], sizes = [2, 2, 1, 128], strides = [1, 1, 1, 1]} : vector<2x2x2x128xbf16> to vector<2x2x1x128xbf16>
    %8 = vector.shape_cast %7 : vector<2x2x1x128xbf16> to vector<2x2x128xbf16>
    %9 = vector.extract_strided_slice %6 {offsets = [0, 0, 1, 0], sizes = [2, 2, 1, 128], strides = [1, 1, 1, 1]} : vector<2x2x2x128xbf16> to vector<2x2x1x128xbf16>
    %10 = vector.shape_cast %9 : vector<2x2x1x128xbf16> to vector<2x2x128xbf16>
    %11 = arith.maximumf %8, %10 : vector<2x2x128xbf16>
    %c0_5 = arith.constant 0 : index
    %c0_6 = arith.constant 0 : index
    %c0_7 = arith.constant 0 : index
    %c0_8 = arith.constant 0 : index
    %12 = vector.load %arg2[%c0_5, %c0_6, %c0_7, %c0_8] : memref<1x2x2x128xbf16, #tpu.memory_space<vmem>>, vector<1x2x2x128xbf16>
    %13 = vector.shape_cast %12 : vector<1x2x2x128xbf16> to vector<2x2x128xbf16>
    %14 = vector.shape_cast %11 : vector<2x2x128xbf16> to vector<1x2x2x128xbf16>
    tpu.vector_store %arg2[%c0_5, %c0_6, %c0_7, %c0_8], %14 {strides = array<i32>} : memref<1x2x2x128xbf16, #tpu.memory_space<vmem>>, vector<1x2x2x128xbf16>,
    return
  }
  func.func @transform_0(%arg0: i32) -> (i32, i32, i32, i32, i32, i32) {
    %c0_i32 = arith.constant 0 : i32
    %c0_i32_0 = arith.constant 0 : i32
    %c0_i32_1 = arith.constant 0 : i32
    %c0_i32_2 = arith.constant 0 : i32
    %c0_i32_3 = arith.constant 0 : i32
    %c0_i32_4 = arith.constant 0 : i32
    return %arg0, %c0_i32, %c0_i32_0, %c0_i32_1, %c0_i32_2, %c0_i32_3 : i32, i32, i32, i32, i32, i32
  }
  func.func @transform_1(%arg0: i32) -> (i32, i32, i32, i32) {
    %c0_i32 = arith.constant 0 : i32
    %c0_i32_0 = arith.constant 0 : i32
    %c0_i32_1 = arith.constant 0 : i32
    %c0_i32_2 = arith.constant 0 : i32
    return %arg0, %c0_i32, %c0_i32_0, %c0_i32_1 : i32, i32, i32, i32
  }
}

module attributes {stable_mosaic.version = 11 : i64} {
  func.func @conv_bn_relu_kernel(%arg0: i32, %arg1: memref<8x1152xbf16, #tpu.memory_space<vmem>>, %arg2: memref<1152x256xbf16, #tpu.memory_space<vmem>>, %arg3: memref<1x256xf32, #tpu.memory_space<vmem>>, %arg4: memref<8x256xbf16, #tpu.memory_space<vmem>>) attributes {dimension_semantics = [#tpu.dimension_semantics<parallel>], iteration_bounds = array<i64: 1>, scalar_prefetch = 0 : i64, scratch_operands = 0 : i64, tpu.core_type = #tpu.core_type<tc>, window_params = [{transform_indices = @transform_0, window_bounds = array<i64: 8, 1152>}, {pipeline_mode = #tpu.pipeline_mode<synchronous>, transform_indices = @transform_1, window_bounds = array<i64: 1152, 256>}, {pipeline_mode = #tpu.pipeline_mode<synchronous>, transform_indices = @transform_2, window_bounds = array<i64: 1, 256>}, {transform_indices = @transform_3, window_bounds = array<i64: 8, 256>}]} {
    %c0 = arith.constant 0 : index
    %c0_0 = arith.constant 0 : index
    %0 = vector.load %arg1[%c0, %c0_0] : memref<8x1152xbf16, #tpu.memory_space<vmem>>, vector<8x1152xbf16>
    %c0_1 = arith.constant 0 : index
    %c0_2 = arith.constant 0 : index
    %1 = vector.load %arg2[%c0_1, %c0_2] : memref<1152x256xbf16, #tpu.memory_space<vmem>>, vector<1152x256xbf16>
    %cst = arith.constant dense<0.000000e+00> : vector<8x256xf32>
    %2 = tpu.matmul %0, %1, %cst {dimension_numbers = #tpu.dot_dimension_numbers<[1], [0], [0], [1], [0, 0, 1, 1], [], []>} : vector<8x1152xbf16>, vector<1152x256xbf16>, vector<8x256xf32> -> vector<8x256xf32>
    %c0_3 = arith.constant 0 : index
    %c0_4 = arith.constant 0 : index
    %3 = vector.load %arg3[%c0_3, %c0_4] : memref<1x256xf32, #tpu.memory_space<vmem>>, vector<1x256xf32>
    %4 = vector.broadcast %3 : vector<1x256xf32> to vector<8x256xf32>
    %5 = arith.addf %2, %4 : vector<8x256xf32>
    %cst_5 = arith.constant 0.000000e+00 : f32
    %6 = vector.broadcast %cst_5 : f32 to vector<8x256xf32>
    %7 = arith.maximumf %5, %6 : vector<8x256xf32>
    %8 = arith.truncf %7 : vector<8x256xf32> to vector<8x256xbf16>
    %c0_6 = arith.constant 0 : index
    %c0_7 = arith.constant 0 : index
    %9 = vector.load %arg4[%c0_6, %c0_7] : memref<8x256xbf16, #tpu.memory_space<vmem>>, vector<8x256xbf16>
    tpu.vector_store %arg4[%c0_6, %c0_7], %8 {strides = array<i32>} : memref<8x256xbf16, #tpu.memory_space<vmem>>, vector<8x256xbf16>,
    return
  }
  func.func @transform_0(%arg0: i32) -> (i32, i32) {
    %c0_i32 = arith.constant 0 : i32
    %c0_i32_0 = arith.constant 0 : i32
    return %arg0, %c0_i32 : i32, i32
  }
  func.func @transform_1(%arg0: i32) -> (i32, i32) {
    %c0_i32 = arith.constant 0 : i32
    %c0_i32_0 = arith.constant 0 : i32
    %c0_i32_1 = arith.constant 0 : i32
    return %c0_i32, %c0_i32_0 : i32, i32
  }
  func.func @transform_2(%arg0: i32) -> (i32, i32) {
    %c0_i32 = arith.constant 0 : i32
    %c0_i32_0 = arith.constant 0 : i32
    %c0_i32_1 = arith.constant 0 : i32
    return %c0_i32, %c0_i32_0 : i32, i32
  }
  func.func @transform_3(%arg0: i32) -> (i32, i32) {
    %c0_i32 = arith.constant 0 : i32
    %c0_i32_0 = arith.constant 0 : i32
    return %arg0, %c0_i32 : i32, i32
  }
}

module attributes {stable_mosaic.version = 11 : i64} {
  func.func @maxpool2_kernel(%arg0: i32, %arg1: memref<1x1x2x1x2x256xbf16, #tpu.memory_space<vmem>>, %arg2: memref<1x1x1x256xbf16, #tpu.memory_space<vmem>>) attributes {dimension_semantics = [#tpu.dimension_semantics<parallel>], iteration_bounds = array<i64: 2>, scalar_prefetch = 0 : i64, scratch_operands = 0 : i64, tpu.core_type = #tpu.core_type<tc>, window_params = [{transform_indices = @transform_0, window_bounds = array<i64: 1, 1, 2, 1, 2, 256>}, {transform_indices = @transform_1, window_bounds = array<i64: 1, 1, 1, 256>}]} {
    %c0 = arith.constant 0 : index
    %c0_0 = arith.constant 0 : index
    %c0_1 = arith.constant 0 : index
    %c0_2 = arith.constant 0 : index
    %c0_3 = arith.constant 0 : index
    %c0_4 = arith.constant 0 : index
    %0 = vector.load %arg1[%c0, %c0_0, %c0_1, %c0_2, %c0_3, %c0_4] : memref<1x1x2x1x2x256xbf16, #tpu.memory_space<vmem>>, vector<1x1x2x1x2x256xbf16>
    %1 = vector.shape_cast %0 : vector<1x1x2x1x2x256xbf16> to vector<1x2x1x2x256xbf16>
    %2 = vector.extract_strided_slice %1 {offsets = [0, 0, 0, 0, 0], sizes = [1, 1, 1, 2, 256], strides = [1, 1, 1, 1, 1]} : vector<1x2x1x2x256xbf16> to vector<1x1x1x2x256xbf16>
    %3 = vector.shape_cast %2 : vector<1x1x1x2x256xbf16> to vector<1x1x2x256xbf16>
    %4 = vector.extract_strided_slice %1 {offsets = [0, 1, 0, 0, 0], sizes = [1, 1, 1, 2, 256], strides = [1, 1, 1, 1, 1]} : vector<1x2x1x2x256xbf16> to vector<1x1x1x2x256xbf16>
    %5 = vector.shape_cast %4 : vector<1x1x1x2x256xbf16> to vector<1x1x2x256xbf16>
    %6 = arith.maximumf %3, %5 : vector<1x1x2x256xbf16>
    %7 = vector.extract_strided_slice %6 {offsets = [0, 0, 0, 0], sizes = [1, 1, 1, 256], strides = [1, 1, 1, 1]} : vector<1x1x2x256xbf16> to vector<1x1x1x256xbf16>
    %8 = vector.shape_cast %7 : vector<1x1x1x256xbf16> to vector<1x1x256xbf16>
    %9 = vector.extract_strided_slice %6 {offsets = [0, 0, 1, 0], sizes = [1, 1, 1, 256], strides = [1, 1, 1, 1]} : vector<1x1x2x256xbf16> to vector<1x1x1x256xbf16>
    %10 = vector.shape_cast %9 : vector<1x1x1x256xbf16> to vector<1x1x256xbf16>
    %11 = arith.maximumf %8, %10 : vector<1x1x256xbf16>
    %c0_5 = arith.constant 0 : index
    %c0_6 = arith.constant 0 : index
    %c0_7 = arith.constant 0 : index
    %c0_8 = arith.constant 0 : index
    %12 = vector.load %arg2[%c0_5, %c0_6, %c0_7, %c0_8] : memref<1x1x1x256xbf16, #tpu.memory_space<vmem>>, vector<1x1x1x256xbf16>
    %13 = vector.shape_cast %12 : vector<1x1x1x256xbf16> to vector<1x1x256xbf16>
    %14 = vector.shape_cast %11 : vector<1x1x256xbf16> to vector<1x1x1x256xbf16>
    tpu.vector_store %arg2[%c0_5, %c0_6, %c0_7, %c0_8], %14 {strides = array<i32>} : memref<1x1x1x256xbf16, #tpu.memory_space<vmem>>, vector<1x1x1x256xbf16>,
    return
  }
  func.func @transform_0(%arg0: i32) -> (i32, i32, i32, i32, i32, i32) {
    %c0_i32 = arith.constant 0 : i32
    %c0_i32_0 = arith.constant 0 : i32
    %c0_i32_1 = arith.constant 0 : i32
    %c0_i32_2 = arith.constant 0 : i32
    %c0_i32_3 = arith.constant 0 : i32
    %c0_i32_4 = arith.constant 0 : i32
    return %arg0, %c0_i32, %c0_i32_0, %c0_i32_1, %c0_i32_2, %c0_i32_3 : i32, i32, i32, i32, i32, i32
  }
  func.func @transform_1(%arg0: i32) -> (i32, i32, i32, i32) {
    %c0_i32 = arith.constant 0 : i32
    %c0_i32_0 = arith.constant 0 : i32
    %c0_i32_1 = arith.constant 0 : i32
    %c0_i32_2 = arith.constant 0 : i32
    return %arg0, %c0_i32, %c0_i32_0, %c0_i32_1 : i32, i32, i32, i32
  }
}

module attributes {stable_mosaic.version = 11 : i64} {
  func.func @linear_kernel(%arg0: i32, %arg1: memref<2x256xbf16, #tpu.memory_space<vmem>>, %arg2: memref<256x128xbf16, #tpu.memory_space<vmem>>, %arg3: memref<1x128xf32, #tpu.memory_space<vmem>>, %arg4: memref<2x128xf32, #tpu.memory_space<vmem>>) attributes {dimension_semantics = [#tpu.dimension_semantics<parallel>], iteration_bounds = array<i64: 1>, scalar_prefetch = 0 : i64, scratch_operands = 0 : i64, tpu.core_type = #tpu.core_type<tc>, window_params = [{transform_indices = @transform_0, window_bounds = array<i64: 2, 256>}, {pipeline_mode = #tpu.pipeline_mode<synchronous>, transform_indices = @transform_1, window_bounds = array<i64: 256, 128>}, {pipeline_mode = #tpu.pipeline_mode<synchronous>, transform_indices = @transform_2, window_bounds = array<i64: 1, 128>}, {transform_indices = @transform_3, window_bounds = array<i64: 2, 128>}]} {
    %c0 = arith.constant 0 : index
    %c0_0 = arith.constant 0 : index
    %0 = vector.load %arg1[%c0, %c0_0] : memref<2x256xbf16, #tpu.memory_space<vmem>>, vector<2x256xbf16>
    %c0_1 = arith.constant 0 : index
    %c0_2 = arith.constant 0 : index
    %1 = vector.load %arg2[%c0_1, %c0_2] : memref<256x128xbf16, #tpu.memory_space<vmem>>, vector<256x128xbf16>
    %cst = arith.constant dense<0.000000e+00> : vector<2x128xf32>
    %2 = tpu.matmul %0, %1, %cst {dimension_numbers = #tpu.dot_dimension_numbers<[1], [0], [0], [1], [0, 0, 1, 1], [], []>} : vector<2x256xbf16>, vector<256x128xbf16>, vector<2x128xf32> -> vector<2x128xf32>
    %c0_3 = arith.constant 0 : index
    %c0_4 = arith.constant 0 : index
    %3 = vector.load %arg3[%c0_3, %c0_4] : memref<1x128xf32, #tpu.memory_space<vmem>>, vector<1x128xf32>
    %4 = vector.broadcast %3 : vector<1x128xf32> to vector<2x128xf32>
    %5 = arith.addf %2, %4 : vector<2x128xf32>
    %c0_5 = arith.constant 0 : index
    %c0_6 = arith.constant 0 : index
    %6 = vector.load %arg4[%c0_5, %c0_6] : memref<2x128xf32, #tpu.memory_space<vmem>>, vector<2x128xf32>
    tpu.vector_store %arg4[%c0_5, %c0_6], %5 {strides = array<i32>} : memref<2x128xf32, #tpu.memory_space<vmem>>, vector<2x128xf32>,
    return
  }
  func.func @transform_0(%arg0: i32) -> (i32, i32) {
    %c0_i32 = arith.constant 0 : i32
    %c0_i32_0 = arith.constant 0 : i32
    return %arg0, %c0_i32 : i32, i32
  }
  func.func @transform_1(%arg0: i32) -> (i32, i32) {
    %c0_i32 = arith.constant 0 : i32
    %c0_i32_0 = arith.constant 0 : i32
    %c0_i32_1 = arith.constant 0 : i32
    return %c0_i32, %c0_i32_0 : i32, i32
  }
  func.func @transform_2(%arg0: i32) -> (i32, i32) {
    %c0_i32 = arith.constant 0 : i32
    %c0_i32_0 = arith.constant 0 : i32
    %c0_i32_1 = arith.constant 0 : i32
    return %c0_i32, %c0_i32_0 : i32, i32
  }
  func.func @transform_3(%arg0: i32) -> (i32, i32) {
    %c0_i32 = arith.constant 0 : i32
    %c0_i32_0 = arith.constant 0 : i32
    return %arg0, %c0_i32 : i32, i32
  }
}

</mosaic_0001>

<llo_original>
// kernel: cnn_forward.12
$region0: #{cnn_forward.12}
  #allocation0 [shape = 'u32[]', space=smem, size = 0x4, offset = 0x4, fixed_abs, tag = 'smem constant byte address 0x4 - core index']
  #allocation1 [shape = 'u32[72,128]{1,0:T(1,128)}', space=vmem, size = 0x9000, scoped, tag = 'internal scratch']
  %s0 = inlined_call_operand.vmem [shape: bf16[512,16], index: 0, kind: input, shape index: {}]
  %s1 = inlined_call_operand.vmem [shape: bf16[16,32], index: 1, kind: input, shape index: {}]
  %s2 = inlined_call_operand.hbm [shape: f32[1,32], index: 2, kind: input, shape index: {}]
  %s3 = inlined_call_operand.vmem [shape: bf16[512,32], index: 3, kind: output, shape index: {}]
  %s4 = sld [smem:[#allocation0]]
  $region26: #{cnn_forward.12} parent=0
    _
  %s6 = ssub.s32 1, %s4
  %s7 = scalar_select 0, %s6, %s4
  $region1: #{cnn_forward.12} parent=0
    #allocation2 [shape = 'u8[512]{0}', space=vmem, size = 0x400, scoped, tag = 'input window, operand 2, single buffered']
    #allocation3 [shape = 's32[1]{0}', space=sflag, size = 0x4, scoped, tag = 'scoped memory for cnn_forward.12']
    %8 = vsyncpa [#allocation3], 0
    // Predicated region
    $region2: #{cnn_forward.12} parent=1 // pred_check
      _
    $region3: #{cnn_forward.12} parent=1 // pred_check_branch
      %10 = sbr.rel (0) target = $region5
    $region4: #{cnn_forward.12} parent=1 // pred_region
      _
    $region5: #{cnn_forward.12} parent=1 // pred_fallthru
      _
    // Predicated region
    $region6: #{cnn_forward.12} parent=1 // pred_check
      _
    $region7: #{cnn_forward.12} parent=1 // pred_check_branch
      %12 = sbr.rel (0) target = $region9
    $region8: #{cnn_forward.12} parent=1 // pred_region
      _
    $region9: #{cnn_forward.12} parent=1 // pred_fallthru
      _
    // Predicated region
    $region10: #{cnn_forward.12} parent=1 // pred_check
      _
    $region11: #{cnn_forward.12} parent=1 // pred_check_branch
      %14 = sbr.rel (0) target = $region13
    $region12: #{cnn_forward.12} parent=1 // pred_region
      %16 = vsyncadd [#allocation3], 0
      %s18 = sshll.u32 %s2, 4
      %s19 = int_to_ptr.hbm [resolvable:$true] %s18
      %s20 = sshll.u32 [#allocation2], 4
      %s21 = int_to_ptr.vmem [resolvable:$true] %s20
      %23 = dma.hbm_to_vmem [thread:$0]  %s19, 16, %s21, [#allocation3]
    $region13: #{cnn_forward.12} parent=1 // pred_fallthru
      _
    // Predicated region
    $region14: #{cnn_forward.12} parent=1 // pred_check
      _
    $region15: #{cnn_forward.12} parent=1 // pred_check_branch
      %25 = sbr.rel (0) target = $region17
    $region16: #{cnn_forward.12} parent=1 // pred_region
      %27 = dma.done [#allocation3], 16
    $region17: #{cnn_forward.12} parent=1 // pred_fallthru
      _
    %v29 = vld [vmem:[%s0] sm:$0xf]
    %v30 = vld [vmem:[%s0 + $0x4] sm:$0xf]
    %v31 = vld [vmem:[%s0 + $0x8] sm:$0xf]
    %v32 = vld [vmem:[%s0 + $0xc] sm:$0xf]
    %v33 = vld [vmem:[%s0 + $0x10] sm:$0xf]
    %v34 = vld [vmem:[%s0 + $0x14] sm:$0xf]
    %v35 = vld [vmem:[%s0 + $0x18] sm:$0xf]
    %v36 = vld [vmem:[%s0 + $0x1c] sm:$0xf]
    %v37 = vld [vmem:[%s0 + $0x20] sm:$0xf]
    %v38 = vld [vmem:[%s0 + $0x24] sm:$0xf]
    %v39 = vld [vmem:[%s0 + $0x28] sm:$0xf]
    %v40 = vld [vmem:[%s0 + $0x2c] sm:$0xf]
    %v41 = vld [vmem:[%s0 + $0x30] sm:$0xf]
    %v42 = vld [vmem:[%s0 + $0x34] sm:$0xf]
    %v43 = vld [vmem:[%s0 + $0x38] sm:$0xf]
    %v44 = vld [vmem:[%s0 + $0x3c] sm:$0xf]
    %v45 = vld [vmem:[%s0 + $0x40] sm:$0xf]
    %v46 = vld [vmem:[%s0 + $0x44] sm:$0xf]
    %v47 = vld [vmem:[%s0 + $0x48] sm:$0xf]
    %v48 = vld [vmem:[%s0 + $0x4c] sm:$0xf]
    %v49 = vld [vmem:[%s0 + $0x50] sm:$0xf]
    %v50 = vld [vmem:[%s0 + $0x54] sm:$0xf]
    %v51 = vld [vmem:[%s0 + $0x58] sm:$0xf]
    %v52 = vld [vmem:[%s0 + $0x5c] sm:$0xf]
    %v53 = vld [vmem:[%s0 + $0x60] sm:$0xf]
    %v54 = vld [vmem:[%s0 + $0x64] sm:$0xf]
    %v55 = vld [vmem:[%s0 + $0x68] sm:$0xf]
    %v56 = vld [vmem:[%s0 + $0x6c] sm:$0xf]
    %v57 = vld [vmem:[%s0 + $0x70] sm:$0xf]
    %v58 = vld [vmem:[%s0 + $0x74] sm:$0xf]
    %v59 = vld [vmem:[%s0 + $0x78] sm:$0xf]
    %v60 = vld [vmem:[%s0 + $0x7c] sm:$0xf]
    %v61 = vld [vmem:[%s0 + $0x80] sm:$0xf]
    %v62 = vld [vmem:[%s0 + $0x84] sm:$0xf]
    %v63 = vld [vmem:[%s0 + $0x88] sm:$0xf]
    %v64 = vld [vmem:[%s0 + $0x8c] sm:$0xf]
    %v65 = vld [vmem:[%s0 + $0x90] sm:$0xf]
    %v66 = vld [vmem:[%s0 + $0x94] sm:$0xf]
    %v67 = vld [vmem:[%s0 + $0x98] sm:$0xf]
    %v68 = vld [vmem:[%s0 + $0x9c] sm:$0xf]
    %v69 = vld [vmem:[%s0 + $0xa0] sm:$0xf]
    %v70 = vld [vmem:[%s0 + $0xa4] sm:$0xf]
    %v71 = vld [vmem:[%s0 + $0xa8] sm:$0xf]
    %v72 = vld [vmem:[%s0 + $0xac] sm:$0xf]
    %v73 = vld [vmem:[%s0 + $0xb0] sm:$0xf]
    %v74 = vld [vmem:[%s0 + $0xb4] sm:$0xf]
    %v75 = vld [vmem:[%s0 + $0xb8] sm:$0xf]
    %v76 = vld [vmem:[%s0 + $0xbc] sm:$0xf]
    %v77 = vld [vmem:[%s0 + $0xc0] sm:$0xf]
    %v78 = vld [vmem:[%s0 + $0xc4] sm:$0xf]
    %v79 = vld [vmem:[%s0 + $0xc8] sm:$0xf]
    %v80 = vld [vmem:[%s0 + $0xcc] sm:$0xf]
    %v81 = vld [vmem:[%s0 + $0xd0] sm:$0xf]
    %v82 = vld [vmem:[%s0 + $0xd4] sm:$0xf]
    %v83 = vld [vmem:[%s0 + $0xd8] sm:$0xf]
    %v84 = vld [vmem:[%s0 + $0xdc] sm:$0xf]
    %v85 = vld [vmem:[%s0 + $0xe0] sm:$0xf]
    %v86 = vld [vmem:[%s0 + $0xe4] sm:$0xf]
    %v87 = vld [vmem:[%s0 + $0xe8] sm:$0xf]
    %v88 = vld [vmem:[%s0 + $0xec] sm:$0xf]
    %v89 = vld [vmem:[%s0 + $0xf0] sm:$0xf]
    %v90 = vld [vmem:[%s0 + $0xf4] sm:$0xf]
    %v91 = vld [vmem:[%s0 + $0xf8] sm:$0xf]
    %v92 = vld [vmem:[%s0 + $0xfc] sm:$0xf]
    %v93 = vld [vmem:[%s1] sm:$0xf]
    %v94 = vld [vmem:[%s1 + $0x4] sm:$0xf]
    %v95 = vld [vmem:[#allocation2] sm:$0x1]
    %v97 = vperm.slane %v95, 0
    %v163 = vunpack.c.l.b16 %v29
    %v164 = vunpack.c.l.b16 %v30
    %v165 = vunpack.c.l.b16 %v31
    %v166 = vunpack.c.l.b16 %v32
    %v167 = vunpack.c.l.b16 %v33
    %v168 = vunpack.c.l.b16 %v34
    %v169 = vunpack.c.l.b16 %v35
    %v170 = vunpack.c.l.b16 %v36
    %v171 = vunpack.c.l.b16 %v37
    %v172 = vunpack.c.l.b16 %v38
    %v173 = vunpack.c.l.b16 %v39
    %v174 = vunpack.c.l.b16 %v40
    %v175 = vunpack.c.l.b16 %v41
    %v176 = vunpack.c.l.b16 %v42
    %v177 = vunpack.c.l.b16 %v43
    %v178 = vunpack.c.l.b16 %v44
    %v179 = vunpack.c.l.b16 %v45
    %v180 = vunpack.c.l.b16 %v46
    %v181 = vunpack.c.l.b16 %v47
    %v182 = vunpack.c.l.b16 %v48
    %v183 = vunpack.c.l.b16 %v49
    %v184 = vunpack.c.l.b16 %v50
    %v185 = vunpack.c.l.b16 %v51
    %v186 = vunpack.c.l.b16 %v52
    %v187 = vunpack.c.l.b16 %v53
    %v188 = vunpack.c.l.b16 %v54
    %v189 = vunpack.c.l.b16 %v55
    %v190 = vunpack.c.l.b16 %v56
    %v191 = vunpack.c.l.b16 %v57
    %v192 = vunpack.c.l.b16 %v58
    %v193 = vunpack.c.l.b16 %v59
    %v194 = vunpack.c.l.b16 %v60
    %v195 = vunpack.c.l.b16 %v61
    %v196 = vunpack.c.l.b16 %v62
    %v197 = vunpack.c.l.b16 %v63
    %v198 = vunpack.c.l.b16 %v64
    %v199 = vunpack.c.l.b16 %v65
    %v200 = vunpack.c.l.b16 %v66
    %v201 = vunpack.c.l.b16 %v67
    %v202 = vunpack.c.l.b16 %v68
    %v203 = vunpack.c.l.b16 %v69
    %v204 = vunpack.c.l.b16 %v70
    %v205 = vunpack.c.l.b16 %v71
    %v206 = vunpack.c.l.b16 %v72
    %v207 = vunpack.c.l.b16 %v73
    %v208 = vunpack.c.l.b16 %v74
    %v209 = vunpack.c.l.b16 %v75
    %v210 = vunpack.c.l.b16 %v76
    %v211 = vunpack.c.l.b16 %v77
    %v212 = vunpack.c.l.b16 %v78
    %v213 = vunpack.c.l.b16 %v79
    %v214 = vunpack.c.l.b16 %v80
    %v215 = vunpack.c.l.b16 %v81
    %v216 = vunpack.c.l.b16 %v82
    %v217 = vunpack.c.l.b16 %v83
    %v218 = vunpack.c.l.b16 %v84
    %v219 = vunpack.c.l.b16 %v85
    %v220 = vunpack.c.l.b16 %v86
    %v221 = vunpack.c.l.b16 %v87
    %v222 = vunpack.c.l.b16 %v88
    %v223 = vunpack.c.l.b16 %v89
    %v224 = vunpack.c.l.b16 %v90
    %v225 = vunpack.c.l.b16 %v91
    %v226 = vunpack.c.l.b16 %v92
    %v227 = vpack.c.b16 %v164, %v163
    %v228 = vpack.c.b16 %v166, %v165
    %v229 = vpack.c.b16 %v168, %v167
    %v230 = vpack.c.b16 %v170, %v169
    %v231 = vpack.c.b16 %v172, %v171
    %v232 = vpack.c.b16 %v174, %v173
    %v233 = vpack.c.b16 %v176, %v175
    %v234 = vpack.c.b16 %v178, %v177
    %v235 = vpack.c.b16 %v180, %v179
    %v236 = vpack.c.b16 %v182, %v181
    %v237 = vpack.c.b16 %v184, %v183
    %v238 = vpack.c.b16 %v186, %v185
    %v239 = vpack.c.b16 %v188, %v187
    %v240 = vpack.c.b16 %v190, %v189
    %v241 = vpack.c.b16 %v192, %v191
    %v242 = vpack.c.b16 %v194, %v193
    %v243 = vpack.c.b16 %v196, %v195
    %v244 = vpack.c.b16 %v198, %v197
    %v245 = vpack.c.b16 %v200, %v199
    %v246 = vpack.c.b16 %v202, %v201
    %v247 = vpack.c.b16 %v204, %v203
    %v248 = vpack.c.b16 %v206, %v205
    %v249 = vpack.c.b16 %v208, %v207
    %v250 = vpack.c.b16 %v210, %v209
    %v251 = vpack.c.b16 %v212, %v211
    %v252 = vpack.c.b16 %v214, %v213
    %v253 = vpack.c.b16 %v216, %v215
    %v254 = vpack.c.b16 %v218, %v217
    %v255 = vpack.c.b16 %v220, %v219
    %v256 = vpack.c.b16 %v222, %v221
    %v257 = vpack.c.b16 %v224, %v223
    %v258 = vpack.c.b16 %v226, %v225
    %v261 = vunpack.c.l.b16 %v93
    %v262 = vunpack.c.l.b16 %v94
    %v263 = vpack.c.b16 %v262, %v261
    %vm265 = vcmask 130048
    %v267 = vsel %vm265, %v227, 0
    %v270 = vsel %vm265, %v228, 0
    %v273 = vsel %vm265, %v229, 0
    %v276 = vsel %vm265, %v230, 0
    %v279 = vsel %vm265, %v231, 0
    %v282 = vsel %vm265, %v232, 0
    %v285 = vsel %vm265, %v233, 0
    %v288 = vsel %vm265, %v234, 0
    %v291 = vsel %vm265, %v235, 0
    %v294 = vsel %vm265, %v236, 0
    %v297 = vsel %vm265, %v237, 0
    %v300 = vsel %vm265, %v238, 0
    %v303 = vsel %vm265, %v239, 0
    %v306 = vsel %vm265, %v240, 0
    %v309 = vsel %vm265, %v241, 0
    %v312 = vsel %vm265, %v242, 0
    %v315 = vsel %vm265, %v243, 0
    %v318 = vsel %vm265, %v244, 0
    %v321 = vsel %vm265, %v245, 0
    %v324 = vsel %vm265, %v246, 0
    %v327 = vsel %vm265, %v247, 0
    %v330 = vsel %vm265, %v248, 0
    %v333 = vsel %vm265, %v249, 0
    %v336 = vsel %vm265, %v250, 0
    %v339 = vsel %vm265, %v251, 0
    %v342 = vsel %vm265, %v252, 0
    %v345 = vsel %vm265, %v253, 0
    %v348 = vsel %vm265, %v254, 0
    %v351 = vsel %vm265, %v255, 0
    %v354 = vsel %vm265, %v256, 0
    %v357 = vsel %vm265, %v257, 0
    %v360 = vsel %vm265, %v258, 0
    %362 = vmatpush.bf16.msra.mxu0 0
    %363 = vmatpush.bf16.msra.mxu0 0
    %364 = vmatpush.bf16.msra.mxu0 0
    %365 = vmatpush.bf16.msra.mxu0 0
    %366 = vmatpush.bf16.msra.mxu0 0
    %367 = vmatpush.bf16.msra.mxu0 0
    %368 = vmatpush.bf16.msra.mxu0 0
    %369 = vmatpush.bf16.msra.mxu0 %v263
    %370 = vmatmul.bf16.gmra.mxu0 %v267
    %v371 = vpop.f32.mrf.mxu0
    %v372 = vadd.f32 %v97, %v371
    %v373 = vpop.f32.mrf.mxu0
    %v374 = vadd.f32 %v97, %v373
    %375 = vmatmul.bf16.gmra.mxu0 %v270
    %v376 = vpop.f32.mrf.mxu0
    %v377 = vadd.f32 %v97, %v376
    %v378 = vpop.f32.mrf.mxu0
    %v379 = vadd.f32 %v97, %v378
    %380 = vmatmul.bf16.gmra.mxu0 %v273
    %v381 = vpop.f32.mrf.mxu0
    %v382 = vadd.f32 %v97, %v381
    %v383 = vpop.f32.mrf.mxu0
    %v384 = vadd.f32 %v97, %v383
    %385 = vmatmul.bf16.gmra.mxu0 %v276
    %v386 = vpop.f32.mrf.mxu0
    %v387 = vadd.f32 %v97, %v386
    %v388 = vpop.f32.mrf.mxu0
    %v389 = vadd.f32 %v97, %v388
    %390 = vmatmul.bf16.gmra.mxu0 %v279
    %v391 = vpop.f32.mrf.mxu0
    %v392 = vadd.f32 %v97, %v391
    %v393 = vpop.f32.mrf.mxu0
    %v394 = vadd.f32 %v97, %v393
    %395 = vmatmul.bf16.gmra.mxu0 %v282
    %v396 = vpop.f32.mrf.mxu0
    %v397 = vadd.f32 %v97, %v396
    %v398 = vpop.f32.mrf.mxu0
    %v399 = vadd.f32 %v97, %v398
    %400 = vmatmul.bf16.gmra.mxu0 %v285
    %v401 = vpop.f32.mrf.mxu0
    %v402 = vadd.f32 %v97, %v401
    %v403 = vpop.f32.mrf.mxu0
    %v404 = vadd.f32 %v97, %v403
    %405 = vmatmul.bf16.gmra.mxu0 %v288
    %v406 = vpop.f32.mrf.mxu0
    %v407 = vadd.f32 %v97, %v406
    %v408 = vpop.f32.mrf.mxu0
    %v409 = vadd.f32 %v97, %v408
    %410 = vmatmul.bf16.gmra.mxu0 %v291
    %v411 = vpop.f32.mrf.mxu0
    %v412 = vadd.f32 %v97, %v411
    %v413 = vpop.f32.mrf.mxu0
    %v414 = vadd.f32 %v97, %v413
    %415 = vmatmul.bf16.gmra.mxu0 %v294
    %v416 = vpop.f32.mrf.mxu0
    %v417 = vadd.f32 %v97, %v416
    %v418 = vpop.f32.mrf.mxu0
    %v419 = vadd.f32 %v97, %v418
    %420 = vmatmul.bf16.gmra.mxu0 %v297
    %v421 = vpop.f32.mrf.mxu0
    %v422 = vadd.f32 %v97, %v421
    %v423 = vpop.f32.mrf.mxu0
    %v424 = vadd.f32 %v97, %v423
    %425 = vmatmul.bf16.gmra.mxu0 %v300
    %v426 = vpop.f32.mrf.mxu0
    %v427 = vadd.f32 %v97, %v426
    %v428 = vpop.f32.mrf.mxu0
    %v429 = vadd.f32 %v97, %v428
    %430 = vmatmul.bf16.gmra.mxu0 %v303
    %v431 = vpop.f32.mrf.mxu0
    %v432 = vadd.f32 %v97, %v431
    %v433 = vpop.f32.mrf.mxu0
    %v434 = vadd.f32 %v97, %v433
    %435 = vmatmul.bf16.gmra.mxu0 %v306
    %v436 = vpop.f32.mrf.mxu0
    %v437 = vadd.f32 %v97, %v436
    %v438 = vpop.f32.mrf.mxu0
    %v439 = vadd.f32 %v97, %v438
    %440 = vmatmul.bf16.gmra.mxu0 %v309
    %v441 = vpop.f32.mrf.mxu0
    %v442 = vadd.f32 %v97, %v441
    %v443 = vpop.f32.mrf.mxu0
    %v444 = vadd.f32 %v97, %v443
    %445 = vmatmul.bf16.gmra.mxu0 %v312
    %v446 = vpop.f32.mrf.mxu0
    %v447 = vadd.f32 %v97, %v446
    %v448 = vpop.f32.mrf.mxu0
    %v449 = vadd.f32 %v97, %v448
    %450 = vmatmul.bf16.gmra.mxu0 %v315
    %v451 = vpop.f32.mrf.mxu0
    %v452 = vadd.f32 %v97, %v451
    %v453 = vpop.f32.mrf.mxu0
    %v454 = vadd.f32 %v97, %v453
    %455 = vmatmul.bf16.gmra.mxu0 %v318
    %v456 = vpop.f32.mrf.mxu0
    %v457 = vadd.f32 %v97, %v456
    %v458 = vpop.f32.mrf.mxu0
    %v459 = vadd.f32 %v97, %v458
    %460 = vmatmul.bf16.gmra.mxu0 %v321
    %v461 = vpop.f32.mrf.mxu0
    %v462 = vadd.f32 %v97, %v461
    %v463 = vpop.f32.mrf.mxu0
    %v464 = vadd.f32 %v97, %v463
    %465 = vmatmul.bf16.gmra.mxu0 %v324
    %v466 = vpop.f32.mrf.mxu0
    %v467 = vadd.f32 %v97, %v466
    %v468 = vpop.f32.mrf.mxu0
    %v469 = vadd.f32 %v97, %v468
    %470 = vmatmul.bf16.gmra.mxu0 %v327
    %v471 = vpop.f32.mrf.mxu0
    %v472 = vadd.f32 %v97, %v471
    %v473 = vpop.f32.mrf.mxu0
    %v474 = vadd.f32 %v97, %v473
    %475 = vmatmul.bf16.gmra.mxu0 %v330
    %v476 = vpop.f32.mrf.mxu0
    %v477 = vadd.f32 %v97, %v476
    %v478 = vpop.f32.mrf.mxu0
    %v479 = vadd.f32 %v97, %v478
    %480 = vmatmul.bf16.gmra.mxu0 %v333
    %v481 = vpop.f32.mrf.mxu0
    %v482 = vadd.f32 %v97, %v481
    %v483 = vpop.f32.mrf.mxu0
    %v484 = vadd.f32 %v97, %v483
    %485 = vmatmul.bf16.gmra.mxu0 %v336
    %v486 = vpop.f32.mrf.mxu0
    %v487 = vadd.f32 %v97, %v486
    %v488 = vpop.f32.mrf.mxu0
    %v489 = vadd.f32 %v97, %v488
    %490 = vmatmul.bf16.gmra.mxu0 %v339
    %v491 = vpop.f32.mrf.mxu0
    %v492 = vadd.f32 %v97, %v491
    %v493 = vpop.f32.mrf.mxu0
    %v494 = vadd.f32 %v97, %v493
    %495 = vmatmul.bf16.gmra.mxu0 %v342
    %v496 = vpop.f32.mrf.mxu0
    %v497 = vadd.f32 %v97, %v496
    %v498 = vpop.f32.mrf.mxu0
    %v499 = vadd.f32 %v97, %v498
    %500 = vmatmul.bf16.gmra.mxu0 %v345
    %v501 = vpop.f32.mrf.mxu0
    %v502 = vadd.f32 %v97, %v501
    %v503 = vpop.f32.mrf.mxu0
    %v504 = vadd.f32 %v97, %v503
    %505 = vmatmul.bf16.gmra.mxu0 %v348
    %v506 = vpop.f32.mrf.mxu0
    %v507 = vadd.f32 %v97, %v506
    %v508 = vpop.f32.mrf.mxu0
    %v509 = vadd.f32 %v97, %v508
    %510 = vmatmul.bf16.gmra.mxu0 %v351
    %v511 = vpop.f32.mrf.mxu0
    %v512 = vadd.f32 %v97, %v511
    %v513 = vpop.f32.mrf.mxu0
    %v514 = vadd.f32 %v97, %v513
    %515 = vmatmul.bf16.gmra.mxu0 %v354
    %v516 = vpop.f32.mrf.mxu0
    %v517 = vadd.f32 %v97, %v516
    %v518 = vpop.f32.mrf.mxu0
    %v519 = vadd.f32 %v97, %v518
    %520 = vmatmul.bf16.gmra.mxu0 %v357
    %v521 = vpop.f32.mrf.mxu0
    %v522 = vadd.f32 %v97, %v521
    %v523 = vpop.f32.mrf.mxu0
    %v524 = vadd.f32 %v97, %v523
    %525 = vmatmul.bf16.gmra.mxu0 %v360
    %v526 = vpop.f32.mrf.mxu0
    %v527 = vadd.f32 %v97, %v526
    %v528 = vpop.f32.mrf.mxu0
    %v529 = vadd.f32 %v97, %v528
    %530 = vdwg.mxu0
    %v531 = vmax.f32 %v372, 0.0
    %v532 = vmax.f32 %v374, 0.0
    %v533 = vmax.f32 %v377, 0.0
    %v534 = vmax.f32 %v379, 0.0
    %v535 = vmax.f32 %v382, 0.0
    %v536 = vmax.f32 %v384, 0.0
    %v537 = vmax.f32 %v387, 0.0
    %v538 = vmax.f32 %v389, 0.0
    %v539 = vmax.f32 %v392, 0.0
    %v540 = vmax.f32 %v394, 0.0
    %v541 = vmax.f32 %v397, 0.0
    %v542 = vmax.f32 %v399, 0.0
    %v543 = vmax.f32 %v402, 0.0
    %v544 = vmax.f32 %v404, 0.0
    %v545 = vmax.f32 %v407, 0.0
    %v546 = vmax.f32 %v409, 0.0
    %v547 = vmax.f32 %v412, 0.0
    %v548 = vmax.f32 %v414, 0.0
    %v549 = vmax.f32 %v417, 0.0
    %v550 = vmax.f32 %v419, 0.0
    %v551 = vmax.f32 %v422, 0.0
    %v552 = vmax.f32 %v424, 0.0
    %v553 = vmax.f32 %v427, 0.0
    %v554 = vmax.f32 %v429, 0.0
    %v555 = vmax.f32 %v432, 0.0
    %v556 = vmax.f32 %v434, 0.0
    %v557 = vmax.f32 %v437, 0.0
    %v558 = vmax.f32 %v439, 0.0
    %v559 = vmax.f32 %v442, 0.0
    %v560 = vmax.f32 %v444, 0.0
    %v561 = vmax.f32 %v447, 0.0
    %v562 = vmax.f32 %v449, 0.0
    %v563 = vmax.f32 %v452, 0.0
    %v564 = vmax.f32 %v454, 0.0
    %v565 = vmax.f32 %v457, 0.0
    %v566 = vmax.f32 %v459, 0.0
    %v567 = vmax.f32 %v462, 0.0
    %v568 = vmax.f32 %v464, 0.0
    %v569 = vmax.f32 %v467, 0.0
    %v570 = vmax.f32 %v469, 0.0
    %v571 = vmax.f32 %v472, 0.0
    %v572 = vmax.f32 %v474, 0.0
    %v573 = vmax.f32 %v477, 0.0
    %v574 = vmax.f32 %v479, 0.0
    %v575 = vmax.f32 %v482, 0.0
    %v576 = vmax.f32 %v484, 0.0
    %v577 = vmax.f32 %v487, 0.0
    %v578 = vmax.f32 %v489, 0.0
    %v579 = vmax.f32 %v492, 0.0
    %v580 = vmax.f32 %v494, 0.0
    %v581 = vmax.f32 %v497, 0.0
    %v582 = vmax.f32 %v499, 0.0
    %v583 = vmax.f32 %v502, 0.0
    %v584 = vmax.f32 %v504, 0.0
    %v585 = vmax.f32 %v507, 0.0
    %v586 = vmax.f32 %v509, 0.0
    %v587 = vmax.f32 %v512, 0.0
    %v588 = vmax.f32 %v514, 0.0
    %v589 = vmax.f32 %v517, 0.0
    %v590 = vmax.f32 %v519, 0.0
    %v591 = vmax.f32 %v522, 0.0
    %v592 = vmax.f32 %v524, 0.0
    %v593 = vmax.f32 %v527, 0.0
    %v594 = vmax.f32 %v529, 0.0
    %v595 = vpack.c.bf16 %v531, %v531
    %v596 = vpack.c.bf16 %v532, %v532
    %v597 = vpack.c.bf16 %v533, %v533
    %v598 = vpack.c.bf16 %v534, %v534
    %v599 = vpack.c.bf16 %v535, %v535
    %v600 = vpack.c.bf16 %v536, %v536
    %v601 = vpack.c.bf16 %v537, %v537
    %v602 = vpack.c.bf16 %v538, %v538
    %v603 = vpack.c.bf16 %v539, %v539
    %v604 = vpack.c.bf16 %v540, %v540
    %v605 = vpack.c.bf16 %v541, %v541
    %v606 = vpack.c.bf16 %v542, %v542
    %v607 = vpack.c.bf16 %v543, %v543
    %v608 = vpack.c.bf16 %v544, %v544
    %v609 = vpack.c.bf16 %v545, %v545
    %v610 = vpack.c.bf16 %v546, %v546
    %v611 = vpack.c.bf16 %v547, %v547
    %v612 = vpack.c.bf16 %v548, %v548
    %v613 = vpack.c.bf16 %v549, %v549
    %v614 = vpack.c.bf16 %v550, %v550
    %v615 = vpack.c.bf16 %v551, %v551
    %v616 = vpack.c.bf16 %v552, %v552
    %v617 = vpack.c.bf16 %v553, %v553
    %v618 = vpack.c.bf16 %v554, %v554
    %v619 = vpack.c.bf16 %v555, %v555
    %v620 = vpack.c.bf16 %v556, %v556
    %v621 = vpack.c.bf16 %v557, %v557
    %v622 = vpack.c.bf16 %v558, %v558
    %v623 = vpack.c.bf16 %v559, %v559
    %v624 = vpack.c.bf16 %v560, %v560
    %v625 = vpack.c.bf16 %v561, %v561
    %v626 = vpack.c.bf16 %v562, %v562
    %v627 = vpack.c.bf16 %v563, %v563
    %v628 = vpack.c.bf16 %v564, %v564
    %v629 = vpack.c.bf16 %v565, %v565
    %v630 = vpack.c.bf16 %v566, %v566
    %v631 = vpack.c.bf16 %v567, %v567
    %v632 = vpack.c.bf16 %v568, %v568
    %v633 = vpack.c.bf16 %v569, %v569
    %v634 = vpack.c.bf16 %v570, %v570
    %v635 = vpack.c.bf16 %v571, %v571
    %v636 = vpack.c.bf16 %v572, %v572
    %v637 = vpack.c.bf16 %v573, %v573
    %v638 = vpack.c.bf16 %v574, %v574
    %v639 = vpack.c.bf16 %v575, %v575
    %v640 = vpack.c.bf16 %v576, %v576
    %v641 = vpack.c.bf16 %v577, %v577
    %v642 = vpack.c.bf16 %v578, %v578
    %v643 = vpack.c.bf16 %v579, %v579
    %v644 = vpack.c.bf16 %v580, %v580
    %v645 = vpack.c.bf16 %v581, %v581
    %v646 = vpack.c.bf16 %v582, %v582
    %v647 = vpack.c.bf16 %v583, %v583
    %v648 = vpack.c.bf16 %v584, %v584
    %v649 = vpack.c.bf16 %v585, %v585
    %v650 = vpack.c.bf16 %v586, %v586
    %v651 = vpack.c.bf16 %v587, %v587
    %v652 = vpack.c.bf16 %v588, %v588
    %v653 = vpack.c.bf16 %v589, %v589
    %v654 = vpack.c.bf16 %v590, %v590
    %v655 = vpack.c.bf16 %v591, %v591
    %v656 = vpack.c.bf16 %v592, %v592
    %v657 = vpack.c.bf16 %v593, %v593
    %v658 = vpack.c.bf16 %v594, %v594
    %vm659 = vcmask 257024
    %660 = vst.msk [vmem:[%s3] sm:$0xf] %vm659, %v595
    %661 = vst.msk [vmem:[%s3 + $0x4] sm:$0xf] %vm659, %v596
    %662 = vst.msk [vmem:[%s3 + $0x8] sm:$0xf] %vm659, %v597
    %663 = vst.msk [vmem:[%s3 + $0xc] sm:$0xf] %vm659, %v598
    %664 = vst.msk [vmem:[%s3 + $0x10] sm:$0xf] %vm659, %v599
    %665 = vst.msk [vmem:[%s3 + $0x14] sm:$0xf] %vm659, %v600
    %666 = vst.msk [vmem:[%s3 + $0x18] sm:$0xf] %vm659, %v601
    %667 = vst.msk [vmem:[%s3 + $0x1c] sm:$0xf] %vm659, %v602
    %668 = vst.msk [vmem:[%s3 + $0x20] sm:$0xf] %vm659, %v603
    %669 = vst.msk [vmem:[%s3 + $0x24] sm:$0xf] %vm659, %v604
    %670 = vst.msk [vmem:[%s3 + $0x28] sm:$0xf] %vm659, %v605
    %671 = vst.msk [vmem:[%s3 + $0x2c] sm:$0xf] %vm659, %v606
    %672 = vst.msk [vmem:[%s3 + $0x30] sm:$0xf] %vm659, %v607
    %673 = vst.msk [vmem:[%s3 + $0x34] sm:$0xf] %vm659, %v608
    %674 = vst.msk [vmem:[%s3 + $0x38] sm:$0xf] %vm659, %v609
    %675 = vst.msk [vmem:[%s3 + $0x3c] sm:$0xf] %vm659, %v610
    %676 = vst.msk [vmem:[%s3 + $0x40] sm:$0xf] %vm659, %v611
    %677 = vst.msk [vmem:[%s3 + $0x44] sm:$0xf] %vm659, %v612
    %678 = vst.msk [vmem:[%s3 + $0x48] sm:$0xf] %vm659, %v613
    %679 = vst.msk [vmem:[%s3 + $0x4c] sm:$0xf] %vm659, %v614
    %680 = vst.msk [vmem:[%s3 + $0x50] sm:$0xf] %vm659, %v615
    %681 = vst.msk [vmem:[%s3 + $0x54] sm:$0xf] %vm659, %v616
    %682 = vst.msk [vmem:[%s3 + $0x58] sm:$0xf] %vm659, %v617
    %683 = vst.msk [vmem:[%s3 + $0x5c] sm:$0xf] %vm659, %v618
    %684 = vst.msk [vmem:[%s3 + $0x60] sm:$0xf] %vm659, %v619
    %685 = vst.msk [vmem:[%s3 + $0x64] sm:$0xf] %vm659, %v620
    %686 = vst.msk [vmem:[%s3 + $0x68] sm:$0xf] %vm659, %v621
    %687 = vst.msk [vmem:[%s3 + $0x6c] sm:$0xf] %vm659, %v622
    %688 = vst.msk [vmem:[%s3 + $0x70] sm:$0xf] %vm659, %v623
    %689 = vst.msk [vmem:[%s3 + $0x74] sm:$0xf] %vm659, %v624
    %690 = vst.msk [vmem:[%s3 + $0x78] sm:$0xf] %vm659, %v625
    %691 = vst.msk [vmem:[%s3 + $0x7c] sm:$0xf] %vm659, %v626
    %692 = vst.msk [vmem:[%s3 + $0x80] sm:$0xf] %vm659, %v627
    %693 = vst.msk [vmem:[%s3 + $0x84] sm:$0xf] %vm659, %v628
    %694 = vst.msk [vmem:[%s3 + $0x88] sm:$0xf] %vm659, %v629
    %695 = vst.msk [vmem:[%s3 + $0x8c] sm:$0xf] %vm659, %v630
    %696 = vst.msk [vmem:[%s3 + $0x90] sm:$0xf] %vm659, %v631
    %697 = vst.msk [vmem:[%s3 + $0x94] sm:$0xf] %vm659, %v632
    %698 = vst.msk [vmem:[%s3 + $0x98] sm:$0xf] %vm659, %v633
    %699 = vst.msk [vmem:[%s3 + $0x9c] sm:$0xf] %vm659, %v634
    %700 = vst.msk [vmem:[%s3 + $0xa0] sm:$0xf] %vm659, %v635
    %701 = vst.msk [vmem:[%s3 + $0xa4] sm:$0xf] %vm659, %v636
    %702 = vst.msk [vmem:[%s3 + $0xa8] sm:$0xf] %vm659, %v637
    %703 = vst.msk [vmem:[%s3 + $0xac] sm:$0xf] %vm659, %v638
    %704 = vst.msk [vmem:[%s3 + $0xb0] sm:$0xf] %vm659, %v639
    %705 = vst.msk [vmem:[%s3 + $0xb4] sm:$0xf] %vm659, %v640
    %706 = vst.msk [vmem:[%s3 + $0xb8] sm:$0xf] %vm659, %v641
    %707 = vst.msk [vmem:[%s3 + $0xbc] sm:$0xf] %vm659, %v642
    %708 = vst.msk [vmem:[%s3 + $0xc0] sm:$0xf] %vm659, %v643
    %709 = vst.msk [vmem:[%s3 + $0xc4] sm:$0xf] %vm659, %v644
    %710 = vst.msk [vmem:[%s3 + $0xc8] sm:$0xf] %vm659, %v645
    %711 = vst.msk [vmem:[%s3 + $0xcc] sm:$0xf] %vm659, %v646
    %712 = vst.msk [vmem:[%s3 + $0xd0] sm:$0xf] %vm659, %v647
    %713 = vst.msk [vmem:[%s3 + $0xd4] sm:$0xf] %vm659, %v648
    %714 = vst.msk [vmem:[%s3 + $0xd8] sm:$0xf] %vm659, %v649
    %715 = vst.msk [vmem:[%s3 + $0xdc] sm:$0xf] %vm659, %v650
    %716 = vst.msk [vmem:[%s3 + $0xe0] sm:$0xf] %vm659, %v651
    %717 = vst.msk [vmem:[%s3 + $0xe4] sm:$0xf] %vm659, %v652
    %718 = vst.msk [vmem:[%s3 + $0xe8] sm:$0xf] %vm659, %v653
    %719 = vst.msk [vmem:[%s3 + $0xec] sm:$0xf] %vm659, %v654
    %720 = vst.msk [vmem:[%s3 + $0xf0] sm:$0xf] %vm659, %v655
    %721 = vst.msk [vmem:[%s3 + $0xf4] sm:$0xf] %vm659, %v656
    %722 = vst.msk [vmem:[%s3 + $0xf8] sm:$0xf] %vm659, %v657
    %723 = vst.msk [vmem:[%s3 + $0xfc] sm:$0xf] %vm659, %v658
    // Predicated region
    $region18: #{cnn_forward.12} parent=1 // pred_check
      _
    $region19: #{cnn_forward.12} parent=1 // pred_check_branch
      %725 = sbr.rel (0) target = $region21
    $region20: #{cnn_forward.12} parent=1 // pred_region
      _
    $region21: #{cnn_forward.12} parent=1 // pred_fallthru
      _
    // Predicated region
    $region22: #{cnn_forward.12} parent=1 // pred_check
      _
    $region23: #{cnn_forward.12} parent=1 // pred_check_branch
      %727 = sbr.rel (0) target = $region25
    $region24: #{cnn_forward.12} parent=1 // pred_region
      _
    $region25: #{cnn_forward.12} parent=1 // pred_fallthru
      _
    %728 = vsyncpa [#allocation3], 1

// kernel: cnn_forward.13
$region0: #{cnn_forward.13}
  #allocation0 [shape = 'u32[]', space=smem, size = 0x4, offset = 0x4, fixed_abs, tag = 'smem constant byte address 0x4 - core index']
  #allocation1 [shape = 'u32[72,128]{1,0:T(1,128)}', space=vmem, size = 0x9000, scoped, tag = 'internal scratch']
  %s0 = inlined_call_operand.vmem [shape: bf16[512,288], index: 0, kind: input, shape index: {}]
  %s1 = inlined_call_operand.vmem [shape: bf16[288,32], index: 1, kind: input, shape index: {}]
  %s2 = inlined_call_operand.vmem [shape: f32[1,32], index: 2, kind: input, shape index: {}]
  %s3 = inlined_call_operand.vmem [shape: bf16[512,32], index: 3, kind: output, shape index: {}]
  %s4 = sld [smem:[#allocation0]]
  $region22: #{cnn_forward.13} parent=0
    _
  %s6 = ssub.s32 1, %s4
  %s7 = scalar_select 0, %s6, %s4
  // Predicated region
  $region2: #{cnn_forward.13} parent=0 // pred_check
    _
  $region3: #{cnn_forward.13} parent=0 // pred_check_branch
    %9 = sbr.rel (0) target = $region5
  $region4: #{cnn_forward.13} parent=0 // pred_region
    _
  $region5: #{cnn_forward.13} parent=0 // pred_fallthru
    _
  // Predicated region
  $region6: #{cnn_forward.13} parent=0 // pred_check
    _
  $region7: #{cnn_forward.13} parent=0 // pred_check_branch
    %11 = sbr.rel (0) target = $region9
  $region8: #{cnn_forward.13} parent=0 // pred_region
    _
  $region9: #{cnn_forward.13} parent=0 // pred_fallthru
    _
  // Predicated region
  $region10: #{cnn_forward.13} parent=0 // pred_check
    _
  $region11: #{cnn_forward.13} parent=0 // pred_check_branch
    %13 = sbr.rel (0) target = $region13
  $region12: #{cnn_forward.13} parent=0 // pred_region
    _
  $region13: #{cnn_forward.13} parent=0 // pred_fallthru
    _
  %v15 = vld [vmem:[%s0] sm:$0xff]
  %v16 = vld [vmem:[%s0 + $0x8] sm:$0xf]
  %v17 = vld [vmem:[%s0 + $0xc] sm:$0xff]
  %v18 = vld [vmem:[%s0 + $0x14] sm:$0xf]
  %v19 = vld [vmem:[%s0 + $0x18] sm:$0xff]
  %v20 = vld [vmem:[%s0 + $0x20] sm:$0xf]
  %v21 = vld [vmem:[%s0 + $0x24] sm:$0xff]
  %v22 = vld [vmem:[%s0 + $0x2c] sm:$0xf]
  %v23 = vld [vmem:[%s0 + $0x30] sm:$0xff]
  %v24 = vld [vmem:[%s0 + $0x38] sm:$0xf]
  %v25 = vld [vmem:[%s0 + $0x3c] sm:$0xff]
  %v26 = vld [vmem:[%s0 + $0x44] sm:$0xf]
  %v27 = vld [vmem:[%s0 + $0x48] sm:$0xff]
  %v28 = vld [vmem:[%s0 + $0x50] sm:$0xf]
  %v29 = vld [vmem:[%s0 + $0x54] sm:$0xff]
  %v30 = vld [vmem:[%s0 + $0x5c] sm:$0xf]
  %v31 = vld [vmem:[%s0 + $0x60] sm:$0xff]
  %v32 = vld [vmem:[%s0 + $0x68] sm:$0xf]
  %v33 = vld [vmem:[%s0 + $0x6c] sm:$0xff]
  %v34 = vld [vmem:[%s0 + $0x74] sm:$0xf]
  %v35 = vld [vmem:[%s0 + $0x78] sm:$0xff]
  %v36 = vld [vmem:[%s0 + $0x80] sm:$0xf]
  %v37 = vld [vmem:[%s0 + $0x84] sm:$0xff]
  %v38 = vld [vmem:[%s0 + $0x8c] sm:$0xf]
  %v39 = vld [vmem:[%s0 + $0x90] sm:$0xff]
  %v40 = vld [vmem:[%s0 + $0x98] sm:$0xf]
  %v41 = vld [vmem:[%s0 + $0x9c] sm:$0xff]
  %v42 = vld [vmem:[%s0 + $0xa4] sm:$0xf]
  %v43 = vld [vmem:[%s0 + $0xa8] sm:$0xff]
  %v44 = vld [vmem:[%s0 + $0xb0] sm:$0xf]
  %v45 = vld [vmem:[%s0 + $0xb4] sm:$0xff]
  %v46 = vld [vmem:[%s0 + $0xbc] sm:$0xf]
  %v47 = vld [vmem:[%s0 + $0xc0] sm:$0xff]
  %v48 = vld [vmem:[%s0 + $0xc8] sm:$0xf]
  %v49 = vld [vmem:[%s0 + $0xcc] sm:$0xff]
  %v50 = vld [vmem:[%s0 + $0xd4] sm:$0xf]
  %v51 = vld [vmem:[%s0 + $0xd8] sm:$0xff]
  %v52 = vld [vmem:[%s0 + $0xe0] sm:$0xf]
  %v53 = vld [vmem:[%s0 + $0xe4] sm:$0xff]
  %v54 = vld [vmem:[%s0 + $0xec] sm:$0xf]
  %v55 = vld [vmem:[%s0 + $0xf0] sm:$0xff]
  %v56 = vld [vmem:[%s0 + $0xf8] sm:$0xf]
  %v57 = vld [vmem:[%s0 + $0xfc] sm:$0xff]
  %v58 = vld [vmem:[%s0 + $0x104] sm:$0xf]
  %v59 = vld [vmem:[%s0 + $0x108] sm:$0xff]
  %v60 = vld [vmem:[%s0 + $0x110] sm:$0xf]
  %v61 = vld [vmem:[%s0 + $0x114] sm:$0xff]
  %v62 = vld [vmem:[%s0 + $0x11c] sm:$0xf]
  %v63 = vld [vmem:[%s0 + $0x120] sm:$0xff]
  %v64 = vld [vmem:[%s0 + $0x128] sm:$0xf]
  %v65 = vld [vmem:[%s0 + $0x12c] sm:$0xff]
  %v66 = vld [vmem:[%s0 + $0x134] sm:$0xf]
  %v67 = vld [vmem:[%s0 + $0x138] sm:$0xff]
  %v68 = vld [vmem:[%s0 + $0x140] sm:$0xf]
  %v69 = vld [vmem:[%s0 + $0x144] sm:$0xff]
  %v70 = vld [vmem:[%s0 + $0x14c] sm:$0xf]
  %v71 = vld [vmem:[%s0 + $0x150] sm:$0xff]
  %v72 = vld [vmem:[%s0 + $0x158] sm:$0xf]
  %v73 = vld [vmem:[%s0 + $0x15c] sm:$0xff]
  %v74 = vld [vmem:[%s0 + $0x164] sm:$0xf]
  %v75 = vld [vmem:[%s0 + $0x168] sm:$0xff]
  %v76 = vld [vmem:[%s0 + $0x170] sm:$0xf]
  %v77 = vld [vmem:[%s0 + $0x174] sm:$0xff]
  %v78 = vld [vmem:[%s0 + $0x17c] sm:$0xf]
  %v79 = vld [vmem:[%s0 + $0x180] sm:$0xff]
  %v80 = vld [vmem:[%s0 + $0x188] sm:$0xf]
  %v81 = vld [vmem:[%s0 + $0x18c] sm:$0xff]
  %v82 = vld [vmem:[%s0 + $0x194] sm:$0xf]
  %v83 = vld [vmem:[%s0 + $0x198] sm:$0xff]
  %v84 = vld [vmem:[%s0 + $0x1a0] sm:$0xf]
  %v85 = vld [vmem:[%s0 + $0x1a4] sm:$0xff]
  %v86 = vld [vmem:[%s0 + $0x1ac] sm:$0xf]
  %v87 = vld [vmem:[%s0 + $0x1b0] sm:$0xff]
  %v88 = vld [vmem:[%s0 + $0x1b8] sm:$0xf]
  %v89 = vld [vmem:[%s0 + $0x1bc] sm:$0xff]
  %v90 = vld [vmem:[%s0 + $0x1c4] sm:$0xf]
  %v91 = vld [vmem:[%s0 + $0x1c8] sm:$0xff]
  %v92 = vld [vmem:[%s0 + $0x1d0] sm:$0xf]
  %v93 = vld [vmem:[%s0 + $0x1d4] sm:$0xff]
  %v94 = vld [vmem:[%s0 + $0x1dc] sm:$0xf]
  %v95 = vld [vmem:[%s0 + $0x1e0] sm:$0xff]
  %v96 = vld [vmem:[%s0 + $0x1e8] sm:$0xf]
  %v97 = vld [vmem:[%s0 + $0x1ec] sm:$0xff]
  %v98 = vld [vmem:[%s0 + $0x1f4] sm:$0xf]
  %v99 = vld [vmem:[%s0 + $0x1f8] sm:$0xff]
  %v100 = vld [vmem:[%s0 + $0x200] sm:$0xf]
  %v101 = vld [vmem:[%s0 + $0x204] sm:$0xff]
  %v102 = vld [vmem:[%s0 + $0x20c] sm:$0xf]
  %v103 = vld [vmem:[%s0 + $0x210] sm:$0xff]
  %v104 = vld [vmem:[%s0 + $0x218] sm:$0xf]
  %v105 = vld [vmem:[%s0 + $0x21c] sm:$0xff]
  %v106 = vld [vmem:[%s0 + $0x224] sm:$0xf]
  %v107 = vld [vmem:[%s0 + $0x228] sm:$0xff]
  %v108 = vld [vmem:[%s0 + $0x230] sm:$0xf]
  %v109 = vld [vmem:[%s0 + $0x234] sm:$0xff]
  %v110 = vld [vmem:[%s0 + $0x23c] sm:$0xf]
  %v111 = vld [vmem:[%s0 + $0x240] sm:$0xff]
  %v112 = vld [vmem:[%s0 + $0x248] sm:$0xf]
  %v113 = vld [vmem:[%s0 + $0x24c] sm:$0xff]
  %v114 = vld [vmem:[%s0 + $0x254] sm:$0xf]
  %v115 = vld [vmem:[%s0 + $0x258] sm:$0xff]
  %v116 = vld [vmem:[%s0 + $0x260] sm:$0xf]
  %v117 = vld [vmem:[%s0 + $0x264] sm:$0xff]
  %v118 = vld [vmem:[%s0 + $0x26c] sm:$0xf]
  %v119 = vld [vmem:[%s0 + $0x270] sm:$0xff]
  %v120 = vld [vmem:[%s0 + $0x278] sm:$0xf]
  %v121 = vld [vmem:[%s0 + $0x27c] sm:$0xff]
  %v122 = vld [vmem:[%s0 + $0x284] sm:$0xf]
  %v123 = vld [vmem:[%s0 + $0x288] sm:$0xff]
  %v124 = vld [vmem:[%s0 + $0x290] sm:$0xf]
  %v125 = vld [vmem:[%s0 + $0x294] sm:$0xff]
  %v126 = vld [vmem:[%s0 + $0x29c] sm:$0xf]
  %v127 = vld [vmem:[%s0 + $0x2a0] sm:$0xff]
  %v128 = vld [vmem:[%s0 + $0x2a8] sm:$0xf]
  %v129 = vld [vmem:[%s0 + $0x2ac] sm:$0xff]
  %v130 = vld [vmem:[%s0 + $0x2b4] sm:$0xf]
  %v131 = vld [vmem:[%s0 + $0x2b8] sm:$0xff]
  %v132 = vld [vmem:[%s0 + $0x2c0] sm:$0xf]
  %v133 = vld [vmem:[%s0 + $0x2c4] sm:$0xff]
  %v134 = vld [vmem:[%s0 + $0x2cc] sm:$0xf]
  %v135 = vld [vmem:[%s0 + $0x2d0] sm:$0xff]
  %v136 = vld [vmem:[%s0 + $0x2d8] sm:$0xf]
  %v137 = vld [vmem:[%s0 + $0x2dc] sm:$0xff]
  %v138 = vld [vmem:[%s0 + $0x2e4] sm:$0xf]
  %v139 = vld [vmem:[%s0 + $0x2e8] sm:$0xff]
  %v140 = vld [vmem:[%s0 + $0x2f0] sm:$0xf]
  %v141 = vld [vmem:[%s0 + $0x2f4] sm:$0xff]
  %v142 = vld [vmem:[%s0 + $0x2fc] sm:$0xf]
  %v143 = vld [vmem:[%s1] sm:$0xf]
  %v144 = vld [vmem:[%s1 + $0x4] sm:$0xf]
  %v145 = vld [vmem:[%s1 + $0x8] sm:$0xf]
  %v146 = vld [vmem:[%s1 + $0xc] sm:$0xf]
  %v147 = vld [vmem:[%s1 + $0x10] sm:$0xf]
  %v148 = vld [vmem:[%s1 + $0x14] sm:$0xf]
  %v149 = vld [vmem:[%s1 + $0x18] sm:$0xf]
  %v150 = vld [vmem:[%s1 + $0x1c] sm:$0xf]
  %v151 = vld [vmem:[%s1 + $0x20] sm:$0xf]
  %v152 = vld [vmem:[%s1 + $0x24] sm:$0xf]
  %v153 = vld [vmem:[%s1 + $0x28] sm:$0xf]
  %v154 = vld [vmem:[%s1 + $0x2c] sm:$0xf]
  %v155 = vld [vmem:[%s1 + $0x30] sm:$0xf]
  %v156 = vld [vmem:[%s1 + $0x34] sm:$0xf]
  %v157 = vld [vmem:[%s1 + $0x38] sm:$0xf]
  %v158 = vld [vmem:[%s1 + $0x3c] sm:$0xf]
  %v159 = vld [vmem:[%s1 + $0x40] sm:$0xf]
  %v160 = vld [vmem:[%s1 + $0x44] sm:$0xf]
  %v161 = vld [vmem:[%s1 + $0x48] sm:$0xf]
  %v162 = vld [vmem:[%s1 + $0x4c] sm:$0xf]
  %v163 = vld [vmem:[%s1 + $0x50] sm:$0xf]
  %v164 = vld [vmem:[%s1 + $0x54] sm:$0xf]
  %v165 = vld [vmem:[%s1 + $0x58] sm:$0xf]
  %v166 = vld [vmem:[%s1 + $0x5c] sm:$0xf]
  %v167 = vld [vmem:[%s1 + $0x60] sm:$0xf]
  %v168 = vld [vmem:[%s1 + $0x64] sm:$0xf]
  %v169 = vld [vmem:[%s1 + $0x68] sm:$0xf]
  %v170 = vld [vmem:[%s1 + $0x6c] sm:$0xf]
  %v171 = vld [vmem:[%s1 + $0x70] sm:$0xf]
  %v172 = vld [vmem:[%s1 + $0x74] sm:$0xf]
  %v173 = vld [vmem:[%s1 + $0x78] sm:$0xf]
  %v174 = vld [vmem:[%s1 + $0x7c] sm:$0xf]
  %v175 = vld [vmem:[%s1 + $0x80] sm:$0xf]
  %v176 = vld [vmem:[%s1 + $0x84] sm:$0xf]
  %v177 = vld [vmem:[%s1 + $0x88] sm:$0xf]
  %v178 = vld [vmem:[%s1 + $0x8c] sm:$0xf]
  %v179 = vld [vmem:[%s2] sm:$0x1]
  %v181 = vperm.slane %v179, 0
  %v311 = vunpack.c.l.b16 %v15
  %v312 = vunpack.c.h.b16 %v15
  %v313 = vunpack.c.l.b16 %v16
  %v314 = vunpack.c.l.b16 %v17
  %v315 = vunpack.c.h.b16 %v17
  %v316 = vunpack.c.l.b16 %v18
  %v317 = vunpack.c.l.b16 %v19
  %v318 = vunpack.c.h.b16 %v19
  %v319 = vunpack.c.l.b16 %v20
  %v320 = vunpack.c.l.b16 %v21
  %v321 = vunpack.c.h.b16 %v21
  %v322 = vunpack.c.l.b16 %v22
  %v323 = vunpack.c.l.b16 %v23
  %v324 = vunpack.c.h.b16 %v23
  %v325 = vunpack.c.l.b16 %v24
  %v326 = vunpack.c.l.b16 %v25
  %v327 = vunpack.c.h.b16 %v25
  %v328 = vunpack.c.l.b16 %v26
  %v329 = vunpack.c.l.b16 %v27
  %v330 = vunpack.c.h.b16 %v27
  %v331 = vunpack.c.l.b16 %v28
  %v332 = vunpack.c.l.b16 %v29
  %v333 = vunpack.c.h.b16 %v29
  %v334 = vunpack.c.l.b16 %v30
  %v335 = vunpack.c.l.b16 %v31
  %v336 = vunpack.c.h.b16 %v31
  %v337 = vunpack.c.l.b16 %v32
  %v338 = vunpack.c.l.b16 %v33
  %v339 = vunpack.c.h.b16 %v33
  %v340 = vunpack.c.l.b16 %v34
  %v341 = vunpack.c.l.b16 %v35
  %v342 = vunpack.c.h.b16 %v35
  %v343 = vunpack.c.l.b16 %v36
  %v344 = vunpack.c.l.b16 %v37
  %v345 = vunpack.c.h.b16 %v37
  %v346 = vunpack.c.l.b16 %v38
  %v347 = vunpack.c.l.b16 %v39
  %v348 = vunpack.c.h.b16 %v39
  %v349 = vunpack.c.l.b16 %v40
  %v350 = vunpack.c.l.b16 %v41
  %v351 = vunpack.c.h.b16 %v41
  %v352 = vunpack.c.l.b16 %v42
  %v353 = vunpack.c.l.b16 %v43
  %v354 = vunpack.c.h.b16 %v43
  %v355 = vunpack.c.l.b16 %v44
  %v356 = vunpack.c.l.b16 %v45
  %v357 = vunpack.c.h.b16 %v45
  %v358 = vunpack.c.l.b16 %v46
  %v359 = vunpack.c.l.b16 %v47
  %v360 = vunpack.c.h.b16 %v47
  %v361 = vunpack.c.l.b16 %v48
  %v362 = vunpack.c.l.b16 %v49
  %v363 = vunpack.c.h.b16 %v49
  %v364 = vunpack.c.l.b16 %v50
  %v365 = vunpack.c.l.b16 %v51
  %v366 = vunpack.c.h.b16 %v51
  %v367 = vunpack.c.l.b16 %v52
  %v368 = vunpack.c.l.b16 %v53
  %v369 = vunpack.c.h.b16 %v53
  %v370 = vunpack.c.l.b16 %v54
  %v371 = vunpack.c.l.b16 %v55
  %v372 = vunpack.c.h.b16 %v55
  %v373 = vunpack.c.l.b16 %v56
  %v374 = vunpack.c.l.b16 %v57
  %v375 = vunpack.c.h.b16 %v57
  %v376 = vunpack.c.l.b16 %v58
  %v377 = vunpack.c.l.b16 %v59
  %v378 = vunpack.c.h.b16 %v59
  %v379 = vunpack.c.l.b16 %v60
  %v380 = vunpack.c.l.b16 %v61
  %v381 = vunpack.c.h.b16 %v61
  %v382 = vunpack.c.l.b16 %v62
  %v383 = vunpack.c.l.b16 %v63
  %v384 = vunpack.c.h.b16 %v63
  %v385 = vunpack.c.l.b16 %v64
  %v386 = vunpack.c.l.b16 %v65
  %v387 = vunpack.c.h.b16 %v65
  %v388 = vunpack.c.l.b16 %v66
  %v389 = vunpack.c.l.b16 %v67
  %v390 = vunpack.c.h.b16 %v67
  %v391 = vunpack.c.l.b16 %v68
  %v392 = vunpack.c.l.b16 %v69
  %v393 = vunpack.c.h.b16 %v69
  %v394 = vunpack.c.l.b16 %v70
  %v395 = vunpack.c.l.b16 %v71
  %v396 = vunpack.c.h.b16 %v71
  %v397 = vunpack.c.l.b16 %v72
  %v398 = vunpack.c.l.b16 %v73
  %v399 = vunpack.c.h.b16 %v73
  %v400 = vunpack.c.l.b16 %v74
  %v401 = vunpack.c.l.b16 %v75
  %v402 = vunpack.c.h.b16 %v75
  %v403 = vunpack.c.l.b16 %v76
  %v404 = vunpack.c.l.b16 %v77
  %v405 = vunpack.c.h.b16 %v77
  %v406 = vunpack.c.l.b16 %v78
  %v407 = vunpack.c.l.b16 %v79
  %v408 = vunpack.c.h.b16 %v79
  %v409 = vunpack.c.l.b16 %v80
  %v410 = vunpack.c.l.b16 %v81
  %v411 = vunpack.c.h.b16 %v81
  %v412 = vunpack.c.l.b16 %v82
  %v413 = vunpack.c.l.b16 %v83
  %v414 = vunpack.c.h.b16 %v83
  %v415 = vunpack.c.l.b16 %v84
  %v416 = vunpack.c.l.b16 %v85
  %v417 = vunpack.c.h.b16 %v85
  %v418 = vunpack.c.l.b16 %v86
  %v419 = vunpack.c.l.b16 %v87
  %v420 = vunpack.c.h.b16 %v87
  %v421 = vunpack.c.l.b16 %v88
  %v422 = vunpack.c.l.b16 %v89
  %v423 = vunpack.c.h.b16 %v89
  %v424 = vunpack.c.l.b16 %v90
  %v425 = vunpack.c.l.b16 %v91
  %v426 = vunpack.c.h.b16 %v91
  %v427 = vunpack.c.l.b16 %v92
  %v428 = vunpack.c.l.b16 %v93
  %v429 = vunpack.c.h.b16 %v93
  %v430 = vunpack.c.l.b16 %v94
  %v431 = vunpack.c.l.b16 %v95
  %v432 = vunpack.c.h.b16 %v95
  %v433 = vunpack.c.l.b16 %v96
  %v434 = vunpack.c.l.b16 %v97
  %v435 = vunpack.c.h.b16 %v97
  %v436 = vunpack.c.l.b16 %v98
  %v437 = vunpack.c.l.b16 %v99
  %v438 = vunpack.c.h.b16 %v99
  %v439 = vunpack.c.l.b16 %v100
  %v440 = vunpack.c.l.b16 %v101
  %v441 = vunpack.c.h.b16 %v101
  %v442 = vunpack.c.l.b16 %v102
  %v443 = vunpack.c.l.b16 %v103
  %v444 = vunpack.c.h.b16 %v103
  %v445 = vunpack.c.l.b16 %v104
  %v446 = vunpack.c.l.b16 %v105
  %v447 = vunpack.c.h.b16 %v105
  %v448 = vunpack.c.l.b16 %v106
  %v449 = vunpack.c.l.b16 %v107
  %v450 = vunpack.c.h.b16 %v107
  %v451 = vunpack.c.l.b16 %v108
  %v452 = vunpack.c.l.b16 %v109
  %v453 = vunpack.c.h.b16 %v109
  %v454 = vunpack.c.l.b16 %v110
  %v455 = vunpack.c.l.b16 %v111
  %v456 = vunpack.c.h.b16 %v111
  %v457 = vunpack.c.l.b16 %v112
  %v458 = vunpack.c.l.b16 %v113
  %v459 = vunpack.c.h.b16 %v113
  %v460 = vunpack.c.l.b16 %v114
  %v461 = vunpack.c.l.b16 %v115
  %v462 = vunpack.c.h.b16 %v115
  %v463 = vunpack.c.l.b16 %v116
  %v464 = vunpack.c.l.b16 %v117
  %v465 = vunpack.c.h.b16 %v117
  %v466 = vunpack.c.l.b16 %v118
  %v467 = vunpack.c.l.b16 %v119
  %v468 = vunpack.c.h.b16 %v119
  %v469 = vunpack.c.l.b16 %v120
  %v470 = vunpack.c.l.b16 %v121
  %v471 = vunpack.c.h.b16 %v121
  %v472 = vunpack.c.l.b16 %v122
  %v473 = vunpack.c.l.b16 %v123
  %v474 = vunpack.c.h.b16 %v123
  %v475 = vunpack.c.l.b16 %v124
  %v476 = vunpack.c.l.b16 %v125
  %v477 = vunpack.c.h.b16 %v125
  %v478 = vunpack.c.l.b16 %v126
  %v479 = vunpack.c.l.b16 %v127
  %v480 = vunpack.c.h.b16 %v127
  %v481 = vunpack.c.l.b16 %v128
  %v482 = vunpack.c.l.b16 %v129
  %v483 = vunpack.c.h.b16 %v129
  %v484 = vunpack.c.l.b16 %v130
  %v485 = vunpack.c.l.b16 %v131
  %v486 = vunpack.c.h.b16 %v131
  %v487 = vunpack.c.l.b16 %v132
  %v488 = vunpack.c.l.b16 %v133
  %v489 = vunpack.c.h.b16 %v133
  %v490 = vunpack.c.l.b16 %v134
  %v491 = vunpack.c.l.b16 %v135
  %v492 = vunpack.c.h.b16 %v135
  %v493 = vunpack.c.l.b16 %v136
  %v494 = vunpack.c.l.b16 %v137
  %v495 = vunpack.c.h.b16 %v137
  %v496 = vunpack.c.l.b16 %v138
  %v497 = vunpack.c.l.b16 %v139
  %v498 = vunpack.c.h.b16 %v139
  %v499 = vunpack.c.l.b16 %v140
  %v500 = vunpack.c.l.b16 %v141
  %v501 = vunpack.c.h.b16 %v141
  %v502 = vunpack.c.l.b16 %v142
  %v503 = vpack.c.b16 %v314, %v311
  %v504 = vpack.c.b16 %v315, %v312
  %v505 = vpack.c.b16 %v316, %v313
  %v506 = vpack.c.b16 %v320, %v317
  %v507 = vpack.c.b16 %v321, %v318
  %v508 = vpack.c.b16 %v322, %v319
  %v509 = vpack.c.b16 %v326, %v323
  %v510 = vpack.c.b16 %v327, %v324
  %v511 = vpack.c.b16 %v328, %v325
  %v512 = vpack.c.b16 %v332, %v329
  %v513 = vpack.c.b16 %v333, %v330
  %v514 = vpack.c.b16 %v334, %v331
  %v515 = vpack.c.b16 %v338, %v335
  %v516 = vpack.c.b16 %v339, %v336
  %v517 = vpack.c.b16 %v340, %v337
  %v518 = vpack.c.b16 %v344, %v341
  %v519 = vpack.c.b16 %v345, %v342
  %v520 = vpack.c.b16 %v346, %v343
  %v521 = vpack.c.b16 %v350, %v347
  %v522 = vpack.c.b16 %v351, %v348
  %v523 = vpack.c.b16 %v352, %v349
  %v524 = vpack.c.b16 %v356, %v353
  %v525 = vpack.c.b16 %v357, %v354
  %v526 = vpack.c.b16 %v358, %v355
  %v527 = vpack.c.b16 %v362, %v359
  %v528 = vpack.c.b16 %v363, %v360
  %v529 = vpack.c.b16 %v364, %v361
  %v530 = vpack.c.b16 %v368, %v365
  %v531 = vpack.c.b16 %v369, %v366
  %v532 = vpack.c.b16 %v370, %v367
  %v533 = vpack.c.b16 %v374, %v371
  %v534 = vpack.c.b16 %v375, %v372
  %v535 = vpack.c.b16 %v376, %v373
  %v536 = vpack.c.b16 %v380, %v377
  %v537 = vpack.c.b16 %v381, %v378
  %v538 = vpack.c.b16 %v382, %v379
  %v539 = vpack.c.b16 %v386, %v383
  %v540 = vpack.c.b16 %v387, %v384
  %v541 = vpack.c.b16 %v388, %v385
  %v542 = vpack.c.b16 %v392, %v389
  %v543 = vpack.c.b16 %v393, %v390
  %v544 = vpack.c.b16 %v394, %v391
  %v545 = vpack.c.b16 %v398, %v395
  %v546 = vpack.c.b16 %v399, %v396
  %v547 = vpack.c.b16 %v400, %v397
  %v548 = vpack.c.b16 %v404, %v401
  %v549 = vpack.c.b16 %v405, %v402
  %v550 = vpack.c.b16 %v406, %v403
  %v551 = vpack.c.b16 %v410, %v407
  %v552 = vpack.c.b16 %v411, %v408
  %v553 = vpack.c.b16 %v412, %v409
  %v554 = vpack.c.b16 %v416, %v413
  %v555 = vpack.c.b16 %v417, %v414
  %v556 = vpack.c.b16 %v418, %v415
  %v557 = vpack.c.b16 %v422, %v419
  %v558 = vpack.c.b16 %v423, %v420
  %v559 = vpack.c.b16 %v424, %v421
  %v560 = vpack.c.b16 %v428, %v425
  %v561 = vpack.c.b16 %v429, %v426
  %v562 = vpack.c.b16 %v430, %v427
  %v563 = vpack.c.b16 %v434, %v431
  %v564 = vpack.c.b16 %v435, %v432
  %v565 = vpack.c.b16 %v436, %v433
  %v566 = vpack.c.b16 %v440, %v437
  %v567 = vpack.c.b16 %v441, %v438
  %v568 = vpack.c.b16 %v442, %v439
  %v569 = vpack.c.b16 %v446, %v443
  %v570 = vpack.c.b16 %v447, %v444
  %v571 = vpack.c.b16 %v448, %v445
  %v572 = vpack.c.b16 %v452, %v449
  %v573 = vpack.c.b16 %v453, %v450
  %v574 = vpack.c.b16 %v454, %v451
  %v575 = vpack.c.b16 %v458, %v455
  %v576 = vpack.c.b16 %v459, %v456
  %v577 = vpack.c.b16 %v460, %v457
  %v578 = vpack.c.b16 %v464, %v461
  %v579 = vpack.c.b16 %v465, %v462
  %v580 = vpack.c.b16 %v466, %v463
  %v581 = vpack.c.b16 %v470, %v467
  %v582 = vpack.c.b16 %v471, %v468
  %v583 = vpack.c.b16 %v472, %v469
  %v584 = vpack.c.b16 %v476, %v473
  %v585 = vpack.c.b16 %v477, %v474
  %v586 = vpack.c.b16 %v478, %v475
  %v587 = vpack.c.b16 %v482, %v479
  %v588 = vpack.c.b16 %v483, %v480
  %v589 = vpack.c.b16 %v484, %v481
  %v590 = vpack.c.b16 %v488, %v485
  %v591 = vpack.c.b16 %v489, %v486
  %v592 = vpack.c.b16 %v490, %v487
  %v593 = vpack.c.b16 %v494, %v491
  %v594 = vpack.c.b16 %v495, %v492
  %v595 = vpack.c.b16 %v496, %v493
  %v596 = vpack.c.b16 %v500, %v497
  %v597 = vpack.c.b16 %v501, %v498
  %v598 = vpack.c.b16 %v502, %v499
  %v699 = vunpack.c.l.b16 %v143
  %v700 = vunpack.c.l.b16 %v144
  %v701 = vunpack.c.l.b16 %v145
  %v702 = vunpack.c.l.b16 %v146
  %v703 = vunpack.c.l.b16 %v147
  %v704 = vunpack.c.l.b16 %v148
  %v705 = vunpack.c.l.b16 %v149
  %v706 = vunpack.c.l.b16 %v150
  %v707 = vunpack.c.l.b16 %v151
  %v708 = vunpack.c.l.b16 %v152
  %v709 = vunpack.c.l.b16 %v153
  %v710 = vunpack.c.l.b16 %v154
  %v711 = vunpack.c.l.b16 %v155
  %v712 = vunpack.c.l.b16 %v156
  %v713 = vunpack.c.l.b16 %v157
  %v714 = vunpack.c.l.b16 %v158
  %v715 = vunpack.c.l.b16 %v159
  %v716 = vunpack.c.l.b16 %v160
  %v717 = vunpack.c.l.b16 %v161
  %v718 = vunpack.c.l.b16 %v162
  %v719 = vunpack.c.l.b16 %v163
  %v720 = vunpack.c.l.b16 %v164
  %v721 = vunpack.c.l.b16 %v165
  %v722 = vunpack.c.l.b16 %v166
  %v723 = vunpack.c.l.b16 %v167
  %v724 = vunpack.c.l.b16 %v168
  %v725 = vunpack.c.l.b16 %v169
  %v726 = vunpack.c.l.b16 %v170
  %v727 = vunpack.c.l.b16 %v171
  %v728 = vunpack.c.l.b16 %v172
  %v729 = vunpack.c.l.b16 %v173
  %v730 = vunpack.c.l.b16 %v174
  %v731 = vunpack.c.l.b16 %v175
  %v732 = vunpack.c.l.b16 %v176
  %v733 = vunpack.c.l.b16 %v177
  %v734 = vunpack.c.l.b16 %v178
  %v735 = vpack.c.b16 %v700, %v699
  %v736 = vpack.c.b16 %v702, %v701
  %v737 = vpack.c.b16 %v704, %v703
  %v738 = vpack.c.b16 %v706, %v705
  %v739 = vpack.c.b16 %v708, %v707
  %v740 = vpack.c.b16 %v710, %v709
  %v741 = vpack.c.b16 %v712, %v711
  %v742 = vpack.c.b16 %v714, %v713
  %v743 = vpack.c.b16 %v716, %v715
  %v744 = vpack.c.b16 %v718, %v717
  %v745 = vpack.c.b16 %v720, %v719
  %v746 = vpack.c.b16 %v722, %v721
  %v747 = vpack.c.b16 %v724, %v723
  %v748 = vpack.c.b16 %v726, %v725
  %v749 = vpack.c.b16 %v728, %v727
  %v750 = vpack.c.b16 %v730, %v729
  %v751 = vpack.c.b16 %v732, %v731
  %v752 = vpack.c.b16 %v734, %v733
  %vm771 = vcmask 261120
  %v773 = vsel %vm771, %v505, 0
  %v776 = vsel %vm771, %v508, 0
  %v779 = vsel %vm771, %v511, 0
  %v782 = vsel %vm771, %v514, 0
  %v785 = vsel %vm771, %v517, 0
  %v788 = vsel %vm771, %v520, 0
  %v791 = vsel %vm771, %v523, 0
  %v794 = vsel %vm771, %v526, 0
  %v797 = vsel %vm771, %v529, 0
  %v800 = vsel %vm771, %v532, 0
  %v803 = vsel %vm771, %v535, 0
  %v806 = vsel %vm771, %v538, 0
  %v809 = vsel %vm771, %v541, 0
  %v812 = vsel %vm771, %v544, 0
  %v815 = vsel %vm771, %v547, 0
  %v818 = vsel %vm771, %v550, 0
  %v821 = vsel %vm771, %v553, 0
  %v824 = vsel %vm771, %v556, 0
  %v827 = vsel %vm771, %v559, 0
  %v830 = vsel %vm771, %v562, 0
  %v833 = vsel %vm771, %v565, 0
  %v836 = vsel %vm771, %v568, 0
  %v839 = vsel %vm771, %v571, 0
  %v842 = vsel %vm771, %v574, 0
  %v845 = vsel %vm771, %v577, 0
  %v848 = vsel %vm771, %v580, 0
  %v851 = vsel %vm771, %v583, 0
  %v854 = vsel %vm771, %v586, 0
  %v857 = vsel %vm771, %v589, 0
  %v860 = vsel %vm771, %v592, 0
  %v863 = vsel %vm771, %v595, 0
  %v866 = vsel %vm771, %v598, 0
  %868 = vmatpush.bf16.msra.mxu0 %v742
  %869 = vmatpush.bf16.msra.mxu0 %v741
  %870 = vmatpush.bf16.msra.mxu0 %v740
  %871 = vmatpush.bf16.msra.mxu0 %v739
  %872 = vmatpush.bf16.msra.mxu0 %v738
  %873 = vmatpush.bf16.msra.mxu0 %v737
  %874 = vmatpush.bf16.msra.mxu0 %v736
  %875 = vmatpush.bf16.msra.mxu0 %v735
  %876 = vmatmul.bf16.gmra.mxu0 %v503
  %v877 = vpop.f32.mrf.mxu0
  %v878 = vadd.f32 %v181, %v877
  %v879 = vpop.f32.mrf.mxu0
  %v880 = vadd.f32 %v181, %v879
  %881 = vmatmul.bf16.gmra.mxu0 %v506
  %v882 = vpop.f32.mrf.mxu0
  %v883 = vadd.f32 %v181, %v882
  %v884 = vpop.f32.mrf.mxu0
  %v885 = vadd.f32 %v181, %v884
  %886 = vmatmul.bf16.gmra.mxu0 %v509
  %v887 = vpop.f32.mrf.mxu0
  %v888 = vadd.f32 %v181, %v887
  %v889 = vpop.f32.mrf.mxu0
  %v890 = vadd.f32 %v181, %v889
  %891 = vmatmul.bf16.gmra.mxu0 %v512
  %v892 = vpop.f32.mrf.mxu0
  %v893 = vadd.f32 %v181, %v892
  %v894 = vpop.f32.mrf.mxu0
  %v895 = vadd.f32 %v181, %v894
  %896 = vmatmul.bf16.gmra.mxu0 %v515
  %v897 = vpop.f32.mrf.mxu0
  %v898 = vadd.f32 %v181, %v897
  %v899 = vpop.f32.mrf.mxu0
  %v900 = vadd.f32 %v181, %v899
  %901 = vmatmul.bf16.gmra.mxu0 %v518
  %v902 = vpop.f32.mrf.mxu0
  %v903 = vadd.f32 %v181, %v902
  %v904 = vpop.f32.mrf.mxu0
  %v905 = vadd.f32 %v181, %v904
  %906 = vmatmul.bf16.gmra.mxu0 %v521
  %v907 = vpop.f32.mrf.mxu0
  %v908 = vadd.f32 %v181, %v907
  %v909 = vpop.f32.mrf.mxu0
  %v910 = vadd.f32 %v181, %v909
  %911 = vmatmul.bf16.gmra.mxu0 %v524
  %v912 = vpop.f32.mrf.mxu0
  %v913 = vadd.f32 %v181, %v912
  %v914 = vpop.f32.mrf.mxu0
  %v915 = vadd.f32 %v181, %v914
  %916 = vmatmul.bf16.gmra.mxu0 %v527
  %v917 = vpop.f32.mrf.mxu0
  %v918 = vadd.f32 %v181, %v917
  %v919 = vpop.f32.mrf.mxu0
  %v920 = vadd.f32 %v181, %v919
  %921 = vmatmul.bf16.gmra.mxu0 %v530
  %v922 = vpop.f32.mrf.mxu0
  %v923 = vadd.f32 %v181, %v922
  %v924 = vpop.f32.mrf.mxu0
  %v925 = vadd.f32 %v181, %v924
  %926 = vmatmul.bf16.gmra.mxu0 %v533
  %v927 = vpop.f32.mrf.mxu0
  %v928 = vadd.f32 %v181, %v927
  %v929 = vpop.f32.mrf.mxu0
  %v930 = vadd.f32 %v181, %v929
  %931 = vmatmul.bf16.gmra.mxu0 %v536
  %v932 = vpop.f32.mrf.mxu0
  %v933 = vadd.f32 %v181, %v932
  %v934 = vpop.f32.mrf.mxu0
  %v935 = vadd.f32 %v181, %v934
  %936 = vmatmul.bf16.gmra.mxu0 %v539
  %v937 = vpop.f32.mrf.mxu0
  %v938 = vadd.f32 %v181, %v937
  %v939 = vpop.f32.mrf.mxu0
  %v940 = vadd.f32 %v181, %v939
  %941 = vmatmul.bf16.gmra.mxu0 %v542
  %v942 = vpop.f32.mrf.mxu0
  %v943 = vadd.f32 %v181, %v942
  %v944 = vpop.f32.mrf.mxu0
  %v945 = vadd.f32 %v181, %v944
  %946 = vmatmul.bf16.gmra.mxu0 %v545
  %v947 = vpop.f32.mrf.mxu0
  %v948 = vadd.f32 %v181, %v947
  %v949 = vpop.f32.mrf.mxu0
  %v950 = vadd.f32 %v181, %v949
  %951 = vmatmul.bf16.gmra.mxu0 %v548
  %v952 = vpop.f32.mrf.mxu0
  %v953 = vadd.f32 %v181, %v952
  %v954 = vpop.f32.mrf.mxu0
  %v955 = vadd.f32 %v181, %v954
  %956 = vmatmul.bf16.gmra.mxu0 %v551
  %v957 = vpop.f32.mrf.mxu0
  %v958 = vadd.f32 %v181, %v957
  %v959 = vpop.f32.mrf.mxu0
  %v960 = vadd.f32 %v181, %v959
  %961 = vmatmul.bf16.gmra.mxu0 %v554
  %v962 = vpop.f32.mrf.mxu0
  %v963 = vadd.f32 %v181, %v962
  %v964 = vpop.f32.mrf.mxu0
  %v965 = vadd.f32 %v181, %v964
  %966 = vmatmul.bf16.gmra.mxu0 %v557
  %v967 = vpop.f32.mrf.mxu0
  %v968 = vadd.f32 %v181, %v967
  %v969 = vpop.f32.mrf.mxu0
  %v970 = vadd.f32 %v181, %v969
  %971 = vmatmul.bf16.gmra.mxu0 %v560
  %v972 = vpop.f32.mrf.mxu0
  %v973 = vadd.f32 %v181, %v972
  %v974 = vpop.f32.mrf.mxu0
  %v975 = vadd.f32 %v181, %v974
  %976 = vmatmul.bf16.gmra.mxu0 %v563
  %v977 = vpop.f32.mrf.mxu0
  %v978 = vadd.f32 %v181, %v977
  %v979 = vpop.f32.mrf.mxu0
  %v980 = vadd.f32 %v181, %v979
  %981 = vmatmul.bf16.gmra.mxu0 %v566
  %v982 = vpop.f32.mrf.mxu0
  %v983 = vadd.f32 %v181, %v982
  %v984 = vpop.f32.mrf.mxu0
  %v985 = vadd.f32 %v181, %v984
  %986 = vmatmul.bf16.gmra.mxu0 %v569
  %v987 = vpop.f32.mrf.mxu0
  %v988 = vadd.f32 %v181, %v987
  %v989 = vpop.f32.mrf.mxu0
  %v990 = vadd.f32 %v181, %v989
  %991 = vmatmul.bf16.gmra.mxu0 %v572
  %v992 = vpop.f32.mrf.mxu0
  %v993 = vadd.f32 %v181, %v992
  %v994 = vpop.f32.mrf.mxu0
  %v995 = vadd.f32 %v181, %v994
  %996 = vmatmul.bf16.gmra.mxu0 %v575
  %v997 = vpop.f32.mrf.mxu0
  %v998 = vadd.f32 %v181, %v997
  %v999 = vpop.f32.mrf.mxu0
  %v1000 = vadd.f32 %v181, %v999
  %1001 = vmatmul.bf16.gmra.mxu0 %v578
  %v1002 = vpop.f32.mrf.mxu0
  %v1003 = vadd.f32 %v181, %v1002
  %v1004 = vpop.f32.mrf.mxu0
  %v1005 = vadd.f32 %v181, %v1004
  %1006 = vmatmul.bf16.gmra.mxu0 %v581
  %v1007 = vpop.f32.mrf.mxu0
  %v1008 = vadd.f32 %v181, %v1007
  %v1009 = vpop.f32.mrf.mxu0
  %v1010 = vadd.f32 %v181, %v1009
  %1011 = vmatmul.bf16.gmra.mxu0 %v584
  %v1012 = vpop.f32.mrf.mxu0
  %v1013 = vadd.f32 %v181, %v1012
  %v1014 = vpop.f32.mrf.mxu0
  %v1015 = vadd.f32 %v181, %v1014
  %1016 = vmatmul.bf16.gmra.mxu0 %v587
  %v1017 = vpop.f32.mrf.mxu0
  %v1018 = vadd.f32 %v181, %v1017
  %v1019 = vpop.f32.mrf.mxu0
  %v1020 = vadd.f32 %v181, %v1019
  %1021 = vmatmul.bf16.gmra.mxu0 %v590
  %v1022 = vpop.f32.mrf.mxu0
  %v1023 = vadd.f32 %v181, %v1022
  %v1024 = vpop.f32.mrf.mxu0
  %v1025 = vadd.f32 %v181, %v1024
  %1026 = vmatmul.bf16.gmra.mxu0 %v593
  %v1027 = vpop.f32.mrf.mxu0
  %v1028 = vadd.f32 %v181, %v1027
  %v1029 = vpop.f32.mrf.mxu0
  %v1030 = vadd.f32 %v181, %v1029
  %1031 = vmatmul.bf16.gmra.mxu0 %v596
  %v1032 = vpop.f32.mrf.mxu0
  %v1033 = vadd.f32 %v181, %v1032
  %v1034 = vpop.f32.mrf.mxu0
  %v1035 = vadd.f32 %v181, %v1034
  %1036 = vdwg.mxu0
  %1037 = vmatpush.bf16.msra.mxu0 %v750
  %1038 = vmatpush.bf16.msra.mxu0 %v749
  %1039 = vmatpush.bf16.msra.mxu0 %v748
  %1040 = vmatpush.bf16.msra.mxu0 %v747
  %1041 = vmatpush.bf16.msra.mxu0 %v746
  %1042 = vmatpush.bf16.msra.mxu0 %v745
  %1043 = vmatpush.bf16.msra.mxu0 %v744
  %1044 = vmatpush.bf16.msra.mxu0 %v743
  %1045 = vmatmul.bf16.gmra.mxu0 %v504
  %v1046 = vpop.f32.mrf.mxu0
  %v1047 = vadd.f32 %v878, %v1046
  %v1048 = vpop.f32.mrf.mxu0
  %v1049 = vadd.f32 %v880, %v1048
  %1050 = vmatmul.bf16.gmra.mxu0 %v507
  %v1051 = vpop.f32.mrf.mxu0
  %v1052 = vadd.f32 %v883, %v1051
  %v1053 = vpop.f32.mrf.mxu0
  %v1054 = vadd.f32 %v885, %v1053
  %1055 = vmatmul.bf16.gmra.mxu0 %v510
  %v1056 = vpop.f32.mrf.mxu0
  %v1057 = vadd.f32 %v888, %v1056
  %v1058 = vpop.f32.mrf.mxu0
  %v1059 = vadd.f32 %v890, %v1058
  %1060 = vmatmul.bf16.gmra.mxu0 %v513
  %v1061 = vpop.f32.mrf.mxu0
  %v1062 = vadd.f32 %v893, %v1061
  %v1063 = vpop.f32.mrf.mxu0
  %v1064 = vadd.f32 %v895, %v1063
  %1065 = vmatmul.bf16.gmra.mxu0 %v516
  %v1066 = vpop.f32.mrf.mxu0
  %v1067 = vadd.f32 %v898, %v1066
  %v1068 = vpop.f32.mrf.mxu0
  %v1069 = vadd.f32 %v900, %v1068
  %1070 = vmatmul.bf16.gmra.mxu0 %v519
  %v1071 = vpop.f32.mrf.mxu0
  %v1072 = vadd.f32 %v903, %v1071
  %v1073 = vpop.f32.mrf.mxu0
  %v1074 = vadd.f32 %v905, %v1073
  %1075 = vmatmul.bf16.gmra.mxu0 %v522
  %v1076 = vpop.f32.mrf.mxu0
  %v1077 = vadd.f32 %v908, %v1076
  %v1078 = vpop.f32.mrf.mxu0
  %v1079 = vadd.f32 %v910, %v1078
  %1080 = vmatmul.bf16.gmra.mxu0 %v525
  %v1081 = vpop.f32.mrf.mxu0
  %v1082 = vadd.f32 %v913, %v1081
  %v1083 = vpop.f32.mrf.mxu0
  %v1084 = vadd.f32 %v915, %v1083
  %1085 = vmatmul.bf16.gmra.mxu0 %v528
  %v1086 = vpop.f32.mrf.mxu0
  %v1087 = vadd.f32 %v918, %v1086
  %v1088 = vpop.f32.mrf.mxu0
  %v1089 = vadd.f32 %v920, %v1088
  %1090 = vmatmul.bf16.gmra.mxu0 %v531
  %v1091 = vpop.f32.mrf.mxu0
  %v1092 = vadd.f32 %v923, %v1091
  %v1093 = vpop.f32.mrf.mxu0
  %v1094 = vadd.f32 %v925, %v1093
  %1095 = vmatmul.bf16.gmra.mxu0 %v534
  %v1096 = vpop.f32.mrf.mxu0
  %v1097 = vadd.f32 %v928, %v1096
  %v1098 = vpop.f32.mrf.mxu0
  %v1099 = vadd.f32 %v930, %v1098
  %1100 = vmatmul.bf16.gmra.mxu0 %v537
  %v1101 = vpop.f32.mrf.mxu0
  %v1102 = vadd.f32 %v933, %v1101
  %v1103 = vpop.f32.mrf.mxu0
  %v1104 = vadd.f32 %v935, %v1103
  %1105 = vmatmul.bf16.gmra.mxu0 %v540
  %v1106 = vpop.f32.mrf.mxu0
  %v1107 = vadd.f32 %v938, %v1106
  %v1108 = vpop.f32.mrf.mxu0
  %v1109 = vadd.f32 %v940, %v1108
  %1110 = vmatmul.bf16.gmra.mxu0 %v543
  %v1111 = vpop.f32.mrf.mxu0
  %v1112 = vadd.f32 %v943, %v1111
  %v1113 = vpop.f32.mrf.mxu0
  %v1114 = vadd.f32 %v945, %v1113
  %1115 = vmatmul.bf16.gmra.mxu0 %v546
  %v1116 = vpop.f32.mrf.mxu0
  %v1117 = vadd.f32 %v948, %v1116
  %v1118 = vpop.f32.mrf.mxu0
  %v1119 = vadd.f32 %v950, %v1118
  %1120 = vmatmul.bf16.gmra.mxu0 %v549
  %v1121 = vpop.f32.mrf.mxu0
  %v1122 = vadd.f32 %v953, %v1121
  %v1123 = vpop.f32.mrf.mxu0
  %v1124 = vadd.f32 %v955, %v1123
  %1125 = vmatmul.bf16.gmra.mxu0 %v552
  %v1126 = vpop.f32.mrf.mxu0
  %v1127 = vadd.f32 %v958, %v1126
  %v1128 = vpop.f32.mrf.mxu0
  %v1129 = vadd.f32 %v960, %v1128
  %1130 = vmatmul.bf16.gmra.mxu0 %v555
  %v1131 = vpop.f32.mrf.mxu0
  %v1132 = vadd.f32 %v963, %v1131
  %v1133 = vpop.f32.mrf.mxu0
  %v1134 = vadd.f32 %v965, %v1133
  %1135 = vmatmul.bf16.gmra.mxu0 %v558
  %v1136 = vpop.f32.mrf.mxu0
  %v1137 = vadd.f32 %v968, %v1136
  %v1138 = vpop.f32.mrf.mxu0
  %v1139 = vadd.f32 %v970, %v1138
  %1140 = vmatmul.bf16.gmra.mxu0 %v561
  %v1141 = vpop.f32.mrf.mxu0
  %v1142 = vadd.f32 %v973, %v1141
  %v1143 = vpop.f32.mrf.mxu0
  %v1144 = vadd.f32 %v975, %v1143
  %1145 = vmatmul.bf16.gmra.mxu0 %v564
  %v1146 = vpop.f32.mrf.mxu0
  %v1147 = vadd.f32 %v978, %v1146
  %v1148 = vpop.f32.mrf.mxu0
  %v1149 = vadd.f32 %v980, %v1148
  %1150 = vmatmul.bf16.gmra.mxu0 %v567
  %v1151 = vpop.f32.mrf.mxu0
  %v1152 = vadd.f32 %v983, %v1151
  %v1153 = vpop.f32.mrf.mxu0
  %v1154 = vadd.f32 %v985, %v1153
  %1155 = vmatmul.bf16.gmra.mxu0 %v570
  %v1156 = vpop.f32.mrf.mxu0
  %v1157 = vadd.f32 %v988, %v1156
  %v1158 = vpop.f32.mrf.mxu0
  %v1159 = vadd.f32 %v990, %v1158
  %1160 = vmatmul.bf16.gmra.mxu0 %v573
  %v1161 = vpop.f32.mrf.mxu0
  %v1162 = vadd.f32 %v993, %v1161
  %v1163 = vpop.f32.mrf.mxu0
  %v1164 = vadd.f32 %v995, %v1163
  %1165 = vmatmul.bf16.gmra.mxu0 %v576
  %v1166 = vpop.f32.mrf.mxu0
  %v1167 = vadd.f32 %v998, %v1166
  %v1168 = vpop.f32.mrf.mxu0
  %v1169 = vadd.f32 %v1000, %v1168
  %1170 = vmatmul.bf16.gmra.mxu0 %v579
  %v1171 = vpop.f32.mrf.mxu0
  %v1172 = vadd.f32 %v1003, %v1171
  %v1173 = vpop.f32.mrf.mxu0
  %v1174 = vadd.f32 %v1005, %v1173
  %1175 = vmatmul.bf16.gmra.mxu0 %v582
  %v1176 = vpop.f32.mrf.mxu0
  %v1177 = vadd.f32 %v1008, %v1176
  %v1178 = vpop.f32.mrf.mxu0
  %v1179 = vadd.f32 %v1010, %v1178
  %1180 = vmatmul.bf16.gmra.mxu0 %v585
  %v1181 = vpop.f32.mrf.mxu0
  %v1182 = vadd.f32 %v1013, %v1181
  %v1183 = vpop.f32.mrf.mxu0
  %v1184 = vadd.f32 %v1015, %v1183
  %1185 = vmatmul.bf16.gmra.mxu0 %v588
  %v1186 = vpop.f32.mrf.mxu0
  %v1187 = vadd.f32 %v1018, %v1186
  %v1188 = vpop.f32.mrf.mxu0
  %v1189 = vadd.f32 %v1020, %v1188
  %1190 = vmatmul.bf16.gmra.mxu0 %v591
  %v1191 = vpop.f32.mrf.mxu0
  %v1192 = vadd.f32 %v1023, %v1191
  %v1193 = vpop.f32.mrf.mxu0
  %v1194 = vadd.f32 %v1025, %v1193
  %1195 = vmatmul.bf16.gmra.mxu0 %v594
  %v1196 = vpop.f32.mrf.mxu0
  %v1197 = vadd.f32 %v1028, %v1196
  %v1198 = vpop.f32.mrf.mxu0
  %v1199 = vadd.f32 %v1030, %v1198
  %1200 = vmatmul.bf16.gmra.mxu0 %v597
  %v1201 = vpop.f32.mrf.mxu0
  %v1202 = vadd.f32 %v1033, %v1201
  %v1203 = vpop.f32.mrf.mxu0
  %v1204 = vadd.f32 %v1035, %v1203
  %1205 = vdwg.mxu0
  %1206 = vmatpush.bf16.msra.mxu0 0
  %1207 = vmatpush.bf16.msra.mxu0 0
  %1208 = vmatpush.bf16.msra.mxu0 0
  %1209 = vmatpush.bf16.msra.mxu0 0
  %1210 = vmatpush.bf16.msra.mxu0 0
  %1211 = vmatpush.bf16.msra.mxu0 0
  %1212 = vmatpush.bf16.msra.mxu0 %v752
  %1213 = vmatpush.bf16.msra.mxu0 %v751
  %1214 = vmatmul.bf16.gmra.mxu0 %v773
  %v1215 = vpop.f32.mrf.mxu0
  %v1216 = vadd.f32 %v1047, %v1215
  %v1217 = vpop.f32.mrf.mxu0
  %v1218 = vadd.f32 %v1049, %v1217
  %1219 = vmatmul.bf16.gmra.mxu0 %v776
  %v1220 = vpop.f32.mrf.mxu0
  %v1221 = vadd.f32 %v1052, %v1220
  %v1222 = vpop.f32.mrf.mxu0
  %v1223 = vadd.f32 %v1054, %v1222
  %1224 = vmatmul.bf16.gmra.mxu0 %v779
  %v1225 = vpop.f32.mrf.mxu0
  %v1226 = vadd.f32 %v1057, %v1225
  %v1227 = vpop.f32.mrf.mxu0
  %v1228 = vadd.f32 %v1059, %v1227
  %1229 = vmatmul.bf16.gmra.mxu0 %v782
  %v1230 = vpop.f32.mrf.mxu0
  %v1231 = vadd.f32 %v1062, %v1230
  %v1232 = vpop.f32.mrf.mxu0
  %v1233 = vadd.f32 %v1064, %v1232
  %1234 = vmatmul.bf16.gmra.mxu0 %v785
  %v1235 = vpop.f32.mrf.mxu0
  %v1236 = vadd.f32 %v1067, %v1235
  %v1237 = vpop.f32.mrf.mxu0
  %v1238 = vadd.f32 %v1069, %v1237
  %1239 = vmatmul.bf16.gmra.mxu0 %v788
  %v1240 = vpop.f32.mrf.mxu0
  %v1241 = vadd.f32 %v1072, %v1240
  %v1242 = vpop.f32.mrf.mxu0
  %v1243 = vadd.f32 %v1074, %v1242
  %1244 = vmatmul.bf16.gmra.mxu0 %v791
  %v1245 = vpop.f32.mrf.mxu0
  %v1246 = vadd.f32 %v1077, %v1245
  %v1247 = vpop.f32.mrf.mxu0
  %v1248 = vadd.f32 %v1079, %v1247
  %1249 = vmatmul.bf16.gmra.mxu0 %v794
  %v1250 = vpop.f32.mrf.mxu0
  %v1251 = vadd.f32 %v1082, %v1250
  %v1252 = vpop.f32.mrf.mxu0
  %v1253 = vadd.f32 %v1084, %v1252
  %1254 = vmatmul.bf16.gmra.mxu0 %v797
  %v1255 = vpop.f32.mrf.mxu0
  %v1256 = vadd.f32 %v1087, %v1255
  %v1257 = vpop.f32.mrf.mxu0
  %v1258 = vadd.f32 %v1089, %v1257
  %1259 = vmatmul.bf16.gmra.mxu0 %v800
  %v1260 = vpop.f32.mrf.mxu0
  %v1261 = vadd.f32 %v1092, %v1260
  %v1262 = vpop.f32.mrf.mxu0
  %v1263 = vadd.f32 %v1094, %v1262
  %1264 = vmatmul.bf16.gmra.mxu0 %v803
  %v1265 = vpop.f32.mrf.mxu0
  %v1266 = vadd.f32 %v1097, %v1265
  %v1267 = vpop.f32.mrf.mxu0
  %v1268 = vadd.f32 %v1099, %v1267
  %1269 = vmatmul.bf16.gmra.mxu0 %v806
  %v1270 = vpop.f32.mrf.mxu0
  %v1271 = vadd.f32 %v1102, %v1270
  %v1272 = vpop.f32.mrf.mxu0
  %v1273 = vadd.f32 %v1104, %v1272
  %1274 = vmatmul.bf16.gmra.mxu0 %v809
  %v1275 = vpop.f32.mrf.mxu0
  %v1276 = vadd.f32 %v1107, %v1275
  %v1277 = vpop.f32.mrf.mxu0
  %v1278 = vadd.f32 %v1109, %v1277
  %1279 = vmatmul.bf16.gmra.mxu0 %v812
  %v1280 = vpop.f32.mrf.mxu0
  %v1281 = vadd.f32 %v1112, %v1280
  %v1282 = vpop.f32.mrf.mxu0
  %v1283 = vadd.f32 %v1114, %v1282
  %1284 = vmatmul.bf16.gmra.mxu0 %v815
  %v1285 = vpop.f32.mrf.mxu0
  %v1286 = vadd.f32 %v1117, %v1285
  %v1287 = vpop.f32.mrf.mxu0
  %v1288 = vadd.f32 %v1119, %v1287
  %1289 = vmatmul.bf16.gmra.mxu0 %v818
  %v1290 = vpop.f32.mrf.mxu0
  %v1291 = vadd.f32 %v1122, %v1290
  %v1292 = vpop.f32.mrf.mxu0
  %v1293 = vadd.f32 %v1124, %v1292
  %1294 = vmatmul.bf16.gmra.mxu0 %v821
  %v1295 = vpop.f32.mrf.mxu0
  %v1296 = vadd.f32 %v1127, %v1295
  %v1297 = vpop.f32.mrf.mxu0
  %v1298 = vadd.f32 %v1129, %v1297
  %1299 = vmatmul.bf16.gmra.mxu0 %v824
  %v1300 = vpop.f32.mrf.mxu0
  %v1301 = vadd.f32 %v1132, %v1300
  %v1302 = vpop.f32.mrf.mxu0
  %v1303 = vadd.f32 %v1134, %v1302
  %1304 = vmatmul.bf16.gmra.mxu0 %v827
  %v1305 = vpop.f32.mrf.mxu0
  %v1306 = vadd.f32 %v1137, %v1305
  %v1307 = vpop.f32.mrf.mxu0
  %v1308 = vadd.f32 %v1139, %v1307
  %1309 = vmatmul.bf16.gmra.mxu0 %v830
  %v1310 = vpop.f32.mrf.mxu0
  %v1311 = vadd.f32 %v1142, %v1310
  %v1312 = vpop.f32.mrf.mxu0
  %v1313 = vadd.f32 %v1144, %v1312
  %1314 = vmatmul.bf16.gmra.mxu0 %v833
  %v1315 = vpop.f32.mrf.mxu0
  %v1316 = vadd.f32 %v1147, %v1315
  %v1317 = vpop.f32.mrf.mxu0
  %v1318 = vadd.f32 %v1149, %v1317
  %1319 = vmatmul.bf16.gmra.mxu0 %v836
  %v1320 = vpop.f32.mrf.mxu0
  %v1321 = vadd.f32 %v1152, %v1320
  %v1322 = vpop.f32.mrf.mxu0
  %v1323 = vadd.f32 %v1154, %v1322
  %1324 = vmatmul.bf16.gmra.mxu0 %v839
  %v1325 = vpop.f32.mrf.mxu0
  %v1326 = vadd.f32 %v1157, %v1325
  %v1327 = vpop.f32.mrf.mxu0
  %v1328 = vadd.f32 %v1159, %v1327
  %1329 = vmatmul.bf16.gmra.mxu0 %v842
  %v1330 = vpop.f32.mrf.mxu0
  %v1331 = vadd.f32 %v1162, %v1330
  %v1332 = vpop.f32.mrf.mxu0
  %v1333 = vadd.f32 %v1164, %v1332
  %1334 = vmatmul.bf16.gmra.mxu0 %v845
  %v1335 = vpop.f32.mrf.mxu0
  %v1336 = vadd.f32 %v1167, %v1335
  %v1337 = vpop.f32.mrf.mxu0
  %v1338 = vadd.f32 %v1169, %v1337
  %1339 = vmatmul.bf16.gmra.mxu0 %v848
  %v1340 = vpop.f32.mrf.mxu0
  %v1341 = vadd.f32 %v1172, %v1340
  %v1342 = vpop.f32.mrf.mxu0
  %v1343 = vadd.f32 %v1174, %v1342
  %1344 = vmatmul.bf16.gmra.mxu0 %v851
  %v1345 = vpop.f32.mrf.mxu0
  %v1346 = vadd.f32 %v1177, %v1345
  %v1347 = vpop.f32.mrf.mxu0
  %v1348 = vadd.f32 %v1179, %v1347
  %1349 = vmatmul.bf16.gmra.mxu0 %v854
  %v1350 = vpop.f32.mrf.mxu0
  %v1351 = vadd.f32 %v1182, %v1350
  %v1352 = vpop.f32.mrf.mxu0
  %v1353 = vadd.f32 %v1184, %v1352
  %1354 = vmatmul.bf16.gmra.mxu0 %v857
  %v1355 = vpop.f32.mrf.mxu0
  %v1356 = vadd.f32 %v1187, %v1355
  %v1357 = vpop.f32.mrf.mxu0
  %v1358 = vadd.f32 %v1189, %v1357
  %1359 = vmatmul.bf16.gmra.mxu0 %v860
  %v1360 = vpop.f32.mrf.mxu0
  %v1361 = vadd.f32 %v1192, %v1360
  %v1362 = vpop.f32.mrf.mxu0
  %v1363 = vadd.f32 %v1194, %v1362
  %1364 = vmatmul.bf16.gmra.mxu0 %v863
  %v1365 = vpop.f32.mrf.mxu0
  %v1366 = vadd.f32 %v1197, %v1365
  %v1367 = vpop.f32.mrf.mxu0
  %v1368 = vadd.f32 %v1199, %v1367
  %1369 = vmatmul.bf16.gmra.mxu0 %v866
  %v1370 = vpop.f32.mrf.mxu0
  %v1371 = vadd.f32 %v1202, %v1370
  %v1372 = vpop.f32.mrf.mxu0
  %v1373 = vadd.f32 %v1204, %v1372
  %1374 = vdwg.mxu0
  %v1375 = vmax.f32 %v1216, 0.0
  %v1376 = vmax.f32 %v1218, 0.0
  %v1377 = vmax.f32 %v1221, 0.0
  %v1378 = vmax.f32 %v1223, 0.0
  %v1379 = vmax.f32 %v1226, 0.0
  %v1380 = vmax.f32 %v1228, 0.0
  %v1381 = vmax.f32 %v1231, 0.0
  %v1382 = vmax.f32 %v1233, 0.0
  %v1383 = vmax.f32 %v1236, 0.0
  %v1384 = vmax.f32 %v1238, 0.0
  %v1385 = vmax.f32 %v1241, 0.0
  %v1386 = vmax.f32 %v1243, 0.0
  %v1387 = vmax.f32 %v1246, 0.0
  %v1388 = vmax.f32 %v1248, 0.0
  %v1389 = vmax.f32 %v1251, 0.0
  %v1390 = vmax.f32 %v1253, 0.0
  %v1391 = vmax.f32 %v1256, 0.0
  %v1392 = vmax.f32 %v1258, 0.0
  %v1393 = vmax.f32 %v1261, 0.0
  %v1394 = vmax.f32 %v1263, 0.0
  %v1395 = vmax.f32 %v1266, 0.0
  %v1396 = vmax.f32 %v1268, 0.0
  %v1397 = vmax.f32 %v1271, 0.0
  %v1398 = vmax.f32 %v1273, 0.0
  %v1399 = vmax.f32 %v1276, 0.0
  %v1400 = vmax.f32 %v1278, 0.0
  %v1401 = vmax.f32 %v1281, 0.0
  %v1402 = vmax.f32 %v1283, 0.0
  %v1403 = vmax.f32 %v1286, 0.0
  %v1404 = vmax.f32 %v1288, 0.0
  %v1405 = vmax.f32 %v1291, 0.0
  %v1406 = vmax.f32 %v1293, 0.0
  %v1407 = vmax.f32 %v1296, 0.0
  %v1408 = vmax.f32 %v1298, 0.0
  %v1409 = vmax.f32 %v1301, 0.0
  %v1410 = vmax.f32 %v1303, 0.0
  %v1411 = vmax.f32 %v1306, 0.0
  %v1412 = vmax.f32 %v1308, 0.0
  %v1413 = vmax.f32 %v1311, 0.0
  %v1414 = vmax.f32 %v1313, 0.0
  %v1415 = vmax.f32 %v1316, 0.0
  %v1416 = vmax.f32 %v1318, 0.0
  %v1417 = vmax.f32 %v1321, 0.0
  %v1418 = vmax.f32 %v1323, 0.0
  %v1419 = vmax.f32 %v1326, 0.0
  %v1420 = vmax.f32 %v1328, 0.0
  %v1421 = vmax.f32 %v1331, 0.0
  %v1422 = vmax.f32 %v1333, 0.0
  %v1423 = vmax.f32 %v1336, 0.0
  %v1424 = vmax.f32 %v1338, 0.0
  %v1425 = vmax.f32 %v1341, 0.0
  %v1426 = vmax.f32 %v1343, 0.0
  %v1427 = vmax.f32 %v1346, 0.0
  %v1428 = vmax.f32 %v1348, 0.0
  %v1429 = vmax.f32 %v1351, 0.0
  %v1430 = vmax.f32 %v1353, 0.0
  %v1431 = vmax.f32 %v1356, 0.0
  %v1432 = vmax.f32 %v1358, 0.0
  %v1433 = vmax.f32 %v1361, 0.0
  %v1434 = vmax.f32 %v1363, 0.0
  %v1435 = vmax.f32 %v1366, 0.0
  %v1436 = vmax.f32 %v1368, 0.0
  %v1437 = vmax.f32 %v1371, 0.0
  %v1438 = vmax.f32 %v1373, 0.0
  %v1439 = vpack.c.bf16 %v1375, %v1375
  %v1440 = vpack.c.bf16 %v1376, %v1376
  %v1441 = vpack.c.bf16 %v1377, %v1377
  %v1442 = vpack.c.bf16 %v1378, %v1378
  %v1443 = vpack.c.bf16 %v1379, %v1379
  %v1444 = vpack.c.bf16 %v1380, %v1380
  %v1445 = vpack.c.bf16 %v1381, %v1381
  %v1446 = vpack.c.bf16 %v1382, %v1382
  %v1447 = vpack.c.bf16 %v1383, %v1383
  %v1448 = vpack.c.bf16 %v1384, %v1384
  %v1449 = vpack.c.bf16 %v1385, %v1385
  %v1450 = vpack.c.bf16 %v1386, %v1386
  %v1451 = vpack.c.bf16 %v1387, %v1387
  %v1452 = vpack.c.bf16 %v1388, %v1388
  %v1453 = vpack.c.bf16 %v1389, %v1389
  %v1454 = vpack.c.bf16 %v1390, %v1390
  %v1455 = vpack.c.bf16 %v1391, %v1391
  %v1456 = vpack.c.bf16 %v1392, %v1392
  %v1457 = vpack.c.bf16 %v1393, %v1393
  %v1458 = vpack.c.bf16 %v1394, %v1394
  %v1459 = vpack.c.bf16 %v1395, %v1395
  %v1460 = vpack.c.bf16 %v1396, %v1396
  %v1461 = vpack.c.bf16 %v1397, %v1397
  %v1462 = vpack.c.bf16 %v1398, %v1398
  %v1463 = vpack.c.bf16 %v1399, %v1399
  %v1464 = vpack.c.bf16 %v1400, %v1400
  %v1465 = vpack.c.bf16 %v1401, %v1401
  %v1466 = vpack.c.bf16 %v1402, %v1402
  %v1467 = vpack.c.bf16 %v1403, %v1403
  %v1468 = vpack.c.bf16 %v1404, %v1404
  %v1469 = vpack.c.bf16 %v1405, %v1405
  %v1470 = vpack.c.bf16 %v1406, %v1406
  %v1471 = vpack.c.bf16 %v1407, %v1407
  %v1472 = vpack.c.bf16 %v1408, %v1408
  %v1473 = vpack.c.bf16 %v1409, %v1409
  %v1474 = vpack.c.bf16 %v1410, %v1410
  %v1475 = vpack.c.bf16 %v1411, %v1411
  %v1476 = vpack.c.bf16 %v1412, %v1412
  %v1477 = vpack.c.bf16 %v1413, %v1413
  %v1478 = vpack.c.bf16 %v1414, %v1414
  %v1479 = vpack.c.bf16 %v1415, %v1415
  %v1480 = vpack.c.bf16 %v1416, %v1416
  %v1481 = vpack.c.bf16 %v1417, %v1417
  %v1482 = vpack.c.bf16 %v1418, %v1418
  %v1483 = vpack.c.bf16 %v1419, %v1419
  %v1484 = vpack.c.bf16 %v1420, %v1420
  %v1485 = vpack.c.bf16 %v1421, %v1421
  %v1486 = vpack.c.bf16 %v1422, %v1422
  %v1487 = vpack.c.bf16 %v1423, %v1423
  %v1488 = vpack.c.bf16 %v1424, %v1424
  %v1489 = vpack.c.bf16 %v1425, %v1425
  %v1490 = vpack.c.bf16 %v1426, %v1426
  %v1491 = vpack.c.bf16 %v1427, %v1427
  %v1492 = vpack.c.bf16 %v1428, %v1428
  %v1493 = vpack.c.bf16 %v1429, %v1429
  %v1494 = vpack.c.bf16 %v1430, %v1430
  %v1495 = vpack.c.bf16 %v1431, %v1431
  %v1496 = vpack.c.bf16 %v1432, %v1432
  %v1497 = vpack.c.bf16 %v1433, %v1433
  %v1498 = vpack.c.bf16 %v1434, %v1434
  %v1499 = vpack.c.bf16 %v1435, %v1435
  %v1500 = vpack.c.bf16 %v1436, %v1436
  %v1501 = vpack.c.bf16 %v1437, %v1437
  %v1502 = vpack.c.bf16 %v1438, %v1438
  %vm1503 = vcmask 257024
  %1504 = vst.msk [vmem:[%s3] sm:$0xf] %vm1503, %v1439
  %1505 = vst.msk [vmem:[%s3 + $0x4] sm:$0xf] %vm1503, %v1440
  %1506 = vst.msk [vmem:[%s3 + $0x8] sm:$0xf] %vm1503, %v1441
  %1507 = vst.msk [vmem:[%s3 + $0xc] sm:$0xf] %vm1503, %v1442
  %1508 = vst.msk [vmem:[%s3 + $0x10] sm:$0xf] %vm1503, %v1443
  %1509 = vst.msk [vmem:[%s3 + $0x14] sm:$0xf] %vm1503, %v1444
  %1510 = vst.msk [vmem:[%s3 + $0x18] sm:$0xf] %vm1503, %v1445
  %1511 = vst.msk [vmem:[%s3 + $0x1c] sm:$0xf] %vm1503, %v1446
  %1512 = vst.msk [vmem:[%s3 + $0x20] sm:$0xf] %vm1503, %v1447
  %1513 = vst.msk [vmem:[%s3 + $0x24] sm:$0xf] %vm1503, %v1448
  %1514 = vst.msk [vmem:[%s3 + $0x28] sm:$0xf] %vm1503, %v1449
  %1515 = vst.msk [vmem:[%s3 + $0x2c] sm:$0xf] %vm1503, %v1450
  %1516 = vst.msk [vmem:[%s3 + $0x30] sm:$0xf] %vm1503, %v1451
  %1517 = vst.msk [vmem:[%s3 + $0x34] sm:$0xf] %vm1503, %v1452
  %1518 = vst.msk [vmem:[%s3 + $0x38] sm:$0xf] %vm1503, %v1453
  %1519 = vst.msk [vmem:[%s3 + $0x3c] sm:$0xf] %vm1503, %v1454
  %1520 = vst.msk [vmem:[%s3 + $0x40] sm:$0xf] %vm1503, %v1455
  %1521 = vst.msk [vmem:[%s3 + $0x44] sm:$0xf] %vm1503, %v1456
  %1522 = vst.msk [vmem:[%s3 + $0x48] sm:$0xf] %vm1503, %v1457
  %1523 = vst.msk [vmem:[%s3 + $0x4c] sm:$0xf] %vm1503, %v1458
  %1524 = vst.msk [vmem:[%s3 + $0x50] sm:$0xf] %vm1503, %v1459
  %1525 = vst.msk [vmem:[%s3 + $0x54] sm:$0xf] %vm1503, %v1460
  %1526 = vst.msk [vmem:[%s3 + $0x58] sm:$0xf] %vm1503, %v1461
  %1527 = vst.msk [vmem:[%s3 + $0x5c] sm:$0xf] %vm1503, %v1462
  %1528 = vst.msk [vmem:[%s3 + $0x60] sm:$0xf] %vm1503, %v1463
  %1529 = vst.msk [vmem:[%s3 + $0x64] sm:$0xf] %vm1503, %v1464
  %1530 = vst.msk [vmem:[%s3 + $0x68] sm:$0xf] %vm1503, %v1465
  %1531 = vst.msk [vmem:[%s3 + $0x6c] sm:$0xf] %vm1503, %v1466
  %1532 = vst.msk [vmem:[%s3 + $0x70] sm:$0xf] %vm1503, %v1467
  %1533 = vst.msk [vmem:[%s3 + $0x74] sm:$0xf] %vm1503, %v1468
  %1534 = vst.msk [vmem:[%s3 + $0x78] sm:$0xf] %vm1503, %v1469
  %1535 = vst.msk [vmem:[%s3 + $0x7c] sm:$0xf] %vm1503, %v1470
  %1536 = vst.msk [vmem:[%s3 + $0x80] sm:$0xf] %vm1503, %v1471
  %1537 = vst.msk [vmem:[%s3 + $0x84] sm:$0xf] %vm1503, %v1472
  %1538 = vst.msk [vmem:[%s3 + $0x88] sm:$0xf] %vm1503, %v1473
  %1539 = vst.msk [vmem:[%s3 + $0x8c] sm:$0xf] %vm1503, %v1474
  %1540 = vst.msk [vmem:[%s3 + $0x90] sm:$0xf] %vm1503, %v1475
  %1541 = vst.msk [vmem:[%s3 + $0x94] sm:$0xf] %vm1503, %v1476
  %1542 = vst.msk [vmem:[%s3 + $0x98] sm:$0xf] %vm1503, %v1477
  %1543 = vst.msk [vmem:[%s3 + $0x9c] sm:$0xf] %vm1503, %v1478
  %1544 = vst.msk [vmem:[%s3 + $0xa0] sm:$0xf] %vm1503, %v1479
  %1545 = vst.msk [vmem:[%s3 + $0xa4] sm:$0xf] %vm1503, %v1480
  %1546 = vst.msk [vmem:[%s3 + $0xa8] sm:$0xf] %vm1503, %v1481
  %1547 = vst.msk [vmem:[%s3 + $0xac] sm:$0xf] %vm1503, %v1482
  %1548 = vst.msk [vmem:[%s3 + $0xb0] sm:$0xf] %vm1503, %v1483
  %1549 = vst.msk [vmem:[%s3 + $0xb4] sm:$0xf] %vm1503, %v1484
  %1550 = vst.msk [vmem:[%s3 + $0xb8] sm:$0xf] %vm1503, %v1485
  %1551 = vst.msk [vmem:[%s3 + $0xbc] sm:$0xf] %vm1503, %v1486
  %1552 = vst.msk [vmem:[%s3 + $0xc0] sm:$0xf] %vm1503, %v1487
  %1553 = vst.msk [vmem:[%s3 + $0xc4] sm:$0xf] %vm1503, %v1488
  %1554 = vst.msk [vmem:[%s3 + $0xc8] sm:$0xf] %vm1503, %v1489
  %1555 = vst.msk [vmem:[%s3 + $0xcc] sm:$0xf] %vm1503, %v1490
  %1556 = vst.msk [vmem:[%s3 + $0xd0] sm:$0xf] %vm1503, %v1491
  %1557 = vst.msk [vmem:[%s3 + $0xd4] sm:$0xf] %vm1503, %v1492
  %1558 = vst.msk [vmem:[%s3 + $0xd8] sm:$0xf] %vm1503, %v1493
  %1559 = vst.msk [vmem:[%s3 + $0xdc] sm:$0xf] %vm1503, %v1494
  %1560 = vst.msk [vmem:[%s3 + $0xe0] sm:$0xf] %vm1503, %v1495
  %1561 = vst.msk [vmem:[%s3 + $0xe4] sm:$0xf] %vm1503, %v1496
  %1562 = vst.msk [vmem:[%s3 + $0xe8] sm:$0xf] %vm1503, %v1497
  %1563 = vst.msk [vmem:[%s3 + $0xec] sm:$0xf] %vm1503, %v1498
  %1564 = vst.msk [vmem:[%s3 + $0xf0] sm:$0xf] %vm1503, %v1499
  %1565 = vst.msk [vmem:[%s3 + $0xf4] sm:$0xf] %vm1503, %v1500
  %1566 = vst.msk [vmem:[%s3 + $0xf8] sm:$0xf] %vm1503, %v1501
  %1567 = vst.msk [vmem:[%s3 + $0xfc] sm:$0xf] %vm1503, %v1502
  // Predicated region
  $region14: #{cnn_forward.13} parent=0 // pred_check
    _
  $region15: #{cnn_forward.13} parent=0 // pred_check_branch
    %1569 = sbr.rel (0) target = $region17
  $region16: #{cnn_forward.13} parent=0 // pred_region
    _
  $region17: #{cnn_forward.13} parent=0 // pred_fallthru
    _
  // Predicated region
  $region18: #{cnn_forward.13} parent=0 // pred_check
    _
  $region19: #{cnn_forward.13} parent=0 // pred_check_branch
    %1571 = sbr.rel (0) target = $region21
  $region20: #{cnn_forward.13} parent=0 // pred_region
    _
  $region21: #{cnn_forward.13} parent=0 // pred_fallthru
    _

// kernel: cnn_forward.14
$region0: #{cnn_forward.14}
  #allocation0 [shape = 'u32[]', space=smem, size = 0x4, offset = 0x4, fixed_abs, tag = 'smem constant byte address 0x4 - core index']
  #allocation1 [shape = 'u32[72,128]{1,0:T(1,128)}', space=vmem, size = 0x9000, scoped, tag = 'internal scratch']
  %s0 = inlined_call_operand.vmem [shape: bf16[2,8,2,8,2,32], index: 0, kind: input, shape index: {}]
  %s1 = inlined_call_operand.vmem [shape: bf16[2,8,8,32], index: 1, kind: output, shape index: {}]
  %s2 = sld [smem:[#allocation0]]
  $region37: #{cnn_forward.14} parent=0
    _
  %s4 = ssub.s32 1, %s2
  %s5 = scalar_select 0, %s4, %s2
  loop: start=0, step=1, limit=4
  $region2: #{cnn_forward.14} parent=0 // loop_pre_header
    _
  $region3: #{cnn_forward.14} parent=0 // loop_header
    %s7 = sphi 0, %s11
    %p8 = scmp.ge.s32.totalorder %s7, 4
    %s17 = sphi 0, %s19
    %s20 = sphi 0, %s17
    %s21 = sphi 0, %s20
    %s37 = sphi 0, %s21
    %s43 = sphi 0, %s45
    %s46 = sphi 0, %s43
    %s47 = sphi 0, %s46
    %s63 = sphi 0, %s47
  $region4: #{cnn_forward.14} parent=0 // loop_header_branch
    %10 = sbr.rel (%p8) target = $region8
  $region5: #{cnn_forward.14} parent=0 // loop_body
    %s12 = ssub.s32 %s7, 1
    %s13 = ssub.s32 %s7, 2
    %s14 = sadd.s32 %s7, 1
    %s15 = ssub.s32 %s7, %s14
    %p16 = scmp.eq.s32.totalorder %s15, 0
    %s18 = sadd.s32 %s17, 1
    %s19 = scalar_select %p16, %s17, %s18
    %p22 = pneg %p16
    %p23 = scmp.eq.s32.totalorder %s7, 1
    %p24 = por %p22, %p23
    %p25 = scmp.ne.s32.totalorder %s17, %s20
    %p26 = scmp.eq.s32.totalorder %s7, 0
    %p27 = por %p25, %p26
    %p28 = scmp.ne.s32.totalorder %s17, %s20
    %p29 = scmp.eq.s32.totalorder %s12, 1
    %p30 = por %p28, %p29
    %p31 = scmp.ne.s32.totalorder %s20, %s21
    %p32 = scmp.eq.s32.totalorder %s12, 0
    %p33 = por %p31, %p32
    %p34 = scmp.ne.s32.totalorder %s20, %s21
    %p35 = scmp.eq.s32.totalorder %s13, 1
    %p36 = por %p34, %p35
    %p38 = scmp.ne.s32.totalorder %s21, %s37
    %p39 = scmp.eq.s32.totalorder %s13, 0
    %p40 = por %p38, %p39
    %s41 = ssub.s32 %s7, %s14
    %p42 = scmp.eq.s32.totalorder %s41, 0
    %s44 = sadd.s32 %s43, 1
    %s45 = scalar_select %p42, %s43, %s44
    %p48 = pneg %p42
    %p49 = scmp.eq.s32.totalorder %s7, 1
    %p50 = por %p48, %p49
    %p51 = scmp.ne.s32.totalorder %s43, %s46
    %p52 = scmp.eq.s32.totalorder %s7, 0
    %p53 = por %p51, %p52
    %p54 = scmp.ne.s32.totalorder %s43, %s46
    %p55 = scmp.eq.s32.totalorder %s12, 1
    %p56 = por %p54, %p55
    %p57 = scmp.ne.s32.totalorder %s46, %s47
    %p58 = scmp.eq.s32.totalorder %s12, 0
    %p59 = por %p57, %p58
    %p60 = scmp.ne.s32.totalorder %s46, %s47
    %p61 = scmp.eq.s32.totalorder %s13, 1
    %p62 = por %p60, %p61
    %p64 = scmp.ne.s32.totalorder %s47, %s63
    %p65 = scmp.eq.s32.totalorder %s13, 0
    %p66 = por %p64, %p65
    %p67 = scmp.le.s32.totalorder 1, %s7
    %p68 = scmp.lt.s32.totalorder %s7, 3
    %p69 = pnand %p67, %p68
    %p70 = pneg %p69
    // Predicated region
    $region9: #{cnn_forward.14} parent=5 // pred_check
      _
    $region10: #{cnn_forward.14} parent=5 // pred_check_branch
      %72 = sbr.rel (%p69) target = $region12
    $region11: #{cnn_forward.14} parent=5 // pred_region
      %s73 = ssub.s32 %s7, 1
    $region12: #{cnn_forward.14} parent=5 // pred_fallthru
      _
    %p74 = scmp.lt.s32.totalorder %s7, 2
    // Predicated region
    $region13: #{cnn_forward.14} parent=5 // pred_check
      %p75 = pneg %p74
    $region14: #{cnn_forward.14} parent=5 // pred_check_branch
      %77 = sbr.rel (%p75) target = $region16
    $region15: #{cnn_forward.14} parent=5 // pred_region
      // Predicated region
      $region17: #{cnn_forward.14} parent=15 // pred_check
        %p78 = pneg %p27
      $region18: #{cnn_forward.14} parent=15 // pred_check_branch
        %80 = sbr.rel (%p78) target = $region20
      $region19: #{cnn_forward.14} parent=15 // pred_region
        %p81 = scmp.lt.s32.totalorder %s7, 1
        %s82 = scalar_select %p81, %s7, 1
        %s83 = smul.addr %s82, 128
        %s84 = scalar_lea.vmem %s0, %s83
      $region20: #{cnn_forward.14} parent=15 // pred_fallthru
        _
    $region16: #{cnn_forward.14} parent=5 // pred_fallthru
      _
    %p85 = scmp.le.s32.totalorder 1, %s7
    %p86 = scmp.lt.s32.totalorder %s7, 3
    %p87 = pnand %p85, %p86
    %p88 = pneg %p87
    // Predicated region
    $region21: #{cnn_forward.14} parent=5 // pred_check
      _
    $region22: #{cnn_forward.14} parent=5 // pred_check_branch
      %90 = sbr.rel (%p87) target = $region24
    $region23: #{cnn_forward.14} parent=5 // pred_region
      %s91 = ssub.s32 %s7, 1
      %p92 = scmp.lt.s32.totalorder %s12, 1
      %s93 = scalar_select %p92, %s12, 1
      %s94 = smul.addr %s93, 128
      %s95 = scalar_lea.vmem %s0, %s94
      %p96 = pneg %p33
      %p97 = pneg %p30
      %p98 = pneg %p59
      %p99 = pneg %p56
      %p100 = scmp.lt.s32.totalorder %s12, 1
      %s101 = scalar_select %p100, %s12, 1
      %s102 = smul.addr %s101, 8
      %s103 = smul.addr %s102, 4
      %s104 = scalar_lea.vmem %s1, %s103
      %p105 = scmp.lt.s32.totalorder %s12, 1
      %s106 = scalar_select %p105, %s12, 1
      %s107 = smul.addr %s106, 128
      %s108 = scalar_lea.vmem %s0, %s107
      %p109 = scmp.lt.s32.totalorder %s12, 1
      %s110 = scalar_select %p109, %s12, 1
      %s111 = smul.addr %s110, 8
      %s112 = smul.addr %s111, 4
      %s113 = scalar_lea.vmem %s1, %s112
      %v114 = vld [vmem:[%s108] sm:$0x1]
      %v115 = vld [vmem:[%s108 + $0x1] sm:$0x1]
      %v116 = vld [vmem:[%s108 + $0x2] sm:$0x1]
      %v117 = vld [vmem:[%s108 + $0x3] sm:$0x1]
      %v118 = vld [vmem:[%s108 + $0x4] sm:$0x1]
      %v119 = vld [vmem:[%s108 + $0x5] sm:$0x1]
      %v120 = vld [vmem:[%s108 + $0x6] sm:$0x1]
      %v121 = vld [vmem:[%s108 + $0x7] sm:$0x1]
      %v122 = vld [vmem:[%s108 + $0x8] sm:$0x1]
      %v123 = vld [vmem:[%s108 + $0x9] sm:$0x1]
      %v124 = vld [vmem:[%s108 + $0xa] sm:$0x1]
      %v125 = vld [vmem:[%s108 + $0xb] sm:$0x1]
      %v126 = vld [vmem:[%s108 + $0xc] sm:$0x1]
      %v127 = vld [vmem:[%s108 + $0xd] sm:$0x1]
      %v128 = vld [vmem:[%s108 + $0xe] sm:$0x1]
      %v129 = vld [vmem:[%s108 + $0xf] sm:$0x1]
      %v130 = vld [vmem:[%s108 + $0x10] sm:$0x1]
      %v131 = vld [vmem:[%s108 + $0x11] sm:$0x1]
      %v132 = vld [vmem:[%s108 + $0x12] sm:$0x1]
      %v133 = vld [vmem:[%s108 + $0x13] sm:$0x1]
      %v134 = vld [vmem:[%s108 + $0x14] sm:$0x1]
      %v135 = vld [vmem:[%s108 + $0x15] sm:$0x1]
      %v136 = vld [vmem:[%s108 + $0x16] sm:$0x1]
      %v137 = vld [vmem:[%s108 + $0x17] sm:$0x1]
      %v138 = vld [vmem:[%s108 + $0x18] sm:$0x1]
      %v139 = vld [vmem:[%s108 + $0x19] sm:$0x1]
      %v140 = vld [vmem:[%s108 + $0x1a] sm:$0x1]
      %v141 = vld [vmem:[%s108 + $0x1b] sm:$0x1]
      %v142 = vld [vmem:[%s108 + $0x1c] sm:$0x1]
      %v143 = vld [vmem:[%s108 + $0x1d] sm:$0x1]
      %v144 = vld [vmem:[%s108 + $0x1e] sm:$0x1]
      %v145 = vld [vmem:[%s108 + $0x1f] sm:$0x1]
      %v146 = vld [vmem:[%s108 + $0x20] sm:$0x1]
      %v147 = vld [vmem:[%s108 + $0x21] sm:$0x1]
      %v148 = vld [vmem:[%s108 + $0x22] sm:$0x1]
      %v149 = vld [vmem:[%s108 + $0x23] sm:$0x1]
      %v150 = vld [vmem:[%s108 + $0x24] sm:$0x1]
      %v151 = vld [vmem:[%s108 + $0x25] sm:$0x1]
      %v152 = vld [vmem:[%s108 + $0x26] sm:$0x1]
      %v153 = vld [vmem:[%s108 + $0x27] sm:$0x1]
      %v154 = vld [vmem:[%s108 + $0x28] sm:$0x1]
      %v155 = vld [vmem:[%s108 + $0x29] sm:$0x1]
      %v156 = vld [vmem:[%s108 + $0x2a] sm:$0x1]
      %v157 = vld [vmem:[%s108 + $0x2b] sm:$0x1]
      %v158 = vld [vmem:[%s108 + $0x2c] sm:$0x1]
      %v159 = vld [vmem:[%s108 + $0x2d] sm:$0x1]
      %v160 = vld [vmem:[%s108 + $0x2e] sm:$0x1]
      %v161 = vld [vmem:[%s108 + $0x2f] sm:$0x1]
      %v162 = vld [vmem:[%s108 + $0x30] sm:$0x1]
      %v163 = vld [vmem:[%s108 + $0x31] sm:$0x1]
      %v164 = vld [vmem:[%s108 + $0x32] sm:$0x1]
      %v165 = vld [vmem:[%s108 + $0x33] sm:$0x1]
      %v166 = vld [vmem:[%s108 + $0x34] sm:$0x1]
      %v167 = vld [vmem:[%s108 + $0x35] sm:$0x1]
      %v168 = vld [vmem:[%s108 + $0x36] sm:$0x1]
      %v169 = vld [vmem:[%s108 + $0x37] sm:$0x1]
      %v170 = vld [vmem:[%s108 + $0x38] sm:$0x1]
      %v171 = vld [vmem:[%s108 + $0x39] sm:$0x1]
      %v172 = vld [vmem:[%s108 + $0x3a] sm:$0x1]
      %v173 = vld [vmem:[%s108 + $0x3b] sm:$0x1]
      %v174 = vld [vmem:[%s108 + $0x3c] sm:$0x1]
      %v175 = vld [vmem:[%s108 + $0x3d] sm:$0x1]
      %v176 = vld [vmem:[%s108 + $0x3e] sm:$0x1]
      %v177 = vld [vmem:[%s108 + $0x3f] sm:$0x1]
      %v178 = vld [vmem:[%s108 + $0x40] sm:$0x1]
      %v179 = vld [vmem:[%s108 + $0x41] sm:$0x1]
      %v180 = vld [vmem:[%s108 + $0x42] sm:$0x1]
      %v181 = vld [vmem:[%s108 + $0x43] sm:$0x1]
      %v182 = vld [vmem:[%s108 + $0x44] sm:$0x1]
      %v183 = vld [vmem:[%s108 + $0x45] sm:$0x1]
      %v184 = vld [vmem:[%s108 + $0x46] sm:$0x1]
      %v185 = vld [vmem:[%s108 + $0x47] sm:$0x1]
      %v186 = vld [vmem:[%s108 + $0x48] sm:$0x1]
      %v187 = vld [vmem:[%s108 + $0x49] sm:$0x1]
      %v188 = vld [vmem:[%s108 + $0x4a] sm:$0x1]
      %v189 = vld [vmem:[%s108 + $0x4b] sm:$0x1]
      %v190 = vld [vmem:[%s108 + $0x4c] sm:$0x1]
      %v191 = vld [vmem:[%s108 + $0x4d] sm:$0x1]
      %v192 = vld [vmem:[%s108 + $0x4e] sm:$0x1]
      %v193 = vld [vmem:[%s108 + $0x4f] sm:$0x1]
      %v194 = vld [vmem:[%s108 + $0x50] sm:$0x1]
      %v195 = vld [vmem:[%s108 + $0x51] sm:$0x1]
      %v196 = vld [vmem:[%s108 + $0x52] sm:$0x1]
      %v197 = vld [vmem:[%s108 + $0x53] sm:$0x1]
      %v198 = vld [vmem:[%s108 + $0x54] sm:$0x1]
      %v199 = vld [vmem:[%s108 + $0x55] sm:$0x1]
      %v200 = vld [vmem:[%s108 + $0x56] sm:$0x1]
      %v201 = vld [vmem:[%s108 + $0x57] sm:$0x1]
      %v202 = vld [vmem:[%s108 + $0x58] sm:$0x1]
      %v203 = vld [vmem:[%s108 + $0x59] sm:$0x1]
      %v204 = vld [vmem:[%s108 + $0x5a] sm:$0x1]
      %v205 = vld [vmem:[%s108 + $0x5b] sm:$0x1]
      %v206 = vld [vmem:[%s108 + $0x5c] sm:$0x1]
      %v207 = vld [vmem:[%s108 + $0x5d] sm:$0x1]
      %v208 = vld [vmem:[%s108 + $0x5e] sm:$0x1]
      %v209 = vld [vmem:[%s108 + $0x5f] sm:$0x1]
      %v210 = vld [vmem:[%s108 + $0x60] sm:$0x1]
      %v211 = vld [vmem:[%s108 + $0x61] sm:$0x1]
      %v212 = vld [vmem:[%s108 + $0x62] sm:$0x1]
      %v213 = vld [vmem:[%s108 + $0x63] sm:$0x1]
      %v214 = vld [vmem:[%s108 + $0x64] sm:$0x1]
      %v215 = vld [vmem:[%s108 + $0x65] sm:$0x1]
      %v216 = vld [vmem:[%s108 + $0x66] sm:$0x1]
      %v217 = vld [vmem:[%s108 + $0x67] sm:$0x1]
      %v218 = vld [vmem:[%s108 + $0x68] sm:$0x1]
      %v219 = vld [vmem:[%s108 + $0x69] sm:$0x1]
      %v220 = vld [vmem:[%s108 + $0x6a] sm:$0x1]
      %v221 = vld [vmem:[%s108 + $0x6b] sm:$0x1]
      %v222 = vld [vmem:[%s108 + $0x6c] sm:$0x1]
      %v223 = vld [vmem:[%s108 + $0x6d] sm:$0x1]
      %v224 = vld [vmem:[%s108 + $0x6e] sm:$0x1]
      %v225 = vld [vmem:[%s108 + $0x6f] sm:$0x1]
      %v226 = vld [vmem:[%s108 + $0x70] sm:$0x1]
      %v227 = vld [vmem:[%s108 + $0x71] sm:$0x1]
      %v228 = vld [vmem:[%s108 + $0x72] sm:$0x1]
      %v229 = vld [vmem:[%s108 + $0x73] sm:$0x1]
      %v230 = vld [vmem:[%s108 + $0x74] sm:$0x1]
      %v231 = vld [vmem:[%s108 + $0x75] sm:$0x1]
      %v232 = vld [vmem:[%s108 + $0x76] sm:$0x1]
      %v233 = vld [vmem:[%s108 + $0x77] sm:$0x1]
      %v234 = vld [vmem:[%s108 + $0x78] sm:$0x1]
      %v235 = vld [vmem:[%s108 + $0x79] sm:$0x1]
      %v236 = vld [vmem:[%s108 + $0x7a] sm:$0x1]
      %v237 = vld [vmem:[%s108 + $0x7b] sm:$0x1]
      %v238 = vld [vmem:[%s108 + $0x7c] sm:$0x1]
      %v239 = vld [vmem:[%s108 + $0x7d] sm:$0x1]
      %v240 = vld [vmem:[%s108 + $0x7e] sm:$0x1]
      %v241 = vld [vmem:[%s108 + $0x7f] sm:$0x1]
      %v242 = vunpack.c.l.bf16 %v114
      %v243 = vunpack.c.l.bf16 %v115
      %v244 = vunpack.c.l.bf16 %v116
      %v245 = vunpack.c.l.bf16 %v117
      %v246 = vunpack.c.l.bf16 %v118
      %v247 = vunpack.c.l.bf16 %v119
      %v248 = vunpack.c.l.bf16 %v120
      %v249 = vunpack.c.l.bf16 %v121
      %v250 = vunpack.c.l.bf16 %v130
      %v251 = vunpack.c.l.bf16 %v131
      %v252 = vunpack.c.l.bf16 %v132
      %v253 = vunpack.c.l.bf16 %v133
      %v254 = vunpack.c.l.bf16 %v134
      %v255 = vunpack.c.l.bf16 %v135
      %v256 = vunpack.c.l.bf16 %v136
      %v257 = vunpack.c.l.bf16 %v137
      %v258 = vunpack.c.l.bf16 %v146
      %v259 = vunpack.c.l.bf16 %v147
      %v260 = vunpack.c.l.bf16 %v148
      %v261 = vunpack.c.l.bf16 %v149
      %v262 = vunpack.c.l.bf16 %v150
      %v263 = vunpack.c.l.bf16 %v151
      %v264 = vunpack.c.l.bf16 %v152
      %v265 = vunpack.c.l.bf16 %v153
      %v266 = vunpack.c.l.bf16 %v162
      %v267 = vunpack.c.l.bf16 %v163
      %v268 = vunpack.c.l.bf16 %v164
      %v269 = vunpack.c.l.bf16 %v165
      %v270 = vunpack.c.l.bf16 %v166
      %v271 = vunpack.c.l.bf16 %v167
      %v272 = vunpack.c.l.bf16 %v168
      %v273 = vunpack.c.l.bf16 %v169
      %v274 = vunpack.c.l.bf16 %v178
      %v275 = vunpack.c.l.bf16 %v179
      %v276 = vunpack.c.l.bf16 %v180
      %v277 = vunpack.c.l.bf16 %v181
      %v278 = vunpack.c.l.bf16 %v182
      %v279 = vunpack.c.l.bf16 %v183
      %v280 = vunpack.c.l.bf16 %v184
      %v281 = vunpack.c.l.bf16 %v185
      %v282 = vunpack.c.l.bf16 %v194
      %v283 = vunpack.c.l.bf16 %v195
      %v284 = vunpack.c.l.bf16 %v196
      %v285 = vunpack.c.l.bf16 %v197
      %v286 = vunpack.c.l.bf16 %v198
      %v287 = vunpack.c.l.bf16 %v199
      %v288 = vunpack.c.l.bf16 %v200
      %v289 = vunpack.c.l.bf16 %v201
      %v290 = vunpack.c.l.bf16 %v210
      %v291 = vunpack.c.l.bf16 %v211
      %v292 = vunpack.c.l.bf16 %v212
      %v293 = vunpack.c.l.bf16 %v213
      %v294 = vunpack.c.l.bf16 %v214
      %v295 = vunpack.c.l.bf16 %v215
      %v296 = vunpack.c.l.bf16 %v216
      %v297 = vunpack.c.l.bf16 %v217
      %v298 = vunpack.c.l.bf16 %v226
      %v299 = vunpack.c.l.bf16 %v227
      %v300 = vunpack.c.l.bf16 %v228
      %v301 = vunpack.c.l.bf16 %v229
      %v302 = vunpack.c.l.bf16 %v230
      %v303 = vunpack.c.l.bf16 %v231
      %v304 = vunpack.c.l.bf16 %v232
      %v305 = vunpack.c.l.bf16 %v233
      %v306 = vunpack.c.l.bf16 %v122
      %v307 = vunpack.c.l.bf16 %v123
      %v308 = vunpack.c.l.bf16 %v124
      %v309 = vunpack.c.l.bf16 %v125
      %v310 = vunpack.c.l.bf16 %v126
      %v311 = vunpack.c.l.bf16 %v127
      %v312 = vunpack.c.l.bf16 %v128
      %v313 = vunpack.c.l.bf16 %v129
      %v314 = vunpack.c.l.bf16 %v138
      %v315 = vunpack.c.l.bf16 %v139
      %v316 = vunpack.c.l.bf16 %v140
      %v317 = vunpack.c.l.bf16 %v141
      %v318 = vunpack.c.l.bf16 %v142
      %v319 = vunpack.c.l.bf16 %v143
      %v320 = vunpack.c.l.bf16 %v144
      %v321 = vunpack.c.l.bf16 %v145
      %v322 = vunpack.c.l.bf16 %v154
      %v323 = vunpack.c.l.bf16 %v155
      %v324 = vunpack.c.l.bf16 %v156
      %v325 = vunpack.c.l.bf16 %v157
      %v326 = vunpack.c.l.bf16 %v158
      %v327 = vunpack.c.l.bf16 %v159
      %v328 = vunpack.c.l.bf16 %v160
      %v329 = vunpack.c.l.bf16 %v161
      %v330 = vunpack.c.l.bf16 %v170
      %v331 = vunpack.c.l.bf16 %v171
      %v332 = vunpack.c.l.bf16 %v172
      %v333 = vunpack.c.l.bf16 %v173
      %v334 = vunpack.c.l.bf16 %v174
      %v335 = vunpack.c.l.bf16 %v175
      %v336 = vunpack.c.l.bf16 %v176
      %v337 = vunpack.c.l.bf16 %v177
      %v338 = vunpack.c.l.bf16 %v186
      %v339 = vunpack.c.l.bf16 %v187
      %v340 = vunpack.c.l.bf16 %v188
      %v341 = vunpack.c.l.bf16 %v189
      %v342 = vunpack.c.l.bf16 %v190
      %v343 = vunpack.c.l.bf16 %v191
      %v344 = vunpack.c.l.bf16 %v192
      %v345 = vunpack.c.l.bf16 %v193
      %v346 = vunpack.c.l.bf16 %v202
      %v347 = vunpack.c.l.bf16 %v203
      %v348 = vunpack.c.l.bf16 %v204
      %v349 = vunpack.c.l.bf16 %v205
      %v350 = vunpack.c.l.bf16 %v206
      %v351 = vunpack.c.l.bf16 %v207
      %v352 = vunpack.c.l.bf16 %v208
      %v353 = vunpack.c.l.bf16 %v209
      %v354 = vunpack.c.l.bf16 %v218
      %v355 = vunpack.c.l.bf16 %v219
      %v356 = vunpack.c.l.bf16 %v220
      %v357 = vunpack.c.l.bf16 %v221
      %v358 = vunpack.c.l.bf16 %v222
      %v359 = vunpack.c.l.bf16 %v223
      %v360 = vunpack.c.l.bf16 %v224
      %v361 = vunpack.c.l.bf16 %v225
      %v362 = vunpack.c.l.bf16 %v234
      %v363 = vunpack.c.l.bf16 %v235
      %v364 = vunpack.c.l.bf16 %v236
      %v365 = vunpack.c.l.bf16 %v237
      %v366 = vunpack.c.l.bf16 %v238
      %v367 = vunpack.c.l.bf16 %v239
      %v368 = vunpack.c.l.bf16 %v240
      %v369 = vunpack.c.l.bf16 %v241
      %v370 = vmax.f32 %v242, %v306
      %v371 = vmax.f32 %v243, %v307
      %v372 = vmax.f32 %v244, %v308
      %v373 = vmax.f32 %v245, %v309
      %v374 = vmax.f32 %v246, %v310
      %v375 = vmax.f32 %v247, %v311
      %v376 = vmax.f32 %v248, %v312
      %v377 = vmax.f32 %v249, %v313
      %v378 = vmax.f32 %v250, %v314
      %v379 = vmax.f32 %v251, %v315
      %v380 = vmax.f32 %v252, %v316
      %v381 = vmax.f32 %v253, %v317
      %v382 = vmax.f32 %v254, %v318
      %v383 = vmax.f32 %v255, %v319
      %v384 = vmax.f32 %v256, %v320
      %v385 = vmax.f32 %v257, %v321
      %v386 = vmax.f32 %v258, %v322
      %v387 = vmax.f32 %v259, %v323
      %v388 = vmax.f32 %v260, %v324
      %v389 = vmax.f32 %v261, %v325
      %v390 = vmax.f32 %v262, %v326
      %v391 = vmax.f32 %v263, %v327
      %v392 = vmax.f32 %v264, %v328
      %v393 = vmax.f32 %v265, %v329
      %v394 = vmax.f32 %v266, %v330
      %v395 = vmax.f32 %v267, %v331
      %v396 = vmax.f32 %v268, %v332
      %v397 = vmax.f32 %v269, %v333
      %v398 = vmax.f32 %v270, %v334
      %v399 = vmax.f32 %v271, %v335
      %v400 = vmax.f32 %v272, %v336
      %v401 = vmax.f32 %v273, %v337
      %v402 = vmax.f32 %v274, %v338
      %v403 = vmax.f32 %v275, %v339
      %v404 = vmax.f32 %v276, %v340
      %v405 = vmax.f32 %v277, %v341
      %v406 = vmax.f32 %v278, %v342
      %v407 = vmax.f32 %v279, %v343
      %v408 = vmax.f32 %v280, %v344
      %v409 = vmax.f32 %v281, %v345
      %v410 = vmax.f32 %v282, %v346
      %v411 = vmax.f32 %v283, %v347
      %v412 = vmax.f32 %v284, %v348
      %v413 = vmax.f32 %v285, %v349
      %v414 = vmax.f32 %v286, %v350
      %v415 = vmax.f32 %v287, %v351
      %v416 = vmax.f32 %v288, %v352
      %v417 = vmax.f32 %v289, %v353
      %v418 = vmax.f32 %v290, %v354
      %v419 = vmax.f32 %v291, %v355
      %v420 = vmax.f32 %v292, %v356
      %v421 = vmax.f32 %v293, %v357
      %v422 = vmax.f32 %v294, %v358
      %v423 = vmax.f32 %v295, %v359
      %v424 = vmax.f32 %v296, %v360
      %v425 = vmax.f32 %v297, %v361
      %v426 = vmax.f32 %v298, %v362
      %v427 = vmax.f32 %v299, %v363
      %v428 = vmax.f32 %v300, %v364
      %v429 = vmax.f32 %v301, %v365
      %v430 = vmax.f32 %v302, %v366
      %v431 = vmax.f32 %v303, %v367
      %v432 = vmax.f32 %v304, %v368
      %v433 = vmax.f32 %v305, %v369
      %v434 = vpack.c.bf16 %v370, %v370
      %v435 = vpack.c.bf16 %v371, %v371
      %v436 = vpack.c.bf16 %v372, %v372
      %v437 = vpack.c.bf16 %v373, %v373
      %v438 = vpack.c.bf16 %v374, %v374
      %v439 = vpack.c.bf16 %v375, %v375
      %v440 = vpack.c.bf16 %v376, %v376
      %v441 = vpack.c.bf16 %v377, %v377
      %v442 = vpack.c.bf16 %v378, %v378
      %v443 = vpack.c.bf16 %v379, %v379
      %v444 = vpack.c.bf16 %v380, %v380
      %v445 = vpack.c.bf16 %v381, %v381
      %v446 = vpack.c.bf16 %v382, %v382
      %v447 = vpack.c.bf16 %v383, %v383
      %v448 = vpack.c.bf16 %v384, %v384
      %v449 = vpack.c.bf16 %v385, %v385
      %v450 = vpack.c.bf16 %v386, %v386
      %v451 = vpack.c.bf16 %v387, %v387
      %v452 = vpack.c.bf16 %v388, %v388
      %v453 = vpack.c.bf16 %v389, %v389
      %v454 = vpack.c.bf16 %v390, %v390
      %v455 = vpack.c.bf16 %v391, %v391
      %v456 = vpack.c.bf16 %v392, %v392
      %v457 = vpack.c.bf16 %v393, %v393
      %v458 = vpack.c.bf16 %v394, %v394
      %v459 = vpack.c.bf16 %v395, %v395
      %v460 = vpack.c.bf16 %v396, %v396
      %v461 = vpack.c.bf16 %v397, %v397
      %v462 = vpack.c.bf16 %v398, %v398
      %v463 = vpack.c.bf16 %v399, %v399
      %v464 = vpack.c.bf16 %v400, %v400
      %v465 = vpack.c.bf16 %v401, %v401
      %v466 = vpack.c.bf16 %v402, %v402
      %v467 = vpack.c.bf16 %v403, %v403
      %v468 = vpack.c.bf16 %v404, %v404
      %v469 = vpack.c.bf16 %v405, %v405
      %v470 = vpack.c.bf16 %v406, %v406
      %v471 = vpack.c.bf16 %v407, %v407
      %v472 = vpack.c.bf16 %v408, %v408
      %v473 = vpack.c.bf16 %v409, %v409
      %v474 = vpack.c.bf16 %v410, %v410
      %v475 = vpack.c.bf16 %v411, %v411
      %v476 = vpack.c.bf16 %v412, %v412
      %v477 = vpack.c.bf16 %v413, %v413
      %v478 = vpack.c.bf16 %v414, %v414
      %v479 = vpack.c.bf16 %v415, %v415
      %v480 = vpack.c.bf16 %v416, %v416
      %v481 = vpack.c.bf16 %v417, %v417
      %v482 = vpack.c.bf16 %v418, %v418
      %v483 = vpack.c.bf16 %v419, %v419
      %v484 = vpack.c.bf16 %v420, %v420
      %v485 = vpack.c.bf16 %v421, %v421
      %v486 = vpack.c.bf16 %v422, %v422
      %v487 = vpack.c.bf16 %v423, %v423
      %v488 = vpack.c.bf16 %v424, %v424
      %v489 = vpack.c.bf16 %v425, %v425
      %v490 = vpack.c.bf16 %v426, %v426
      %v491 = vpack.c.bf16 %v427, %v427
      %v492 = vpack.c.bf16 %v428, %v428
      %v493 = vpack.c.bf16 %v429, %v429
      %v494 = vpack.c.bf16 %v430, %v430
      %v495 = vpack.c.bf16 %v431, %v431
      %v496 = vpack.c.bf16 %v432, %v432
      %v497 = vpack.c.bf16 %v433, %v433
      %v498 = vunpack.c.l.bf16 %v434
      %v499 = vunpack.c.l.bf16 %v435
      %v500 = vunpack.c.l.bf16 %v436
      %v501 = vunpack.c.l.bf16 %v437
      %v502 = vunpack.c.l.bf16 %v438
      %v503 = vunpack.c.l.bf16 %v439
      %v504 = vunpack.c.l.bf16 %v440
      %v505 = vunpack.c.l.bf16 %v441
      %v506 = vunpack.c.l.bf16 %v442
      %v507 = vunpack.c.l.bf16 %v443
      %v508 = vunpack.c.l.bf16 %v444
      %v509 = vunpack.c.l.bf16 %v445
      %v510 = vunpack.c.l.bf16 %v446
      %v511 = vunpack.c.l.bf16 %v447
      %v512 = vunpack.c.l.bf16 %v448
      %v513 = vunpack.c.l.bf16 %v449
      %v514 = vunpack.c.l.bf16 %v450
      %v515 = vunpack.c.l.bf16 %v451
      %v516 = vunpack.c.l.bf16 %v452
      %v517 = vunpack.c.l.bf16 %v453
      %v518 = vunpack.c.l.bf16 %v454
      %v519 = vunpack.c.l.bf16 %v455
      %v520 = vunpack.c.l.bf16 %v456
      %v521 = vunpack.c.l.bf16 %v457
      %v522 = vunpack.c.l.bf16 %v458
      %v523 = vunpack.c.l.bf16 %v459
      %v524 = vunpack.c.l.bf16 %v460
      %v525 = vunpack.c.l.bf16 %v461
      %v526 = vunpack.c.l.bf16 %v462
      %v527 = vunpack.c.l.bf16 %v463
      %v528 = vunpack.c.l.bf16 %v464
      %v529 = vunpack.c.l.bf16 %v465
      %v530 = vunpack.c.l.bf16 %v466
      %v531 = vunpack.c.l.bf16 %v467
      %v532 = vunpack.c.l.bf16 %v468
      %v533 = vunpack.c.l.bf16 %v469
      %v534 = vunpack.c.l.bf16 %v470
      %v535 = vunpack.c.l.bf16 %v471
      %v536 = vunpack.c.l.bf16 %v472
      %v537 = vunpack.c.l.bf16 %v473
      %v538 = vunpack.c.l.bf16 %v474
      %v539 = vunpack.c.l.bf16 %v475
      %v540 = vunpack.c.l.bf16 %v476
      %v541 = vunpack.c.l.bf16 %v477
      %v542 = vunpack.c.l.bf16 %v478
      %v543 = vunpack.c.l.bf16 %v479
      %v544 = vunpack.c.l.bf16 %v480
      %v545 = vunpack.c.l.bf16 %v481
      %v546 = vunpack.c.l.bf16 %v482
      %v547 = vunpack.c.l.bf16 %v483
      %v548 = vunpack.c.l.bf16 %v484
      %v549 = vunpack.c.l.bf16 %v485
      %v550 = vunpack.c.l.bf16 %v486
      %v551 = vunpack.c.l.bf16 %v487
      %v552 = vunpack.c.l.bf16 %v488
      %v553 = vunpack.c.l.bf16 %v489
      %v554 = vunpack.c.l.bf16 %v490
      %v555 = vunpack.c.l.bf16 %v491
      %v556 = vunpack.c.l.bf16 %v492
      %v557 = vunpack.c.l.bf16 %v493
      %v558 = vunpack.c.l.bf16 %v494
      %v559 = vunpack.c.l.bf16 %v495
      %v560 = vunpack.c.l.bf16 %v496
      %v561 = vunpack.c.l.bf16 %v497
      %v626 = vrot.slane %v498, 1
      %v627 = vrot.slane %v499, 1
      %v628 = vrot.slane %v500, 1
      %v629 = vrot.slane %v501, 1
      %v630 = vrot.slane %v502, 1
      %v631 = vrot.slane %v503, 1
      %v632 = vrot.slane %v504, 1
      %v633 = vrot.slane %v505, 1
      %v634 = vrot.slane %v506, 1
      %v635 = vrot.slane %v507, 1
      %v636 = vrot.slane %v508, 1
      %v637 = vrot.slane %v509, 1
      %v638 = vrot.slane %v510, 1
      %v639 = vrot.slane %v511, 1
      %v640 = vrot.slane %v512, 1
      %v641 = vrot.slane %v513, 1
      %v642 = vrot.slane %v514, 1
      %v643 = vrot.slane %v515, 1
      %v644 = vrot.slane %v516, 1
      %v645 = vrot.slane %v517, 1
      %v646 = vrot.slane %v518, 1
      %v647 = vrot.slane %v519, 1
      %v648 = vrot.slane %v520, 1
      %v649 = vrot.slane %v521, 1
      %v650 = vrot.slane %v522, 1
      %v651 = vrot.slane %v523, 1
      %v652 = vrot.slane %v524, 1
      %v653 = vrot.slane %v525, 1
      %v654 = vrot.slane %v526, 1
      %v655 = vrot.slane %v527, 1
      %v656 = vrot.slane %v528, 1
      %v657 = vrot.slane %v529, 1
      %v658 = vrot.slane %v530, 1
      %v659 = vrot.slane %v531, 1
      %v660 = vrot.slane %v532, 1
      %v661 = vrot.slane %v533, 1
      %v662 = vrot.slane %v534, 1
      %v663 = vrot.slane %v535, 1
      %v664 = vrot.slane %v536, 1
      %v665 = vrot.slane %v537, 1
      %v666 = vrot.slane %v538, 1
      %v667 = vrot.slane %v539, 1
      %v668 = vrot.slane %v540, 1
      %v669 = vrot.slane %v541, 1
      %v670 = vrot.slane %v542, 1
      %v671 = vrot.slane %v543, 1
      %v672 = vrot.slane %v544, 1
      %v673 = vrot.slane %v545, 1
      %v674 = vrot.slane %v546, 1
      %v675 = vrot.slane %v547, 1
      %v676 = vrot.slane %v548, 1
      %v677 = vrot.slane %v549, 1
      %v678 = vrot.slane %v550, 1
      %v679 = vrot.slane %v551, 1
      %v680 = vrot.slane %v552, 1
      %v681 = vrot.slane %v553, 1
      %v682 = vrot.slane %v554, 1
      %v683 = vrot.slane %v555, 1
      %v684 = vrot.slane %v556, 1
      %v685 = vrot.slane %v557, 1
      %v686 = vrot.slane %v558, 1
      %v687 = vrot.slane %v559, 1
      %v688 = vrot.slane %v560, 1
      %v689 = vrot.slane %v561, 1
      %v754 = vmax.f32 %v498, %v626
      %v755 = vmax.f32 %v499, %v627
      %v756 = vmax.f32 %v500, %v628
      %v757 = vmax.f32 %v501, %v629
      %v758 = vmax.f32 %v502, %v630
      %v759 = vmax.f32 %v503, %v631
      %v760 = vmax.f32 %v504, %v632
      %v761 = vmax.f32 %v505, %v633
      %v762 = vmax.f32 %v506, %v634
      %v763 = vmax.f32 %v507, %v635
      %v764 = vmax.f32 %v508, %v636
      %v765 = vmax.f32 %v509, %v637
      %v766 = vmax.f32 %v510, %v638
      %v767 = vmax.f32 %v511, %v639
      %v768 = vmax.f32 %v512, %v640
      %v769 = vmax.f32 %v513, %v641
      %v770 = vmax.f32 %v514, %v642
      %v771 = vmax.f32 %v515, %v643
      %v772 = vmax.f32 %v516, %v644
      %v773 = vmax.f32 %v517, %v645
      %v774 = vmax.f32 %v518, %v646
      %v775 = vmax.f32 %v519, %v647
      %v776 = vmax.f32 %v520, %v648
      %v777 = vmax.f32 %v521, %v649
      %v778 = vmax.f32 %v522, %v650
      %v779 = vmax.f32 %v523, %v651
      %v780 = vmax.f32 %v524, %v652
      %v781 = vmax.f32 %v525, %v653
      %v782 = vmax.f32 %v526, %v654
      %v783 = vmax.f32 %v527, %v655
      %v784 = vmax.f32 %v528, %v656
      %v785 = vmax.f32 %v529, %v657
      %v786 = vmax.f32 %v530, %v658
      %v787 = vmax.f32 %v531, %v659
      %v788 = vmax.f32 %v532, %v660
      %v789 = vmax.f32 %v533, %v661
      %v790 = vmax.f32 %v534, %v662
      %v791 = vmax.f32 %v535, %v663
      %v792 = vmax.f32 %v536, %v664
      %v793 = vmax.f32 %v537, %v665
      %v794 = vmax.f32 %v538, %v666
      %v795 = vmax.f32 %v539, %v667
      %v796 = vmax.f32 %v540, %v668
      %v797 = vmax.f32 %v541, %v669
      %v798 = vmax.f32 %v542, %v670
      %v799 = vmax.f32 %v543, %v671
      %v800 = vmax.f32 %v544, %v672
      %v801 = vmax.f32 %v545, %v673
      %v802 = vmax.f32 %v546, %v674
      %v803 = vmax.f32 %v547, %v675
      %v804 = vmax.f32 %v548, %v676
      %v805 = vmax.f32 %v549, %v677
      %v806 = vmax.f32 %v550, %v678
      %v807 = vmax.f32 %v551, %v679
      %v808 = vmax.f32 %v552, %v680
      %v809 = vmax.f32 %v553, %v681
      %v810 = vmax.f32 %v554, %v682
      %v811 = vmax.f32 %v555, %v683
      %v812 = vmax.f32 %v556, %v684
      %v813 = vmax.f32 %v557, %v685
      %v814 = vmax.f32 %v558, %v686
      %v815 = vmax.f32 %v559, %v687
      %v816 = vmax.f32 %v560, %v688
      %v817 = vmax.f32 %v561, %v689
      %v818 = vpack.c.bf16 %v754, %v754
      %v819 = vpack.c.bf16 %v755, %v755
      %v820 = vpack.c.bf16 %v756, %v756
      %v821 = vpack.c.bf16 %v757, %v757
      %v822 = vpack.c.bf16 %v758, %v758
      %v823 = vpack.c.bf16 %v759, %v759
      %v824 = vpack.c.bf16 %v760, %v760
      %v825 = vpack.c.bf16 %v761, %v761
      %v826 = vpack.c.bf16 %v762, %v762
      %v827 = vpack.c.bf16 %v763, %v763
      %v828 = vpack.c.bf16 %v764, %v764
      %v829 = vpack.c.bf16 %v765, %v765
      %v830 = vpack.c.bf16 %v766, %v766
      %v831 = vpack.c.bf16 %v767, %v767
      %v832 = vpack.c.bf16 %v768, %v768
      %v833 = vpack.c.bf16 %v769, %v769
      %v834 = vpack.c.bf16 %v770, %v770
      %v835 = vpack.c.bf16 %v771, %v771
      %v836 = vpack.c.bf16 %v772, %v772
      %v837 = vpack.c.bf16 %v773, %v773
      %v838 = vpack.c.bf16 %v774, %v774
      %v839 = vpack.c.bf16 %v775, %v775
      %v840 = vpack.c.bf16 %v776, %v776
      %v841 = vpack.c.bf16 %v777, %v777
      %v842 = vpack.c.bf16 %v778, %v778
      %v843 = vpack.c.bf16 %v779, %v779
      %v844 = vpack.c.bf16 %v780, %v780
      %v845 = vpack.c.bf16 %v781, %v781
      %v846 = vpack.c.bf16 %v782, %v782
      %v847 = vpack.c.bf16 %v783, %v783
      %v848 = vpack.c.bf16 %v784, %v784
      %v849 = vpack.c.bf16 %v785, %v785
      %v850 = vpack.c.bf16 %v786, %v786
      %v851 = vpack.c.bf16 %v787, %v787
      %v852 = vpack.c.bf16 %v788, %v788
      %v853 = vpack.c.bf16 %v789, %v789
      %v854 = vpack.c.bf16 %v790, %v790
      %v855 = vpack.c.bf16 %v791, %v791
      %v856 = vpack.c.bf16 %v792, %v792
      %v857 = vpack.c.bf16 %v793, %v793
      %v858 = vpack.c.bf16 %v794, %v794
      %v859 = vpack.c.bf16 %v795, %v795
      %v860 = vpack.c.bf16 %v796, %v796
      %v861 = vpack.c.bf16 %v797, %v797
      %v862 = vpack.c.bf16 %v798, %v798
      %v863 = vpack.c.bf16 %v799, %v799
      %v864 = vpack.c.bf16 %v800, %v800
      %v865 = vpack.c.bf16 %v801, %v801
      %v866 = vpack.c.bf16 %v802, %v802
      %v867 = vpack.c.bf16 %v803, %v803
      %v868 = vpack.c.bf16 %v804, %v804
      %v869 = vpack.c.bf16 %v805, %v805
      %v870 = vpack.c.bf16 %v806, %v806
      %v871 = vpack.c.bf16 %v807, %v807
      %v872 = vpack.c.bf16 %v808, %v808
      %v873 = vpack.c.bf16 %v809, %v809
      %v874 = vpack.c.bf16 %v810, %v810
      %v875 = vpack.c.bf16 %v811, %v811
      %v876 = vpack.c.bf16 %v812, %v812
      %v877 = vpack.c.bf16 %v813, %v813
      %v878 = vpack.c.bf16 %v814, %v814
      %v879 = vpack.c.bf16 %v815, %v815
      %v880 = vpack.c.bf16 %v816, %v816
      %v881 = vpack.c.bf16 %v817, %v817
      %v946 = vunpack.c.l.b16 %v818
      %v947 = vunpack.c.l.b16 %v819
      %v948 = vunpack.c.l.b16 %v820
      %v949 = vunpack.c.l.b16 %v821
      %v950 = vunpack.c.l.b16 %v822
      %v951 = vunpack.c.l.b16 %v823
      %v952 = vunpack.c.l.b16 %v824
      %v953 = vunpack.c.l.b16 %v825
      %v954 = vunpack.c.l.b16 %v826
      %v955 = vunpack.c.l.b16 %v827
      %v956 = vunpack.c.l.b16 %v828
      %v957 = vunpack.c.l.b16 %v829
      %v958 = vunpack.c.l.b16 %v830
      %v959 = vunpack.c.l.b16 %v831
      %v960 = vunpack.c.l.b16 %v832
      %v961 = vunpack.c.l.b16 %v833
      %v962 = vunpack.c.l.b16 %v834
      %v963 = vunpack.c.l.b16 %v835
      %v964 = vunpack.c.l.b16 %v836
      %v965 = vunpack.c.l.b16 %v837
      %v966 = vunpack.c.l.b16 %v838
      %v967 = vunpack.c.l.b16 %v839
      %v968 = vunpack.c.l.b16 %v840
      %v969 = vunpack.c.l.b16 %v841
      %v970 = vunpack.c.l.b16 %v842
      %v971 = vunpack.c.l.b16 %v843
      %v972 = vunpack.c.l.b16 %v844
      %v973 = vunpack.c.l.b16 %v845
      %v974 = vunpack.c.l.b16 %v846
      %v975 = vunpack.c.l.b16 %v847
      %v976 = vunpack.c.l.b16 %v848
      %v977 = vunpack.c.l.b16 %v849
      %v978 = vunpack.c.l.b16 %v850
      %v979 = vunpack.c.l.b16 %v851
      %v980 = vunpack.c.l.b16 %v852
      %v981 = vunpack.c.l.b16 %v853
      %v982 = vunpack.c.l.b16 %v854
      %v983 = vunpack.c.l.b16 %v855
      %v984 = vunpack.c.l.b16 %v856
      %v985 = vunpack.c.l.b16 %v857
      %v986 = vunpack.c.l.b16 %v858
      %v987 = vunpack.c.l.b16 %v859
      %v988 = vunpack.c.l.b16 %v860
      %v989 = vunpack.c.l.b16 %v861
      %v990 = vunpack.c.l.b16 %v862
      %v991 = vunpack.c.l.b16 %v863
      %v992 = vunpack.c.l.b16 %v864
      %v993 = vunpack.c.l.b16 %v865
      %v994 = vunpack.c.l.b16 %v866
      %v995 = vunpack.c.l.b16 %v867
      %v996 = vunpack.c.l.b16 %v868
      %v997 = vunpack.c.l.b16 %v869
      %v998 = vunpack.c.l.b16 %v870
      %v999 = vunpack.c.l.b16 %v871
      %v1000 = vunpack.c.l.b16 %v872
      %v1001 = vunpack.c.l.b16 %v873
      %v1002 = vunpack.c.l.b16 %v874
      %v1003 = vunpack.c.l.b16 %v875
      %v1004 = vunpack.c.l.b16 %v876
      %v1005 = vunpack.c.l.b16 %v877
      %v1006 = vunpack.c.l.b16 %v878
      %v1007 = vunpack.c.l.b16 %v879
      %v1008 = vunpack.c.l.b16 %v880
      %v1009 = vunpack.c.l.b16 %v881
      %v1010 = vrot.slane %v947, 7
      %vm1011 = vcmask 1041409
      %v1012 = vsel %vm1011, %v1010, %v946
      %v1013 = vrot.slane %v948, 6
      %vm1014 = vcmask 1042434
      %v1015 = vsel %vm1014, %v1013, %v1012
      %v1016 = vrot.slane %v949, 5
      %vm1017 = vcmask 1043459
      %v1018 = vsel %vm1017, %v1016, %v1015
      %v1019 = vrot.slane %v950, 4
      %vm1020 = vcmask 1044484
      %v1021 = vsel %vm1020, %v1019, %v1018
      %v1022 = vrot.slane %v951, 3
      %vm1023 = vcmask 1045509
      %v1024 = vsel %vm1023, %v1022, %v1021
      %v1025 = vrot.slane %v952, 2
      %vm1026 = vcmask 1046534
      %v1027 = vsel %vm1026, %v1025, %v1024
      %v1028 = vrot.slane %v953, 1
      %vm1029 = vcmask 1047559
      %v1030 = vsel %vm1029, %v1028, %v1027
      %v1031 = vrot.slane %v955, 7
      %v1032 = vsel %vm1011, %v1031, %v954
      %v1033 = vrot.slane %v956, 6
      %v1034 = vsel %vm1014, %v1033, %v1032
      %v1035 = vrot.slane %v957, 5
      %v1036 = vsel %vm1017, %v1035, %v1034
      %v1037 = vrot.slane %v958, 4
      %v1038 = vsel %vm1020, %v1037, %v1036
      %v1039 = vrot.slane %v959, 3
      %v1040 = vsel %vm1023, %v1039, %v1038
      %v1041 = vrot.slane %v960, 2
      %v1042 = vsel %vm1026, %v1041, %v1040
      %v1043 = vrot.slane %v961, 1
      %v1044 = vsel %vm1029, %v1043, %v1042
      %v1045 = vrot.slane %v963, 7
      %v1046 = vsel %vm1011, %v1045, %v962
      %v1047 = vrot.slane %v964, 6
      %v1048 = vsel %vm1014, %v1047, %v1046
      %v1049 = vrot.slane %v965, 5
      %v1050 = vsel %vm1017, %v1049, %v1048
      %v1051 = vrot.slane %v966, 4
      %v1052 = vsel %vm1020, %v1051, %v1050
      %v1053 = vrot.slane %v967, 3
      %v1054 = vsel %vm1023, %v1053, %v1052
      %v1055 = vrot.slane %v968, 2
      %v1056 = vsel %vm1026, %v1055, %v1054
      %v1057 = vrot.slane %v969, 1
      %v1058 = vsel %vm1029, %v1057, %v1056
      %v1059 = vrot.slane %v971, 7
      %v1060 = vsel %vm1011, %v1059, %v970
      %v1061 = vrot.slane %v972, 6
      %v1062 = vsel %vm1014, %v1061, %v1060
      %v1063 = vrot.slane %v973, 5
      %v1064 = vsel %vm1017, %v1063, %v1062
      %v1065 = vrot.slane %v974, 4
      %v1066 = vsel %vm1020, %v1065, %v1064
      %v1067 = vrot.slane %v975, 3
      %v1068 = vsel %vm1023, %v1067, %v1066
      %v1069 = vrot.slane %v976, 2
      %v1070 = vsel %vm1026, %v1069, %v1068
      %v1071 = vrot.slane %v977, 1
      %v1072 = vsel %vm1029, %v1071, %v1070
      %v1073 = vrot.slane %v979, 7
      %v1074 = vsel %vm1011, %v1073, %v978
      %v1075 = vrot.slane %v980, 6
      %v1076 = vsel %vm1014, %v1075, %v1074
      %v1077 = vrot.slane %v981, 5
      %v1078 = vsel %vm1017, %v1077, %v1076
      %v1079 = vrot.slane %v982, 4
      %v1080 = vsel %vm1020, %v1079, %v1078
      %v1081 = vrot.slane %v983, 3
      %v1082 = vsel %vm1023, %v1081, %v1080
      %v1083 = vrot.slane %v984, 2
      %v1084 = vsel %vm1026, %v1083, %v1082
      %v1085 = vrot.slane %v985, 1
      %v1086 = vsel %vm1029, %v1085, %v1084
      %v1087 = vrot.slane %v987, 7
      %v1088 = vsel %vm1011, %v1087, %v986
      %v1089 = vrot.slane %v988, 6
      %v1090 = vsel %vm1014, %v1089, %v1088
      %v1091 = vrot.slane %v989, 5
      %v1092 = vsel %vm1017, %v1091, %v1090
      %v1093 = vrot.slane %v990, 4
      %v1094 = vsel %vm1020, %v1093, %v1092
      %v1095 = vrot.slane %v991, 3
      %v1096 = vsel %vm1023, %v1095, %v1094
      %v1097 = vrot.slane %v992, 2
      %v1098 = vsel %vm1026, %v1097, %v1096
      %v1099 = vrot.slane %v993, 1
      %v1100 = vsel %vm1029, %v1099, %v1098
      %v1101 = vrot.slane %v995, 7
      %v1102 = vsel %vm1011, %v1101, %v994
      %v1103 = vrot.slane %v996, 6
      %v1104 = vsel %vm1014, %v1103, %v1102
      %v1105 = vrot.slane %v997, 5
      %v1106 = vsel %vm1017, %v1105, %v1104
      %v1107 = vrot.slane %v998, 4
      %v1108 = vsel %vm1020, %v1107, %v1106
      %v1109 = vrot.slane %v999, 3
      %v1110 = vsel %vm1023, %v1109, %v1108
      %v1111 = vrot.slane %v1000, 2
      %v1112 = vsel %vm1026, %v1111, %v1110
      %v1113 = vrot.slane %v1001, 1
      %v1114 = vsel %vm1029, %v1113, %v1112
      %v1115 = vrot.slane %v1003, 7
      %v1116 = vsel %vm1011, %v1115, %v1002
      %v1117 = vrot.slane %v1004, 6
      %v1118 = vsel %vm1014, %v1117, %v1116
      %v1119 = vrot.slane %v1005, 5
      %v1120 = vsel %vm1017, %v1119, %v1118
      %v1121 = vrot.slane %v1006, 4
      %v1122 = vsel %vm1020, %v1121, %v1120
      %v1123 = vrot.slane %v1007, 3
      %v1124 = vsel %vm1023, %v1123, %v1122
      %v1125 = vrot.slane %v1008, 2
      %v1126 = vsel %vm1026, %v1125, %v1124
      %v1127 = vrot.slane %v1009, 1
      %v1128 = vsel %vm1029, %v1127, %v1126
      %v1129 = vpack.c.b16 %v1030, %v1030
      %v1130 = vpack.c.b16 %v1044, %v1044
      %v1131 = vpack.c.b16 %v1058, %v1058
      %v1132 = vpack.c.b16 %v1072, %v1072
      %v1133 = vpack.c.b16 %v1086, %v1086
      %v1134 = vpack.c.b16 %v1100, %v1100
      %v1135 = vpack.c.b16 %v1114, %v1114
      %v1136 = vpack.c.b16 %v1128, %v1128
      %vm1145 = vcmask 257024
      %1146 = vst.msk [vmem:[%s113] sm:$0xf] %vm1145, %v1129
      %1147 = vst.msk [vmem:[%s113 + $0x4] sm:$0xf] %vm1145, %v1130
      %1148 = vst.msk [vmem:[%s113 + $0x8] sm:$0xf] %vm1145, %v1131
      %1149 = vst.msk [vmem:[%s113 + $0xc] sm:$0xf] %vm1145, %v1132
      %1150 = vst.msk [vmem:[%s113 + $0x10] sm:$0xf] %vm1145, %v1133
      %1151 = vst.msk [vmem:[%s113 + $0x14] sm:$0xf] %vm1145, %v1134
      %1152 = vst.msk [vmem:[%s113 + $0x18] sm:$0xf] %vm1145, %v1135
      %1153 = vst.msk [vmem:[%s113 + $0x1c] sm:$0xf] %vm1145, %v1136
      %p1154 = scmp.lt.s32.totalorder %s12, 1
      %s1155 = scalar_select %p1154, %s12, 1
      %s1156 = smul.addr %s1155, 8
      %s1157 = smul.addr %s1156, 4
      %s1158 = scalar_lea.vmem %s1, %s1157
      // Predicated region
      $region25: #{cnn_forward.14} parent=23 // pred_check
        %p1159 = pneg %p56
      $region26: #{cnn_forward.14} parent=23 // pred_check_branch
        %1161 = sbr.rel (%p1159) target = $region28
      $region27: #{cnn_forward.14} parent=23 // pred_region
        _
      $region28: #{cnn_forward.14} parent=23 // pred_fallthru
        _
    $region24: #{cnn_forward.14} parent=5 // pred_fallthru
      _
    %p1162 = scmp.le.s32.totalorder 2, %s7
    // Predicated region
    $region29: #{cnn_forward.14} parent=5 // pred_check
      %p1163 = pneg %p1162
    $region30: #{cnn_forward.14} parent=5 // pred_check_branch
      %1165 = sbr.rel (%p1163) target = $region32
    $region31: #{cnn_forward.14} parent=5 // pred_region
      %s1166 = ssub.s32 %s7, 2
      // Predicated region
      $region33: #{cnn_forward.14} parent=31 // pred_check
        %p1167 = pneg %p62
      $region34: #{cnn_forward.14} parent=31 // pred_check_branch
        %1169 = sbr.rel (%p1167) target = $region36
      $region35: #{cnn_forward.14} parent=31 // pred_region
        %p1170 = scmp.lt.s32.totalorder %s13, 1
        %s1171 = scalar_select %p1170, %s13, 1
        %s1172 = smul.addr %s1171, 8
        %s1173 = smul.addr %s1172, 4
        %s1174 = scalar_lea.vmem %s1, %s1173
      $region36: #{cnn_forward.14} parent=31 // pred_fallthru
        _
    $region32: #{cnn_forward.14} parent=5 // pred_fallthru
      _
  $region6: #{cnn_forward.14} parent=0 // loop_footer
    %s11 = sadd.s32 1, %s7
  $region7: #{cnn_forward.14} parent=0 // loop_footer_branch
    %6 = sbr.rel target = $region3
  $region8: #{cnn_forward.14} parent=0 // loop_exit
    _

// kernel: cnn_forward.15
$region0: #{cnn_forward.15}
  #allocation0 [shape = 'u32[]', space=smem, size = 0x4, offset = 0x4, fixed_abs, tag = 'smem constant byte address 0x4 - core index']
  #allocation1 [shape = 'u32[72,128]{1,0:T(1,128)}', space=vmem, size = 0x9000, scoped, tag = 'internal scratch']
  %s0 = inlined_call_operand.vmem [shape: bf16[128,288], index: 0, kind: input, shape index: {}]
  %s1 = inlined_call_operand.vmem [shape: bf16[288,64], index: 1, kind: input, shape index: {}]
  %s2 = inlined_call_operand.vmem [shape: f32[1,64], index: 2, kind: input, shape index: {}]
  %s3 = inlined_call_operand.vmem [shape: bf16[128,64], index: 3, kind: output, shape index: {}]
  %s4 = sld [smem:[#allocation0]]
  $region22: #{cnn_forward.15} parent=0
    _
  %s6 = ssub.s32 1, %s4
  %s7 = scalar_select 0, %s6, %s4
  // Predicated region
  $region2: #{cnn_forward.15} parent=0 // pred_check
    _
  $region3: #{cnn_forward.15} parent=0 // pred_check_branch
    %9 = sbr.rel (0) target = $region5
  $region4: #{cnn_forward.15} parent=0 // pred_region
    _
  $region5: #{cnn_forward.15} parent=0 // pred_fallthru
    _
  // Predicated region
  $region6: #{cnn_forward.15} parent=0 // pred_check
    _
  $region7: #{cnn_forward.15} parent=0 // pred_check_branch
    %11 = sbr.rel (0) target = $region9
  $region8: #{cnn_forward.15} parent=0 // pred_region
    _
  $region9: #{cnn_forward.15} parent=0 // pred_fallthru
    _
  // Predicated region
  $region10: #{cnn_forward.15} parent=0 // pred_check
    _
  $region11: #{cnn_forward.15} parent=0 // pred_check_branch
    %13 = sbr.rel (0) target = $region13
  $region12: #{cnn_forward.15} parent=0 // pred_region
    _
  $region13: #{cnn_forward.15} parent=0 // pred_fallthru
    _
  %v15 = vld [vmem:[%s0] sm:$0xff]
  %v16 = vld [vmem:[%s0 + $0x8] sm:$0xf]
  %v17 = vld [vmem:[%s0 + $0xc] sm:$0xff]
  %v18 = vld [vmem:[%s0 + $0x14] sm:$0xf]
  %v19 = vld [vmem:[%s0 + $0x18] sm:$0xff]
  %v20 = vld [vmem:[%s0 + $0x20] sm:$0xf]
  %v21 = vld [vmem:[%s0 + $0x24] sm:$0xff]
  %v22 = vld [vmem:[%s0 + $0x2c] sm:$0xf]
  %v23 = vld [vmem:[%s0 + $0x30] sm:$0xff]
  %v24 = vld [vmem:[%s0 + $0x38] sm:$0xf]
  %v25 = vld [vmem:[%s0 + $0x3c] sm:$0xff]
  %v26 = vld [vmem:[%s0 + $0x44] sm:$0xf]
  %v27 = vld [vmem:[%s0 + $0x48] sm:$0xff]
  %v28 = vld [vmem:[%s0 + $0x50] sm:$0xf]
  %v29 = vld [vmem:[%s0 + $0x54] sm:$0xff]
  %v30 = vld [vmem:[%s0 + $0x5c] sm:$0xf]
  %v31 = vld [vmem:[%s0 + $0x60] sm:$0xff]
  %v32 = vld [vmem:[%s0 + $0x68] sm:$0xf]
  %v33 = vld [vmem:[%s0 + $0x6c] sm:$0xff]
  %v34 = vld [vmem:[%s0 + $0x74] sm:$0xf]
  %v35 = vld [vmem:[%s0 + $0x78] sm:$0xff]
  %v36 = vld [vmem:[%s0 + $0x80] sm:$0xf]
  %v37 = vld [vmem:[%s0 + $0x84] sm:$0xff]
  %v38 = vld [vmem:[%s0 + $0x8c] sm:$0xf]
  %v39 = vld [vmem:[%s0 + $0x90] sm:$0xff]
  %v40 = vld [vmem:[%s0 + $0x98] sm:$0xf]
  %v41 = vld [vmem:[%s0 + $0x9c] sm:$0xff]
  %v42 = vld [vmem:[%s0 + $0xa4] sm:$0xf]
  %v43 = vld [vmem:[%s0 + $0xa8] sm:$0xff]
  %v44 = vld [vmem:[%s0 + $0xb0] sm:$0xf]
  %v45 = vld [vmem:[%s0 + $0xb4] sm:$0xff]
  %v46 = vld [vmem:[%s0 + $0xbc] sm:$0xf]
  %v47 = vld [vmem:[%s1] sm:$0xf]
  %v48 = vld [vmem:[%s1 + $0x4] sm:$0xf]
  %v49 = vld [vmem:[%s1 + $0x8] sm:$0xf]
  %v50 = vld [vmem:[%s1 + $0xc] sm:$0xf]
  %v51 = vld [vmem:[%s1 + $0x10] sm:$0xf]
  %v52 = vld [vmem:[%s1 + $0x14] sm:$0xf]
  %v53 = vld [vmem:[%s1 + $0x18] sm:$0xf]
  %v54 = vld [vmem:[%s1 + $0x1c] sm:$0xf]
  %v55 = vld [vmem:[%s1 + $0x20] sm:$0xf]
  %v56 = vld [vmem:[%s1 + $0x24] sm:$0xf]
  %v57 = vld [vmem:[%s1 + $0x28] sm:$0xf]
  %v58 = vld [vmem:[%s1 + $0x2c] sm:$0xf]
  %v59 = vld [vmem:[%s1 + $0x30] sm:$0xf]
  %v60 = vld [vmem:[%s1 + $0x34] sm:$0xf]
  %v61 = vld [vmem:[%s1 + $0x38] sm:$0xf]
  %v62 = vld [vmem:[%s1 + $0x3c] sm:$0xf]
  %v63 = vld [vmem:[%s1 + $0x40] sm:$0xf]
  %v64 = vld [vmem:[%s1 + $0x44] sm:$0xf]
  %v65 = vld [vmem:[%s1 + $0x48] sm:$0xf]
  %v66 = vld [vmem:[%s1 + $0x4c] sm:$0xf]
  %v67 = vld [vmem:[%s1 + $0x50] sm:$0xf]
  %v68 = vld [vmem:[%s1 + $0x54] sm:$0xf]
  %v69 = vld [vmem:[%s1 + $0x58] sm:$0xf]
  %v70 = vld [vmem:[%s1 + $0x5c] sm:$0xf]
  %v71 = vld [vmem:[%s1 + $0x60] sm:$0xf]
  %v72 = vld [vmem:[%s1 + $0x64] sm:$0xf]
  %v73 = vld [vmem:[%s1 + $0x68] sm:$0xf]
  %v74 = vld [vmem:[%s1 + $0x6c] sm:$0xf]
  %v75 = vld [vmem:[%s1 + $0x70] sm:$0xf]
  %v76 = vld [vmem:[%s1 + $0x74] sm:$0xf]
  %v77 = vld [vmem:[%s1 + $0x78] sm:$0xf]
  %v78 = vld [vmem:[%s1 + $0x7c] sm:$0xf]
  %v79 = vld [vmem:[%s1 + $0x80] sm:$0xf]
  %v80 = vld [vmem:[%s1 + $0x84] sm:$0xf]
  %v81 = vld [vmem:[%s1 + $0x88] sm:$0xf]
  %v82 = vld [vmem:[%s1 + $0x8c] sm:$0xf]
  %v83 = vld [vmem:[%s2] sm:$0x1]
  %v85 = vperm.slane %v83, 0
  %v119 = vunpack.c.l.b16 %v15
  %v120 = vunpack.c.h.b16 %v15
  %v121 = vunpack.c.l.b16 %v16
  %v122 = vunpack.c.l.b16 %v17
  %v123 = vunpack.c.h.b16 %v17
  %v124 = vunpack.c.l.b16 %v18
  %v125 = vunpack.c.l.b16 %v19
  %v126 = vunpack.c.h.b16 %v19
  %v127 = vunpack.c.l.b16 %v20
  %v128 = vunpack.c.l.b16 %v21
  %v129 = vunpack.c.h.b16 %v21
  %v130 = vunpack.c.l.b16 %v22
  %v131 = vunpack.c.l.b16 %v23
  %v132 = vunpack.c.h.b16 %v23
  %v133 = vunpack.c.l.b16 %v24
  %v134 = vunpack.c.l.b16 %v25
  %v135 = vunpack.c.h.b16 %v25
  %v136 = vunpack.c.l.b16 %v26
  %v137 = vunpack.c.l.b16 %v27
  %v138 = vunpack.c.h.b16 %v27
  %v139 = vunpack.c.l.b16 %v28
  %v140 = vunpack.c.l.b16 %v29
  %v141 = vunpack.c.h.b16 %v29
  %v142 = vunpack.c.l.b16 %v30
  %v143 = vunpack.c.l.b16 %v31
  %v144 = vunpack.c.h.b16 %v31
  %v145 = vunpack.c.l.b16 %v32
  %v146 = vunpack.c.l.b16 %v33
  %v147 = vunpack.c.h.b16 %v33
  %v148 = vunpack.c.l.b16 %v34
  %v149 = vunpack.c.l.b16 %v35
  %v150 = vunpack.c.h.b16 %v35
  %v151 = vunpack.c.l.b16 %v36
  %v152 = vunpack.c.l.b16 %v37
  %v153 = vunpack.c.h.b16 %v37
  %v154 = vunpack.c.l.b16 %v38
  %v155 = vunpack.c.l.b16 %v39
  %v156 = vunpack.c.h.b16 %v39
  %v157 = vunpack.c.l.b16 %v40
  %v158 = vunpack.c.l.b16 %v41
  %v159 = vunpack.c.h.b16 %v41
  %v160 = vunpack.c.l.b16 %v42
  %v161 = vunpack.c.l.b16 %v43
  %v162 = vunpack.c.h.b16 %v43
  %v163 = vunpack.c.l.b16 %v44
  %v164 = vunpack.c.l.b16 %v45
  %v165 = vunpack.c.h.b16 %v45
  %v166 = vunpack.c.l.b16 %v46
  %v167 = vpack.c.b16 %v122, %v119
  %v168 = vpack.c.b16 %v123, %v120
  %v169 = vpack.c.b16 %v124, %v121
  %v170 = vpack.c.b16 %v128, %v125
  %v171 = vpack.c.b16 %v129, %v126
  %v172 = vpack.c.b16 %v130, %v127
  %v173 = vpack.c.b16 %v134, %v131
  %v174 = vpack.c.b16 %v135, %v132
  %v175 = vpack.c.b16 %v136, %v133
  %v176 = vpack.c.b16 %v140, %v137
  %v177 = vpack.c.b16 %v141, %v138
  %v178 = vpack.c.b16 %v142, %v139
  %v179 = vpack.c.b16 %v146, %v143
  %v180 = vpack.c.b16 %v147, %v144
  %v181 = vpack.c.b16 %v148, %v145
  %v182 = vpack.c.b16 %v152, %v149
  %v183 = vpack.c.b16 %v153, %v150
  %v184 = vpack.c.b16 %v154, %v151
  %v185 = vpack.c.b16 %v158, %v155
  %v186 = vpack.c.b16 %v159, %v156
  %v187 = vpack.c.b16 %v160, %v157
  %v188 = vpack.c.b16 %v164, %v161
  %v189 = vpack.c.b16 %v165, %v162
  %v190 = vpack.c.b16 %v166, %v163
  %v243 = vunpack.c.l.b16 %v47
  %v244 = vunpack.c.l.b16 %v48
  %v245 = vunpack.c.l.b16 %v49
  %v246 = vunpack.c.l.b16 %v50
  %v247 = vunpack.c.l.b16 %v51
  %v248 = vunpack.c.l.b16 %v52
  %v249 = vunpack.c.l.b16 %v53
  %v250 = vunpack.c.l.b16 %v54
  %v251 = vunpack.c.l.b16 %v55
  %v252 = vunpack.c.l.b16 %v56
  %v253 = vunpack.c.l.b16 %v57
  %v254 = vunpack.c.l.b16 %v58
  %v255 = vunpack.c.l.b16 %v59
  %v256 = vunpack.c.l.b16 %v60
  %v257 = vunpack.c.l.b16 %v61
  %v258 = vunpack.c.l.b16 %v62
  %v259 = vunpack.c.l.b16 %v63
  %v260 = vunpack.c.l.b16 %v64
  %v261 = vunpack.c.l.b16 %v65
  %v262 = vunpack.c.l.b16 %v66
  %v263 = vunpack.c.l.b16 %v67
  %v264 = vunpack.c.l.b16 %v68
  %v265 = vunpack.c.l.b16 %v69
  %v266 = vunpack.c.l.b16 %v70
  %v267 = vunpack.c.l.b16 %v71
  %v268 = vunpack.c.l.b16 %v72
  %v269 = vunpack.c.l.b16 %v73
  %v270 = vunpack.c.l.b16 %v74
  %v271 = vunpack.c.l.b16 %v75
  %v272 = vunpack.c.l.b16 %v76
  %v273 = vunpack.c.l.b16 %v77
  %v274 = vunpack.c.l.b16 %v78
  %v275 = vunpack.c.l.b16 %v79
  %v276 = vunpack.c.l.b16 %v80
  %v277 = vunpack.c.l.b16 %v81
  %v278 = vunpack.c.l.b16 %v82
  %v279 = vpack.c.b16 %v244, %v243
  %v280 = vpack.c.b16 %v246, %v245
  %v281 = vpack.c.b16 %v248, %v247
  %v282 = vpack.c.b16 %v250, %v249
  %v283 = vpack.c.b16 %v252, %v251
  %v284 = vpack.c.b16 %v254, %v253
  %v285 = vpack.c.b16 %v256, %v255
  %v286 = vpack.c.b16 %v258, %v257
  %v287 = vpack.c.b16 %v260, %v259
  %v288 = vpack.c.b16 %v262, %v261
  %v289 = vpack.c.b16 %v264, %v263
  %v290 = vpack.c.b16 %v266, %v265
  %v291 = vpack.c.b16 %v268, %v267
  %v292 = vpack.c.b16 %v270, %v269
  %v293 = vpack.c.b16 %v272, %v271
  %v294 = vpack.c.b16 %v274, %v273
  %v295 = vpack.c.b16 %v276, %v275
  %v296 = vpack.c.b16 %v278, %v277
  %vm315 = vcmask 261120
  %v317 = vsel %vm315, %v169, 0
  %v320 = vsel %vm315, %v172, 0
  %v323 = vsel %vm315, %v175, 0
  %v326 = vsel %vm315, %v178, 0
  %v329 = vsel %vm315, %v181, 0
  %v332 = vsel %vm315, %v184, 0
  %v335 = vsel %vm315, %v187, 0
  %v338 = vsel %vm315, %v190, 0
  %340 = vmatpush.bf16.msra.mxu0 %v286
  %341 = vmatpush.bf16.msra.mxu0 %v285
  %342 = vmatpush.bf16.msra.mxu0 %v284
  %343 = vmatpush.bf16.msra.mxu0 %v283
  %344 = vmatpush.bf16.msra.mxu0 %v282
  %345 = vmatpush.bf16.msra.mxu0 %v281
  %346 = vmatpush.bf16.msra.mxu0 %v280
  %347 = vmatpush.bf16.msra.mxu0 %v279
  %348 = vmatmul.bf16.gmra.mxu0 %v167
  %v349 = vpop.f32.mrf.mxu0
  %v350 = vadd.f32 %v85, %v349
  %v351 = vpop.f32.mrf.mxu0
  %v352 = vadd.f32 %v85, %v351
  %353 = vmatmul.bf16.gmra.mxu0 %v170
  %v354 = vpop.f32.mrf.mxu0
  %v355 = vadd.f32 %v85, %v354
  %v356 = vpop.f32.mrf.mxu0
  %v357 = vadd.f32 %v85, %v356
  %358 = vmatmul.bf16.gmra.mxu0 %v173
  %v359 = vpop.f32.mrf.mxu0
  %v360 = vadd.f32 %v85, %v359
  %v361 = vpop.f32.mrf.mxu0
  %v362 = vadd.f32 %v85, %v361
  %363 = vmatmul.bf16.gmra.mxu0 %v176
  %v364 = vpop.f32.mrf.mxu0
  %v365 = vadd.f32 %v85, %v364
  %v366 = vpop.f32.mrf.mxu0
  %v367 = vadd.f32 %v85, %v366
  %368 = vmatmul.bf16.gmra.mxu0 %v179
  %v369 = vpop.f32.mrf.mxu0
  %v370 = vadd.f32 %v85, %v369
  %v371 = vpop.f32.mrf.mxu0
  %v372 = vadd.f32 %v85, %v371
  %373 = vmatmul.bf16.gmra.mxu0 %v182
  %v374 = vpop.f32.mrf.mxu0
  %v375 = vadd.f32 %v85, %v374
  %v376 = vpop.f32.mrf.mxu0
  %v377 = vadd.f32 %v85, %v376
  %378 = vmatmul.bf16.gmra.mxu0 %v185
  %v379 = vpop.f32.mrf.mxu0
  %v380 = vadd.f32 %v85, %v379
  %v381 = vpop.f32.mrf.mxu0
  %v382 = vadd.f32 %v85, %v381
  %383 = vmatmul.bf16.gmra.mxu0 %v188
  %v384 = vpop.f32.mrf.mxu0
  %v385 = vadd.f32 %v85, %v384
  %v386 = vpop.f32.mrf.mxu0
  %v387 = vadd.f32 %v85, %v386
  %388 = vdwg.mxu0
  %389 = vmatpush.bf16.msra.mxu0 %v294
  %390 = vmatpush.bf16.msra.mxu0 %v293
  %391 = vmatpush.bf16.msra.mxu0 %v292
  %392 = vmatpush.bf16.msra.mxu0 %v291
  %393 = vmatpush.bf16.msra.mxu0 %v290
  %394 = vmatpush.bf16.msra.mxu0 %v289
  %395 = vmatpush.bf16.msra.mxu0 %v288
  %396 = vmatpush.bf16.msra.mxu0 %v287
  %397 = vmatmul.bf16.gmra.mxu0 %v168
  %v398 = vpop.f32.mrf.mxu0
  %v399 = vadd.f32 %v350, %v398
  %v400 = vpop.f32.mrf.mxu0
  %v401 = vadd.f32 %v352, %v400
  %402 = vmatmul.bf16.gmra.mxu0 %v171
  %v403 = vpop.f32.mrf.mxu0
  %v404 = vadd.f32 %v355, %v403
  %v405 = vpop.f32.mrf.mxu0
  %v406 = vadd.f32 %v357, %v405
  %407 = vmatmul.bf16.gmra.mxu0 %v174
  %v408 = vpop.f32.mrf.mxu0
  %v409 = vadd.f32 %v360, %v408
  %v410 = vpop.f32.mrf.mxu0
  %v411 = vadd.f32 %v362, %v410
  %412 = vmatmul.bf16.gmra.mxu0 %v177
  %v413 = vpop.f32.mrf.mxu0
  %v414 = vadd.f32 %v365, %v413
  %v415 = vpop.f32.mrf.mxu0
  %v416 = vadd.f32 %v367, %v415
  %417 = vmatmul.bf16.gmra.mxu0 %v180
  %v418 = vpop.f32.mrf.mxu0
  %v419 = vadd.f32 %v370, %v418
  %v420 = vpop.f32.mrf.mxu0
  %v421 = vadd.f32 %v372, %v420
  %422 = vmatmul.bf16.gmra.mxu0 %v183
  %v423 = vpop.f32.mrf.mxu0
  %v424 = vadd.f32 %v375, %v423
  %v425 = vpop.f32.mrf.mxu0
  %v426 = vadd.f32 %v377, %v425
  %427 = vmatmul.bf16.gmra.mxu0 %v186
  %v428 = vpop.f32.mrf.mxu0
  %v429 = vadd.f32 %v380, %v428
  %v430 = vpop.f32.mrf.mxu0
  %v431 = vadd.f32 %v382, %v430
  %432 = vmatmul.bf16.gmra.mxu0 %v189
  %v433 = vpop.f32.mrf.mxu0
  %v434 = vadd.f32 %v385, %v433
  %v435 = vpop.f32.mrf.mxu0
  %v436 = vadd.f32 %v387, %v435
  %437 = vdwg.mxu0
  %438 = vmatpush.bf16.msra.mxu0 0
  %439 = vmatpush.bf16.msra.mxu0 0
  %440 = vmatpush.bf16.msra.mxu0 0
  %441 = vmatpush.bf16.msra.mxu0 0
  %442 = vmatpush.bf16.msra.mxu0 0
  %443 = vmatpush.bf16.msra.mxu0 0
  %444 = vmatpush.bf16.msra.mxu0 %v296
  %445 = vmatpush.bf16.msra.mxu0 %v295
  %446 = vmatmul.bf16.gmra.mxu0 %v317
  %v447 = vpop.f32.mrf.mxu0
  %v448 = vadd.f32 %v399, %v447
  %v449 = vpop.f32.mrf.mxu0
  %v450 = vadd.f32 %v401, %v449
  %451 = vmatmul.bf16.gmra.mxu0 %v320
  %v452 = vpop.f32.mrf.mxu0
  %v453 = vadd.f32 %v404, %v452
  %v454 = vpop.f32.mrf.mxu0
  %v455 = vadd.f32 %v406, %v454
  %456 = vmatmul.bf16.gmra.mxu0 %v323
  %v457 = vpop.f32.mrf.mxu0
  %v458 = vadd.f32 %v409, %v457
  %v459 = vpop.f32.mrf.mxu0
  %v460 = vadd.f32 %v411, %v459
  %461 = vmatmul.bf16.gmra.mxu0 %v326
  %v462 = vpop.f32.mrf.mxu0
  %v463 = vadd.f32 %v414, %v462
  %v464 = vpop.f32.mrf.mxu0
  %v465 = vadd.f32 %v416, %v464
  %466 = vmatmul.bf16.gmra.mxu0 %v329
  %v467 = vpop.f32.mrf.mxu0
  %v468 = vadd.f32 %v419, %v467
  %v469 = vpop.f32.mrf.mxu0
  %v470 = vadd.f32 %v421, %v469
  %471 = vmatmul.bf16.gmra.mxu0 %v332
  %v472 = vpop.f32.mrf.mxu0
  %v473 = vadd.f32 %v424, %v472
  %v474 = vpop.f32.mrf.mxu0
  %v475 = vadd.f32 %v426, %v474
  %476 = vmatmul.bf16.gmra.mxu0 %v335
  %v477 = vpop.f32.mrf.mxu0
  %v478 = vadd.f32 %v429, %v477
  %v479 = vpop.f32.mrf.mxu0
  %v480 = vadd.f32 %v431, %v479
  %481 = vmatmul.bf16.gmra.mxu0 %v338
  %v482 = vpop.f32.mrf.mxu0
  %v483 = vadd.f32 %v434, %v482
  %v484 = vpop.f32.mrf.mxu0
  %v485 = vadd.f32 %v436, %v484
  %486 = vdwg.mxu0
  %v487 = vmax.f32 %v448, 0.0
  %v488 = vmax.f32 %v450, 0.0
  %v489 = vmax.f32 %v453, 0.0
  %v490 = vmax.f32 %v455, 0.0
  %v491 = vmax.f32 %v458, 0.0
  %v492 = vmax.f32 %v460, 0.0
  %v493 = vmax.f32 %v463, 0.0
  %v494 = vmax.f32 %v465, 0.0
  %v495 = vmax.f32 %v468, 0.0
  %v496 = vmax.f32 %v470, 0.0
  %v497 = vmax.f32 %v473, 0.0
  %v498 = vmax.f32 %v475, 0.0
  %v499 = vmax.f32 %v478, 0.0
  %v500 = vmax.f32 %v480, 0.0
  %v501 = vmax.f32 %v483, 0.0
  %v502 = vmax.f32 %v485, 0.0
  %v503 = vpack.c.bf16 %v487, %v487
  %v504 = vpack.c.bf16 %v488, %v488
  %v505 = vpack.c.bf16 %v489, %v489
  %v506 = vpack.c.bf16 %v490, %v490
  %v507 = vpack.c.bf16 %v491, %v491
  %v508 = vpack.c.bf16 %v492, %v492
  %v509 = vpack.c.bf16 %v493, %v493
  %v510 = vpack.c.bf16 %v494, %v494
  %v511 = vpack.c.bf16 %v495, %v495
  %v512 = vpack.c.bf16 %v496, %v496
  %v513 = vpack.c.bf16 %v497, %v497
  %v514 = vpack.c.bf16 %v498, %v498
  %v515 = vpack.c.bf16 %v499, %v499
  %v516 = vpack.c.bf16 %v500, %v500
  %v517 = vpack.c.bf16 %v501, %v501
  %v518 = vpack.c.bf16 %v502, %v502
  %vm519 = vcmask 519168
  %520 = vst.msk [vmem:[%s3] sm:$0xf] %vm519, %v503
  %521 = vst.msk [vmem:[%s3 + $0x4] sm:$0xf] %vm519, %v504
  %522 = vst.msk [vmem:[%s3 + $0x8] sm:$0xf] %vm519, %v505
  %523 = vst.msk [vmem:[%s3 + $0xc] sm:$0xf] %vm519, %v506
  %524 = vst.msk [vmem:[%s3 + $0x10] sm:$0xf] %vm519, %v507
  %525 = vst.msk [vmem:[%s3 + $0x14] sm:$0xf] %vm519, %v508
  %526 = vst.msk [vmem:[%s3 + $0x18] sm:$0xf] %vm519, %v509
  %527 = vst.msk [vmem:[%s3 + $0x1c] sm:$0xf] %vm519, %v510
  %528 = vst.msk [vmem:[%s3 + $0x20] sm:$0xf] %vm519, %v511
  %529 = vst.msk [vmem:[%s3 + $0x24] sm:$0xf] %vm519, %v512
  %530 = vst.msk [vmem:[%s3 + $0x28] sm:$0xf] %vm519, %v513
  %531 = vst.msk [vmem:[%s3 + $0x2c] sm:$0xf] %vm519, %v514
  %532 = vst.msk [vmem:[%s3 + $0x30] sm:$0xf] %vm519, %v515
  %533 = vst.msk [vmem:[%s3 + $0x34] sm:$0xf] %vm519, %v516
  %534 = vst.msk [vmem:[%s3 + $0x38] sm:$0xf] %vm519, %v517
  %535 = vst.msk [vmem:[%s3 + $0x3c] sm:$0xf] %vm519, %v518
  // Predicated region
  $region14: #{cnn_forward.15} parent=0 // pred_check
    _
  $region15: #{cnn_forward.15} parent=0 // pred_check_branch
    %537 = sbr.rel (0) target = $region17
  $region16: #{cnn_forward.15} parent=0 // pred_region
    _
  $region17: #{cnn_forward.15} parent=0 // pred_fallthru
    _
  // Predicated region
  $region18: #{cnn_forward.15} parent=0 // pred_check
    _
  $region19: #{cnn_forward.15} parent=0 // pred_check_branch
    %539 = sbr.rel (0) target = $region21
  $region20: #{cnn_forward.15} parent=0 // pred_region
    _
  $region21: #{cnn_forward.15} parent=0 // pred_fallthru
    _

// kernel: cnn_forward.16
$region0: #{cnn_forward.16}
  #allocation0 [shape = 'u32[]', space=smem, size = 0x4, offset = 0x4, fixed_abs, tag = 'smem constant byte address 0x4 - core index']
  #allocation1 [shape = 'u32[72,128]{1,0:T(1,128)}', space=vmem, size = 0x9000, scoped, tag = 'internal scratch']
  %s0 = inlined_call_operand.vmem [shape: bf16[128,576], index: 0, kind: input, shape index: {}]
  %s1 = inlined_call_operand.vmem [shape: bf16[576,64], index: 1, kind: input, shape index: {}]
  %s2 = inlined_call_operand.vmem [shape: f32[1,64], index: 2, kind: input, shape index: {}]
  %s3 = inlined_call_operand.vmem [shape: bf16[128,64], index: 3, kind: output, shape index: {}]
  %s4 = sld [smem:[#allocation0]]
  $region22: #{cnn_forward.16} parent=0
    _
  %s6 = ssub.s32 1, %s4
  %s7 = scalar_select 0, %s6, %s4
  // Predicated region
  $region2: #{cnn_forward.16} parent=0 // pred_check
    _
  $region3: #{cnn_forward.16} parent=0 // pred_check_branch
    %9 = sbr.rel (0) target = $region5
  $region4: #{cnn_forward.16} parent=0 // pred_region
    _
  $region5: #{cnn_forward.16} parent=0 // pred_fallthru
    _
  // Predicated region
  $region6: #{cnn_forward.16} parent=0 // pred_check
    _
  $region7: #{cnn_forward.16} parent=0 // pred_check_branch
    %11 = sbr.rel (0) target = $region9
  $region8: #{cnn_forward.16} parent=0 // pred_region
    _
  $region9: #{cnn_forward.16} parent=0 // pred_fallthru
    _
  // Predicated region
  $region10: #{cnn_forward.16} parent=0 // pred_check
    _
  $region11: #{cnn_forward.16} parent=0 // pred_check_branch
    %13 = sbr.rel (0) target = $region13
  $region12: #{cnn_forward.16} parent=0 // pred_region
    _
  $region13: #{cnn_forward.16} parent=0 // pred_fallthru
    _
  %v15 = vld [vmem:[%s0] sm:$0xff]
  %v16 = vld [vmem:[%s0 + $0x8] sm:$0xff]
  %v17 = vld [vmem:[%s0 + $0x10] sm:$0xf]
  %v18 = vld [vmem:[%s0 + $0x14] sm:$0xff]
  %v19 = vld [vmem:[%s0 + $0x1c] sm:$0xff]
  %v20 = vld [vmem:[%s0 + $0x24] sm:$0xf]
  %v21 = vld [vmem:[%s0 + $0x28] sm:$0xff]
  %v22 = vld [vmem:[%s0 + $0x30] sm:$0xff]
  %v23 = vld [vmem:[%s0 + $0x38] sm:$0xf]
  %v24 = vld [vmem:[%s0 + $0x3c] sm:$0xff]
  %v25 = vld [vmem:[%s0 + $0x44] sm:$0xff]
  %v26 = vld [vmem:[%s0 + $0x4c] sm:$0xf]
  %v27 = vld [vmem:[%s0 + $0x50] sm:$0xff]
  %v28 = vld [vmem:[%s0 + $0x58] sm:$0xff]
  %v29 = vld [vmem:[%s0 + $0x60] sm:$0xf]
  %v30 = vld [vmem:[%s0 + $0x64] sm:$0xff]
  %v31 = vld [vmem:[%s0 + $0x6c] sm:$0xff]
  %v32 = vld [vmem:[%s0 + $0x74] sm:$0xf]
  %v33 = vld [vmem:[%s0 + $0x78] sm:$0xff]
  %v34 = vld [vmem:[%s0 + $0x80] sm:$0xff]
  %v35 = vld [vmem:[%s0 + $0x88] sm:$0xf]
  %v36 = vld [vmem:[%s0 + $0x8c] sm:$0xff]
  %v37 = vld [vmem:[%s0 + $0x94] sm:$0xff]
  %v38 = vld [vmem:[%s0 + $0x9c] sm:$0xf]
  %v39 = vld [vmem:[%s0 + $0xa0] sm:$0xff]
  %v40 = vld [vmem:[%s0 + $0xa8] sm:$0xff]
  %v41 = vld [vmem:[%s0 + $0xb0] sm:$0xf]
  %v42 = vld [vmem:[%s0 + $0xb4] sm:$0xff]
  %v43 = vld [vmem:[%s0 + $0xbc] sm:$0xff]
  %v44 = vld [vmem:[%s0 + $0xc4] sm:$0xf]
  %v45 = vld [vmem:[%s0 + $0xc8] sm:$0xff]
  %v46 = vld [vmem:[%s0 + $0xd0] sm:$0xff]
  %v47 = vld [vmem:[%s0 + $0xd8] sm:$0xf]
  %v48 = vld [vmem:[%s0 + $0xdc] sm:$0xff]
  %v49 = vld [vmem:[%s0 + $0xe4] sm:$0xff]
  %v50 = vld [vmem:[%s0 + $0xec] sm:$0xf]
  %v51 = vld [vmem:[%s0 + $0xf0] sm:$0xff]
  %v52 = vld [vmem:[%s0 + $0xf8] sm:$0xff]
  %v53 = vld [vmem:[%s0 + $0x100] sm:$0xf]
  %v54 = vld [vmem:[%s0 + $0x104] sm:$0xff]
  %v55 = vld [vmem:[%s0 + $0x10c] sm:$0xff]
  %v56 = vld [vmem:[%s0 + $0x114] sm:$0xf]
  %v57 = vld [vmem:[%s0 + $0x118] sm:$0xff]
  %v58 = vld [vmem:[%s0 + $0x120] sm:$0xff]
  %v59 = vld [vmem:[%s0 + $0x128] sm:$0xf]
  %v60 = vld [vmem:[%s0 + $0x12c] sm:$0xff]
  %v61 = vld [vmem:[%s0 + $0x134] sm:$0xff]
  %v62 = vld [vmem:[%s0 + $0x13c] sm:$0xf]
  %v63 = vld [vmem:[%s1] sm:$0xf]
  %v64 = vld [vmem:[%s1 + $0x4] sm:$0xf]
  %v65 = vld [vmem:[%s1 + $0x8] sm:$0xf]
  %v66 = vld [vmem:[%s1 + $0xc] sm:$0xf]
  %v67 = vld [vmem:[%s1 + $0x10] sm:$0xf]
  %v68 = vld [vmem:[%s1 + $0x14] sm:$0xf]
  %v69 = vld [vmem:[%s1 + $0x18] sm:$0xf]
  %v70 = vld [vmem:[%s1 + $0x1c] sm:$0xf]
  %v71 = vld [vmem:[%s1 + $0x20] sm:$0xf]
  %v72 = vld [vmem:[%s1 + $0x24] sm:$0xf]
  %v73 = vld [vmem:[%s1 + $0x28] sm:$0xf]
  %v74 = vld [vmem:[%s1 + $0x2c] sm:$0xf]
  %v75 = vld [vmem:[%s1 + $0x30] sm:$0xf]
  %v76 = vld [vmem:[%s1 + $0x34] sm:$0xf]
  %v77 = vld [vmem:[%s1 + $0x38] sm:$0xf]
  %v78 = vld [vmem:[%s1 + $0x3c] sm:$0xf]
  %v79 = vld [vmem:[%s1 + $0x40] sm:$0xf]
  %v80 = vld [vmem:[%s1 + $0x44] sm:$0xf]
  %v81 = vld [vmem:[%s1 + $0x48] sm:$0xf]
  %v82 = vld [vmem:[%s1 + $0x4c] sm:$0xf]
  %v83 = vld [vmem:[%s1 + $0x50] sm:$0xf]
  %v84 = vld [vmem:[%s1 + $0x54] sm:$0xf]
  %v85 = vld [vmem:[%s1 + $0x58] sm:$0xf]
  %v86 = vld [vmem:[%s1 + $0x5c] sm:$0xf]
  %v87 = vld [vmem:[%s1 + $0x60] sm:$0xf]
  %v88 = vld [vmem:[%s1 + $0x64] sm:$0xf]
  %v89 = vld [vmem:[%s1 + $0x68] sm:$0xf]
  %v90 = vld [vmem:[%s1 + $0x6c] sm:$0xf]
  %v91 = vld [vmem:[%s1 + $0x70] sm:$0xf]
  %v92 = vld [vmem:[%s1 + $0x74] sm:$0xf]
  %v93 = vld [vmem:[%s1 + $0x78] sm:$0xf]
  %v94 = vld [vmem:[%s1 + $0x7c] sm:$0xf]
  %v95 = vld [vmem:[%s1 + $0x80] sm:$0xf]
  %v96 = vld [vmem:[%s1 + $0x84] sm:$0xf]
  %v97 = vld [vmem:[%s1 + $0x88] sm:$0xf]
  %v98 = vld [vmem:[%s1 + $0x8c] sm:$0xf]
  %v99 = vld [vmem:[%s1 + $0x90] sm:$0xf]
  %v100 = vld [vmem:[%s1 + $0x94] sm:$0xf]
  %v101 = vld [vmem:[%s1 + $0x98] sm:$0xf]
  %v102 = vld [vmem:[%s1 + $0x9c] sm:$0xf]
  %v103 = vld [vmem:[%s1 + $0xa0] sm:$0xf]
  %v104 = vld [vmem:[%s1 + $0xa4] sm:$0xf]
  %v105 = vld [vmem:[%s1 + $0xa8] sm:$0xf]
  %v106 = vld [vmem:[%s1 + $0xac] sm:$0xf]
  %v107 = vld [vmem:[%s1 + $0xb0] sm:$0xf]
  %v108 = vld [vmem:[%s1 + $0xb4] sm:$0xf]
  %v109 = vld [vmem:[%s1 + $0xb8] sm:$0xf]
  %v110 = vld [vmem:[%s1 + $0xbc] sm:$0xf]
  %v111 = vld [vmem:[%s1 + $0xc0] sm:$0xf]
  %v112 = vld [vmem:[%s1 + $0xc4] sm:$0xf]
  %v113 = vld [vmem:[%s1 + $0xc8] sm:$0xf]
  %v114 = vld [vmem:[%s1 + $0xcc] sm:$0xf]
  %v115 = vld [vmem:[%s1 + $0xd0] sm:$0xf]
  %v116 = vld [vmem:[%s1 + $0xd4] sm:$0xf]
  %v117 = vld [vmem:[%s1 + $0xd8] sm:$0xf]
  %v118 = vld [vmem:[%s1 + $0xdc] sm:$0xf]
  %v119 = vld [vmem:[%s1 + $0xe0] sm:$0xf]
  %v120 = vld [vmem:[%s1 + $0xe4] sm:$0xf]
  %v121 = vld [vmem:[%s1 + $0xe8] sm:$0xf]
  %v122 = vld [vmem:[%s1 + $0xec] sm:$0xf]
  %v123 = vld [vmem:[%s1 + $0xf0] sm:$0xf]
  %v124 = vld [vmem:[%s1 + $0xf4] sm:$0xf]
  %v125 = vld [vmem:[%s1 + $0xf8] sm:$0xf]
  %v126 = vld [vmem:[%s1 + $0xfc] sm:$0xf]
  %v127 = vld [vmem:[%s1 + $0x100] sm:$0xf]
  %v128 = vld [vmem:[%s1 + $0x104] sm:$0xf]
  %v129 = vld [vmem:[%s1 + $0x108] sm:$0xf]
  %v130 = vld [vmem:[%s1 + $0x10c] sm:$0xf]
  %v131 = vld [vmem:[%s1 + $0x110] sm:$0xf]
  %v132 = vld [vmem:[%s1 + $0x114] sm:$0xf]
  %v133 = vld [vmem:[%s1 + $0x118] sm:$0xf]
  %v134 = vld [vmem:[%s1 + $0x11c] sm:$0xf]
  %v135 = vld [vmem:[%s2] sm:$0x1]
  %v137 = vperm.slane %v135, 0
  %v187 = vunpack.c.l.b16 %v15
  %v188 = vunpack.c.h.b16 %v15
  %v189 = vunpack.c.l.b16 %v16
  %v190 = vunpack.c.h.b16 %v16
  %v191 = vunpack.c.l.b16 %v17
  %v192 = vunpack.c.l.b16 %v18
  %v193 = vunpack.c.h.b16 %v18
  %v194 = vunpack.c.l.b16 %v19
  %v195 = vunpack.c.h.b16 %v19
  %v196 = vunpack.c.l.b16 %v20
  %v197 = vunpack.c.l.b16 %v21
  %v198 = vunpack.c.h.b16 %v21
  %v199 = vunpack.c.l.b16 %v22
  %v200 = vunpack.c.h.b16 %v22
  %v201 = vunpack.c.l.b16 %v23
  %v202 = vunpack.c.l.b16 %v24
  %v203 = vunpack.c.h.b16 %v24
  %v204 = vunpack.c.l.b16 %v25
  %v205 = vunpack.c.h.b16 %v25
  %v206 = vunpack.c.l.b16 %v26
  %v207 = vunpack.c.l.b16 %v27
  %v208 = vunpack.c.h.b16 %v27
  %v209 = vunpack.c.l.b16 %v28
  %v210 = vunpack.c.h.b16 %v28
  %v211 = vunpack.c.l.b16 %v29
  %v212 = vunpack.c.l.b16 %v30
  %v213 = vunpack.c.h.b16 %v30
  %v214 = vunpack.c.l.b16 %v31
  %v215 = vunpack.c.h.b16 %v31
  %v216 = vunpack.c.l.b16 %v32
  %v217 = vunpack.c.l.b16 %v33
  %v218 = vunpack.c.h.b16 %v33
  %v219 = vunpack.c.l.b16 %v34
  %v220 = vunpack.c.h.b16 %v34
  %v221 = vunpack.c.l.b16 %v35
  %v222 = vunpack.c.l.b16 %v36
  %v223 = vunpack.c.h.b16 %v36
  %v224 = vunpack.c.l.b16 %v37
  %v225 = vunpack.c.h.b16 %v37
  %v226 = vunpack.c.l.b16 %v38
  %v227 = vunpack.c.l.b16 %v39
  %v228 = vunpack.c.h.b16 %v39
  %v229 = vunpack.c.l.b16 %v40
  %v230 = vunpack.c.h.b16 %v40
  %v231 = vunpack.c.l.b16 %v41
  %v232 = vunpack.c.l.b16 %v42
  %v233 = vunpack.c.h.b16 %v42
  %v234 = vunpack.c.l.b16 %v43
  %v235 = vunpack.c.h.b16 %v43
  %v236 = vunpack.c.l.b16 %v44
  %v237 = vunpack.c.l.b16 %v45
  %v238 = vunpack.c.h.b16 %v45
  %v239 = vunpack.c.l.b16 %v46
  %v240 = vunpack.c.h.b16 %v46
  %v241 = vunpack.c.l.b16 %v47
  %v242 = vunpack.c.l.b16 %v48
  %v243 = vunpack.c.h.b16 %v48
  %v244 = vunpack.c.l.b16 %v49
  %v245 = vunpack.c.h.b16 %v49
  %v246 = vunpack.c.l.b16 %v50
  %v247 = vunpack.c.l.b16 %v51
  %v248 = vunpack.c.h.b16 %v51
  %v249 = vunpack.c.l.b16 %v52
  %v250 = vunpack.c.h.b16 %v52
  %v251 = vunpack.c.l.b16 %v53
  %v252 = vunpack.c.l.b16 %v54
  %v253 = vunpack.c.h.b16 %v54
  %v254 = vunpack.c.l.b16 %v55
  %v255 = vunpack.c.h.b16 %v55
  %v256 = vunpack.c.l.b16 %v56
  %v257 = vunpack.c.l.b16 %v57
  %v258 = vunpack.c.h.b16 %v57
  %v259 = vunpack.c.l.b16 %v58
  %v260 = vunpack.c.h.b16 %v58
  %v261 = vunpack.c.l.b16 %v59
  %v262 = vunpack.c.l.b16 %v60
  %v263 = vunpack.c.h.b16 %v60
  %v264 = vunpack.c.l.b16 %v61
  %v265 = vunpack.c.h.b16 %v61
  %v266 = vunpack.c.l.b16 %v62
  %v267 = vpack.c.b16 %v192, %v187
  %v268 = vpack.c.b16 %v193, %v188
  %v269 = vpack.c.b16 %v194, %v189
  %v270 = vpack.c.b16 %v195, %v190
  %v271 = vpack.c.b16 %v196, %v191
  %v272 = vpack.c.b16 %v202, %v197
  %v273 = vpack.c.b16 %v203, %v198
  %v274 = vpack.c.b16 %v204, %v199
  %v275 = vpack.c.b16 %v205, %v200
  %v276 = vpack.c.b16 %v206, %v201
  %v277 = vpack.c.b16 %v212, %v207
  %v278 = vpack.c.b16 %v213, %v208
  %v279 = vpack.c.b16 %v214, %v209
  %v280 = vpack.c.b16 %v215, %v210
  %v281 = vpack.c.b16 %v216, %v211
  %v282 = vpack.c.b16 %v222, %v217
  %v283 = vpack.c.b16 %v223, %v218
  %v284 = vpack.c.b16 %v224, %v219
  %v285 = vpack.c.b16 %v225, %v220
  %v286 = vpack.c.b16 %v226, %v221
  %v287 = vpack.c.b16 %v232, %v227
  %v288 = vpack.c.b16 %v233, %v228
  %v289 = vpack.c.b16 %v234, %v229
  %v290 = vpack.c.b16 %v235, %v230
  %v291 = vpack.c.b16 %v236, %v231
  %v292 = vpack.c.b16 %v242, %v237
  %v293 = vpack.c.b16 %v243, %v238
  %v294 = vpack.c.b16 %v244, %v239
  %v295 = vpack.c.b16 %v245, %v240
  %v296 = vpack.c.b16 %v246, %v241
  %v297 = vpack.c.b16 %v252, %v247
  %v298 = vpack.c.b16 %v253, %v248
  %v299 = vpack.c.b16 %v254, %v249
  %v300 = vpack.c.b16 %v255, %v250
  %v301 = vpack.c.b16 %v256, %v251
  %v302 = vpack.c.b16 %v262, %v257
  %v303 = vpack.c.b16 %v263, %v258
  %v304 = vpack.c.b16 %v264, %v259
  %v305 = vpack.c.b16 %v265, %v260
  %v306 = vpack.c.b16 %v266, %v261
  %v411 = vunpack.c.l.b16 %v63
  %v412 = vunpack.c.l.b16 %v64
  %v413 = vunpack.c.l.b16 %v65
  %v414 = vunpack.c.l.b16 %v66
  %v415 = vunpack.c.l.b16 %v67
  %v416 = vunpack.c.l.b16 %v68
  %v417 = vunpack.c.l.b16 %v69
  %v418 = vunpack.c.l.b16 %v70
  %v419 = vunpack.c.l.b16 %v71
  %v420 = vunpack.c.l.b16 %v72
  %v421 = vunpack.c.l.b16 %v73
  %v422 = vunpack.c.l.b16 %v74
  %v423 = vunpack.c.l.b16 %v75
  %v424 = vunpack.c.l.b16 %v76
  %v425 = vunpack.c.l.b16 %v77
  %v426 = vunpack.c.l.b16 %v78
  %v427 = vunpack.c.l.b16 %v79
  %v428 = vunpack.c.l.b16 %v80
  %v429 = vunpack.c.l.b16 %v81
  %v430 = vunpack.c.l.b16 %v82
  %v431 = vunpack.c.l.b16 %v83
  %v432 = vunpack.c.l.b16 %v84
  %v433 = vunpack.c.l.b16 %v85
  %v434 = vunpack.c.l.b16 %v86
  %v435 = vunpack.c.l.b16 %v87
  %v436 = vunpack.c.l.b16 %v88
  %v437 = vunpack.c.l.b16 %v89
  %v438 = vunpack.c.l.b16 %v90
  %v439 = vunpack.c.l.b16 %v91
  %v440 = vunpack.c.l.b16 %v92
  %v441 = vunpack.c.l.b16 %v93
  %v442 = vunpack.c.l.b16 %v94
  %v443 = vunpack.c.l.b16 %v95
  %v444 = vunpack.c.l.b16 %v96
  %v445 = vunpack.c.l.b16 %v97
  %v446 = vunpack.c.l.b16 %v98
  %v447 = vunpack.c.l.b16 %v99
  %v448 = vunpack.c.l.b16 %v100
  %v449 = vunpack.c.l.b16 %v101
  %v450 = vunpack.c.l.b16 %v102
  %v451 = vunpack.c.l.b16 %v103
  %v452 = vunpack.c.l.b16 %v104
  %v453 = vunpack.c.l.b16 %v105
  %v454 = vunpack.c.l.b16 %v106
  %v455 = vunpack.c.l.b16 %v107
  %v456 = vunpack.c.l.b16 %v108
  %v457 = vunpack.c.l.b16 %v109
  %v458 = vunpack.c.l.b16 %v110
  %v459 = vunpack.c.l.b16 %v111
  %v460 = vunpack.c.l.b16 %v112
  %v461 = vunpack.c.l.b16 %v113
  %v462 = vunpack.c.l.b16 %v114
  %v463 = vunpack.c.l.b16 %v115
  %v464 = vunpack.c.l.b16 %v116
  %v465 = vunpack.c.l.b16 %v117
  %v466 = vunpack.c.l.b16 %v118
  %v467 = vunpack.c.l.b16 %v119
  %v468 = vunpack.c.l.b16 %v120
  %v469 = vunpack.c.l.b16 %v121
  %v470 = vunpack.c.l.b16 %v122
  %v471 = vunpack.c.l.b16 %v123
  %v472 = vunpack.c.l.b16 %v124
  %v473 = vunpack.c.l.b16 %v125
  %v474 = vunpack.c.l.b16 %v126
  %v475 = vunpack.c.l.b16 %v127
  %v476 = vunpack.c.l.b16 %v128
  %v477 = vunpack.c.l.b16 %v129
  %v478 = vunpack.c.l.b16 %v130
  %v479 = vunpack.c.l.b16 %v131
  %v480 = vunpack.c.l.b16 %v132
  %v481 = vunpack.c.l.b16 %v133
  %v482 = vunpack.c.l.b16 %v134
  %v483 = vpack.c.b16 %v412, %v411
  %v484 = vpack.c.b16 %v414, %v413
  %v485 = vpack.c.b16 %v416, %v415
  %v486 = vpack.c.b16 %v418, %v417
  %v487 = vpack.c.b16 %v420, %v419
  %v488 = vpack.c.b16 %v422, %v421
  %v489 = vpack.c.b16 %v424, %v423
  %v490 = vpack.c.b16 %v426, %v425
  %v491 = vpack.c.b16 %v428, %v427
  %v492 = vpack.c.b16 %v430, %v429
  %v493 = vpack.c.b16 %v432, %v431
  %v494 = vpack.c.b16 %v434, %v433
  %v495 = vpack.c.b16 %v436, %v435
  %v496 = vpack.c.b16 %v438, %v437
  %v497 = vpack.c.b16 %v440, %v439
  %v498 = vpack.c.b16 %v442, %v441
  %v499 = vpack.c.b16 %v444, %v443
  %v500 = vpack.c.b16 %v446, %v445
  %v501 = vpack.c.b16 %v448, %v447
  %v502 = vpack.c.b16 %v450, %v449
  %v503 = vpack.c.b16 %v452, %v451
  %v504 = vpack.c.b16 %v454, %v453
  %v505 = vpack.c.b16 %v456, %v455
  %v506 = vpack.c.b16 %v458, %v457
  %v507 = vpack.c.b16 %v460, %v459
  %v508 = vpack.c.b16 %v462, %v461
  %v509 = vpack.c.b16 %v464, %v463
  %v510 = vpack.c.b16 %v466, %v465
  %v511 = vpack.c.b16 %v468, %v467
  %v512 = vpack.c.b16 %v470, %v469
  %v513 = vpack.c.b16 %v472, %v471
  %v514 = vpack.c.b16 %v474, %v473
  %v515 = vpack.c.b16 %v476, %v475
  %v516 = vpack.c.b16 %v478, %v477
  %v517 = vpack.c.b16 %v480, %v479
  %v518 = vpack.c.b16 %v482, %v481
  %vm555 = vcmask 523264
  %v557 = vsel %vm555, %v271, 0
  %v560 = vsel %vm555, %v276, 0
  %v563 = vsel %vm555, %v281, 0
  %v566 = vsel %vm555, %v286, 0
  %v569 = vsel %vm555, %v291, 0
  %v572 = vsel %vm555, %v296, 0
  %v575 = vsel %vm555, %v301, 0
  %v578 = vsel %vm555, %v306, 0
  %580 = vmatpush.bf16.msra.mxu0 %v490
  %581 = vmatpush.bf16.msra.mxu0 %v489
  %582 = vmatpush.bf16.msra.mxu0 %v488
  %583 = vmatpush.bf16.msra.mxu0 %v487
  %584 = vmatpush.bf16.msra.mxu0 %v486
  %585 = vmatpush.bf16.msra.mxu0 %v485
  %586 = vmatpush.bf16.msra.mxu0 %v484
  %587 = vmatpush.bf16.msra.mxu0 %v483
  %588 = vmatmul.bf16.gmra.mxu0 %v267
  %v589 = vpop.f32.mrf.mxu0
  %v590 = vadd.f32 %v137, %v589
  %v591 = vpop.f32.mrf.mxu0
  %v592 = vadd.f32 %v137, %v591
  %593 = vmatmul.bf16.gmra.mxu0 %v272
  %v594 = vpop.f32.mrf.mxu0
  %v595 = vadd.f32 %v137, %v594
  %v596 = vpop.f32.mrf.mxu0
  %v597 = vadd.f32 %v137, %v596
  %598 = vmatmul.bf16.gmra.mxu0 %v277
  %v599 = vpop.f32.mrf.mxu0
  %v600 = vadd.f32 %v137, %v599
  %v601 = vpop.f32.mrf.mxu0
  %v602 = vadd.f32 %v137, %v601
  %603 = vmatmul.bf16.gmra.mxu0 %v282
  %v604 = vpop.f32.mrf.mxu0
  %v605 = vadd.f32 %v137, %v604
  %v606 = vpop.f32.mrf.mxu0
  %v607 = vadd.f32 %v137, %v606
  %608 = vmatmul.bf16.gmra.mxu0 %v287
  %v609 = vpop.f32.mrf.mxu0
  %v610 = vadd.f32 %v137, %v609
  %v611 = vpop.f32.mrf.mxu0
  %v612 = vadd.f32 %v137, %v611
  %613 = vmatmul.bf16.gmra.mxu0 %v292
  %v614 = vpop.f32.mrf.mxu0
  %v615 = vadd.f32 %v137, %v614
  %v616 = vpop.f32.mrf.mxu0
  %v617 = vadd.f32 %v137, %v616
  %618 = vmatmul.bf16.gmra.mxu0 %v297
  %v619 = vpop.f32.mrf.mxu0
  %v620 = vadd.f32 %v137, %v619
  %v621 = vpop.f32.mrf.mxu0
  %v622 = vadd.f32 %v137, %v621
  %623 = vmatmul.bf16.gmra.mxu0 %v302
  %v624 = vpop.f32.mrf.mxu0
  %v625 = vadd.f32 %v137, %v624
  %v626 = vpop.f32.mrf.mxu0
  %v627 = vadd.f32 %v137, %v626
  %628 = vdwg.mxu0
  %629 = vmatpush.bf16.msra.mxu0 %v498
  %630 = vmatpush.bf16.msra.mxu0 %v497
  %631 = vmatpush.bf16.msra.mxu0 %v496
  %632 = vmatpush.bf16.msra.mxu0 %v495
  %633 = vmatpush.bf16.msra.mxu0 %v494
  %634 = vmatpush.bf16.msra.mxu0 %v493
  %635 = vmatpush.bf16.msra.mxu0 %v492
  %636 = vmatpush.bf16.msra.mxu0 %v491
  %637 = vmatmul.bf16.gmra.mxu0 %v268
  %v638 = vpop.f32.mrf.mxu0
  %v639 = vadd.f32 %v590, %v638
  %v640 = vpop.f32.mrf.mxu0
  %v641 = vadd.f32 %v592, %v640
  %642 = vmatmul.bf16.gmra.mxu0 %v273
  %v643 = vpop.f32.mrf.mxu0
  %v644 = vadd.f32 %v595, %v643
  %v645 = vpop.f32.mrf.mxu0
  %v646 = vadd.f32 %v597, %v645
  %647 = vmatmul.bf16.gmra.mxu0 %v278
  %v648 = vpop.f32.mrf.mxu0
  %v649 = vadd.f32 %v600, %v648
  %v650 = vpop.f32.mrf.mxu0
  %v651 = vadd.f32 %v602, %v650
  %652 = vmatmul.bf16.gmra.mxu0 %v283
  %v653 = vpop.f32.mrf.mxu0
  %v654 = vadd.f32 %v605, %v653
  %v655 = vpop.f32.mrf.mxu0
  %v656 = vadd.f32 %v607, %v655
  %657 = vmatmul.bf16.gmra.mxu0 %v288
  %v658 = vpop.f32.mrf.mxu0
  %v659 = vadd.f32 %v610, %v658
  %v660 = vpop.f32.mrf.mxu0
  %v661 = vadd.f32 %v612, %v660
  %662 = vmatmul.bf16.gmra.mxu0 %v293
  %v663 = vpop.f32.mrf.mxu0
  %v664 = vadd.f32 %v615, %v663
  %v665 = vpop.f32.mrf.mxu0
  %v666 = vadd.f32 %v617, %v665
  %667 = vmatmul.bf16.gmra.mxu0 %v298
  %v668 = vpop.f32.mrf.mxu0
  %v669 = vadd.f32 %v620, %v668
  %v670 = vpop.f32.mrf.mxu0
  %v671 = vadd.f32 %v622, %v670
  %672 = vmatmul.bf16.gmra.mxu0 %v303
  %v673 = vpop.f32.mrf.mxu0
  %v674 = vadd.f32 %v625, %v673
  %v675 = vpop.f32.mrf.mxu0
  %v676 = vadd.f32 %v627, %v675
  %677 = vdwg.mxu0
  %678 = vmatpush.bf16.msra.mxu0 %v506
  %679 = vmatpush.bf16.msra.mxu0 %v505
  %680 = vmatpush.bf16.msra.mxu0 %v504
  %681 = vmatpush.bf16.msra.mxu0 %v503
  %682 = vmatpush.bf16.msra.mxu0 %v502
  %683 = vmatpush.bf16.msra.mxu0 %v501
  %684 = vmatpush.bf16.msra.mxu0 %v500
  %685 = vmatpush.bf16.msra.mxu0 %v499
  %686 = vmatmul.bf16.gmra.mxu0 %v269
  %v687 = vpop.f32.mrf.mxu0
  %v688 = vadd.f32 %v639, %v687
  %v689 = vpop.f32.mrf.mxu0
  %v690 = vadd.f32 %v641, %v689
  %691 = vmatmul.bf16.gmra.mxu0 %v274
  %v692 = vpop.f32.mrf.mxu0
  %v693 = vadd.f32 %v644, %v692
  %v694 = vpop.f32.mrf.mxu0
  %v695 = vadd.f32 %v646, %v694
  %696 = vmatmul.bf16.gmra.mxu0 %v279
  %v697 = vpop.f32.mrf.mxu0
  %v698 = vadd.f32 %v649, %v697
  %v699 = vpop.f32.mrf.mxu0
  %v700 = vadd.f32 %v651, %v699
  %701 = vmatmul.bf16.gmra.mxu0 %v284
  %v702 = vpop.f32.mrf.mxu0
  %v703 = vadd.f32 %v654, %v702
  %v704 = vpop.f32.mrf.mxu0
  %v705 = vadd.f32 %v656, %v704
  %706 = vmatmul.bf16.gmra.mxu0 %v289
  %v707 = vpop.f32.mrf.mxu0
  %v708 = vadd.f32 %v659, %v707
  %v709 = vpop.f32.mrf.mxu0
  %v710 = vadd.f32 %v661, %v709
  %711 = vmatmul.bf16.gmra.mxu0 %v294
  %v712 = vpop.f32.mrf.mxu0
  %v713 = vadd.f32 %v664, %v712
  %v714 = vpop.f32.mrf.mxu0
  %v715 = vadd.f32 %v666, %v714
  %716 = vmatmul.bf16.gmra.mxu0 %v299
  %v717 = vpop.f32.mrf.mxu0
  %v718 = vadd.f32 %v669, %v717
  %v719 = vpop.f32.mrf.mxu0
  %v720 = vadd.f32 %v671, %v719
  %721 = vmatmul.bf16.gmra.mxu0 %v304
  %v722 = vpop.f32.mrf.mxu0
  %v723 = vadd.f32 %v674, %v722
  %v724 = vpop.f32.mrf.mxu0
  %v725 = vadd.f32 %v676, %v724
  %726 = vdwg.mxu0
  %727 = vmatpush.bf16.msra.mxu0 %v514
  %728 = vmatpush.bf16.msra.mxu0 %v513
  %729 = vmatpush.bf16.msra.mxu0 %v512
  %730 = vmatpush.bf16.msra.mxu0 %v511
  %731 = vmatpush.bf16.msra.mxu0 %v510
  %732 = vmatpush.bf16.msra.mxu0 %v509
  %733 = vmatpush.bf16.msra.mxu0 %v508
  %734 = vmatpush.bf16.msra.mxu0 %v507
  %735 = vmatmul.bf16.gmra.mxu0 %v270
  %v736 = vpop.f32.mrf.mxu0
  %v737 = vadd.f32 %v688, %v736
  %v738 = vpop.f32.mrf.mxu0
  %v739 = vadd.f32 %v690, %v738
  %740 = vmatmul.bf16.gmra.mxu0 %v275
  %v741 = vpop.f32.mrf.mxu0
  %v742 = vadd.f32 %v693, %v741
  %v743 = vpop.f32.mrf.mxu0
  %v744 = vadd.f32 %v695, %v743
  %745 = vmatmul.bf16.gmra.mxu0 %v280
  %v746 = vpop.f32.mrf.mxu0
  %v747 = vadd.f32 %v698, %v746
  %v748 = vpop.f32.mrf.mxu0
  %v749 = vadd.f32 %v700, %v748
  %750 = vmatmul.bf16.gmra.mxu0 %v285
  %v751 = vpop.f32.mrf.mxu0
  %v752 = vadd.f32 %v703, %v751
  %v753 = vpop.f32.mrf.mxu0
  %v754 = vadd.f32 %v705, %v753
  %755 = vmatmul.bf16.gmra.mxu0 %v290
  %v756 = vpop.f32.mrf.mxu0
  %v757 = vadd.f32 %v708, %v756
  %v758 = vpop.f32.mrf.mxu0
  %v759 = vadd.f32 %v710, %v758
  %760 = vmatmul.bf16.gmra.mxu0 %v295
  %v761 = vpop.f32.mrf.mxu0
  %v762 = vadd.f32 %v713, %v761
  %v763 = vpop.f32.mrf.mxu0
  %v764 = vadd.f32 %v715, %v763
  %765 = vmatmul.bf16.gmra.mxu0 %v300
  %v766 = vpop.f32.mrf.mxu0
  %v767 = vadd.f32 %v718, %v766
  %v768 = vpop.f32.mrf.mxu0
  %v769 = vadd.f32 %v720, %v768
  %770 = vmatmul.bf16.gmra.mxu0 %v305
  %v771 = vpop.f32.mrf.mxu0
  %v772 = vadd.f32 %v723, %v771
  %v773 = vpop.f32.mrf.mxu0
  %v774 = vadd.f32 %v725, %v773
  %775 = vdwg.mxu0
  %776 = vmatpush.bf16.msra.mxu0 0
  %777 = vmatpush.bf16.msra.mxu0 0
  %778 = vmatpush.bf16.msra.mxu0 0
  %779 = vmatpush.bf16.msra.mxu0 0
  %780 = vmatpush.bf16.msra.mxu0 %v518
  %781 = vmatpush.bf16.msra.mxu0 %v517
  %782 = vmatpush.bf16.msra.mxu0 %v516
  %783 = vmatpush.bf16.msra.mxu0 %v515
  %784 = vmatmul.bf16.gmra.mxu0 %v557
  %v785 = vpop.f32.mrf.mxu0
  %v786 = vadd.f32 %v737, %v785
  %v787 = vpop.f32.mrf.mxu0
  %v788 = vadd.f32 %v739, %v787
  %789 = vmatmul.bf16.gmra.mxu0 %v560
  %v790 = vpop.f32.mrf.mxu0
  %v791 = vadd.f32 %v742, %v790
  %v792 = vpop.f32.mrf.mxu0
  %v793 = vadd.f32 %v744, %v792
  %794 = vmatmul.bf16.gmra.mxu0 %v563
  %v795 = vpop.f32.mrf.mxu0
  %v796 = vadd.f32 %v747, %v795
  %v797 = vpop.f32.mrf.mxu0
  %v798 = vadd.f32 %v749, %v797
  %799 = vmatmul.bf16.gmra.mxu0 %v566
  %v800 = vpop.f32.mrf.mxu0
  %v801 = vadd.f32 %v752, %v800
  %v802 = vpop.f32.mrf.mxu0
  %v803 = vadd.f32 %v754, %v802
  %804 = vmatmul.bf16.gmra.mxu0 %v569
  %v805 = vpop.f32.mrf.mxu0
  %v806 = vadd.f32 %v757, %v805
  %v807 = vpop.f32.mrf.mxu0
  %v808 = vadd.f32 %v759, %v807
  %809 = vmatmul.bf16.gmra.mxu0 %v572
  %v810 = vpop.f32.mrf.mxu0
  %v811 = vadd.f32 %v762, %v810
  %v812 = vpop.f32.mrf.mxu0
  %v813 = vadd.f32 %v764, %v812
  %814 = vmatmul.bf16.gmra.mxu0 %v575
  %v815 = vpop.f32.mrf.mxu0
  %v816 = vadd.f32 %v767, %v815
  %v817 = vpop.f32.mrf.mxu0
  %v818 = vadd.f32 %v769, %v817
  %819 = vmatmul.bf16.gmra.mxu0 %v578
  %v820 = vpop.f32.mrf.mxu0
  %v821 = vadd.f32 %v772, %v820
  %v822 = vpop.f32.mrf.mxu0
  %v823 = vadd.f32 %v774, %v822
  %824 = vdwg.mxu0
  %v825 = vmax.f32 %v786, 0.0
  %v826 = vmax.f32 %v788, 0.0
  %v827 = vmax.f32 %v791, 0.0
  %v828 = vmax.f32 %v793, 0.0
  %v829 = vmax.f32 %v796, 0.0
  %v830 = vmax.f32 %v798, 0.0
  %v831 = vmax.f32 %v801, 0.0
  %v832 = vmax.f32 %v803, 0.0
  %v833 = vmax.f32 %v806, 0.0
  %v834 = vmax.f32 %v808, 0.0
  %v835 = vmax.f32 %v811, 0.0
  %v836 = vmax.f32 %v813, 0.0
  %v837 = vmax.f32 %v816, 0.0
  %v838 = vmax.f32 %v818, 0.0
  %v839 = vmax.f32 %v821, 0.0
  %v840 = vmax.f32 %v823, 0.0
  %v841 = vpack.c.bf16 %v825, %v825
  %v842 = vpack.c.bf16 %v826, %v826
  %v843 = vpack.c.bf16 %v827, %v827
  %v844 = vpack.c.bf16 %v828, %v828
  %v845 = vpack.c.bf16 %v829, %v829
  %v846 = vpack.c.bf16 %v830, %v830
  %v847 = vpack.c.bf16 %v831, %v831
  %v848 = vpack.c.bf16 %v832, %v832
  %v849 = vpack.c.bf16 %v833, %v833
  %v850 = vpack.c.bf16 %v834, %v834
  %v851 = vpack.c.bf16 %v835, %v835
  %v852 = vpack.c.bf16 %v836, %v836
  %v853 = vpack.c.bf16 %v837, %v837
  %v854 = vpack.c.bf16 %v838, %v838
  %v855 = vpack.c.bf16 %v839, %v839
  %v856 = vpack.c.bf16 %v840, %v840
  %vm857 = vcmask 519168
  %858 = vst.msk [vmem:[%s3] sm:$0xf] %vm857, %v841
  %859 = vst.msk [vmem:[%s3 + $0x4] sm:$0xf] %vm857, %v842
  %860 = vst.msk [vmem:[%s3 + $0x8] sm:$0xf] %vm857, %v843
  %861 = vst.msk [vmem:[%s3 + $0xc] sm:$0xf] %vm857, %v844
  %862 = vst.msk [vmem:[%s3 + $0x10] sm:$0xf] %vm857, %v845
  %863 = vst.msk [vmem:[%s3 + $0x14] sm:$0xf] %vm857, %v846
  %864 = vst.msk [vmem:[%s3 + $0x18] sm:$0xf] %vm857, %v847
  %865 = vst.msk [vmem:[%s3 + $0x1c] sm:$0xf] %vm857, %v848
  %866 = vst.msk [vmem:[%s3 + $0x20] sm:$0xf] %vm857, %v849
  %867 = vst.msk [vmem:[%s3 + $0x24] sm:$0xf] %vm857, %v850
  %868 = vst.msk [vmem:[%s3 + $0x28] sm:$0xf] %vm857, %v851
  %869 = vst.msk [vmem:[%s3 + $0x2c] sm:$0xf] %vm857, %v852
  %870 = vst.msk [vmem:[%s3 + $0x30] sm:$0xf] %vm857, %v853
  %871 = vst.msk [vmem:[%s3 + $0x34] sm:$0xf] %vm857, %v854
  %872 = vst.msk [vmem:[%s3 + $0x38] sm:$0xf] %vm857, %v855
  %873 = vst.msk [vmem:[%s3 + $0x3c] sm:$0xf] %vm857, %v856
  // Predicated region
  $region14: #{cnn_forward.16} parent=0 // pred_check
    _
  $region15: #{cnn_forward.16} parent=0 // pred_check_branch
    %875 = sbr.rel (0) target = $region17
  $region16: #{cnn_forward.16} parent=0 // pred_region
    _
  $region17: #{cnn_forward.16} parent=0 // pred_fallthru
    _
  // Predicated region
  $region18: #{cnn_forward.16} parent=0 // pred_check
    _
  $region19: #{cnn_forward.16} parent=0 // pred_check_branch
    %877 = sbr.rel (0) target = $region21
  $region20: #{cnn_forward.16} parent=0 // pred_region
    _
  $region21: #{cnn_forward.16} parent=0 // pred_fallthru
    _

// kernel: cnn_forward.17
$region0: #{cnn_forward.17}
  #allocation0 [shape = 'u32[]', space=smem, size = 0x4, offset = 0x4, fixed_abs, tag = 'smem constant byte address 0x4 - core index']
  #allocation1 [shape = 'u32[72,128]{1,0:T(1,128)}', space=vmem, size = 0x9000, scoped, tag = 'internal scratch']
  %s0 = inlined_call_operand.vmem [shape: bf16[2,4,2,4,2,64], index: 0, kind: input, shape index: {}]
  %s1 = inlined_call_operand.vmem [shape: bf16[2,4,4,64], index: 1, kind: output, shape index: {}]
  %s2 = sld [smem:[#allocation0]]
  $region37: #{cnn_forward.17} parent=0
    _
  %s4 = ssub.s32 1, %s2
  %s5 = scalar_select 0, %s4, %s2
  loop: start=0, step=1, limit=4
  $region2: #{cnn_forward.17} parent=0 // loop_pre_header
    _
  $region3: #{cnn_forward.17} parent=0 // loop_header
    %s7 = sphi 0, %s11
    %p8 = scmp.ge.s32.totalorder %s7, 4
    %s17 = sphi 0, %s19
    %s20 = sphi 0, %s17
    %s21 = sphi 0, %s20
    %s37 = sphi 0, %s21
    %s43 = sphi 0, %s45
    %s46 = sphi 0, %s43
    %s47 = sphi 0, %s46
    %s63 = sphi 0, %s47
  $region4: #{cnn_forward.17} parent=0 // loop_header_branch
    %10 = sbr.rel (%p8) target = $region8
  $region5: #{cnn_forward.17} parent=0 // loop_body
    %s12 = ssub.s32 %s7, 1
    %s13 = ssub.s32 %s7, 2
    %s14 = sadd.s32 %s7, 1
    %s15 = ssub.s32 %s7, %s14
    %p16 = scmp.eq.s32.totalorder %s15, 0
    %s18 = sadd.s32 %s17, 1
    %s19 = scalar_select %p16, %s17, %s18
    %p22 = pneg %p16
    %p23 = scmp.eq.s32.totalorder %s7, 1
    %p24 = por %p22, %p23
    %p25 = scmp.ne.s32.totalorder %s17, %s20
    %p26 = scmp.eq.s32.totalorder %s7, 0
    %p27 = por %p25, %p26
    %p28 = scmp.ne.s32.totalorder %s17, %s20
    %p29 = scmp.eq.s32.totalorder %s12, 1
    %p30 = por %p28, %p29
    %p31 = scmp.ne.s32.totalorder %s20, %s21
    %p32 = scmp.eq.s32.totalorder %s12, 0
    %p33 = por %p31, %p32
    %p34 = scmp.ne.s32.totalorder %s20, %s21
    %p35 = scmp.eq.s32.totalorder %s13, 1
    %p36 = por %p34, %p35
    %p38 = scmp.ne.s32.totalorder %s21, %s37
    %p39 = scmp.eq.s32.totalorder %s13, 0
    %p40 = por %p38, %p39
    %s41 = ssub.s32 %s7, %s14
    %p42 = scmp.eq.s32.totalorder %s41, 0
    %s44 = sadd.s32 %s43, 1
    %s45 = scalar_select %p42, %s43, %s44
    %p48 = pneg %p42
    %p49 = scmp.eq.s32.totalorder %s7, 1
    %p50 = por %p48, %p49
    %p51 = scmp.ne.s32.totalorder %s43, %s46
    %p52 = scmp.eq.s32.totalorder %s7, 0
    %p53 = por %p51, %p52
    %p54 = scmp.ne.s32.totalorder %s43, %s46
    %p55 = scmp.eq.s32.totalorder %s12, 1
    %p56 = por %p54, %p55
    %p57 = scmp.ne.s32.totalorder %s46, %s47
    %p58 = scmp.eq.s32.totalorder %s12, 0
    %p59 = por %p57, %p58
    %p60 = scmp.ne.s32.totalorder %s46, %s47
    %p61 = scmp.eq.s32.totalorder %s13, 1
    %p62 = por %p60, %p61
    %p64 = scmp.ne.s32.totalorder %s47, %s63
    %p65 = scmp.eq.s32.totalorder %s13, 0
    %p66 = por %p64, %p65
    %p67 = scmp.le.s32.totalorder 1, %s7
    %p68 = scmp.lt.s32.totalorder %s7, 3
    %p69 = pnand %p67, %p68
    %p70 = pneg %p69
    // Predicated region
    $region9: #{cnn_forward.17} parent=5 // pred_check
      _
    $region10: #{cnn_forward.17} parent=5 // pred_check_branch
      %72 = sbr.rel (%p69) target = $region12
    $region11: #{cnn_forward.17} parent=5 // pred_region
      %s73 = ssub.s32 %s7, 1
    $region12: #{cnn_forward.17} parent=5 // pred_fallthru
      _
    %p74 = scmp.lt.s32.totalorder %s7, 2
    // Predicated region
    $region13: #{cnn_forward.17} parent=5 // pred_check
      %p75 = pneg %p74
    $region14: #{cnn_forward.17} parent=5 // pred_check_branch
      %77 = sbr.rel (%p75) target = $region16
    $region15: #{cnn_forward.17} parent=5 // pred_region
      // Predicated region
      $region17: #{cnn_forward.17} parent=15 // pred_check
        %p78 = pneg %p27
      $region18: #{cnn_forward.17} parent=15 // pred_check_branch
        %80 = sbr.rel (%p78) target = $region20
      $region19: #{cnn_forward.17} parent=15 // pred_region
        %p81 = scmp.lt.s32.totalorder %s7, 1
        %s82 = scalar_select %p81, %s7, 1
        %s83 = smul.addr %s82, 32
        %s84 = scalar_lea.vmem %s0, %s83
      $region20: #{cnn_forward.17} parent=15 // pred_fallthru
        _
    $region16: #{cnn_forward.17} parent=5 // pred_fallthru
      _
    %p85 = scmp.le.s32.totalorder 1, %s7
    %p86 = scmp.lt.s32.totalorder %s7, 3
    %p87 = pnand %p85, %p86
    %p88 = pneg %p87
    // Predicated region
    $region21: #{cnn_forward.17} parent=5 // pred_check
      _
    $region22: #{cnn_forward.17} parent=5 // pred_check_branch
      %90 = sbr.rel (%p87) target = $region24
    $region23: #{cnn_forward.17} parent=5 // pred_region
      %s91 = ssub.s32 %s7, 1
      %p92 = scmp.lt.s32.totalorder %s12, 1
      %s93 = scalar_select %p92, %s12, 1
      %s94 = smul.addr %s93, 32
      %s95 = scalar_lea.vmem %s0, %s94
      %p96 = pneg %p33
      %p97 = pneg %p30
      %p98 = pneg %p59
      %p99 = pneg %p56
      %p100 = scmp.lt.s32.totalorder %s12, 1
      %s101 = scalar_select %p100, %s12, 1
      %s102 = smul.addr %s101, 4
      %s103 = smul.addr %s102, 2
      %s104 = scalar_lea.vmem %s1, %s103
      %p105 = scmp.lt.s32.totalorder %s12, 1
      %s106 = scalar_select %p105, %s12, 1
      %s107 = smul.addr %s106, 32
      %s108 = scalar_lea.vmem %s0, %s107
      %p109 = scmp.lt.s32.totalorder %s12, 1
      %s110 = scalar_select %p109, %s12, 1
      %s111 = smul.addr %s110, 4
      %s112 = smul.addr %s111, 2
      %s113 = scalar_lea.vmem %s1, %s112
      %v114 = vld [vmem:[%s108] sm:$0x1]
      %v115 = vld [vmem:[%s108 + $0x1] sm:$0x1]
      %v116 = vld [vmem:[%s108 + $0x2] sm:$0x1]
      %v117 = vld [vmem:[%s108 + $0x3] sm:$0x1]
      %v118 = vld [vmem:[%s108 + $0x4] sm:$0x1]
      %v119 = vld [vmem:[%s108 + $0x5] sm:$0x1]
      %v120 = vld [vmem:[%s108 + $0x6] sm:$0x1]
      %v121 = vld [vmem:[%s108 + $0x7] sm:$0x1]
      %v122 = vld [vmem:[%s108 + $0x8] sm:$0x1]
      %v123 = vld [vmem:[%s108 + $0x9] sm:$0x1]
      %v124 = vld [vmem:[%s108 + $0xa] sm:$0x1]
      %v125 = vld [vmem:[%s108 + $0xb] sm:$0x1]
      %v126 = vld [vmem:[%s108 + $0xc] sm:$0x1]
      %v127 = vld [vmem:[%s108 + $0xd] sm:$0x1]
      %v128 = vld [vmem:[%s108 + $0xe] sm:$0x1]
      %v129 = vld [vmem:[%s108 + $0xf] sm:$0x1]
      %v130 = vld [vmem:[%s108 + $0x10] sm:$0x1]
      %v131 = vld [vmem:[%s108 + $0x11] sm:$0x1]
      %v132 = vld [vmem:[%s108 + $0x12] sm:$0x1]
      %v133 = vld [vmem:[%s108 + $0x13] sm:$0x1]
      %v134 = vld [vmem:[%s108 + $0x14] sm:$0x1]
      %v135 = vld [vmem:[%s108 + $0x15] sm:$0x1]
      %v136 = vld [vmem:[%s108 + $0x16] sm:$0x1]
      %v137 = vld [vmem:[%s108 + $0x17] sm:$0x1]
      %v138 = vld [vmem:[%s108 + $0x18] sm:$0x1]
      %v139 = vld [vmem:[%s108 + $0x19] sm:$0x1]
      %v140 = vld [vmem:[%s108 + $0x1a] sm:$0x1]
      %v141 = vld [vmem:[%s108 + $0x1b] sm:$0x1]
      %v142 = vld [vmem:[%s108 + $0x1c] sm:$0x1]
      %v143 = vld [vmem:[%s108 + $0x1d] sm:$0x1]
      %v144 = vld [vmem:[%s108 + $0x1e] sm:$0x1]
      %v145 = vld [vmem:[%s108 + $0x1f] sm:$0x1]
      %v146 = vunpack.c.l.bf16 %v114
      %v147 = vunpack.c.l.bf16 %v115
      %v148 = vunpack.c.l.bf16 %v116
      %v149 = vunpack.c.l.bf16 %v117
      %v150 = vunpack.c.l.bf16 %v122
      %v151 = vunpack.c.l.bf16 %v123
      %v152 = vunpack.c.l.bf16 %v124
      %v153 = vunpack.c.l.bf16 %v125
      %v154 = vunpack.c.l.bf16 %v130
      %v155 = vunpack.c.l.bf16 %v131
      %v156 = vunpack.c.l.bf16 %v132
      %v157 = vunpack.c.l.bf16 %v133
      %v158 = vunpack.c.l.bf16 %v138
      %v159 = vunpack.c.l.bf16 %v139
      %v160 = vunpack.c.l.bf16 %v140
      %v161 = vunpack.c.l.bf16 %v141
      %v162 = vunpack.c.l.bf16 %v118
      %v163 = vunpack.c.l.bf16 %v119
      %v164 = vunpack.c.l.bf16 %v120
      %v165 = vunpack.c.l.bf16 %v121
      %v166 = vunpack.c.l.bf16 %v126
      %v167 = vunpack.c.l.bf16 %v127
      %v168 = vunpack.c.l.bf16 %v128
      %v169 = vunpack.c.l.bf16 %v129
      %v170 = vunpack.c.l.bf16 %v134
      %v171 = vunpack.c.l.bf16 %v135
      %v172 = vunpack.c.l.bf16 %v136
      %v173 = vunpack.c.l.bf16 %v137
      %v174 = vunpack.c.l.bf16 %v142
      %v175 = vunpack.c.l.bf16 %v143
      %v176 = vunpack.c.l.bf16 %v144
      %v177 = vunpack.c.l.bf16 %v145
      %v178 = vmax.f32 %v146, %v162
      %v179 = vmax.f32 %v147, %v163
      %v180 = vmax.f32 %v148, %v164
      %v181 = vmax.f32 %v149, %v165
      %v182 = vmax.f32 %v150, %v166
      %v183 = vmax.f32 %v151, %v167
      %v184 = vmax.f32 %v152, %v168
      %v185 = vmax.f32 %v153, %v169
      %v186 = vmax.f32 %v154, %v170
      %v187 = vmax.f32 %v155, %v171
      %v188 = vmax.f32 %v156, %v172
      %v189 = vmax.f32 %v157, %v173
      %v190 = vmax.f32 %v158, %v174
      %v191 = vmax.f32 %v159, %v175
      %v192 = vmax.f32 %v160, %v176
      %v193 = vmax.f32 %v161, %v177
      %v194 = vpack.c.bf16 %v178, %v178
      %v195 = vpack.c.bf16 %v179, %v179
      %v196 = vpack.c.bf16 %v180, %v180
      %v197 = vpack.c.bf16 %v181, %v181
      %v198 = vpack.c.bf16 %v182, %v182
      %v199 = vpack.c.bf16 %v183, %v183
      %v200 = vpack.c.bf16 %v184, %v184
      %v201 = vpack.c.bf16 %v185, %v185
      %v202 = vpack.c.bf16 %v186, %v186
      %v203 = vpack.c.bf16 %v187, %v187
      %v204 = vpack.c.bf16 %v188, %v188
      %v205 = vpack.c.bf16 %v189, %v189
      %v206 = vpack.c.bf16 %v190, %v190
      %v207 = vpack.c.bf16 %v191, %v191
      %v208 = vpack.c.bf16 %v192, %v192
      %v209 = vpack.c.bf16 %v193, %v193
      %v210 = vunpack.c.l.bf16 %v194
      %v211 = vunpack.c.l.bf16 %v195
      %v212 = vunpack.c.l.bf16 %v196
      %v213 = vunpack.c.l.bf16 %v197
      %v214 = vunpack.c.l.bf16 %v198
      %v215 = vunpack.c.l.bf16 %v199
      %v216 = vunpack.c.l.bf16 %v200
      %v217 = vunpack.c.l.bf16 %v201
      %v218 = vunpack.c.l.bf16 %v202
      %v219 = vunpack.c.l.bf16 %v203
      %v220 = vunpack.c.l.bf16 %v204
      %v221 = vunpack.c.l.bf16 %v205
      %v222 = vunpack.c.l.bf16 %v206
      %v223 = vunpack.c.l.bf16 %v207
      %v224 = vunpack.c.l.bf16 %v208
      %v225 = vunpack.c.l.bf16 %v209
      %v242 = vrot.slane %v210, 1
      %v243 = vrot.slane %v211, 1
      %v244 = vrot.slane %v212, 1
      %v245 = vrot.slane %v213, 1
      %v246 = vrot.slane %v214, 1
      %v247 = vrot.slane %v215, 1
      %v248 = vrot.slane %v216, 1
      %v249 = vrot.slane %v217, 1
      %v250 = vrot.slane %v218, 1
      %v251 = vrot.slane %v219, 1
      %v252 = vrot.slane %v220, 1
      %v253 = vrot.slane %v221, 1
      %v254 = vrot.slane %v222, 1
      %v255 = vrot.slane %v223, 1
      %v256 = vrot.slane %v224, 1
      %v257 = vrot.slane %v225, 1
      %v274 = vmax.f32 %v210, %v242
      %v275 = vmax.f32 %v211, %v243
      %v276 = vmax.f32 %v212, %v244
      %v277 = vmax.f32 %v213, %v245
      %v278 = vmax.f32 %v214, %v246
      %v279 = vmax.f32 %v215, %v247
      %v280 = vmax.f32 %v216, %v248
      %v281 = vmax.f32 %v217, %v249
      %v282 = vmax.f32 %v218, %v250
      %v283 = vmax.f32 %v219, %v251
      %v284 = vmax.f32 %v220, %v252
      %v285 = vmax.f32 %v221, %v253
      %v286 = vmax.f32 %v222, %v254
      %v287 = vmax.f32 %v223, %v255
      %v288 = vmax.f32 %v224, %v256
      %v289 = vmax.f32 %v225, %v257
      %v290 = vpack.c.bf16 %v274, %v274
      %v291 = vpack.c.bf16 %v275, %v275
      %v292 = vpack.c.bf16 %v276, %v276
      %v293 = vpack.c.bf16 %v277, %v277
      %v294 = vpack.c.bf16 %v278, %v278
      %v295 = vpack.c.bf16 %v279, %v279
      %v296 = vpack.c.bf16 %v280, %v280
      %v297 = vpack.c.bf16 %v281, %v281
      %v298 = vpack.c.bf16 %v282, %v282
      %v299 = vpack.c.bf16 %v283, %v283
      %v300 = vpack.c.bf16 %v284, %v284
      %v301 = vpack.c.bf16 %v285, %v285
      %v302 = vpack.c.bf16 %v286, %v286
      %v303 = vpack.c.bf16 %v287, %v287
      %v304 = vpack.c.bf16 %v288, %v288
      %v305 = vpack.c.bf16 %v289, %v289
      %v322 = vrot.slane %v290, 2
      %v323 = vrot.slane %v291, 2
      %v324 = vrot.slane %v292, 2
      %v325 = vrot.slane %v293, 2
      %v326 = vrot.slane %v294, 2
      %v327 = vrot.slane %v295, 2
      %v328 = vrot.slane %v296, 2
      %v329 = vrot.slane %v297, 2
      %v330 = vrot.slane %v298, 2
      %v331 = vrot.slane %v299, 2
      %v332 = vrot.slane %v300, 2
      %v333 = vrot.slane %v301, 2
      %v334 = vrot.slane %v302, 2
      %v335 = vrot.slane %v303, 2
      %v336 = vrot.slane %v304, 2
      %v337 = vrot.slane %v305, 2
      %vm338 = vcmask 1041408
      %v341 = vsel %vm338, %v290, %v322
      %v344 = vsel %vm338, %v291, %v323
      %v347 = vsel %vm338, %v292, %v324
      %v350 = vsel %vm338, %v293, %v325
      %v353 = vsel %vm338, %v294, %v326
      %v356 = vsel %vm338, %v295, %v327
      %v359 = vsel %vm338, %v296, %v328
      %v362 = vsel %vm338, %v297, %v329
      %v365 = vsel %vm338, %v298, %v330
      %v368 = vsel %vm338, %v299, %v331
      %v371 = vsel %vm338, %v300, %v332
      %v374 = vsel %vm338, %v301, %v333
      %v377 = vsel %vm338, %v302, %v334
      %v380 = vsel %vm338, %v303, %v335
      %v383 = vsel %vm338, %v304, %v336
      %v386 = vsel %vm338, %v305, %v337
      %387 = vst [vmem:[#allocation1] ss:$2 sm:$0xff] %v341
      %v388 = vld.sshfl [vmem:[#allocation1] sm:$0xff pattern:$0x75643120]
      %s390 = scalar_lea.vmem [#allocation1], 16
      %391 = vst [vmem:[%s390] ss:$2 sm:$0xff] %v344
      %v392 = vld.sshfl [vmem:[#allocation1 + $0x10] sm:$0xff pattern:$0x75643120]
      %s394 = scalar_lea.vmem [#allocation1], 32
      %395 = vst [vmem:[%s394] ss:$2 sm:$0xff] %v347
      %v396 = vld.sshfl [vmem:[#allocation1 + $0x20] sm:$0xff pattern:$0x75643120]
      %s398 = scalar_lea.vmem [#allocation1], 48
      %399 = vst [vmem:[%s398] ss:$2 sm:$0xff] %v350
      %v400 = vld.sshfl [vmem:[#allocation1 + $0x30] sm:$0xff pattern:$0x75643120]
      %402 = vst [vmem:[#allocation1] ss:$2 sm:$0xff] %v353
      %v403 = vld.sshfl [vmem:[#allocation1] sm:$0xff pattern:$0x75643120]
      %405 = vst [vmem:[%s390] ss:$2 sm:$0xff] %v356
      %v406 = vld.sshfl [vmem:[#allocation1 + $0x10] sm:$0xff pattern:$0x75643120]
      %408 = vst [vmem:[%s394] ss:$2 sm:$0xff] %v359
      %v409 = vld.sshfl [vmem:[#allocation1 + $0x20] sm:$0xff pattern:$0x75643120]
      %411 = vst [vmem:[%s398] ss:$2 sm:$0xff] %v362
      %v412 = vld.sshfl [vmem:[#allocation1 + $0x30] sm:$0xff pattern:$0x75643120]
      %414 = vst [vmem:[#allocation1] ss:$2 sm:$0xff] %v365
      %v415 = vld.sshfl [vmem:[#allocation1] sm:$0xff pattern:$0x75643120]
      %417 = vst [vmem:[%s390] ss:$2 sm:$0xff] %v368
      %v418 = vld.sshfl [vmem:[#allocation1 + $0x10] sm:$0xff pattern:$0x75643120]
      %420 = vst [vmem:[%s394] ss:$2 sm:$0xff] %v371
      %v421 = vld.sshfl [vmem:[#allocation1 + $0x20] sm:$0xff pattern:$0x75643120]
      %423 = vst [vmem:[%s398] ss:$2 sm:$0xff] %v374
      %v424 = vld.sshfl [vmem:[#allocation1 + $0x30] sm:$0xff pattern:$0x75643120]
      %426 = vst [vmem:[#allocation1] ss:$2 sm:$0xff] %v377
      %v427 = vld.sshfl [vmem:[#allocation1] sm:$0xff pattern:$0x75643120]
      %429 = vst [vmem:[%s390] ss:$2 sm:$0xff] %v380
      %v430 = vld.sshfl [vmem:[#allocation1 + $0x10] sm:$0xff pattern:$0x75643120]
      %432 = vst [vmem:[%s394] ss:$2 sm:$0xff] %v383
      %v433 = vld.sshfl [vmem:[#allocation1 + $0x20] sm:$0xff pattern:$0x75643120]
      %435 = vst [vmem:[%s398] ss:$2 sm:$0xff] %v386
      %v436 = vld.sshfl [vmem:[#allocation1 + $0x30] sm:$0xff pattern:$0x75643120]
      %v438 = vunpack.c.l.b16 %v388
      %v439 = vunpack.c.l.b16 %v392
      %v440 = vunpack.c.l.b16 %v396
      %v441 = vunpack.c.l.b16 %v400
      %v442 = vunpack.c.l.b16 %v403
      %v443 = vunpack.c.l.b16 %v406
      %v444 = vunpack.c.l.b16 %v409
      %v445 = vunpack.c.l.b16 %v412
      %v446 = vunpack.c.l.b16 %v415
      %v447 = vunpack.c.l.b16 %v418
      %v448 = vunpack.c.l.b16 %v421
      %v449 = vunpack.c.l.b16 %v424
      %v450 = vunpack.c.l.b16 %v427
      %v451 = vunpack.c.l.b16 %v430
      %v452 = vunpack.c.l.b16 %v433
      %v453 = vunpack.c.l.b16 %v436
      %v454 = vrot.slane %v439, 7
      %vm455 = vcmask 1041409
      %v456 = vsel %vm455, %v454, %v438
      %v457 = vrot.slane %v440, 6
      %vm458 = vcmask 1042434
      %v459 = vsel %vm458, %v457, %v456
      %v460 = vrot.slane %v441, 5
      %vm461 = vcmask 1043459
      %v462 = vsel %vm461, %v460, %v459
      %v463 = vrot.slane %v443, 7
      %v464 = vsel %vm455, %v463, %v442
      %v465 = vrot.slane %v444, 6
      %v466 = vsel %vm458, %v465, %v464
      %v467 = vrot.slane %v445, 5
      %v468 = vsel %vm461, %v467, %v466
      %v469 = vrot.slane %v447, 7
      %v470 = vsel %vm455, %v469, %v446
      %v471 = vrot.slane %v448, 6
      %v472 = vsel %vm458, %v471, %v470
      %v473 = vrot.slane %v449, 5
      %v474 = vsel %vm461, %v473, %v472
      %v475 = vrot.slane %v451, 7
      %v476 = vsel %vm455, %v475, %v450
      %v477 = vrot.slane %v452, 6
      %v478 = vsel %vm458, %v477, %v476
      %v479 = vrot.slane %v453, 5
      %v480 = vsel %vm461, %v479, %v478
      %v481 = vpack.c.b16 %v462, %v462
      %v482 = vpack.c.b16 %v468, %v468
      %v483 = vpack.c.b16 %v474, %v474
      %v484 = vpack.c.b16 %v480, %v480
      %v485 = vrot.slane %v481, 2
      %v486 = vrot.slane %v482, 2
      %v487 = vrot.slane %v483, 2
      %v488 = vrot.slane %v484, 2
      %v491 = vsel %vm338, %v481, %v485
      %v494 = vsel %vm338, %v482, %v486
      %v497 = vsel %vm338, %v483, %v487
      %v500 = vsel %vm338, %v484, %v488
      %vm505 = vcmask 517120
      %506 = vst.msk [vmem:[%s113] sm:$0x3] %vm505, %v491
      %507 = vst.msk [vmem:[%s113 + $0x2] sm:$0x3] %vm505, %v494
      %508 = vst.msk [vmem:[%s113 + $0x4] sm:$0x3] %vm505, %v497
      %509 = vst.msk [vmem:[%s113 + $0x6] sm:$0x3] %vm505, %v500
      %p510 = scmp.lt.s32.totalorder %s12, 1
      %s511 = scalar_select %p510, %s12, 1
      %s512 = smul.addr %s511, 4
      %s513 = smul.addr %s512, 2
      %s514 = scalar_lea.vmem %s1, %s513
      // Predicated region
      $region25: #{cnn_forward.17} parent=23 // pred_check
        %p515 = pneg %p56
      $region26: #{cnn_forward.17} parent=23 // pred_check_branch
        %517 = sbr.rel (%p515) target = $region28
      $region27: #{cnn_forward.17} parent=23 // pred_region
        _
      $region28: #{cnn_forward.17} parent=23 // pred_fallthru
        _
    $region24: #{cnn_forward.17} parent=5 // pred_fallthru
      _
    %p518 = scmp.le.s32.totalorder 2, %s7
    // Predicated region
    $region29: #{cnn_forward.17} parent=5 // pred_check
      %p519 = pneg %p518
    $region30: #{cnn_forward.17} parent=5 // pred_check_branch
      %521 = sbr.rel (%p519) target = $region32
    $region31: #{cnn_forward.17} parent=5 // pred_region
      %s522 = ssub.s32 %s7, 2
      // Predicated region
      $region33: #{cnn_forward.17} parent=31 // pred_check
        %p523 = pneg %p62
      $region34: #{cnn_forward.17} parent=31 // pred_check_branch
        %525 = sbr.rel (%p523) target = $region36
      $region35: #{cnn_forward.17} parent=31 // pred_region
        %p526 = scmp.lt.s32.totalorder %s13, 1
        %s527 = scalar_select %p526, %s13, 1
        %s528 = smul.addr %s527, 4
        %s529 = smul.addr %s528, 2
        %s530 = scalar_lea.vmem %s1, %s529
      $region36: #{cnn_forward.17} parent=31 // pred_fallthru
        _
    $region32: #{cnn_forward.17} parent=5 // pred_fallthru
      _
  $region6: #{cnn_forward.17} parent=0 // loop_footer
    %s11 = sadd.s32 1, %s7
  $region7: #{cnn_forward.17} parent=0 // loop_footer_branch
    %6 = sbr.rel target = $region3
  $region8: #{cnn_forward.17} parent=0 // loop_exit
    _

// kernel: cnn_forward.18
$region0: #{cnn_forward.18}
  #allocation0 [shape = 'u32[]', space=smem, size = 0x4, offset = 0x4, fixed_abs, tag = 'smem constant byte address 0x4 - core index']
  #allocation1 [shape = 'u32[72,128]{1,0:T(1,128)}', space=vmem, size = 0x9000, scoped, tag = 'internal scratch']
  %s0 = inlined_call_operand.vmem [shape: bf16[32,576], index: 0, kind: input, shape index: {}]
  %s1 = inlined_call_operand.vmem [shape: bf16[576,128], index: 1, kind: input, shape index: {}]
  %s2 = inlined_call_operand.vmem [shape: f32[1,128], index: 2, kind: input, shape index: {}]
  %s3 = inlined_call_operand.vmem [shape: bf16[32,128], index: 3, kind: output, shape index: {}]
  %s4 = sld [smem:[#allocation0]]
  $region22: #{cnn_forward.18} parent=0
    _
  %s6 = ssub.s32 1, %s4
  %s7 = scalar_select 0, %s6, %s4
  // Predicated region
  $region2: #{cnn_forward.18} parent=0 // pred_check
    _
  $region3: #{cnn_forward.18} parent=0 // pred_check_branch
    %9 = sbr.rel (0) target = $region5
  $region4: #{cnn_forward.18} parent=0 // pred_region
    _
  $region5: #{cnn_forward.18} parent=0 // pred_fallthru
    _
  // Predicated region
  $region6: #{cnn_forward.18} parent=0 // pred_check
    _
  $region7: #{cnn_forward.18} parent=0 // pred_check_branch
    %11 = sbr.rel (0) target = $region9
  $region8: #{cnn_forward.18} parent=0 // pred_region
    _
  $region9: #{cnn_forward.18} parent=0 // pred_fallthru
    _
  // Predicated region
  $region10: #{cnn_forward.18} parent=0 // pred_check
    _
  $region11: #{cnn_forward.18} parent=0 // pred_check_branch
    %13 = sbr.rel (0) target = $region13
  $region12: #{cnn_forward.18} parent=0 // pred_region
    _
  $region13: #{cnn_forward.18} parent=0 // pred_fallthru
    _
  %v15 = vld [vmem:[%s0] sm:$0xff]
  %v16 = vld [vmem:[%s0 + $0x8] sm:$0xff]
  %v17 = vld [vmem:[%s0 + $0x10] sm:$0xf]
  %v18 = vld [vmem:[%s0 + $0x14] sm:$0xff]
  %v19 = vld [vmem:[%s0 + $0x1c] sm:$0xff]
  %v20 = vld [vmem:[%s0 + $0x24] sm:$0xf]
  %v21 = vld [vmem:[%s0 + $0x28] sm:$0xff]
  %v22 = vld [vmem:[%s0 + $0x30] sm:$0xff]
  %v23 = vld [vmem:[%s0 + $0x38] sm:$0xf]
  %v24 = vld [vmem:[%s0 + $0x3c] sm:$0xff]
  %v25 = vld [vmem:[%s0 + $0x44] sm:$0xff]
  %v26 = vld [vmem:[%s0 + $0x4c] sm:$0xf]
  %v27 = vld [vmem:[%s1] sm:$0xf]
  %v28 = vld [vmem:[%s1 + $0x4] sm:$0xf]
  %v29 = vld [vmem:[%s1 + $0x8] sm:$0xf]
  %v30 = vld [vmem:[%s1 + $0xc] sm:$0xf]
  %v31 = vld [vmem:[%s1 + $0x10] sm:$0xf]
  %v32 = vld [vmem:[%s1 + $0x14] sm:$0xf]
  %v33 = vld [vmem:[%s1 + $0x18] sm:$0xf]
  %v34 = vld [vmem:[%s1 + $0x1c] sm:$0xf]
  %v35 = vld [vmem:[%s1 + $0x20] sm:$0xf]
  %v36 = vld [vmem:[%s1 + $0x24] sm:$0xf]
  %v37 = vld [vmem:[%s1 + $0x28] sm:$0xf]
  %v38 = vld [vmem:[%s1 + $0x2c] sm:$0xf]
  %v39 = vld [vmem:[%s1 + $0x30] sm:$0xf]
  %v40 = vld [vmem:[%s1 + $0x34] sm:$0xf]
  %v41 = vld [vmem:[%s1 + $0x38] sm:$0xf]
  %v42 = vld [vmem:[%s1 + $0x3c] sm:$0xf]
  %v43 = vld [vmem:[%s1 + $0x40] sm:$0xf]
  %v44 = vld [vmem:[%s1 + $0x44] sm:$0xf]
  %v45 = vld [vmem:[%s1 + $0x48] sm:$0xf]
  %v46 = vld [vmem:[%s1 + $0x4c] sm:$0xf]
  %v47 = vld [vmem:[%s1 + $0x50] sm:$0xf]
  %v48 = vld [vmem:[%s1 + $0x54] sm:$0xf]
  %v49 = vld [vmem:[%s1 + $0x58] sm:$0xf]
  %v50 = vld [vmem:[%s1 + $0x5c] sm:$0xf]
  %v51 = vld [vmem:[%s1 + $0x60] sm:$0xf]
  %v52 = vld [vmem:[%s1 + $0x64] sm:$0xf]
  %v53 = vld [vmem:[%s1 + $0x68] sm:$0xf]
  %v54 = vld [vmem:[%s1 + $0x6c] sm:$0xf]
  %v55 = vld [vmem:[%s1 + $0x70] sm:$0xf]
  %v56 = vld [vmem:[%s1 + $0x74] sm:$0xf]
  %v57 = vld [vmem:[%s1 + $0x78] sm:$0xf]
  %v58 = vld [vmem:[%s1 + $0x7c] sm:$0xf]
  %v59 = vld [vmem:[%s1 + $0x80] sm:$0xf]
  %v60 = vld [vmem:[%s1 + $0x84] sm:$0xf]
  %v61 = vld [vmem:[%s1 + $0x88] sm:$0xf]
  %v62 = vld [vmem:[%s1 + $0x8c] sm:$0xf]
  %v63 = vld [vmem:[%s1 + $0x90] sm:$0xf]
  %v64 = vld [vmem:[%s1 + $0x94] sm:$0xf]
  %v65 = vld [vmem:[%s1 + $0x98] sm:$0xf]
  %v66 = vld [vmem:[%s1 + $0x9c] sm:$0xf]
  %v67 = vld [vmem:[%s1 + $0xa0] sm:$0xf]
  %v68 = vld [vmem:[%s1 + $0xa4] sm:$0xf]
  %v69 = vld [vmem:[%s1 + $0xa8] sm:$0xf]
  %v70 = vld [vmem:[%s1 + $0xac] sm:$0xf]
  %v71 = vld [vmem:[%s1 + $0xb0] sm:$0xf]
  %v72 = vld [vmem:[%s1 + $0xb4] sm:$0xf]
  %v73 = vld [vmem:[%s1 + $0xb8] sm:$0xf]
  %v74 = vld [vmem:[%s1 + $0xbc] sm:$0xf]
  %v75 = vld [vmem:[%s1 + $0xc0] sm:$0xf]
  %v76 = vld [vmem:[%s1 + $0xc4] sm:$0xf]
  %v77 = vld [vmem:[%s1 + $0xc8] sm:$0xf]
  %v78 = vld [vmem:[%s1 + $0xcc] sm:$0xf]
  %v79 = vld [vmem:[%s1 + $0xd0] sm:$0xf]
  %v80 = vld [vmem:[%s1 + $0xd4] sm:$0xf]
  %v81 = vld [vmem:[%s1 + $0xd8] sm:$0xf]
  %v82 = vld [vmem:[%s1 + $0xdc] sm:$0xf]
  %v83 = vld [vmem:[%s1 + $0xe0] sm:$0xf]
  %v84 = vld [vmem:[%s1 + $0xe4] sm:$0xf]
  %v85 = vld [vmem:[%s1 + $0xe8] sm:$0xf]
  %v86 = vld [vmem:[%s1 + $0xec] sm:$0xf]
  %v87 = vld [vmem:[%s1 + $0xf0] sm:$0xf]
  %v88 = vld [vmem:[%s1 + $0xf4] sm:$0xf]
  %v89 = vld [vmem:[%s1 + $0xf8] sm:$0xf]
  %v90 = vld [vmem:[%s1 + $0xfc] sm:$0xf]
  %v91 = vld [vmem:[%s1 + $0x100] sm:$0xf]
  %v92 = vld [vmem:[%s1 + $0x104] sm:$0xf]
  %v93 = vld [vmem:[%s1 + $0x108] sm:$0xf]
  %v94 = vld [vmem:[%s1 + $0x10c] sm:$0xf]
  %v95 = vld [vmem:[%s1 + $0x110] sm:$0xf]
  %v96 = vld [vmem:[%s1 + $0x114] sm:$0xf]
  %v97 = vld [vmem:[%s1 + $0x118] sm:$0xf]
  %v98 = vld [vmem:[%s1 + $0x11c] sm:$0xf]
  %v99 = vld [vmem:[%s2] sm:$0x1]
  %v101 = vperm.slane %v99, 0
  %v115 = vunpack.c.l.b16 %v15
  %v116 = vunpack.c.h.b16 %v15
  %v117 = vunpack.c.l.b16 %v16
  %v118 = vunpack.c.h.b16 %v16
  %v119 = vunpack.c.l.b16 %v17
  %v120 = vunpack.c.l.b16 %v18
  %v121 = vunpack.c.h.b16 %v18
  %v122 = vunpack.c.l.b16 %v19
  %v123 = vunpack.c.h.b16 %v19
  %v124 = vunpack.c.l.b16 %v20
  %v125 = vunpack.c.l.b16 %v21
  %v126 = vunpack.c.h.b16 %v21
  %v127 = vunpack.c.l.b16 %v22
  %v128 = vunpack.c.h.b16 %v22
  %v129 = vunpack.c.l.b16 %v23
  %v130 = vunpack.c.l.b16 %v24
  %v131 = vunpack.c.h.b16 %v24
  %v132 = vunpack.c.l.b16 %v25
  %v133 = vunpack.c.h.b16 %v25
  %v134 = vunpack.c.l.b16 %v26
  %v135 = vpack.c.b16 %v120, %v115
  %v136 = vpack.c.b16 %v121, %v116
  %v137 = vpack.c.b16 %v122, %v117
  %v138 = vpack.c.b16 %v123, %v118
  %v139 = vpack.c.b16 %v124, %v119
  %v140 = vpack.c.b16 %v130, %v125
  %v141 = vpack.c.b16 %v131, %v126
  %v142 = vpack.c.b16 %v132, %v127
  %v143 = vpack.c.b16 %v133, %v128
  %v144 = vpack.c.b16 %v134, %v129
  %v225 = vunpack.c.l.b16 %v27
  %v226 = vunpack.c.l.b16 %v28
  %v227 = vunpack.c.l.b16 %v29
  %v228 = vunpack.c.l.b16 %v30
  %v229 = vunpack.c.l.b16 %v31
  %v230 = vunpack.c.l.b16 %v32
  %v231 = vunpack.c.l.b16 %v33
  %v232 = vunpack.c.l.b16 %v34
  %v233 = vunpack.c.l.b16 %v35
  %v234 = vunpack.c.l.b16 %v36
  %v235 = vunpack.c.l.b16 %v37
  %v236 = vunpack.c.l.b16 %v38
  %v237 = vunpack.c.l.b16 %v39
  %v238 = vunpack.c.l.b16 %v40
  %v239 = vunpack.c.l.b16 %v41
  %v240 = vunpack.c.l.b16 %v42
  %v241 = vunpack.c.l.b16 %v43
  %v242 = vunpack.c.l.b16 %v44
  %v243 = vunpack.c.l.b16 %v45
  %v244 = vunpack.c.l.b16 %v46
  %v245 = vunpack.c.l.b16 %v47
  %v246 = vunpack.c.l.b16 %v48
  %v247 = vunpack.c.l.b16 %v49
  %v248 = vunpack.c.l.b16 %v50
  %v249 = vunpack.c.l.b16 %v51
  %v250 = vunpack.c.l.b16 %v52
  %v251 = vunpack.c.l.b16 %v53
  %v252 = vunpack.c.l.b16 %v54
  %v253 = vunpack.c.l.b16 %v55
  %v254 = vunpack.c.l.b16 %v56
  %v255 = vunpack.c.l.b16 %v57
  %v256 = vunpack.c.l.b16 %v58
  %v257 = vunpack.c.l.b16 %v59
  %v258 = vunpack.c.l.b16 %v60
  %v259 = vunpack.c.l.b16 %v61
  %v260 = vunpack.c.l.b16 %v62
  %v261 = vunpack.c.l.b16 %v63
  %v262 = vunpack.c.l.b16 %v64
  %v263 = vunpack.c.l.b16 %v65
  %v264 = vunpack.c.l.b16 %v66
  %v265 = vunpack.c.l.b16 %v67
  %v266 = vunpack.c.l.b16 %v68
  %v267 = vunpack.c.l.b16 %v69
  %v268 = vunpack.c.l.b16 %v70
  %v269 = vunpack.c.l.b16 %v71
  %v270 = vunpack.c.l.b16 %v72
  %v271 = vunpack.c.l.b16 %v73
  %v272 = vunpack.c.l.b16 %v74
  %v273 = vunpack.c.l.b16 %v75
  %v274 = vunpack.c.l.b16 %v76
  %v275 = vunpack.c.l.b16 %v77
  %v276 = vunpack.c.l.b16 %v78
  %v277 = vunpack.c.l.b16 %v79
  %v278 = vunpack.c.l.b16 %v80
  %v279 = vunpack.c.l.b16 %v81
  %v280 = vunpack.c.l.b16 %v82
  %v281 = vunpack.c.l.b16 %v83
  %v282 = vunpack.c.l.b16 %v84
  %v283 = vunpack.c.l.b16 %v85
  %v284 = vunpack.c.l.b16 %v86
  %v285 = vunpack.c.l.b16 %v87
  %v286 = vunpack.c.l.b16 %v88
  %v287 = vunpack.c.l.b16 %v89
  %v288 = vunpack.c.l.b16 %v90
  %v289 = vunpack.c.l.b16 %v91
  %v290 = vunpack.c.l.b16 %v92
  %v291 = vunpack.c.l.b16 %v93
  %v292 = vunpack.c.l.b16 %v94
  %v293 = vunpack.c.l.b16 %v95
  %v294 = vunpack.c.l.b16 %v96
  %v295 = vunpack.c.l.b16 %v97
  %v296 = vunpack.c.l.b16 %v98
  %v297 = vpack.c.b16 %v226, %v225
  %v298 = vpack.c.b16 %v228, %v227
  %v299 = vpack.c.b16 %v230, %v229
  %v300 = vpack.c.b16 %v232, %v231
  %v301 = vpack.c.b16 %v234, %v233
  %v302 = vpack.c.b16 %v236, %v235
  %v303 = vpack.c.b16 %v238, %v237
  %v304 = vpack.c.b16 %v240, %v239
  %v305 = vpack.c.b16 %v242, %v241
  %v306 = vpack.c.b16 %v244, %v243
  %v307 = vpack.c.b16 %v246, %v245
  %v308 = vpack.c.b16 %v248, %v247
  %v309 = vpack.c.b16 %v250, %v249
  %v310 = vpack.c.b16 %v252, %v251
  %v311 = vpack.c.b16 %v254, %v253
  %v312 = vpack.c.b16 %v256, %v255
  %v313 = vpack.c.b16 %v258, %v257
  %v314 = vpack.c.b16 %v260, %v259
  %v315 = vpack.c.b16 %v262, %v261
  %v316 = vpack.c.b16 %v264, %v263
  %v317 = vpack.c.b16 %v266, %v265
  %v318 = vpack.c.b16 %v268, %v267
  %v319 = vpack.c.b16 %v270, %v269
  %v320 = vpack.c.b16 %v272, %v271
  %v321 = vpack.c.b16 %v274, %v273
  %v322 = vpack.c.b16 %v276, %v275
  %v323 = vpack.c.b16 %v278, %v277
  %v324 = vpack.c.b16 %v280, %v279
  %v325 = vpack.c.b16 %v282, %v281
  %v326 = vpack.c.b16 %v284, %v283
  %v327 = vpack.c.b16 %v286, %v285
  %v328 = vpack.c.b16 %v288, %v287
  %v329 = vpack.c.b16 %v290, %v289
  %v330 = vpack.c.b16 %v292, %v291
  %v331 = vpack.c.b16 %v294, %v293
  %v332 = vpack.c.b16 %v296, %v295
  %vm369 = vcmask 523264
  %v371 = vsel %vm369, %v139, 0
  %v374 = vsel %vm369, %v144, 0
  %376 = vmatpush.bf16.msra.mxu0 %v304
  %377 = vmatpush.bf16.msra.mxu0 %v303
  %378 = vmatpush.bf16.msra.mxu0 %v302
  %379 = vmatpush.bf16.msra.mxu0 %v301
  %380 = vmatpush.bf16.msra.mxu0 %v300
  %381 = vmatpush.bf16.msra.mxu0 %v299
  %382 = vmatpush.bf16.msra.mxu0 %v298
  %383 = vmatpush.bf16.msra.mxu0 %v297
  %384 = vmatmul.bf16.gmra.mxu0 %v135
  %v385 = vpop.f32.mrf.mxu0
  %v386 = vadd.f32 %v101, %v385
  %v387 = vpop.f32.mrf.mxu0
  %v388 = vadd.f32 %v101, %v387
  %389 = vmatmul.bf16.gmra.mxu0 %v140
  %v390 = vpop.f32.mrf.mxu0
  %v391 = vadd.f32 %v101, %v390
  %v392 = vpop.f32.mrf.mxu0
  %v393 = vadd.f32 %v101, %v392
  %394 = vdwg.mxu0
  %395 = vmatpush.bf16.msra.mxu0 %v312
  %396 = vmatpush.bf16.msra.mxu0 %v311
  %397 = vmatpush.bf16.msra.mxu0 %v310
  %398 = vmatpush.bf16.msra.mxu0 %v309
  %399 = vmatpush.bf16.msra.mxu0 %v308
  %400 = vmatpush.bf16.msra.mxu0 %v307
  %401 = vmatpush.bf16.msra.mxu0 %v306
  %402 = vmatpush.bf16.msra.mxu0 %v305
  %403 = vmatmul.bf16.gmra.mxu0 %v136
  %v404 = vpop.f32.mrf.mxu0
  %v405 = vadd.f32 %v386, %v404
  %v406 = vpop.f32.mrf.mxu0
  %v407 = vadd.f32 %v388, %v406
  %408 = vmatmul.bf16.gmra.mxu0 %v141
  %v409 = vpop.f32.mrf.mxu0
  %v410 = vadd.f32 %v391, %v409
  %v411 = vpop.f32.mrf.mxu0
  %v412 = vadd.f32 %v393, %v411
  %413 = vdwg.mxu0
  %414 = vmatpush.bf16.msra.mxu0 %v320
  %415 = vmatpush.bf16.msra.mxu0 %v319
  %416 = vmatpush.bf16.msra.mxu0 %v318
  %417 = vmatpush.bf16.msra.mxu0 %v317
  %418 = vmatpush.bf16.msra.mxu0 %v316
  %419 = vmatpush.bf16.msra.mxu0 %v315
  %420 = vmatpush.bf16.msra.mxu0 %v314
  %421 = vmatpush.bf16.msra.mxu0 %v313
  %422 = vmatmul.bf16.gmra.mxu0 %v137
  %v423 = vpop.f32.mrf.mxu0
  %v424 = vadd.f32 %v405, %v423
  %v425 = vpop.f32.mrf.mxu0
  %v426 = vadd.f32 %v407, %v425
  %427 = vmatmul.bf16.gmra.mxu0 %v142
  %v428 = vpop.f32.mrf.mxu0
  %v429 = vadd.f32 %v410, %v428
  %v430 = vpop.f32.mrf.mxu0
  %v431 = vadd.f32 %v412, %v430
  %432 = vdwg.mxu0
  %433 = vmatpush.bf16.msra.mxu0 %v328
  %434 = vmatpush.bf16.msra.mxu0 %v327
  %435 = vmatpush.bf16.msra.mxu0 %v326
  %436 = vmatpush.bf16.msra.mxu0 %v325
  %437 = vmatpush.bf16.msra.mxu0 %v324
  %438 = vmatpush.bf16.msra.mxu0 %v323
  %439 = vmatpush.bf16.msra.mxu0 %v322
  %440 = vmatpush.bf16.msra.mxu0 %v321
  %441 = vmatmul.bf16.gmra.mxu0 %v138
  %v442 = vpop.f32.mrf.mxu0
  %v443 = vadd.f32 %v424, %v442
  %v444 = vpop.f32.mrf.mxu0
  %v445 = vadd.f32 %v426, %v444
  %446 = vmatmul.bf16.gmra.mxu0 %v143
  %v447 = vpop.f32.mrf.mxu0
  %v448 = vadd.f32 %v429, %v447
  %v449 = vpop.f32.mrf.mxu0
  %v450 = vadd.f32 %v431, %v449
  %451 = vdwg.mxu0
  %452 = vmatpush.bf16.msra.mxu0 0
  %453 = vmatpush.bf16.msra.mxu0 0
  %454 = vmatpush.bf16.msra.mxu0 0
  %455 = vmatpush.bf16.msra.mxu0 0
  %456 = vmatpush.bf16.msra.mxu0 %v332
  %457 = vmatpush.bf16.msra.mxu0 %v331
  %458 = vmatpush.bf16.msra.mxu0 %v330
  %459 = vmatpush.bf16.msra.mxu0 %v329
  %460 = vmatmul.bf16.gmra.mxu0 %v371
  %v461 = vpop.f32.mrf.mxu0
  %v462 = vadd.f32 %v443, %v461
  %v463 = vpop.f32.mrf.mxu0
  %v464 = vadd.f32 %v445, %v463
  %465 = vmatmul.bf16.gmra.mxu0 %v374
  %v466 = vpop.f32.mrf.mxu0
  %v467 = vadd.f32 %v448, %v466
  %v468 = vpop.f32.mrf.mxu0
  %v469 = vadd.f32 %v450, %v468
  %470 = vdwg.mxu0
  %v471 = vmax.f32 %v462, 0.0
  %v472 = vmax.f32 %v464, 0.0
  %v473 = vmax.f32 %v467, 0.0
  %v474 = vmax.f32 %v469, 0.0
  %v475 = vpack.c.bf16 %v471, %v471
  %v476 = vpack.c.bf16 %v472, %v472
  %v477 = vpack.c.bf16 %v473, %v473
  %v478 = vpack.c.bf16 %v474, %v474
  %479 = vst [vmem:[%s3] sm:$0xf] %v475
  %480 = vst [vmem:[%s3 + $0x4] sm:$0xf] %v476
  %481 = vst [vmem:[%s3 + $0x8] sm:$0xf] %v477
  %482 = vst [vmem:[%s3 + $0xc] sm:$0xf] %v478
  // Predicated region
  $region14: #{cnn_forward.18} parent=0 // pred_check
    _
  $region15: #{cnn_forward.18} parent=0 // pred_check_branch
    %484 = sbr.rel (0) target = $region17
  $region16: #{cnn_forward.18} parent=0 // pred_region
    _
  $region17: #{cnn_forward.18} parent=0 // pred_fallthru
    _
  // Predicated region
  $region18: #{cnn_forward.18} parent=0 // pred_check
    _
  $region19: #{cnn_forward.18} parent=0 // pred_check_branch
    %486 = sbr.rel (0) target = $region21
  $region20: #{cnn_forward.18} parent=0 // pred_region
    _
  $region21: #{cnn_forward.18} parent=0 // pred_fallthru
    _

// kernel: cnn_forward.20
$region0: #{cnn_forward.20}
  #allocation0 [shape = 'u32[]', space=smem, size = 0x4, offset = 0x4, fixed_abs, tag = 'smem constant byte address 0x4 - core index']
  #allocation1 [shape = 'u32[72,128]{1,0:T(1,128)}', space=vmem, size = 0x9000, scoped, tag = 'internal scratch']
  %s0 = inlined_call_operand.vmem [shape: bf16[2,2,2,2,2,128], index: 0, kind: input, shape index: {}]
  %s1 = inlined_call_operand.vmem [shape: bf16[2,2,2,128], index: 1, kind: output, shape index: {}]
  %s2 = sld [smem:[#allocation0]]
  $region37: #{cnn_forward.20} parent=0
    _
  %s4 = ssub.s32 1, %s2
  %s5 = scalar_select 0, %s4, %s2
  loop: start=0, step=1, limit=4
  $region2: #{cnn_forward.20} parent=0 // loop_pre_header
    _
  $region3: #{cnn_forward.20} parent=0 // loop_header
    %s7 = sphi 0, %s11
    %p8 = scmp.ge.s32.totalorder %s7, 4
    %s17 = sphi 0, %s19
    %s20 = sphi 0, %s17
    %s21 = sphi 0, %s20
    %s37 = sphi 0, %s21
    %s43 = sphi 0, %s45
    %s46 = sphi 0, %s43
    %s47 = sphi 0, %s46
    %s63 = sphi 0, %s47
  $region4: #{cnn_forward.20} parent=0 // loop_header_branch
    %10 = sbr.rel (%p8) target = $region8
  $region5: #{cnn_forward.20} parent=0 // loop_body
    %s12 = ssub.s32 %s7, 1
    %s13 = ssub.s32 %s7, 2
    %s14 = sadd.s32 %s7, 1
    %s15 = ssub.s32 %s7, %s14
    %p16 = scmp.eq.s32.totalorder %s15, 0
    %s18 = sadd.s32 %s17, 1
    %s19 = scalar_select %p16, %s17, %s18
    %p22 = pneg %p16
    %p23 = scmp.eq.s32.totalorder %s7, 1
    %p24 = por %p22, %p23
    %p25 = scmp.ne.s32.totalorder %s17, %s20
    %p26 = scmp.eq.s32.totalorder %s7, 0
    %p27 = por %p25, %p26
    %p28 = scmp.ne.s32.totalorder %s17, %s20
    %p29 = scmp.eq.s32.totalorder %s12, 1
    %p30 = por %p28, %p29
    %p31 = scmp.ne.s32.totalorder %s20, %s21
    %p32 = scmp.eq.s32.totalorder %s12, 0
    %p33 = por %p31, %p32
    %p34 = scmp.ne.s32.totalorder %s20, %s21
    %p35 = scmp.eq.s32.totalorder %s13, 1
    %p36 = por %p34, %p35
    %p38 = scmp.ne.s32.totalorder %s21, %s37
    %p39 = scmp.eq.s32.totalorder %s13, 0
    %p40 = por %p38, %p39
    %s41 = ssub.s32 %s7, %s14
    %p42 = scmp.eq.s32.totalorder %s41, 0
    %s44 = sadd.s32 %s43, 1
    %s45 = scalar_select %p42, %s43, %s44
    %p48 = pneg %p42
    %p49 = scmp.eq.s32.totalorder %s7, 1
    %p50 = por %p48, %p49
    %p51 = scmp.ne.s32.totalorder %s43, %s46
    %p52 = scmp.eq.s32.totalorder %s7, 0
    %p53 = por %p51, %p52
    %p54 = scmp.ne.s32.totalorder %s43, %s46
    %p55 = scmp.eq.s32.totalorder %s12, 1
    %p56 = por %p54, %p55
    %p57 = scmp.ne.s32.totalorder %s46, %s47
    %p58 = scmp.eq.s32.totalorder %s12, 0
    %p59 = por %p57, %p58
    %p60 = scmp.ne.s32.totalorder %s46, %s47
    %p61 = scmp.eq.s32.totalorder %s13, 1
    %p62 = por %p60, %p61
    %p64 = scmp.ne.s32.totalorder %s47, %s63
    %p65 = scmp.eq.s32.totalorder %s13, 0
    %p66 = por %p64, %p65
    %p67 = scmp.le.s32.totalorder 1, %s7
    %p68 = scmp.lt.s32.totalorder %s7, 3
    %p69 = pnand %p67, %p68
    %p70 = pneg %p69
    // Predicated region
    $region9: #{cnn_forward.20} parent=5 // pred_check
      _
    $region10: #{cnn_forward.20} parent=5 // pred_check_branch
      %72 = sbr.rel (%p69) target = $region12
    $region11: #{cnn_forward.20} parent=5 // pred_region
      %s73 = ssub.s32 %s7, 1
    $region12: #{cnn_forward.20} parent=5 // pred_fallthru
      _
    %p74 = scmp.lt.s32.totalorder %s7, 2
    // Predicated region
    $region13: #{cnn_forward.20} parent=5 // pred_check
      %p75 = pneg %p74
    $region14: #{cnn_forward.20} parent=5 // pred_check_branch
      %77 = sbr.rel (%p75) target = $region16
    $region15: #{cnn_forward.20} parent=5 // pred_region
      // Predicated region
      $region17: #{cnn_forward.20} parent=15 // pred_check
        %p78 = pneg %p27
      $region18: #{cnn_forward.20} parent=15 // pred_check_branch
        %80 = sbr.rel (%p78) target = $region20
      $region19: #{cnn_forward.20} parent=15 // pred_region
        %p81 = scmp.lt.s32.totalorder %s7, 1
        %s82 = scalar_select %p81, %s7, 1
        %s83 = smul.addr %s82, 8
        %s84 = scalar_lea.vmem %s0, %s83
      $region20: #{cnn_forward.20} parent=15 // pred_fallthru
        _
    $region16: #{cnn_forward.20} parent=5 // pred_fallthru
      _
    %p85 = scmp.le.s32.totalorder 1, %s7
    %p86 = scmp.lt.s32.totalorder %s7, 3
    %p87 = pnand %p85, %p86
    %p88 = pneg %p87
    // Predicated region
    $region21: #{cnn_forward.20} parent=5 // pred_check
      _
    $region22: #{cnn_forward.20} parent=5 // pred_check_branch
      %90 = sbr.rel (%p87) target = $region24
    $region23: #{cnn_forward.20} parent=5 // pred_region
      %s91 = ssub.s32 %s7, 1
      %p92 = scmp.lt.s32.totalorder %s12, 1
      %s93 = scalar_select %p92, %s12, 1
      %s94 = smul.addr %s93, 8
      %s95 = scalar_lea.vmem %s0, %s94
      %p96 = pneg %p33
      %p97 = pneg %p30
      %p98 = pneg %p59
      %p99 = pneg %p56
      %p100 = scmp.lt.s32.totalorder %s12, 1
      %s101 = scalar_select %p100, %s12, 1
      %s102 = smul.addr %s101, 2
      %s103 = scalar_lea.vmem %s1, %s102
      %p104 = scmp.lt.s32.totalorder %s12, 1
      %s105 = scalar_select %p104, %s12, 1
      %s106 = smul.addr %s105, 8
      %s107 = scalar_lea.vmem %s0, %s106
      %p108 = scmp.lt.s32.totalorder %s12, 1
      %s109 = scalar_select %p108, %s12, 1
      %s110 = smul.addr %s109, 2
      %s111 = scalar_lea.vmem %s1, %s110
      %v112 = vld [vmem:[%s107] sm:$0x1]
      %v113 = vld [vmem:[%s107 + $0x1] sm:$0x1]
      %v114 = vld [vmem:[%s107 + $0x2] sm:$0x1]
      %v115 = vld [vmem:[%s107 + $0x3] sm:$0x1]
      %v116 = vld [vmem:[%s107 + $0x4] sm:$0x1]
      %v117 = vld [vmem:[%s107 + $0x5] sm:$0x1]
      %v118 = vld [vmem:[%s107 + $0x6] sm:$0x1]
      %v119 = vld [vmem:[%s107 + $0x7] sm:$0x1]
      %v120 = vunpack.c.l.bf16 %v112
      %v121 = vunpack.c.l.bf16 %v113
      %v122 = vunpack.c.l.bf16 %v116
      %v123 = vunpack.c.l.bf16 %v117
      %v124 = vunpack.c.l.bf16 %v114
      %v125 = vunpack.c.l.bf16 %v115
      %v126 = vunpack.c.l.bf16 %v118
      %v127 = vunpack.c.l.bf16 %v119
      %v128 = vmax.f32 %v120, %v124
      %v129 = vmax.f32 %v121, %v125
      %v130 = vmax.f32 %v122, %v126
      %v131 = vmax.f32 %v123, %v127
      %v132 = vpack.c.bf16 %v128, %v128
      %v133 = vpack.c.bf16 %v129, %v129
      %v134 = vpack.c.bf16 %v130, %v130
      %v135 = vpack.c.bf16 %v131, %v131
      %v136 = vunpack.c.l.bf16 %v132
      %v137 = vunpack.c.l.bf16 %v133
      %v138 = vunpack.c.l.bf16 %v134
      %v139 = vunpack.c.l.bf16 %v135
      %v144 = vrot.slane %v136, 1
      %v145 = vrot.slane %v137, 1
      %v146 = vrot.slane %v138, 1
      %v147 = vrot.slane %v139, 1
      %v152 = vmax.f32 %v136, %v144
      %v153 = vmax.f32 %v137, %v145
      %v154 = vmax.f32 %v138, %v146
      %v155 = vmax.f32 %v139, %v147
      %v156 = vpack.c.bf16 %v152, %v152
      %v157 = vpack.c.bf16 %v153, %v153
      %v158 = vpack.c.bf16 %v154, %v154
      %v159 = vpack.c.bf16 %v155, %v155
      %v164 = vrot.slane %v156, 3
      %v165 = vrot.slane %v157, 3
      %v166 = vrot.slane %v158, 3
      %v167 = vrot.slane %v159, 3
      %vm168 = vcmask 1040384
      %v171 = vsel %vm168, %v156, %v164
      %v174 = vsel %vm168, %v157, %v165
      %v177 = vsel %vm168, %v158, %v166
      %v180 = vsel %vm168, %v159, %v167
      %181 = vst [vmem:[#allocation1] ss:$4 sm:$0xff] %v171
      %v182 = vld [vmem:[#allocation1] sm:$0xff]
      %s184 = scalar_lea.vmem [#allocation1], 32
      %185 = vst [vmem:[%s184] ss:$4 sm:$0xff] %v174
      %v186 = vld [vmem:[#allocation1 + $0x20] sm:$0xff]
      %188 = vst [vmem:[#allocation1] ss:$4 sm:$0xff] %v177
      %v189 = vld [vmem:[#allocation1] sm:$0xff]
      %191 = vst [vmem:[%s184] ss:$4 sm:$0xff] %v180
      %v192 = vld [vmem:[#allocation1 + $0x20] sm:$0xff]
      %v194 = vunpack.c.l.b16 %v182
      %v195 = vunpack.c.l.b16 %v186
      %v196 = vunpack.c.l.b16 %v189
      %v197 = vunpack.c.l.b16 %v192
      %v198 = vrot.slane %v195, 7
      %vm199 = vcmask 1041409
      %v200 = vsel %vm199, %v198, %v194
      %v201 = vrot.slane %v197, 7
      %v202 = vsel %vm199, %v201, %v196
      %v203 = vpack.c.b16 %v200, %v200
      %v204 = vpack.c.b16 %v202, %v202
      %v205 = vrot.slane %v203, 3
      %v206 = vrot.slane %v204, 3
      %v209 = vsel %vm168, %v203, %v205
      %v212 = vsel %vm168, %v204, %v206
      %215 = vst [vmem:[%s111] sm:$0x1] %v209
      %216 = vst [vmem:[%s111 + $0x1] sm:$0x1] %v212
      %p217 = scmp.lt.s32.totalorder %s12, 1
      %s218 = scalar_select %p217, %s12, 1
      %s219 = smul.addr %s218, 2
      %s220 = scalar_lea.vmem %s1, %s219
      // Predicated region
      $region25: #{cnn_forward.20} parent=23 // pred_check
        %p221 = pneg %p56
      $region26: #{cnn_forward.20} parent=23 // pred_check_branch
        %223 = sbr.rel (%p221) target = $region28
      $region27: #{cnn_forward.20} parent=23 // pred_region
        _
      $region28: #{cnn_forward.20} parent=23 // pred_fallthru
        _
    $region24: #{cnn_forward.20} parent=5 // pred_fallthru
      _
    %p224 = scmp.le.s32.totalorder 2, %s7
    // Predicated region
    $region29: #{cnn_forward.20} parent=5 // pred_check
      %p225 = pneg %p224
    $region30: #{cnn_forward.20} parent=5 // pred_check_branch
      %227 = sbr.rel (%p225) target = $region32
    $region31: #{cnn_forward.20} parent=5 // pred_region
      %s228 = ssub.s32 %s7, 2
      // Predicated region
      $region33: #{cnn_forward.20} parent=31 // pred_check
        %p229 = pneg %p62
      $region34: #{cnn_forward.20} parent=31 // pred_check_branch
        %231 = sbr.rel (%p229) target = $region36
      $region35: #{cnn_forward.20} parent=31 // pred_region
        %p232 = scmp.lt.s32.totalorder %s13, 1
        %s233 = scalar_select %p232, %s13, 1
        %s234 = smul.addr %s233, 2
        %s235 = scalar_lea.vmem %s1, %s234
      $region36: #{cnn_forward.20} parent=31 // pred_fallthru
        _
    $region32: #{cnn_forward.20} parent=5 // pred_fallthru
      _
  $region6: #{cnn_forward.20} parent=0 // loop_footer
    %s11 = sadd.s32 1, %s7
  $region7: #{cnn_forward.20} parent=0 // loop_footer_branch
    %6 = sbr.rel target = $region3
  $region8: #{cnn_forward.20} parent=0 // loop_exit
    _

// kernel: cnn_forward.22
$region0: #{cnn_forward.22}
  #allocation0 [shape = 'u32[]', space=smem, size = 0x4, offset = 0x4, fixed_abs, tag = 'smem constant byte address 0x4 - core index']
  #allocation1 [shape = 'u32[72,128]{1,0:T(1,128)}', space=vmem, size = 0x9000, scoped, tag = 'internal scratch']
  %s0 = inlined_call_operand.vmem [shape: bf16[2,1,2,1,2,256], index: 0, kind: input, shape index: {}]
  %s1 = inlined_call_operand.vmem [shape: bf16[2,1,1,256], index: 1, kind: output, shape index: {}]
  %s2 = sld [smem:[#allocation0]]
  $region37: #{cnn_forward.22} parent=0
    _
  %s4 = ssub.s32 1, %s2
  %s5 = scalar_select 0, %s4, %s2
  loop: start=0, step=1, limit=4
  $region2: #{cnn_forward.22} parent=0 // loop_pre_header
    _
  $region3: #{cnn_forward.22} parent=0 // loop_header
    %s7 = sphi 0, %s11
    %p8 = scmp.ge.s32.totalorder %s7, 4
    %s17 = sphi 0, %s19
    %s20 = sphi 0, %s17
    %s21 = sphi 0, %s20
    %s37 = sphi 0, %s21
    %s43 = sphi 0, %s45
    %s46 = sphi 0, %s43
    %s47 = sphi 0, %s46
    %s63 = sphi 0, %s47
  $region4: #{cnn_forward.22} parent=0 // loop_header_branch
    %10 = sbr.rel (%p8) target = $region8
  $region5: #{cnn_forward.22} parent=0 // loop_body
    %s12 = ssub.s32 %s7, 1
    %s13 = ssub.s32 %s7, 2
    %s14 = sadd.s32 %s7, 1
    %s15 = ssub.s32 %s7, %s14
    %p16 = scmp.eq.s32.totalorder %s15, 0
    %s18 = sadd.s32 %s17, 1
    %s19 = scalar_select %p16, %s17, %s18
    %p22 = pneg %p16
    %p23 = scmp.eq.s32.totalorder %s7, 1
    %p24 = por %p22, %p23
    %p25 = scmp.ne.s32.totalorder %s17, %s20
    %p26 = scmp.eq.s32.totalorder %s7, 0
    %p27 = por %p25, %p26
    %p28 = scmp.ne.s32.totalorder %s17, %s20
    %p29 = scmp.eq.s32.totalorder %s12, 1
    %p30 = por %p28, %p29
    %p31 = scmp.ne.s32.totalorder %s20, %s21
    %p32 = scmp.eq.s32.totalorder %s12, 0
    %p33 = por %p31, %p32
    %p34 = scmp.ne.s32.totalorder %s20, %s21
    %p35 = scmp.eq.s32.totalorder %s13, 1
    %p36 = por %p34, %p35
    %p38 = scmp.ne.s32.totalorder %s21, %s37
    %p39 = scmp.eq.s32.totalorder %s13, 0
    %p40 = por %p38, %p39
    %s41 = ssub.s32 %s7, %s14
    %p42 = scmp.eq.s32.totalorder %s41, 0
    %s44 = sadd.s32 %s43, 1
    %s45 = scalar_select %p42, %s43, %s44
    %p48 = pneg %p42
    %p49 = scmp.eq.s32.totalorder %s7, 1
    %p50 = por %p48, %p49
    %p51 = scmp.ne.s32.totalorder %s43, %s46
    %p52 = scmp.eq.s32.totalorder %s7, 0
    %p53 = por %p51, %p52
    %p54 = scmp.ne.s32.totalorder %s43, %s46
    %p55 = scmp.eq.s32.totalorder %s12, 1
    %p56 = por %p54, %p55
    %p57 = scmp.ne.s32.totalorder %s46, %s47
    %p58 = scmp.eq.s32.totalorder %s12, 0
    %p59 = por %p57, %p58
    %p60 = scmp.ne.s32.totalorder %s46, %s47
    %p61 = scmp.eq.s32.totalorder %s13, 1
    %p62 = por %p60, %p61
    %p64 = scmp.ne.s32.totalorder %s47, %s63
    %p65 = scmp.eq.s32.totalorder %s13, 0
    %p66 = por %p64, %p65
    %p67 = scmp.le.s32.totalorder 1, %s7
    %p68 = scmp.lt.s32.totalorder %s7, 3
    %p69 = pnand %p67, %p68
    %p70 = pneg %p69
    // Predicated region
    $region9: #{cnn_forward.22} parent=5 // pred_check
      _
    $region10: #{cnn_forward.22} parent=5 // pred_check_branch
      %72 = sbr.rel (%p69) target = $region12
    $region11: #{cnn_forward.22} parent=5 // pred_region
      %s73 = ssub.s32 %s7, 1
    $region12: #{cnn_forward.22} parent=5 // pred_fallthru
      _
    %p74 = scmp.lt.s32.totalorder %s7, 2
    // Predicated region
    $region13: #{cnn_forward.22} parent=5 // pred_check
      %p75 = pneg %p74
    $region14: #{cnn_forward.22} parent=5 // pred_check_branch
      %77 = sbr.rel (%p75) target = $region16
    $region15: #{cnn_forward.22} parent=5 // pred_region
      // Predicated region
      $region17: #{cnn_forward.22} parent=15 // pred_check
        %p78 = pneg %p27
      $region18: #{cnn_forward.22} parent=15 // pred_check_branch
        %80 = sbr.rel (%p78) target = $region20
      $region19: #{cnn_forward.22} parent=15 // pred_region
        %p81 = scmp.lt.s32.totalorder %s7, 1
        %s82 = scalar_select %p81, %s7, 1
        %s83 = smul.addr %s82, 4
        %s84 = scalar_lea.vmem %s0, %s83
      $region20: #{cnn_forward.22} parent=15 // pred_fallthru
        _
    $region16: #{cnn_forward.22} parent=5 // pred_fallthru
      _
    %p85 = scmp.le.s32.totalorder 1, %s7
    %p86 = scmp.lt.s32.totalorder %s7, 3
    %p87 = pnand %p85, %p86
    %p88 = pneg %p87
    // Predicated region
    $region21: #{cnn_forward.22} parent=5 // pred_check
      _
    $region22: #{cnn_forward.22} parent=5 // pred_check_branch
      %90 = sbr.rel (%p87) target = $region24
    $region23: #{cnn_forward.22} parent=5 // pred_region
      %s91 = ssub.s32 %s7, 1
      %p92 = scmp.lt.s32.totalorder %s12, 1
      %s93 = scalar_select %p92, %s12, 1
      %s94 = smul.addr %s93, 4
      %s95 = scalar_lea.vmem %s0, %s94
      %p96 = pneg %p33
      %p97 = pneg %p30
      %p98 = pneg %p59
      %p99 = pneg %p56
      %p100 = scmp.lt.s32.totalorder %s12, 1
      %s101 = scalar_select %p100, %s12, 1
      %s102 = smul.addr %s101, 2
      %s103 = scalar_lea.vmem %s1, %s102
      %p104 = scmp.lt.s32.totalorder %s12, 1
      %s105 = scalar_select %p104, %s12, 1
      %s106 = smul.addr %s105, 4
      %s107 = scalar_lea.vmem %s0, %s106
      %p108 = scmp.lt.s32.totalorder %s12, 1
      %s109 = scalar_select %p108, %s12, 1
      %s110 = smul.addr %s109, 2
      %s111 = scalar_lea.vmem %s1, %s110
      %v112 = vld [vmem:[%s107] sm:$0x3]
      %v113 = vld [vmem:[%s107 + $0x2] sm:$0x3]
      %v114 = vunpack.c.l.bf16 %v112
      %v115 = vunpack.c.l.bf16 %v113
      %v116 = vmax.f32 %v114, %v115
      %118 = vst [vmem:[#allocation1] ss:$4 sm:$0xff] %v116
      %v119 = vld.sshfl [vmem:[#allocation1] sm:$0xff pattern:$0x73625140]
      %v120 = vld.sshfl [vmem:[#allocation1 + $0x8] sm:$0xff pattern:$0x73625140]
      %v123 = vpack.c.bf16 %v120, %v119
      %v124 = vunpack.c.l.bf16 %v123
      %v125 = vunpack.c.h.bf16 %v123
      %v128 = vrot.slane %v124, 1
      %v129 = vrot.slane %v125, 1
      %v132 = vmax.f32 %v124, %v128
      %v133 = vmax.f32 %v125, %v129
      %v134 = vpack.c.bf16 %v133, %v132
      %v136 = vrot.slane %v134, 3
      %vm137 = vcmask 1040384
      %v140 = vsel %vm137, %v134, %v136
      %vm142 = vcmask 1040384
      %vm143 = vsmask.f32 256
      %vm144 = vmand %vm142, %vm143
      %vm145 = vcmask 1041409
      %vm146 = vsmask.f32 1280
      %vm147 = vmand %vm145, %vm146
      %vm148 = vmor %vm147, %vm144
      %v149 = vld [vmem:[%s111] sm:$0x3]
      %v150 = vsel %vm148, %v140, %v149
      %151 = vst [vmem:[%s111] sm:$0x3] %v150
      %p152 = scmp.lt.s32.totalorder %s12, 1
      %s153 = scalar_select %p152, %s12, 1
      %s154 = smul.addr %s153, 2
      %s155 = scalar_lea.vmem %s1, %s154
      // Predicated region
      $region25: #{cnn_forward.22} parent=23 // pred_check
        %p156 = pneg %p56
      $region26: #{cnn_forward.22} parent=23 // pred_check_branch
        %158 = sbr.rel (%p156) target = $region28
      $region27: #{cnn_forward.22} parent=23 // pred_region
        _
      $region28: #{cnn_forward.22} parent=23 // pred_fallthru
        _
    $region24: #{cnn_forward.22} parent=5 // pred_fallthru
      _
    %p159 = scmp.le.s32.totalorder 2, %s7
    // Predicated region
    $region29: #{cnn_forward.22} parent=5 // pred_check
      %p160 = pneg %p159
    $region30: #{cnn_forward.22} parent=5 // pred_check_branch
      %162 = sbr.rel (%p160) target = $region32
    $region31: #{cnn_forward.22} parent=5 // pred_region
      %s163 = ssub.s32 %s7, 2
      // Predicated region
      $region33: #{cnn_forward.22} parent=31 // pred_check
        %p164 = pneg %p62
      $region34: #{cnn_forward.22} parent=31 // pred_check_branch
        %166 = sbr.rel (%p164) target = $region36
      $region35: #{cnn_forward.22} parent=31 // pred_region
        %p167 = scmp.lt.s32.totalorder %s13, 1
        %s168 = scalar_select %p167, %s13, 1
        %s169 = smul.addr %s168, 2
        %s170 = scalar_lea.vmem %s1, %s169
      $region36: #{cnn_forward.22} parent=31 // pred_fallthru
        _
    $region32: #{cnn_forward.22} parent=5 // pred_fallthru
      _
  $region6: #{cnn_forward.22} parent=0 // loop_footer
    %s11 = sadd.s32 1, %s7
  $region7: #{cnn_forward.22} parent=0 // loop_footer_branch
    %6 = sbr.rel target = $region3
  $region8: #{cnn_forward.22} parent=0 // loop_exit
    _

// kernel: cnn_forward.19
$region0: #{cnn_forward.19}
  #allocation0 [shape = 'u32[]', space=smem, size = 0x4, offset = 0x4, fixed_abs, tag = 'smem constant byte address 0x4 - core index']
  #allocation1 [shape = 'u32[72,128]{1,0:T(1,128)}', space=vmem, size = 0x9000, scoped, tag = 'internal scratch']
  %s0 = inlined_call_operand.vmem [shape: bf16[32,1152], index: 0, kind: input, shape index: {}]
  %s1 = inlined_call_operand.vmem [shape: bf16[1152,128], index: 1, kind: input, shape index: {}]
  %s2 = inlined_call_operand.vmem [shape: f32[1,128], index: 2, kind: input, shape index: {}]
  %s3 = inlined_call_operand.vmem [shape: bf16[32,128], index: 3, kind: output, shape index: {}]
  %s4 = sld [smem:[#allocation0]]
  $region22: #{cnn_forward.19} parent=0
    _
  %s6 = ssub.s32 1, %s4
  %s7 = scalar_select 0, %s6, %s4
  // Predicated region
  $region2: #{cnn_forward.19} parent=0 // pred_check
    _
  $region3: #{cnn_forward.19} parent=0 // pred_check_branch
    %9 = sbr.rel (0) target = $region5
  $region4: #{cnn_forward.19} parent=0 // pred_region
    _
  $region5: #{cnn_forward.19} parent=0 // pred_fallthru
    _
  // Predicated region
  $region6: #{cnn_forward.19} parent=0 // pred_check
    _
  $region7: #{cnn_forward.19} parent=0 // pred_check_branch
    %11 = sbr.rel (0) target = $region9
  $region8: #{cnn_forward.19} parent=0 // pred_region
    _
  $region9: #{cnn_forward.19} parent=0 // pred_fallthru
    _
  // Predicated region
  $region10: #{cnn_forward.19} parent=0 // pred_check
    _
  $region11: #{cnn_forward.19} parent=0 // pred_check_branch
    %13 = sbr.rel (0) target = $region13
  $region12: #{cnn_forward.19} parent=0 // pred_region
    _
  $region13: #{cnn_forward.19} parent=0 // pred_fallthru
    _
  %v14 = vld [vmem:[%s0] sm:$0xff]
  %v15 = vld [vmem:[%s0 + $0x8] sm:$0xff]
  %v16 = vld [vmem:[%s0 + $0x10] sm:$0xff]
  %v17 = vld [vmem:[%s0 + $0x18] sm:$0xff]
  %v18 = vld [vmem:[%s0 + $0x20] sm:$0xf]
  %v19 = vld [vmem:[%s0 + $0x24] sm:$0xff]
  %v20 = vld [vmem:[%s0 + $0x2c] sm:$0xff]
  %v21 = vld [vmem:[%s0 + $0x34] sm:$0xff]
  %v22 = vld [vmem:[%s0 + $0x3c] sm:$0xff]
  %v23 = vld [vmem:[%s0 + $0x44] sm:$0xf]
  %v24 = vld [vmem:[%s0 + $0x48] sm:$0xff]
  %v25 = vld [vmem:[%s0 + $0x50] sm:$0xff]
  %v26 = vld [vmem:[%s0 + $0x58] sm:$0xff]
  %v27 = vld [vmem:[%s0 + $0x60] sm:$0xff]
  %v28 = vld [vmem:[%s0 + $0x68] sm:$0xf]
  %v29 = vld [vmem:[%s0 + $0x6c] sm:$0xff]
  %v30 = vld [vmem:[%s0 + $0x74] sm:$0xff]
  %v31 = vld [vmem:[%s0 + $0x7c] sm:$0xff]
  %v32 = vld [vmem:[%s0 + $0x84] sm:$0xff]
  %v33 = vld [vmem:[%s0 + $0x8c] sm:$0xf]
  %v34 = vld [vmem:[%s1] sm:$0xf]
  %v35 = vld [vmem:[%s1 + $0x4] sm:$0xf]
  %v36 = vld [vmem:[%s1 + $0x8] sm:$0xf]
  %v37 = vld [vmem:[%s1 + $0xc] sm:$0xf]
  %v38 = vld [vmem:[%s1 + $0x10] sm:$0xf]
  %v39 = vld [vmem:[%s1 + $0x14] sm:$0xf]
  %v40 = vld [vmem:[%s1 + $0x18] sm:$0xf]
  %v41 = vld [vmem:[%s1 + $0x1c] sm:$0xf]
  %v42 = vld [vmem:[%s1 + $0x20] sm:$0xf]
  %v43 = vld [vmem:[%s1 + $0x24] sm:$0xf]
  %v44 = vld [vmem:[%s1 + $0x28] sm:$0xf]
  %v45 = vld [vmem:[%s1 + $0x2c] sm:$0xf]
  %v46 = vld [vmem:[%s1 + $0x30] sm:$0xf]
  %v47 = vld [vmem:[%s1 + $0x34] sm:$0xf]
  %v48 = vld [vmem:[%s1 + $0x38] sm:$0xf]
  %v49 = vld [vmem:[%s1 + $0x3c] sm:$0xf]
  %v50 = vld [vmem:[%s1 + $0x40] sm:$0xf]
  %v51 = vld [vmem:[%s1 + $0x44] sm:$0xf]
  %v52 = vld [vmem:[%s1 + $0x48] sm:$0xf]
  %v53 = vld [vmem:[%s1 + $0x4c] sm:$0xf]
  %v54 = vld [vmem:[%s1 + $0x50] sm:$0xf]
  %v55 = vld [vmem:[%s1 + $0x54] sm:$0xf]
  %v56 = vld [vmem:[%s1 + $0x58] sm:$0xf]
  %v57 = vld [vmem:[%s1 + $0x5c] sm:$0xf]
  %v58 = vld [vmem:[%s1 + $0x60] sm:$0xf]
  %v59 = vld [vmem:[%s1 + $0x64] sm:$0xf]
  %v60 = vld [vmem:[%s1 + $0x68] sm:$0xf]
  %v61 = vld [vmem:[%s1 + $0x6c] sm:$0xf]
  %v62 = vld [vmem:[%s1 + $0x70] sm:$0xf]
  %v63 = vld [vmem:[%s1 + $0x74] sm:$0xf]
  %v64 = vld [vmem:[%s1 + $0x78] sm:$0xf]
  %v65 = vld [vmem:[%s1 + $0x7c] sm:$0xf]
  %v66 = vld [vmem:[%s1 + $0x80] sm:$0xf]
  %v67 = vld [vmem:[%s1 + $0x84] sm:$0xf]
  %v68 = vld [vmem:[%s1 + $0x88] sm:$0xf]
  %v69 = vld [vmem:[%s1 + $0x8c] sm:$0xf]
  %v70 = vld [vmem:[%s1 + $0x90] sm:$0xf]
  %v71 = vld [vmem:[%s1 + $0x94] sm:$0xf]
  %v72 = vld [vmem:[%s1 + $0x98] sm:$0xf]
  %v73 = vld [vmem:[%s1 + $0x9c] sm:$0xf]
  %v74 = vld [vmem:[%s1 + $0xa0] sm:$0xf]
  %v75 = vld [vmem:[%s1 + $0xa4] sm:$0xf]
  %v76 = vld [vmem:[%s1 + $0xa8] sm:$0xf]
  %v77 = vld [vmem:[%s1 + $0xac] sm:$0xf]
  %v78 = vld [vmem:[%s1 + $0xb0] sm:$0xf]
  %v79 = vld [vmem:[%s1 + $0xb4] sm:$0xf]
  %v80 = vld [vmem:[%s1 + $0xb8] sm:$0xf]
  %v81 = vld [vmem:[%s1 + $0xbc] sm:$0xf]
  %v82 = vld [vmem:[%s1 + $0xc0] sm:$0xf]
  %v83 = vld [vmem:[%s1 + $0xc4] sm:$0xf]
  %v84 = vld [vmem:[%s1 + $0xc8] sm:$0xf]
  %v85 = vld [vmem:[%s1 + $0xcc] sm:$0xf]
  %v86 = vld [vmem:[%s1 + $0xd0] sm:$0xf]
  %v87 = vld [vmem:[%s1 + $0xd4] sm:$0xf]
  %v88 = vld [vmem:[%s1 + $0xd8] sm:$0xf]
  %v89 = vld [vmem:[%s1 + $0xdc] sm:$0xf]
  %v90 = vld [vmem:[%s1 + $0xe0] sm:$0xf]
  %v91 = vld [vmem:[%s1 + $0xe4] sm:$0xf]
  %v92 = vld [vmem:[%s1 + $0xe8] sm:$0xf]
  %v93 = vld [vmem:[%s1 + $0xec] sm:$0xf]
  %v94 = vld [vmem:[%s1 + $0xf0] sm:$0xf]
  %v95 = vld [vmem:[%s1 + $0xf4] sm:$0xf]
  %v96 = vld [vmem:[%s1 + $0xf8] sm:$0xf]
  %v97 = vld [vmem:[%s1 + $0xfc] sm:$0xf]
  %v98 = vld [vmem:[%s1 + $0x100] sm:$0xf]
  %v99 = vld [vmem:[%s1 + $0x104] sm:$0xf]
  %v100 = vld [vmem:[%s1 + $0x108] sm:$0xf]
  %v101 = vld [vmem:[%s1 + $0x10c] sm:$0xf]
  %v102 = vld [vmem:[%s1 + $0x110] sm:$0xf]
  %v103 = vld [vmem:[%s1 + $0x114] sm:$0xf]
  %v104 = vld [vmem:[%s1 + $0x118] sm:$0xf]
  %v105 = vld [vmem:[%s1 + $0x11c] sm:$0xf]
  %v106 = vld [vmem:[%s1 + $0x120] sm:$0xf]
  %v107 = vld [vmem:[%s1 + $0x124] sm:$0xf]
  %v108 = vld [vmem:[%s1 + $0x128] sm:$0xf]
  %v109 = vld [vmem:[%s1 + $0x12c] sm:$0xf]
  %v110 = vld [vmem:[%s1 + $0x130] sm:$0xf]
  %v111 = vld [vmem:[%s1 + $0x134] sm:$0xf]
  %v112 = vld [vmem:[%s1 + $0x138] sm:$0xf]
  %v113 = vld [vmem:[%s1 + $0x13c] sm:$0xf]
  %v114 = vld [vmem:[%s1 + $0x140] sm:$0xf]
  %v115 = vld [vmem:[%s1 + $0x144] sm:$0xf]
  %v116 = vld [vmem:[%s1 + $0x148] sm:$0xf]
  %v117 = vld [vmem:[%s1 + $0x14c] sm:$0xf]
  %v118 = vld [vmem:[%s1 + $0x150] sm:$0xf]
  %v119 = vld [vmem:[%s1 + $0x154] sm:$0xf]
  %v120 = vld [vmem:[%s1 + $0x158] sm:$0xf]
  %v121 = vld [vmem:[%s1 + $0x15c] sm:$0xf]
  %v122 = vld [vmem:[%s1 + $0x160] sm:$0xf]
  %v123 = vld [vmem:[%s1 + $0x164] sm:$0xf]
  %v124 = vld [vmem:[%s1 + $0x168] sm:$0xf]
  %v125 = vld [vmem:[%s1 + $0x16c] sm:$0xf]
  %v126 = vld [vmem:[%s1 + $0x170] sm:$0xf]
  %v127 = vld [vmem:[%s1 + $0x174] sm:$0xf]
  %v128 = vld [vmem:[%s1 + $0x178] sm:$0xf]
  %v129 = vld [vmem:[%s1 + $0x17c] sm:$0xf]
  %v130 = vld [vmem:[%s1 + $0x180] sm:$0xf]
  %v131 = vld [vmem:[%s1 + $0x184] sm:$0xf]
  %v132 = vld [vmem:[%s1 + $0x188] sm:$0xf]
  %v133 = vld [vmem:[%s1 + $0x18c] sm:$0xf]
  %v134 = vld [vmem:[%s1 + $0x190] sm:$0xf]
  %v135 = vld [vmem:[%s1 + $0x194] sm:$0xf]
  %v136 = vld [vmem:[%s1 + $0x198] sm:$0xf]
  %v137 = vld [vmem:[%s1 + $0x19c] sm:$0xf]
  %v138 = vld [vmem:[%s1 + $0x1a0] sm:$0xf]
  %v139 = vld [vmem:[%s1 + $0x1a4] sm:$0xf]
  %v140 = vld [vmem:[%s1 + $0x1a8] sm:$0xf]
  %v141 = vld [vmem:[%s1 + $0x1ac] sm:$0xf]
  %v142 = vld [vmem:[%s1 + $0x1b0] sm:$0xf]
  %v143 = vld [vmem:[%s1 + $0x1b4] sm:$0xf]
  %v144 = vld [vmem:[%s1 + $0x1b8] sm:$0xf]
  %v145 = vld [vmem:[%s1 + $0x1bc] sm:$0xf]
  %v146 = vld [vmem:[%s1 + $0x1c0] sm:$0xf]
  %v147 = vld [vmem:[%s1 + $0x1c4] sm:$0xf]
  %v148 = vld [vmem:[%s1 + $0x1c8] sm:$0xf]
  %v149 = vld [vmem:[%s1 + $0x1cc] sm:$0xf]
  %v150 = vld [vmem:[%s1 + $0x1d0] sm:$0xf]
  %v151 = vld [vmem:[%s1 + $0x1d4] sm:$0xf]
  %v152 = vld [vmem:[%s1 + $0x1d8] sm:$0xf]
  %v153 = vld [vmem:[%s1 + $0x1dc] sm:$0xf]
  %v154 = vld [vmem:[%s1 + $0x1e0] sm:$0xf]
  %v155 = vld [vmem:[%s1 + $0x1e4] sm:$0xf]
  %v156 = vld [vmem:[%s1 + $0x1e8] sm:$0xf]
  %v157 = vld [vmem:[%s1 + $0x1ec] sm:$0xf]
  %v158 = vld [vmem:[%s1 + $0x1f0] sm:$0xf]
  %v159 = vld [vmem:[%s1 + $0x1f4] sm:$0xf]
  %v160 = vld [vmem:[%s1 + $0x1f8] sm:$0xf]
  %v161 = vld [vmem:[%s1 + $0x1fc] sm:$0xf]
  %v162 = vld [vmem:[%s1 + $0x200] sm:$0xf]
  %v163 = vld [vmem:[%s1 + $0x204] sm:$0xf]
  %v164 = vld [vmem:[%s1 + $0x208] sm:$0xf]
  %v165 = vld [vmem:[%s1 + $0x20c] sm:$0xf]
  %v166 = vld [vmem:[%s1 + $0x210] sm:$0xf]
  %v167 = vld [vmem:[%s1 + $0x214] sm:$0xf]
  %v168 = vld [vmem:[%s1 + $0x218] sm:$0xf]
  %v169 = vld [vmem:[%s1 + $0x21c] sm:$0xf]
  %v170 = vld [vmem:[%s1 + $0x220] sm:$0xf]
  %v171 = vld [vmem:[%s1 + $0x224] sm:$0xf]
  %v172 = vld [vmem:[%s1 + $0x228] sm:$0xf]
  %v173 = vld [vmem:[%s1 + $0x22c] sm:$0xf]
  %v174 = vld [vmem:[%s1 + $0x230] sm:$0xf]
  %v175 = vld [vmem:[%s1 + $0x234] sm:$0xf]
  %v176 = vld [vmem:[%s1 + $0x238] sm:$0xf]
  %v177 = vld [vmem:[%s1 + $0x23c] sm:$0xf]
  %v178 = vld [vmem:[%s2] sm:$0x1]
  %v180 = vperm.slane %v178, 0
  %v202 = vunpack.c.l.b16 %v14
  %v203 = vunpack.c.h.b16 %v14
  %v204 = vunpack.c.l.b16 %v15
  %v205 = vunpack.c.h.b16 %v15
  %v206 = vunpack.c.l.b16 %v16
  %v207 = vunpack.c.h.b16 %v16
  %v208 = vunpack.c.l.b16 %v17
  %v209 = vunpack.c.h.b16 %v17
  %v210 = vunpack.c.l.b16 %v18
  %v211 = vunpack.c.l.b16 %v19
  %v212 = vunpack.c.h.b16 %v19
  %v213 = vunpack.c.l.b16 %v20
  %v214 = vunpack.c.h.b16 %v20
  %v215 = vunpack.c.l.b16 %v21
  %v216 = vunpack.c.h.b16 %v21
  %v217 = vunpack.c.l.b16 %v22
  %v218 = vunpack.c.h.b16 %v22
  %v219 = vunpack.c.l.b16 %v23
  %v220 = vunpack.c.l.b16 %v24
  %v221 = vunpack.c.h.b16 %v24
  %v222 = vunpack.c.l.b16 %v25
  %v223 = vunpack.c.h.b16 %v25
  %v224 = vunpack.c.l.b16 %v26
  %v225 = vunpack.c.h.b16 %v26
  %v226 = vunpack.c.l.b16 %v27
  %v227 = vunpack.c.h.b16 %v27
  %v228 = vunpack.c.l.b16 %v28
  %v229 = vunpack.c.l.b16 %v29
  %v230 = vunpack.c.h.b16 %v29
  %v231 = vunpack.c.l.b16 %v30
  %v232 = vunpack.c.h.b16 %v30
  %v233 = vunpack.c.l.b16 %v31
  %v234 = vunpack.c.h.b16 %v31
  %v235 = vunpack.c.l.b16 %v32
  %v236 = vunpack.c.h.b16 %v32
  %v237 = vunpack.c.l.b16 %v33
  %v238 = vpack.c.b16 %v211, %v202
  %v239 = vpack.c.b16 %v212, %v203
  %v240 = vpack.c.b16 %v213, %v204
  %v241 = vpack.c.b16 %v214, %v205
  %v242 = vpack.c.b16 %v215, %v206
  %v243 = vpack.c.b16 %v216, %v207
  %v244 = vpack.c.b16 %v217, %v208
  %v245 = vpack.c.b16 %v218, %v209
  %v246 = vpack.c.b16 %v219, %v210
  %v247 = vpack.c.b16 %v229, %v220
  %v248 = vpack.c.b16 %v230, %v221
  %v249 = vpack.c.b16 %v231, %v222
  %v250 = vpack.c.b16 %v232, %v223
  %v251 = vpack.c.b16 %v233, %v224
  %v252 = vpack.c.b16 %v234, %v225
  %v253 = vpack.c.b16 %v235, %v226
  %v254 = vpack.c.b16 %v236, %v227
  %v255 = vpack.c.b16 %v237, %v228
  %v418 = vunpack.c.l.b16 %v34
  %v419 = vunpack.c.l.b16 %v35
  %v420 = vunpack.c.l.b16 %v36
  %v421 = vunpack.c.l.b16 %v37
  %v422 = vunpack.c.l.b16 %v38
  %v423 = vunpack.c.l.b16 %v39
  %v424 = vunpack.c.l.b16 %v40
  %v425 = vunpack.c.l.b16 %v41
  %v426 = vunpack.c.l.b16 %v42
  %v427 = vunpack.c.l.b16 %v43
  %v428 = vunpack.c.l.b16 %v44
  %v429 = vunpack.c.l.b16 %v45
  %v430 = vunpack.c.l.b16 %v46
  %v431 = vunpack.c.l.b16 %v47
  %v432 = vunpack.c.l.b16 %v48
  %v433 = vunpack.c.l.b16 %v49
  %v434 = vunpack.c.l.b16 %v50
  %v435 = vunpack.c.l.b16 %v51
  %v436 = vunpack.c.l.b16 %v52
  %v437 = vunpack.c.l.b16 %v53
  %v438 = vunpack.c.l.b16 %v54
  %v439 = vunpack.c.l.b16 %v55
  %v440 = vunpack.c.l.b16 %v56
  %v441 = vunpack.c.l.b16 %v57
  %v442 = vunpack.c.l.b16 %v58
  %v443 = vunpack.c.l.b16 %v59
  %v444 = vunpack.c.l.b16 %v60
  %v445 = vunpack.c.l.b16 %v61
  %v446 = vunpack.c.l.b16 %v62
  %v447 = vunpack.c.l.b16 %v63
  %v448 = vunpack.c.l.b16 %v64
  %v449 = vunpack.c.l.b16 %v65
  %v450 = vunpack.c.l.b16 %v66
  %v451 = vunpack.c.l.b16 %v67
  %v452 = vunpack.c.l.b16 %v68
  %v453 = vunpack.c.l.b16 %v69
  %v454 = vunpack.c.l.b16 %v70
  %v455 = vunpack.c.l.b16 %v71
  %v456 = vunpack.c.l.b16 %v72
  %v457 = vunpack.c.l.b16 %v73
  %v458 = vunpack.c.l.b16 %v74
  %v459 = vunpack.c.l.b16 %v75
  %v460 = vunpack.c.l.b16 %v76
  %v461 = vunpack.c.l.b16 %v77
  %v462 = vunpack.c.l.b16 %v78
  %v463 = vunpack.c.l.b16 %v79
  %v464 = vunpack.c.l.b16 %v80
  %v465 = vunpack.c.l.b16 %v81
  %v466 = vunpack.c.l.b16 %v82
  %v467 = vunpack.c.l.b16 %v83
  %v468 = vunpack.c.l.b16 %v84
  %v469 = vunpack.c.l.b16 %v85
  %v470 = vunpack.c.l.b16 %v86
  %v471 = vunpack.c.l.b16 %v87
  %v472 = vunpack.c.l.b16 %v88
  %v473 = vunpack.c.l.b16 %v89
  %v474 = vunpack.c.l.b16 %v90
  %v475 = vunpack.c.l.b16 %v91
  %v476 = vunpack.c.l.b16 %v92
  %v477 = vunpack.c.l.b16 %v93
  %v478 = vunpack.c.l.b16 %v94
  %v479 = vunpack.c.l.b16 %v95
  %v480 = vunpack.c.l.b16 %v96
  %v481 = vunpack.c.l.b16 %v97
  %v482 = vunpack.c.l.b16 %v98
  %v483 = vunpack.c.l.b16 %v99
  %v484 = vunpack.c.l.b16 %v100
  %v485 = vunpack.c.l.b16 %v101
  %v486 = vunpack.c.l.b16 %v102
  %v487 = vunpack.c.l.b16 %v103
  %v488 = vunpack.c.l.b16 %v104
  %v489 = vunpack.c.l.b16 %v105
  %v490 = vunpack.c.l.b16 %v106
  %v491 = vunpack.c.l.b16 %v107
  %v492 = vunpack.c.l.b16 %v108
  %v493 = vunpack.c.l.b16 %v109
  %v494 = vunpack.c.l.b16 %v110
  %v495 = vunpack.c.l.b16 %v111
  %v496 = vunpack.c.l.b16 %v112
  %v497 = vunpack.c.l.b16 %v113
  %v498 = vunpack.c.l.b16 %v114
  %v499 = vunpack.c.l.b16 %v115
  %v500 = vunpack.c.l.b16 %v116
  %v501 = vunpack.c.l.b16 %v117
  %v502 = vunpack.c.l.b16 %v118
  %v503 = vunpack.c.l.b16 %v119
  %v504 = vunpack.c.l.b16 %v120
  %v505 = vunpack.c.l.b16 %v121
  %v506 = vunpack.c.l.b16 %v122
  %v507 = vunpack.c.l.b16 %v123
  %v508 = vunpack.c.l.b16 %v124
  %v509 = vunpack.c.l.b16 %v125
  %v510 = vunpack.c.l.b16 %v126
  %v511 = vunpack.c.l.b16 %v127
  %v512 = vunpack.c.l.b16 %v128
  %v513 = vunpack.c.l.b16 %v129
  %v514 = vunpack.c.l.b16 %v130
  %v515 = vunpack.c.l.b16 %v131
  %v516 = vunpack.c.l.b16 %v132
  %v517 = vunpack.c.l.b16 %v133
  %v518 = vunpack.c.l.b16 %v134
  %v519 = vunpack.c.l.b16 %v135
  %v520 = vunpack.c.l.b16 %v136
  %v521 = vunpack.c.l.b16 %v137
  %v522 = vunpack.c.l.b16 %v138
  %v523 = vunpack.c.l.b16 %v139
  %v524 = vunpack.c.l.b16 %v140
  %v525 = vunpack.c.l.b16 %v141
  %v526 = vunpack.c.l.b16 %v142
  %v527 = vunpack.c.l.b16 %v143
  %v528 = vunpack.c.l.b16 %v144
  %v529 = vunpack.c.l.b16 %v145
  %v530 = vunpack.c.l.b16 %v146
  %v531 = vunpack.c.l.b16 %v147
  %v532 = vunpack.c.l.b16 %v148
  %v533 = vunpack.c.l.b16 %v149
  %v534 = vunpack.c.l.b16 %v150
  %v535 = vunpack.c.l.b16 %v151
  %v536 = vunpack.c.l.b16 %v152
  %v537 = vunpack.c.l.b16 %v153
  %v538 = vunpack.c.l.b16 %v154
  %v539 = vunpack.c.l.b16 %v155
  %v540 = vunpack.c.l.b16 %v156
  %v541 = vunpack.c.l.b16 %v157
  %v542 = vunpack.c.l.b16 %v158
  %v543 = vunpack.c.l.b16 %v159
  %v544 = vunpack.c.l.b16 %v160
  %v545 = vunpack.c.l.b16 %v161
  %v546 = vunpack.c.l.b16 %v162
  %v547 = vunpack.c.l.b16 %v163
  %v548 = vunpack.c.l.b16 %v164
  %v549 = vunpack.c.l.b16 %v165
  %v550 = vunpack.c.l.b16 %v166
  %v551 = vunpack.c.l.b16 %v167
  %v552 = vunpack.c.l.b16 %v168
  %v553 = vunpack.c.l.b16 %v169
  %v554 = vunpack.c.l.b16 %v170
  %v555 = vunpack.c.l.b16 %v171
  %v556 = vunpack.c.l.b16 %v172
  %v557 = vunpack.c.l.b16 %v173
  %v558 = vunpack.c.l.b16 %v174
  %v559 = vunpack.c.l.b16 %v175
  %v560 = vunpack.c.l.b16 %v176
  %v561 = vunpack.c.l.b16 %v177
  %v562 = vpack.c.b16 %v419, %v418
  %v563 = vpack.c.b16 %v421, %v420
  %v564 = vpack.c.b16 %v423, %v422
  %v565 = vpack.c.b16 %v425, %v424
  %v566 = vpack.c.b16 %v427, %v426
  %v567 = vpack.c.b16 %v429, %v428
  %v568 = vpack.c.b16 %v431, %v430
  %v569 = vpack.c.b16 %v433, %v432
  %v570 = vpack.c.b16 %v435, %v434
  %v571 = vpack.c.b16 %v437, %v436
  %v572 = vpack.c.b16 %v439, %v438
  %v573 = vpack.c.b16 %v441, %v440
  %v574 = vpack.c.b16 %v443, %v442
  %v575 = vpack.c.b16 %v445, %v444
  %v576 = vpack.c.b16 %v447, %v446
  %v577 = vpack.c.b16 %v449, %v448
  %v578 = vpack.c.b16 %v451, %v450
  %v579 = vpack.c.b16 %v453, %v452
  %v580 = vpack.c.b16 %v455, %v454
  %v581 = vpack.c.b16 %v457, %v456
  %v582 = vpack.c.b16 %v459, %v458
  %v583 = vpack.c.b16 %v461, %v460
  %v584 = vpack.c.b16 %v463, %v462
  %v585 = vpack.c.b16 %v465, %v464
  %v586 = vpack.c.b16 %v467, %v466
  %v587 = vpack.c.b16 %v469, %v468
  %v588 = vpack.c.b16 %v471, %v470
  %v589 = vpack.c.b16 %v473, %v472
  %v590 = vpack.c.b16 %v475, %v474
  %v591 = vpack.c.b16 %v477, %v476
  %v592 = vpack.c.b16 %v479, %v478
  %v593 = vpack.c.b16 %v481, %v480
  %v594 = vpack.c.b16 %v483, %v482
  %v595 = vpack.c.b16 %v485, %v484
  %v596 = vpack.c.b16 %v487, %v486
  %v597 = vpack.c.b16 %v489, %v488
  %v598 = vpack.c.b16 %v491, %v490
  %v599 = vpack.c.b16 %v493, %v492
  %v600 = vpack.c.b16 %v495, %v494
  %v601 = vpack.c.b16 %v497, %v496
  %v602 = vpack.c.b16 %v499, %v498
  %v603 = vpack.c.b16 %v501, %v500
  %v604 = vpack.c.b16 %v503, %v502
  %v605 = vpack.c.b16 %v505, %v504
  %v606 = vpack.c.b16 %v507, %v506
  %v607 = vpack.c.b16 %v509, %v508
  %v608 = vpack.c.b16 %v511, %v510
  %v609 = vpack.c.b16 %v513, %v512
  %v610 = vpack.c.b16 %v515, %v514
  %v611 = vpack.c.b16 %v517, %v516
  %v612 = vpack.c.b16 %v519, %v518
  %v613 = vpack.c.b16 %v521, %v520
  %v614 = vpack.c.b16 %v523, %v522
  %v615 = vpack.c.b16 %v525, %v524
  %v616 = vpack.c.b16 %v527, %v526
  %v617 = vpack.c.b16 %v529, %v528
  %v618 = vpack.c.b16 %v531, %v530
  %v619 = vpack.c.b16 %v533, %v532
  %v620 = vpack.c.b16 %v535, %v534
  %v621 = vpack.c.b16 %v537, %v536
  %v622 = vpack.c.b16 %v539, %v538
  %v623 = vpack.c.b16 %v541, %v540
  %v624 = vpack.c.b16 %v543, %v542
  %v625 = vpack.c.b16 %v545, %v544
  %v626 = vpack.c.b16 %v547, %v546
  %v627 = vpack.c.b16 %v549, %v548
  %v628 = vpack.c.b16 %v551, %v550
  %v629 = vpack.c.b16 %v553, %v552
  %v630 = vpack.c.b16 %v555, %v554
  %v631 = vpack.c.b16 %v557, %v556
  %v632 = vpack.c.b16 %v559, %v558
  %v633 = vpack.c.b16 %v561, %v560
  %706 = vmatpush.bf16.msra.mxu0 %v569
  %707 = vmatpush.bf16.msra.mxu0 %v568
  %708 = vmatpush.bf16.msra.mxu0 %v567
  %709 = vmatpush.bf16.msra.mxu0 %v566
  %710 = vmatpush.bf16.msra.mxu0 %v565
  %711 = vmatpush.bf16.msra.mxu0 %v564
  %712 = vmatpush.bf16.msra.mxu0 %v563
  %713 = vmatpush.bf16.msra.mxu0 %v562
  %714 = vmatmul.bf16.gmra.mxu0 %v238
  %v715 = vpop.f32.mrf.mxu0
  %v716 = vadd.f32 %v180, %v715
  %v717 = vpop.f32.mrf.mxu0
  %v718 = vadd.f32 %v180, %v717
  %719 = vmatmul.bf16.gmra.mxu0 %v247
  %v720 = vpop.f32.mrf.mxu0
  %v721 = vadd.f32 %v180, %v720
  %v722 = vpop.f32.mrf.mxu0
  %v723 = vadd.f32 %v180, %v722
  %724 = vdwg.mxu0
  %725 = vmatpush.bf16.msra.mxu0 %v577
  %726 = vmatpush.bf16.msra.mxu0 %v576
  %727 = vmatpush.bf16.msra.mxu0 %v575
  %728 = vmatpush.bf16.msra.mxu0 %v574
  %729 = vmatpush.bf16.msra.mxu0 %v573
  %730 = vmatpush.bf16.msra.mxu0 %v572
  %731 = vmatpush.bf16.msra.mxu0 %v571
  %732 = vmatpush.bf16.msra.mxu0 %v570
  %733 = vmatmul.bf16.gmra.mxu0 %v239
  %v734 = vpop.f32.mrf.mxu0
  %v735 = vadd.f32 %v716, %v734
  %v736 = vpop.f32.mrf.mxu0
  %v737 = vadd.f32 %v718, %v736
  %738 = vmatmul.bf16.gmra.mxu0 %v248
  %v739 = vpop.f32.mrf.mxu0
  %v740 = vadd.f32 %v721, %v739
  %v741 = vpop.f32.mrf.mxu0
  %v742 = vadd.f32 %v723, %v741
  %743 = vdwg.mxu0
  %744 = vmatpush.bf16.msra.mxu0 %v585
  %745 = vmatpush.bf16.msra.mxu0 %v584
  %746 = vmatpush.bf16.msra.mxu0 %v583
  %747 = vmatpush.bf16.msra.mxu0 %v582
  %748 = vmatpush.bf16.msra.mxu0 %v581
  %749 = vmatpush.bf16.msra.mxu0 %v580
  %750 = vmatpush.bf16.msra.mxu0 %v579
  %751 = vmatpush.bf16.msra.mxu0 %v578
  %752 = vmatmul.bf16.gmra.mxu0 %v240
  %v753 = vpop.f32.mrf.mxu0
  %v754 = vadd.f32 %v735, %v753
  %v755 = vpop.f32.mrf.mxu0
  %v756 = vadd.f32 %v737, %v755
  %757 = vmatmul.bf16.gmra.mxu0 %v249
  %v758 = vpop.f32.mrf.mxu0
  %v759 = vadd.f32 %v740, %v758
  %v760 = vpop.f32.mrf.mxu0
  %v761 = vadd.f32 %v742, %v760
  %762 = vdwg.mxu0
  %763 = vmatpush.bf16.msra.mxu0 %v593
  %764 = vmatpush.bf16.msra.mxu0 %v592
  %765 = vmatpush.bf16.msra.mxu0 %v591
  %766 = vmatpush.bf16.msra.mxu0 %v590
  %767 = vmatpush.bf16.msra.mxu0 %v589
  %768 = vmatpush.bf16.msra.mxu0 %v588
  %769 = vmatpush.bf16.msra.mxu0 %v587
  %770 = vmatpush.bf16.msra.mxu0 %v586
  %771 = vmatmul.bf16.gmra.mxu0 %v241
  %v772 = vpop.f32.mrf.mxu0
  %v773 = vadd.f32 %v754, %v772
  %v774 = vpop.f32.mrf.mxu0
  %v775 = vadd.f32 %v756, %v774
  %776 = vmatmul.bf16.gmra.mxu0 %v250
  %v777 = vpop.f32.mrf.mxu0
  %v778 = vadd.f32 %v759, %v777
  %v779 = vpop.f32.mrf.mxu0
  %v780 = vadd.f32 %v761, %v779
  %781 = vdwg.mxu0
  %782 = vmatpush.bf16.msra.mxu0 %v601
  %783 = vmatpush.bf16.msra.mxu0 %v600
  %784 = vmatpush.bf16.msra.mxu0 %v599
  %785 = vmatpush.bf16.msra.mxu0 %v598
  %786 = vmatpush.bf16.msra.mxu0 %v597
  %787 = vmatpush.bf16.msra.mxu0 %v596
  %788 = vmatpush.bf16.msra.mxu0 %v595
  %789 = vmatpush.bf16.msra.mxu0 %v594
  %790 = vmatmul.bf16.gmra.mxu0 %v242
  %v791 = vpop.f32.mrf.mxu0
  %v792 = vadd.f32 %v773, %v791
  %v793 = vpop.f32.mrf.mxu0
  %v794 = vadd.f32 %v775, %v793
  %795 = vmatmul.bf16.gmra.mxu0 %v251
  %v796 = vpop.f32.mrf.mxu0
  %v797 = vadd.f32 %v778, %v796
  %v798 = vpop.f32.mrf.mxu0
  %v799 = vadd.f32 %v780, %v798
  %800 = vdwg.mxu0
  %801 = vmatpush.bf16.msra.mxu0 %v609
  %802 = vmatpush.bf16.msra.mxu0 %v608
  %803 = vmatpush.bf16.msra.mxu0 %v607
  %804 = vmatpush.bf16.msra.mxu0 %v606
  %805 = vmatpush.bf16.msra.mxu0 %v605
  %806 = vmatpush.bf16.msra.mxu0 %v604
  %807 = vmatpush.bf16.msra.mxu0 %v603
  %808 = vmatpush.bf16.msra.mxu0 %v602
  %809 = vmatmul.bf16.gmra.mxu0 %v243
  %v810 = vpop.f32.mrf.mxu0
  %v811 = vadd.f32 %v792, %v810
  %v812 = vpop.f32.mrf.mxu0
  %v813 = vadd.f32 %v794, %v812
  %814 = vmatmul.bf16.gmra.mxu0 %v252
  %v815 = vpop.f32.mrf.mxu0
  %v816 = vadd.f32 %v797, %v815
  %v817 = vpop.f32.mrf.mxu0
  %v818 = vadd.f32 %v799, %v817
  %819 = vdwg.mxu0
  %820 = vmatpush.bf16.msra.mxu0 %v617
  %821 = vmatpush.bf16.msra.mxu0 %v616
  %822 = vmatpush.bf16.msra.mxu0 %v615
  %823 = vmatpush.bf16.msra.mxu0 %v614
  %824 = vmatpush.bf16.msra.mxu0 %v613
  %825 = vmatpush.bf16.msra.mxu0 %v612
  %826 = vmatpush.bf16.msra.mxu0 %v611
  %827 = vmatpush.bf16.msra.mxu0 %v610
  %828 = vmatmul.bf16.gmra.mxu0 %v244
  %v829 = vpop.f32.mrf.mxu0
  %v830 = vadd.f32 %v811, %v829
  %v831 = vpop.f32.mrf.mxu0
  %v832 = vadd.f32 %v813, %v831
  %833 = vmatmul.bf16.gmra.mxu0 %v253
  %v834 = vpop.f32.mrf.mxu0
  %v835 = vadd.f32 %v816, %v834
  %v836 = vpop.f32.mrf.mxu0
  %v837 = vadd.f32 %v818, %v836
  %838 = vdwg.mxu0
  %839 = vmatpush.bf16.msra.mxu0 %v625
  %840 = vmatpush.bf16.msra.mxu0 %v624
  %841 = vmatpush.bf16.msra.mxu0 %v623
  %842 = vmatpush.bf16.msra.mxu0 %v622
  %843 = vmatpush.bf16.msra.mxu0 %v621
  %844 = vmatpush.bf16.msra.mxu0 %v620
  %845 = vmatpush.bf16.msra.mxu0 %v619
  %846 = vmatpush.bf16.msra.mxu0 %v618
  %847 = vmatmul.bf16.gmra.mxu0 %v245
  %v848 = vpop.f32.mrf.mxu0
  %v849 = vadd.f32 %v830, %v848
  %v850 = vpop.f32.mrf.mxu0
  %v851 = vadd.f32 %v832, %v850
  %852 = vmatmul.bf16.gmra.mxu0 %v254
  %v853 = vpop.f32.mrf.mxu0
  %v854 = vadd.f32 %v835, %v853
  %v855 = vpop.f32.mrf.mxu0
  %v856 = vadd.f32 %v837, %v855
  %857 = vdwg.mxu0
  %858 = vmatpush.bf16.msra.mxu0 %v633
  %859 = vmatpush.bf16.msra.mxu0 %v632
  %860 = vmatpush.bf16.msra.mxu0 %v631
  %861 = vmatpush.bf16.msra.mxu0 %v630
  %862 = vmatpush.bf16.msra.mxu0 %v629
  %863 = vmatpush.bf16.msra.mxu0 %v628
  %864 = vmatpush.bf16.msra.mxu0 %v627
  %865 = vmatpush.bf16.msra.mxu0 %v626
  %866 = vmatmul.bf16.gmra.mxu0 %v246
  %v867 = vpop.f32.mrf.mxu0
  %v868 = vadd.f32 %v849, %v867
  %v869 = vpop.f32.mrf.mxu0
  %v870 = vadd.f32 %v851, %v869
  %871 = vmatmul.bf16.gmra.mxu0 %v255
  %v872 = vpop.f32.mrf.mxu0
  %v873 = vadd.f32 %v854, %v872
  %v874 = vpop.f32.mrf.mxu0
  %v875 = vadd.f32 %v856, %v874
  %876 = vdwg.mxu0
  %v877 = vmax.f32 %v868, 0.0
  %v878 = vmax.f32 %v870, 0.0
  %v879 = vmax.f32 %v873, 0.0
  %v880 = vmax.f32 %v875, 0.0
  %v881 = vpack.c.bf16 %v877, %v877
  %v882 = vpack.c.bf16 %v878, %v878
  %v883 = vpack.c.bf16 %v879, %v879
  %v884 = vpack.c.bf16 %v880, %v880
  %885 = vst [vmem:[%s3] sm:$0xf] %v881
  %886 = vst [vmem:[%s3 + $0x4] sm:$0xf] %v882
  %887 = vst [vmem:[%s3 + $0x8] sm:$0xf] %v883
  %888 = vst [vmem:[%s3 + $0xc] sm:$0xf] %v884
  // Predicated region
  $region14: #{cnn_forward.19} parent=0 // pred_check
    _
  $region15: #{cnn_forward.19} parent=0 // pred_check_branch
    %890 = sbr.rel (0) target = $region17
  $region16: #{cnn_forward.19} parent=0 // pred_region
    _
  $region17: #{cnn_forward.19} parent=0 // pred_fallthru
    _
  // Predicated region
  $region18: #{cnn_forward.19} parent=0 // pred_check
    _
  $region19: #{cnn_forward.19} parent=0 // pred_check_branch
    %892 = sbr.rel (0) target = $region21
  $region20: #{cnn_forward.19} parent=0 // pred_region
    _
  $region21: #{cnn_forward.19} parent=0 // pred_fallthru
    _

// kernel: cnn_forward.21
$region0: #{cnn_forward.21}
  #allocation0 [shape = 'u32[]', space=smem, size = 0x4, offset = 0x4, fixed_abs, tag = 'smem constant byte address 0x4 - core index']
  #allocation1 [shape = 'u32[72,128]{1,0:T(1,128)}', space=vmem, size = 0x9000, scoped, tag = 'internal scratch']
  %s0 = inlined_call_operand.vmem [shape: bf16[8,1152], index: 0, kind: input, shape index: {}]
  %s1 = inlined_call_operand.vmem [shape: bf16[1152,256], index: 1, kind: input, shape index: {}]
  %s2 = inlined_call_operand.vmem [shape: f32[1,256], index: 2, kind: input, shape index: {}]
  %s3 = inlined_call_operand.vmem [shape: bf16[8,256], index: 3, kind: output, shape index: {}]
  %s4 = sld [smem:[#allocation0]]
  $region22: #{cnn_forward.21} parent=0
    _
  %s6 = ssub.s32 1, %s4
  %s7 = scalar_select 0, %s6, %s4
  // Predicated region
  $region2: #{cnn_forward.21} parent=0 // pred_check
    _
  $region3: #{cnn_forward.21} parent=0 // pred_check_branch
    %9 = sbr.rel (0) target = $region5
  $region4: #{cnn_forward.21} parent=0 // pred_region
    _
  $region5: #{cnn_forward.21} parent=0 // pred_fallthru
    _
  // Predicated region
  $region6: #{cnn_forward.21} parent=0 // pred_check
    _
  $region7: #{cnn_forward.21} parent=0 // pred_check_branch
    %11 = sbr.rel (0) target = $region9
  $region8: #{cnn_forward.21} parent=0 // pred_region
    _
  $region9: #{cnn_forward.21} parent=0 // pred_fallthru
    _
  // Predicated region
  $region10: #{cnn_forward.21} parent=0 // pred_check
    _
  $region11: #{cnn_forward.21} parent=0 // pred_check_branch
    %13 = sbr.rel (0) target = $region13
  $region12: #{cnn_forward.21} parent=0 // pred_region
    _
  $region13: #{cnn_forward.21} parent=0 // pred_fallthru
    _
  %v14 = vld [vmem:[%s0] sm:$0xff]
  %v15 = vld [vmem:[%s0 + $0x8] sm:$0xff]
  %v16 = vld [vmem:[%s0 + $0x10] sm:$0xff]
  %v17 = vld [vmem:[%s0 + $0x18] sm:$0xff]
  %v18 = vld [vmem:[%s0 + $0x20] sm:$0xf]
  %v19 = vld [vmem:[%s1] sm:$0xff]
  %v20 = vld [vmem:[%s1 + $0x8] sm:$0xff]
  %v21 = vld [vmem:[%s1 + $0x10] sm:$0xff]
  %v22 = vld [vmem:[%s1 + $0x18] sm:$0xff]
  %v23 = vld [vmem:[%s1 + $0x20] sm:$0xff]
  %v24 = vld [vmem:[%s1 + $0x28] sm:$0xff]
  %v25 = vld [vmem:[%s1 + $0x30] sm:$0xff]
  %v26 = vld [vmem:[%s1 + $0x38] sm:$0xff]
  %v27 = vld [vmem:[%s1 + $0x40] sm:$0xff]
  %v28 = vld [vmem:[%s1 + $0x48] sm:$0xff]
  %v29 = vld [vmem:[%s1 + $0x50] sm:$0xff]
  %v30 = vld [vmem:[%s1 + $0x58] sm:$0xff]
  %v31 = vld [vmem:[%s1 + $0x60] sm:$0xff]
  %v32 = vld [vmem:[%s1 + $0x68] sm:$0xff]
  %v33 = vld [vmem:[%s1 + $0x70] sm:$0xff]
  %v34 = vld [vmem:[%s1 + $0x78] sm:$0xff]
  %v35 = vld [vmem:[%s1 + $0x80] sm:$0xff]
  %v36 = vld [vmem:[%s1 + $0x88] sm:$0xff]
  %v37 = vld [vmem:[%s1 + $0x90] sm:$0xff]
  %v38 = vld [vmem:[%s1 + $0x98] sm:$0xff]
  %v39 = vld [vmem:[%s1 + $0xa0] sm:$0xff]
  %v40 = vld [vmem:[%s1 + $0xa8] sm:$0xff]
  %v41 = vld [vmem:[%s1 + $0xb0] sm:$0xff]
  %v42 = vld [vmem:[%s1 + $0xb8] sm:$0xff]
  %v43 = vld [vmem:[%s1 + $0xc0] sm:$0xff]
  %v44 = vld [vmem:[%s1 + $0xc8] sm:$0xff]
  %v45 = vld [vmem:[%s1 + $0xd0] sm:$0xff]
  %v46 = vld [vmem:[%s1 + $0xd8] sm:$0xff]
  %v47 = vld [vmem:[%s1 + $0xe0] sm:$0xff]
  %v48 = vld [vmem:[%s1 + $0xe8] sm:$0xff]
  %v49 = vld [vmem:[%s1 + $0xf0] sm:$0xff]
  %v50 = vld [vmem:[%s1 + $0xf8] sm:$0xff]
  %v51 = vld [vmem:[%s1 + $0x100] sm:$0xff]
  %v52 = vld [vmem:[%s1 + $0x108] sm:$0xff]
  %v53 = vld [vmem:[%s1 + $0x110] sm:$0xff]
  %v54 = vld [vmem:[%s1 + $0x118] sm:$0xff]
  %v55 = vld [vmem:[%s1 + $0x120] sm:$0xff]
  %v56 = vld [vmem:[%s1 + $0x128] sm:$0xff]
  %v57 = vld [vmem:[%s1 + $0x130] sm:$0xff]
  %v58 = vld [vmem:[%s1 + $0x138] sm:$0xff]
  %v59 = vld [vmem:[%s1 + $0x140] sm:$0xff]
  %v60 = vld [vmem:[%s1 + $0x148] sm:$0xff]
  %v61 = vld [vmem:[%s1 + $0x150] sm:$0xff]
  %v62 = vld [vmem:[%s1 + $0x158] sm:$0xff]
  %v63 = vld [vmem:[%s1 + $0x160] sm:$0xff]
  %v64 = vld [vmem:[%s1 + $0x168] sm:$0xff]
  %v65 = vld [vmem:[%s1 + $0x170] sm:$0xff]
  %v66 = vld [vmem:[%s1 + $0x178] sm:$0xff]
  %v67 = vld [vmem:[%s1 + $0x180] sm:$0xff]
  %v68 = vld [vmem:[%s1 + $0x188] sm:$0xff]
  %v69 = vld [vmem:[%s1 + $0x190] sm:$0xff]
  %v70 = vld [vmem:[%s1 + $0x198] sm:$0xff]
  %v71 = vld [vmem:[%s1 + $0x1a0] sm:$0xff]
  %v72 = vld [vmem:[%s1 + $0x1a8] sm:$0xff]
  %v73 = vld [vmem:[%s1 + $0x1b0] sm:$0xff]
  %v74 = vld [vmem:[%s1 + $0x1b8] sm:$0xff]
  %v75 = vld [vmem:[%s1 + $0x1c0] sm:$0xff]
  %v76 = vld [vmem:[%s1 + $0x1c8] sm:$0xff]
  %v77 = vld [vmem:[%s1 + $0x1d0] sm:$0xff]
  %v78 = vld [vmem:[%s1 + $0x1d8] sm:$0xff]
  %v79 = vld [vmem:[%s1 + $0x1e0] sm:$0xff]
  %v80 = vld [vmem:[%s1 + $0x1e8] sm:$0xff]
  %v81 = vld [vmem:[%s1 + $0x1f0] sm:$0xff]
  %v82 = vld [vmem:[%s1 + $0x1f8] sm:$0xff]
  %v83 = vld [vmem:[%s1 + $0x200] sm:$0xff]
  %v84 = vld [vmem:[%s1 + $0x208] sm:$0xff]
  %v85 = vld [vmem:[%s1 + $0x210] sm:$0xff]
  %v86 = vld [vmem:[%s1 + $0x218] sm:$0xff]
  %v87 = vld [vmem:[%s1 + $0x220] sm:$0xff]
  %v88 = vld [vmem:[%s1 + $0x228] sm:$0xff]
  %v89 = vld [vmem:[%s1 + $0x230] sm:$0xff]
  %v90 = vld [vmem:[%s1 + $0x238] sm:$0xff]
  %v91 = vld [vmem:[%s1 + $0x240] sm:$0xff]
  %v92 = vld [vmem:[%s1 + $0x248] sm:$0xff]
  %v93 = vld [vmem:[%s1 + $0x250] sm:$0xff]
  %v94 = vld [vmem:[%s1 + $0x258] sm:$0xff]
  %v95 = vld [vmem:[%s1 + $0x260] sm:$0xff]
  %v96 = vld [vmem:[%s1 + $0x268] sm:$0xff]
  %v97 = vld [vmem:[%s1 + $0x270] sm:$0xff]
  %v98 = vld [vmem:[%s1 + $0x278] sm:$0xff]
  %v99 = vld [vmem:[%s1 + $0x280] sm:$0xff]
  %v100 = vld [vmem:[%s1 + $0x288] sm:$0xff]
  %v101 = vld [vmem:[%s1 + $0x290] sm:$0xff]
  %v102 = vld [vmem:[%s1 + $0x298] sm:$0xff]
  %v103 = vld [vmem:[%s1 + $0x2a0] sm:$0xff]
  %v104 = vld [vmem:[%s1 + $0x2a8] sm:$0xff]
  %v105 = vld [vmem:[%s1 + $0x2b0] sm:$0xff]
  %v106 = vld [vmem:[%s1 + $0x2b8] sm:$0xff]
  %v107 = vld [vmem:[%s1 + $0x2c0] sm:$0xff]
  %v108 = vld [vmem:[%s1 + $0x2c8] sm:$0xff]
  %v109 = vld [vmem:[%s1 + $0x2d0] sm:$0xff]
  %v110 = vld [vmem:[%s1 + $0x2d8] sm:$0xff]
  %v111 = vld [vmem:[%s1 + $0x2e0] sm:$0xff]
  %v112 = vld [vmem:[%s1 + $0x2e8] sm:$0xff]
  %v113 = vld [vmem:[%s1 + $0x2f0] sm:$0xff]
  %v114 = vld [vmem:[%s1 + $0x2f8] sm:$0xff]
  %v115 = vld [vmem:[%s1 + $0x300] sm:$0xff]
  %v116 = vld [vmem:[%s1 + $0x308] sm:$0xff]
  %v117 = vld [vmem:[%s1 + $0x310] sm:$0xff]
  %v118 = vld [vmem:[%s1 + $0x318] sm:$0xff]
  %v119 = vld [vmem:[%s1 + $0x320] sm:$0xff]
  %v120 = vld [vmem:[%s1 + $0x328] sm:$0xff]
  %v121 = vld [vmem:[%s1 + $0x330] sm:$0xff]
  %v122 = vld [vmem:[%s1 + $0x338] sm:$0xff]
  %v123 = vld [vmem:[%s1 + $0x340] sm:$0xff]
  %v124 = vld [vmem:[%s1 + $0x348] sm:$0xff]
  %v125 = vld [vmem:[%s1 + $0x350] sm:$0xff]
  %v126 = vld [vmem:[%s1 + $0x358] sm:$0xff]
  %v127 = vld [vmem:[%s1 + $0x360] sm:$0xff]
  %v128 = vld [vmem:[%s1 + $0x368] sm:$0xff]
  %v129 = vld [vmem:[%s1 + $0x370] sm:$0xff]
  %v130 = vld [vmem:[%s1 + $0x378] sm:$0xff]
  %v131 = vld [vmem:[%s1 + $0x380] sm:$0xff]
  %v132 = vld [vmem:[%s1 + $0x388] sm:$0xff]
  %v133 = vld [vmem:[%s1 + $0x390] sm:$0xff]
  %v134 = vld [vmem:[%s1 + $0x398] sm:$0xff]
  %v135 = vld [vmem:[%s1 + $0x3a0] sm:$0xff]
  %v136 = vld [vmem:[%s1 + $0x3a8] sm:$0xff]
  %v137 = vld [vmem:[%s1 + $0x3b0] sm:$0xff]
  %v138 = vld [vmem:[%s1 + $0x3b8] sm:$0xff]
  %v139 = vld [vmem:[%s1 + $0x3c0] sm:$0xff]
  %v140 = vld [vmem:[%s1 + $0x3c8] sm:$0xff]
  %v141 = vld [vmem:[%s1 + $0x3d0] sm:$0xff]
  %v142 = vld [vmem:[%s1 + $0x3d8] sm:$0xff]
  %v143 = vld [vmem:[%s1 + $0x3e0] sm:$0xff]
  %v144 = vld [vmem:[%s1 + $0x3e8] sm:$0xff]
  %v145 = vld [vmem:[%s1 + $0x3f0] sm:$0xff]
  %v146 = vld [vmem:[%s1 + $0x3f8] sm:$0xff]
  %v147 = vld [vmem:[%s1 + $0x400] sm:$0xff]
  %v148 = vld [vmem:[%s1 + $0x408] sm:$0xff]
  %v149 = vld [vmem:[%s1 + $0x410] sm:$0xff]
  %v150 = vld [vmem:[%s1 + $0x418] sm:$0xff]
  %v151 = vld [vmem:[%s1 + $0x420] sm:$0xff]
  %v152 = vld [vmem:[%s1 + $0x428] sm:$0xff]
  %v153 = vld [vmem:[%s1 + $0x430] sm:$0xff]
  %v154 = vld [vmem:[%s1 + $0x438] sm:$0xff]
  %v155 = vld [vmem:[%s1 + $0x440] sm:$0xff]
  %v156 = vld [vmem:[%s1 + $0x448] sm:$0xff]
  %v157 = vld [vmem:[%s1 + $0x450] sm:$0xff]
  %v158 = vld [vmem:[%s1 + $0x458] sm:$0xff]
  %v159 = vld [vmem:[%s1 + $0x460] sm:$0xff]
  %v160 = vld [vmem:[%s1 + $0x468] sm:$0xff]
  %v161 = vld [vmem:[%s1 + $0x470] sm:$0xff]
  %v162 = vld [vmem:[%s1 + $0x478] sm:$0xff]
  %v163 = vld [vmem:[%s2] sm:$0x3]
  %v165 = vperm.slane %v163, 0
  %v166 = vperm.slane %v163, 1
  %v174 = vunpack.c.l.b16 %v14
  %v175 = vunpack.c.h.b16 %v14
  %v176 = vunpack.c.l.b16 %v15
  %v177 = vunpack.c.h.b16 %v15
  %v178 = vunpack.c.l.b16 %v16
  %v179 = vunpack.c.h.b16 %v16
  %v180 = vunpack.c.l.b16 %v17
  %v181 = vunpack.c.h.b16 %v17
  %v182 = vunpack.c.l.b16 %v18
  %v183 = vpack.c.b16 %v174, %v174
  %v184 = vpack.c.b16 %v175, %v175
  %v185 = vpack.c.b16 %v176, %v176
  %v186 = vpack.c.b16 %v177, %v177
  %v187 = vpack.c.b16 %v178, %v178
  %v188 = vpack.c.b16 %v179, %v179
  %v189 = vpack.c.b16 %v180, %v180
  %v190 = vpack.c.b16 %v181, %v181
  %v191 = vpack.c.b16 %v182, %v182
  %v345 = vunpack.c.l.b16 %v19
  %v346 = vunpack.c.h.b16 %v19
  %v347 = vunpack.c.l.b16 %v20
  %v348 = vunpack.c.h.b16 %v20
  %v349 = vunpack.c.l.b16 %v21
  %v350 = vunpack.c.h.b16 %v21
  %v351 = vunpack.c.l.b16 %v22
  %v352 = vunpack.c.h.b16 %v22
  %v353 = vunpack.c.l.b16 %v23
  %v354 = vunpack.c.h.b16 %v23
  %v355 = vunpack.c.l.b16 %v24
  %v356 = vunpack.c.h.b16 %v24
  %v357 = vunpack.c.l.b16 %v25
  %v358 = vunpack.c.h.b16 %v25
  %v359 = vunpack.c.l.b16 %v26
  %v360 = vunpack.c.h.b16 %v26
  %v361 = vunpack.c.l.b16 %v27
  %v362 = vunpack.c.h.b16 %v27
  %v363 = vunpack.c.l.b16 %v28
  %v364 = vunpack.c.h.b16 %v28
  %v365 = vunpack.c.l.b16 %v29
  %v366 = vunpack.c.h.b16 %v29
  %v367 = vunpack.c.l.b16 %v30
  %v368 = vunpack.c.h.b16 %v30
  %v369 = vunpack.c.l.b16 %v31
  %v370 = vunpack.c.h.b16 %v31
  %v371 = vunpack.c.l.b16 %v32
  %v372 = vunpack.c.h.b16 %v32
  %v373 = vunpack.c.l.b16 %v33
  %v374 = vunpack.c.h.b16 %v33
  %v375 = vunpack.c.l.b16 %v34
  %v376 = vunpack.c.h.b16 %v34
  %v377 = vunpack.c.l.b16 %v35
  %v378 = vunpack.c.h.b16 %v35
  %v379 = vunpack.c.l.b16 %v36
  %v380 = vunpack.c.h.b16 %v36
  %v381 = vunpack.c.l.b16 %v37
  %v382 = vunpack.c.h.b16 %v37
  %v383 = vunpack.c.l.b16 %v38
  %v384 = vunpack.c.h.b16 %v38
  %v385 = vunpack.c.l.b16 %v39
  %v386 = vunpack.c.h.b16 %v39
  %v387 = vunpack.c.l.b16 %v40
  %v388 = vunpack.c.h.b16 %v40
  %v389 = vunpack.c.l.b16 %v41
  %v390 = vunpack.c.h.b16 %v41
  %v391 = vunpack.c.l.b16 %v42
  %v392 = vunpack.c.h.b16 %v42
  %v393 = vunpack.c.l.b16 %v43
  %v394 = vunpack.c.h.b16 %v43
  %v395 = vunpack.c.l.b16 %v44
  %v396 = vunpack.c.h.b16 %v44
  %v397 = vunpack.c.l.b16 %v45
  %v398 = vunpack.c.h.b16 %v45
  %v399 = vunpack.c.l.b16 %v46
  %v400 = vunpack.c.h.b16 %v46
  %v401 = vunpack.c.l.b16 %v47
  %v402 = vunpack.c.h.b16 %v47
  %v403 = vunpack.c.l.b16 %v48
  %v404 = vunpack.c.h.b16 %v48
  %v405 = vunpack.c.l.b16 %v49
  %v406 = vunpack.c.h.b16 %v49
  %v407 = vunpack.c.l.b16 %v50
  %v408 = vunpack.c.h.b16 %v50
  %v409 = vunpack.c.l.b16 %v51
  %v410 = vunpack.c.h.b16 %v51
  %v411 = vunpack.c.l.b16 %v52
  %v412 = vunpack.c.h.b16 %v52
  %v413 = vunpack.c.l.b16 %v53
  %v414 = vunpack.c.h.b16 %v53
  %v415 = vunpack.c.l.b16 %v54
  %v416 = vunpack.c.h.b16 %v54
  %v417 = vunpack.c.l.b16 %v55
  %v418 = vunpack.c.h.b16 %v55
  %v419 = vunpack.c.l.b16 %v56
  %v420 = vunpack.c.h.b16 %v56
  %v421 = vunpack.c.l.b16 %v57
  %v422 = vunpack.c.h.b16 %v57
  %v423 = vunpack.c.l.b16 %v58
  %v424 = vunpack.c.h.b16 %v58
  %v425 = vunpack.c.l.b16 %v59
  %v426 = vunpack.c.h.b16 %v59
  %v427 = vunpack.c.l.b16 %v60
  %v428 = vunpack.c.h.b16 %v60
  %v429 = vunpack.c.l.b16 %v61
  %v430 = vunpack.c.h.b16 %v61
  %v431 = vunpack.c.l.b16 %v62
  %v432 = vunpack.c.h.b16 %v62
  %v433 = vunpack.c.l.b16 %v63
  %v434 = vunpack.c.h.b16 %v63
  %v435 = vunpack.c.l.b16 %v64
  %v436 = vunpack.c.h.b16 %v64
  %v437 = vunpack.c.l.b16 %v65
  %v438 = vunpack.c.h.b16 %v65
  %v439 = vunpack.c.l.b16 %v66
  %v440 = vunpack.c.h.b16 %v66
  %v441 = vunpack.c.l.b16 %v67
  %v442 = vunpack.c.h.b16 %v67
  %v443 = vunpack.c.l.b16 %v68
  %v444 = vunpack.c.h.b16 %v68
  %v445 = vunpack.c.l.b16 %v69
  %v446 = vunpack.c.h.b16 %v69
  %v447 = vunpack.c.l.b16 %v70
  %v448 = vunpack.c.h.b16 %v70
  %v449 = vunpack.c.l.b16 %v71
  %v450 = vunpack.c.h.b16 %v71
  %v451 = vunpack.c.l.b16 %v72
  %v452 = vunpack.c.h.b16 %v72
  %v453 = vunpack.c.l.b16 %v73
  %v454 = vunpack.c.h.b16 %v73
  %v455 = vunpack.c.l.b16 %v74
  %v456 = vunpack.c.h.b16 %v74
  %v457 = vunpack.c.l.b16 %v75
  %v458 = vunpack.c.h.b16 %v75
  %v459 = vunpack.c.l.b16 %v76
  %v460 = vunpack.c.h.b16 %v76
  %v461 = vunpack.c.l.b16 %v77
  %v462 = vunpack.c.h.b16 %v77
  %v463 = vunpack.c.l.b16 %v78
  %v464 = vunpack.c.h.b16 %v78
  %v465 = vunpack.c.l.b16 %v79
  %v466 = vunpack.c.h.b16 %v79
  %v467 = vunpack.c.l.b16 %v80
  %v468 = vunpack.c.h.b16 %v80
  %v469 = vunpack.c.l.b16 %v81
  %v470 = vunpack.c.h.b16 %v81
  %v471 = vunpack.c.l.b16 %v82
  %v472 = vunpack.c.h.b16 %v82
  %v473 = vunpack.c.l.b16 %v83
  %v474 = vunpack.c.h.b16 %v83
  %v475 = vunpack.c.l.b16 %v84
  %v476 = vunpack.c.h.b16 %v84
  %v477 = vunpack.c.l.b16 %v85
  %v478 = vunpack.c.h.b16 %v85
  %v479 = vunpack.c.l.b16 %v86
  %v480 = vunpack.c.h.b16 %v86
  %v481 = vunpack.c.l.b16 %v87
  %v482 = vunpack.c.h.b16 %v87
  %v483 = vunpack.c.l.b16 %v88
  %v484 = vunpack.c.h.b16 %v88
  %v485 = vunpack.c.l.b16 %v89
  %v486 = vunpack.c.h.b16 %v89
  %v487 = vunpack.c.l.b16 %v90
  %v488 = vunpack.c.h.b16 %v90
  %v489 = vunpack.c.l.b16 %v91
  %v490 = vunpack.c.h.b16 %v91
  %v491 = vunpack.c.l.b16 %v92
  %v492 = vunpack.c.h.b16 %v92
  %v493 = vunpack.c.l.b16 %v93
  %v494 = vunpack.c.h.b16 %v93
  %v495 = vunpack.c.l.b16 %v94
  %v496 = vunpack.c.h.b16 %v94
  %v497 = vunpack.c.l.b16 %v95
  %v498 = vunpack.c.h.b16 %v95
  %v499 = vunpack.c.l.b16 %v96
  %v500 = vunpack.c.h.b16 %v96
  %v501 = vunpack.c.l.b16 %v97
  %v502 = vunpack.c.h.b16 %v97
  %v503 = vunpack.c.l.b16 %v98
  %v504 = vunpack.c.h.b16 %v98
  %v505 = vunpack.c.l.b16 %v99
  %v506 = vunpack.c.h.b16 %v99
  %v507 = vunpack.c.l.b16 %v100
  %v508 = vunpack.c.h.b16 %v100
  %v509 = vunpack.c.l.b16 %v101
  %v510 = vunpack.c.h.b16 %v101
  %v511 = vunpack.c.l.b16 %v102
  %v512 = vunpack.c.h.b16 %v102
  %v513 = vunpack.c.l.b16 %v103
  %v514 = vunpack.c.h.b16 %v103
  %v515 = vunpack.c.l.b16 %v104
  %v516 = vunpack.c.h.b16 %v104
  %v517 = vunpack.c.l.b16 %v105
  %v518 = vunpack.c.h.b16 %v105
  %v519 = vunpack.c.l.b16 %v106
  %v520 = vunpack.c.h.b16 %v106
  %v521 = vunpack.c.l.b16 %v107
  %v522 = vunpack.c.h.b16 %v107
  %v523 = vunpack.c.l.b16 %v108
  %v524 = vunpack.c.h.b16 %v108
  %v525 = vunpack.c.l.b16 %v109
  %v526 = vunpack.c.h.b16 %v109
  %v527 = vunpack.c.l.b16 %v110
  %v528 = vunpack.c.h.b16 %v110
  %v529 = vunpack.c.l.b16 %v111
  %v530 = vunpack.c.h.b16 %v111
  %v531 = vunpack.c.l.b16 %v112
  %v532 = vunpack.c.h.b16 %v112
  %v533 = vunpack.c.l.b16 %v113
  %v534 = vunpack.c.h.b16 %v113
  %v535 = vunpack.c.l.b16 %v114
  %v536 = vunpack.c.h.b16 %v114
  %v537 = vunpack.c.l.b16 %v115
  %v538 = vunpack.c.h.b16 %v115
  %v539 = vunpack.c.l.b16 %v116
  %v540 = vunpack.c.h.b16 %v116
  %v541 = vunpack.c.l.b16 %v117
  %v542 = vunpack.c.h.b16 %v117
  %v543 = vunpack.c.l.b16 %v118
  %v544 = vunpack.c.h.b16 %v118
  %v545 = vunpack.c.l.b16 %v119
  %v546 = vunpack.c.h.b16 %v119
  %v547 = vunpack.c.l.b16 %v120
  %v548 = vunpack.c.h.b16 %v120
  %v549 = vunpack.c.l.b16 %v121
  %v550 = vunpack.c.h.b16 %v121
  %v551 = vunpack.c.l.b16 %v122
  %v552 = vunpack.c.h.b16 %v122
  %v553 = vunpack.c.l.b16 %v123
  %v554 = vunpack.c.h.b16 %v123
  %v555 = vunpack.c.l.b16 %v124
  %v556 = vunpack.c.h.b16 %v124
  %v557 = vunpack.c.l.b16 %v125
  %v558 = vunpack.c.h.b16 %v125
  %v559 = vunpack.c.l.b16 %v126
  %v560 = vunpack.c.h.b16 %v126
  %v561 = vunpack.c.l.b16 %v127
  %v562 = vunpack.c.h.b16 %v127
  %v563 = vunpack.c.l.b16 %v128
  %v564 = vunpack.c.h.b16 %v128
  %v565 = vunpack.c.l.b16 %v129
  %v566 = vunpack.c.h.b16 %v129
  %v567 = vunpack.c.l.b16 %v130
  %v568 = vunpack.c.h.b16 %v130
  %v569 = vunpack.c.l.b16 %v131
  %v570 = vunpack.c.h.b16 %v131
  %v571 = vunpack.c.l.b16 %v132
  %v572 = vunpack.c.h.b16 %v132
  %v573 = vunpack.c.l.b16 %v133
  %v574 = vunpack.c.h.b16 %v133
  %v575 = vunpack.c.l.b16 %v134
  %v576 = vunpack.c.h.b16 %v134
  %v577 = vunpack.c.l.b16 %v135
  %v578 = vunpack.c.h.b16 %v135
  %v579 = vunpack.c.l.b16 %v136
  %v580 = vunpack.c.h.b16 %v136
  %v581 = vunpack.c.l.b16 %v137
  %v582 = vunpack.c.h.b16 %v137
  %v583 = vunpack.c.l.b16 %v138
  %v584 = vunpack.c.h.b16 %v138
  %v585 = vunpack.c.l.b16 %v139
  %v586 = vunpack.c.h.b16 %v139
  %v587 = vunpack.c.l.b16 %v140
  %v588 = vunpack.c.h.b16 %v140
  %v589 = vunpack.c.l.b16 %v141
  %v590 = vunpack.c.h.b16 %v141
  %v591 = vunpack.c.l.b16 %v142
  %v592 = vunpack.c.h.b16 %v142
  %v593 = vunpack.c.l.b16 %v143
  %v594 = vunpack.c.h.b16 %v143
  %v595 = vunpack.c.l.b16 %v144
  %v596 = vunpack.c.h.b16 %v144
  %v597 = vunpack.c.l.b16 %v145
  %v598 = vunpack.c.h.b16 %v145
  %v599 = vunpack.c.l.b16 %v146
  %v600 = vunpack.c.h.b16 %v146
  %v601 = vunpack.c.l.b16 %v147
  %v602 = vunpack.c.h.b16 %v147
  %v603 = vunpack.c.l.b16 %v148
  %v604 = vunpack.c.h.b16 %v148
  %v605 = vunpack.c.l.b16 %v149
  %v606 = vunpack.c.h.b16 %v149
  %v607 = vunpack.c.l.b16 %v150
  %v608 = vunpack.c.h.b16 %v150
  %v609 = vunpack.c.l.b16 %v151
  %v610 = vunpack.c.h.b16 %v151
  %v611 = vunpack.c.l.b16 %v152
  %v612 = vunpack.c.h.b16 %v152
  %v613 = vunpack.c.l.b16 %v153
  %v614 = vunpack.c.h.b16 %v153
  %v615 = vunpack.c.l.b16 %v154
  %v616 = vunpack.c.h.b16 %v154
  %v617 = vunpack.c.l.b16 %v155
  %v618 = vunpack.c.h.b16 %v155
  %v619 = vunpack.c.l.b16 %v156
  %v620 = vunpack.c.h.b16 %v156
  %v621 = vunpack.c.l.b16 %v157
  %v622 = vunpack.c.h.b16 %v157
  %v623 = vunpack.c.l.b16 %v158
  %v624 = vunpack.c.h.b16 %v158
  %v625 = vunpack.c.l.b16 %v159
  %v626 = vunpack.c.h.b16 %v159
  %v627 = vunpack.c.l.b16 %v160
  %v628 = vunpack.c.h.b16 %v160
  %v629 = vunpack.c.l.b16 %v161
  %v630 = vunpack.c.h.b16 %v161
  %v631 = vunpack.c.l.b16 %v162
  %v632 = vunpack.c.h.b16 %v162
  %v633 = vpack.c.b16 %v347, %v345
  %v634 = vpack.c.b16 %v348, %v346
  %v635 = vpack.c.b16 %v351, %v349
  %v636 = vpack.c.b16 %v352, %v350
  %v637 = vpack.c.b16 %v355, %v353
  %v638 = vpack.c.b16 %v356, %v354
  %v639 = vpack.c.b16 %v359, %v357
  %v640 = vpack.c.b16 %v360, %v358
  %v641 = vpack.c.b16 %v363, %v361
  %v642 = vpack.c.b16 %v364, %v362
  %v643 = vpack.c.b16 %v367, %v365
  %v644 = vpack.c.b16 %v368, %v366
  %v645 = vpack.c.b16 %v371, %v369
  %v646 = vpack.c.b16 %v372, %v370
  %v647 = vpack.c.b16 %v375, %v373
  %v648 = vpack.c.b16 %v376, %v374
  %v649 = vpack.c.b16 %v379, %v377
  %v650 = vpack.c.b16 %v380, %v378
  %v651 = vpack.c.b16 %v383, %v381
  %v652 = vpack.c.b16 %v384, %v382
  %v653 = vpack.c.b16 %v387, %v385
  %v654 = vpack.c.b16 %v388, %v386
  %v655 = vpack.c.b16 %v391, %v389
  %v656 = vpack.c.b16 %v392, %v390
  %v657 = vpack.c.b16 %v395, %v393
  %v658 = vpack.c.b16 %v396, %v394
  %v659 = vpack.c.b16 %v399, %v397
  %v660 = vpack.c.b16 %v400, %v398
  %v661 = vpack.c.b16 %v403, %v401
  %v662 = vpack.c.b16 %v404, %v402
  %v663 = vpack.c.b16 %v407, %v405
  %v664 = vpack.c.b16 %v408, %v406
  %v665 = vpack.c.b16 %v411, %v409
  %v666 = vpack.c.b16 %v412, %v410
  %v667 = vpack.c.b16 %v415, %v413
  %v668 = vpack.c.b16 %v416, %v414
  %v669 = vpack.c.b16 %v419, %v417
  %v670 = vpack.c.b16 %v420, %v418
  %v671 = vpack.c.b16 %v423, %v421
  %v672 = vpack.c.b16 %v424, %v422
  %v673 = vpack.c.b16 %v427, %v425
  %v674 = vpack.c.b16 %v428, %v426
  %v675 = vpack.c.b16 %v431, %v429
  %v676 = vpack.c.b16 %v432, %v430
  %v677 = vpack.c.b16 %v435, %v433
  %v678 = vpack.c.b16 %v436, %v434
  %v679 = vpack.c.b16 %v439, %v437
  %v680 = vpack.c.b16 %v440, %v438
  %v681 = vpack.c.b16 %v443, %v441
  %v682 = vpack.c.b16 %v444, %v442
  %v683 = vpack.c.b16 %v447, %v445
  %v684 = vpack.c.b16 %v448, %v446
  %v685 = vpack.c.b16 %v451, %v449
  %v686 = vpack.c.b16 %v452, %v450
  %v687 = vpack.c.b16 %v455, %v453
  %v688 = vpack.c.b16 %v456, %v454
  %v689 = vpack.c.b16 %v459, %v457
  %v690 = vpack.c.b16 %v460, %v458
  %v691 = vpack.c.b16 %v463, %v461
  %v692 = vpack.c.b16 %v464, %v462
  %v693 = vpack.c.b16 %v467, %v465
  %v694 = vpack.c.b16 %v468, %v466
  %v695 = vpack.c.b16 %v471, %v469
  %v696 = vpack.c.b16 %v472, %v470
  %v697 = vpack.c.b16 %v475, %v473
  %v698 = vpack.c.b16 %v476, %v474
  %v699 = vpack.c.b16 %v479, %v477
  %v700 = vpack.c.b16 %v480, %v478
  %v701 = vpack.c.b16 %v483, %v481
  %v702 = vpack.c.b16 %v484, %v482
  %v703 = vpack.c.b16 %v487, %v485
  %v704 = vpack.c.b16 %v488, %v486
  %v705 = vpack.c.b16 %v491, %v489
  %v706 = vpack.c.b16 %v492, %v490
  %v707 = vpack.c.b16 %v495, %v493
  %v708 = vpack.c.b16 %v496, %v494
  %v709 = vpack.c.b16 %v499, %v497
  %v710 = vpack.c.b16 %v500, %v498
  %v711 = vpack.c.b16 %v503, %v501
  %v712 = vpack.c.b16 %v504, %v502
  %v713 = vpack.c.b16 %v507, %v505
  %v714 = vpack.c.b16 %v508, %v506
  %v715 = vpack.c.b16 %v511, %v509
  %v716 = vpack.c.b16 %v512, %v510
  %v717 = vpack.c.b16 %v515, %v513
  %v718 = vpack.c.b16 %v516, %v514
  %v719 = vpack.c.b16 %v519, %v517
  %v720 = vpack.c.b16 %v520, %v518
  %v721 = vpack.c.b16 %v523, %v521
  %v722 = vpack.c.b16 %v524, %v522
  %v723 = vpack.c.b16 %v527, %v525
  %v724 = vpack.c.b16 %v528, %v526
  %v725 = vpack.c.b16 %v531, %v529
  %v726 = vpack.c.b16 %v532, %v530
  %v727 = vpack.c.b16 %v535, %v533
  %v728 = vpack.c.b16 %v536, %v534
  %v729 = vpack.c.b16 %v539, %v537
  %v730 = vpack.c.b16 %v540, %v538
  %v731 = vpack.c.b16 %v543, %v541
  %v732 = vpack.c.b16 %v544, %v542
  %v733 = vpack.c.b16 %v547, %v545
  %v734 = vpack.c.b16 %v548, %v546
  %v735 = vpack.c.b16 %v551, %v549
  %v736 = vpack.c.b16 %v552, %v550
  %v737 = vpack.c.b16 %v555, %v553
  %v738 = vpack.c.b16 %v556, %v554
  %v739 = vpack.c.b16 %v559, %v557
  %v740 = vpack.c.b16 %v560, %v558
  %v741 = vpack.c.b16 %v563, %v561
  %v742 = vpack.c.b16 %v564, %v562
  %v743 = vpack.c.b16 %v567, %v565
  %v744 = vpack.c.b16 %v568, %v566
  %v745 = vpack.c.b16 %v571, %v569
  %v746 = vpack.c.b16 %v572, %v570
  %v747 = vpack.c.b16 %v575, %v573
  %v748 = vpack.c.b16 %v576, %v574
  %v749 = vpack.c.b16 %v579, %v577
  %v750 = vpack.c.b16 %v580, %v578
  %v751 = vpack.c.b16 %v583, %v581
  %v752 = vpack.c.b16 %v584, %v582
  %v753 = vpack.c.b16 %v587, %v585
  %v754 = vpack.c.b16 %v588, %v586
  %v755 = vpack.c.b16 %v591, %v589
  %v756 = vpack.c.b16 %v592, %v590
  %v757 = vpack.c.b16 %v595, %v593
  %v758 = vpack.c.b16 %v596, %v594
  %v759 = vpack.c.b16 %v599, %v597
  %v760 = vpack.c.b16 %v600, %v598
  %v761 = vpack.c.b16 %v603, %v601
  %v762 = vpack.c.b16 %v604, %v602
  %v763 = vpack.c.b16 %v607, %v605
  %v764 = vpack.c.b16 %v608, %v606
  %v765 = vpack.c.b16 %v611, %v609
  %v766 = vpack.c.b16 %v612, %v610
  %v767 = vpack.c.b16 %v615, %v613
  %v768 = vpack.c.b16 %v616, %v614
  %v769 = vpack.c.b16 %v619, %v617
  %v770 = vpack.c.b16 %v620, %v618
  %v771 = vpack.c.b16 %v623, %v621
  %v772 = vpack.c.b16 %v624, %v622
  %v773 = vpack.c.b16 %v627, %v625
  %v774 = vpack.c.b16 %v628, %v626
  %v775 = vpack.c.b16 %v631, %v629
  %v776 = vpack.c.b16 %v632, %v630
  %921 = vmatpush.bf16.msra.mxu0 %v647
  %922 = vmatpush.bf16.msra.mxu0 %v645
  %923 = vmatpush.bf16.msra.mxu0 %v643
  %924 = vmatpush.bf16.msra.mxu0 %v641
  %925 = vmatpush.bf16.msra.mxu0 %v639
  %926 = vmatpush.bf16.msra.mxu0 %v637
  %927 = vmatpush.bf16.msra.mxu0 %v635
  %928 = vmatpush.bf16.msra.mxu0 %v633
  %929 = vmatmul.bf16.gmra.mxu0 %v183
  %v930 = vpop.f32.mrf.mxu0
  %v931 = vadd.f32 %v165, %v930
  %v932 = vpop.f32.mrf.mxu0
  %933 = vdwg.mxu0
  %934 = vmatpush.bf16.msra.mxu0 %v663
  %935 = vmatpush.bf16.msra.mxu0 %v661
  %936 = vmatpush.bf16.msra.mxu0 %v659
  %937 = vmatpush.bf16.msra.mxu0 %v657
  %938 = vmatpush.bf16.msra.mxu0 %v655
  %939 = vmatpush.bf16.msra.mxu0 %v653
  %940 = vmatpush.bf16.msra.mxu0 %v651
  %941 = vmatpush.bf16.msra.mxu0 %v649
  %942 = vmatmul.bf16.gmra.mxu0 %v184
  %v943 = vpop.f32.mrf.mxu0
  %v944 = vadd.f32 %v931, %v943
  %v945 = vpop.f32.mrf.mxu0
  %946 = vdwg.mxu0
  %947 = vmatpush.bf16.msra.mxu0 %v679
  %948 = vmatpush.bf16.msra.mxu0 %v677
  %949 = vmatpush.bf16.msra.mxu0 %v675
  %950 = vmatpush.bf16.msra.mxu0 %v673
  %951 = vmatpush.bf16.msra.mxu0 %v671
  %952 = vmatpush.bf16.msra.mxu0 %v669
  %953 = vmatpush.bf16.msra.mxu0 %v667
  %954 = vmatpush.bf16.msra.mxu0 %v665
  %955 = vmatmul.bf16.gmra.mxu0 %v185
  %v956 = vpop.f32.mrf.mxu0
  %v957 = vadd.f32 %v944, %v956
  %v958 = vpop.f32.mrf.mxu0
  %959 = vdwg.mxu0
  %960 = vmatpush.bf16.msra.mxu0 %v695
  %961 = vmatpush.bf16.msra.mxu0 %v693
  %962 = vmatpush.bf16.msra.mxu0 %v691
  %963 = vmatpush.bf16.msra.mxu0 %v689
  %964 = vmatpush.bf16.msra.mxu0 %v687
  %965 = vmatpush.bf16.msra.mxu0 %v685
  %966 = vmatpush.bf16.msra.mxu0 %v683
  %967 = vmatpush.bf16.msra.mxu0 %v681
  %968 = vmatmul.bf16.gmra.mxu0 %v186
  %v969 = vpop.f32.mrf.mxu0
  %v970 = vadd.f32 %v957, %v969
  %v971 = vpop.f32.mrf.mxu0
  %972 = vdwg.mxu0
  %973 = vmatpush.bf16.msra.mxu0 %v711
  %974 = vmatpush.bf16.msra.mxu0 %v709
  %975 = vmatpush.bf16.msra.mxu0 %v707
  %976 = vmatpush.bf16.msra.mxu0 %v705
  %977 = vmatpush.bf16.msra.mxu0 %v703
  %978 = vmatpush.bf16.msra.mxu0 %v701
  %979 = vmatpush.bf16.msra.mxu0 %v699
  %980 = vmatpush.bf16.msra.mxu0 %v697
  %981 = vmatmul.bf16.gmra.mxu0 %v187
  %v982 = vpop.f32.mrf.mxu0
  %v983 = vadd.f32 %v970, %v982
  %v984 = vpop.f32.mrf.mxu0
  %985 = vdwg.mxu0
  %986 = vmatpush.bf16.msra.mxu0 %v727
  %987 = vmatpush.bf16.msra.mxu0 %v725
  %988 = vmatpush.bf16.msra.mxu0 %v723
  %989 = vmatpush.bf16.msra.mxu0 %v721
  %990 = vmatpush.bf16.msra.mxu0 %v719
  %991 = vmatpush.bf16.msra.mxu0 %v717
  %992 = vmatpush.bf16.msra.mxu0 %v715
  %993 = vmatpush.bf16.msra.mxu0 %v713
  %994 = vmatmul.bf16.gmra.mxu0 %v188
  %v995 = vpop.f32.mrf.mxu0
  %v996 = vadd.f32 %v983, %v995
  %v997 = vpop.f32.mrf.mxu0
  %998 = vdwg.mxu0
  %999 = vmatpush.bf16.msra.mxu0 %v743
  %1000 = vmatpush.bf16.msra.mxu0 %v741
  %1001 = vmatpush.bf16.msra.mxu0 %v739
  %1002 = vmatpush.bf16.msra.mxu0 %v737
  %1003 = vmatpush.bf16.msra.mxu0 %v735
  %1004 = vmatpush.bf16.msra.mxu0 %v733
  %1005 = vmatpush.bf16.msra.mxu0 %v731
  %1006 = vmatpush.bf16.msra.mxu0 %v729
  %1007 = vmatmul.bf16.gmra.mxu0 %v189
  %v1008 = vpop.f32.mrf.mxu0
  %v1009 = vadd.f32 %v996, %v1008
  %v1010 = vpop.f32.mrf.mxu0
  %1011 = vdwg.mxu0
  %1012 = vmatpush.bf16.msra.mxu0 %v759
  %1013 = vmatpush.bf16.msra.mxu0 %v757
  %1014 = vmatpush.bf16.msra.mxu0 %v755
  %1015 = vmatpush.bf16.msra.mxu0 %v753
  %1016 = vmatpush.bf16.msra.mxu0 %v751
  %1017 = vmatpush.bf16.msra.mxu0 %v749
  %1018 = vmatpush.bf16.msra.mxu0 %v747
  %1019 = vmatpush.bf16.msra.mxu0 %v745
  %1020 = vmatmul.bf16.gmra.mxu0 %v190
  %v1021 = vpop.f32.mrf.mxu0
  %v1022 = vadd.f32 %v1009, %v1021
  %v1023 = vpop.f32.mrf.mxu0
  %1024 = vdwg.mxu0
  %1025 = vmatpush.bf16.msra.mxu0 %v775
  %1026 = vmatpush.bf16.msra.mxu0 %v773
  %1027 = vmatpush.bf16.msra.mxu0 %v771
  %1028 = vmatpush.bf16.msra.mxu0 %v769
  %1029 = vmatpush.bf16.msra.mxu0 %v767
  %1030 = vmatpush.bf16.msra.mxu0 %v765
  %1031 = vmatpush.bf16.msra.mxu0 %v763
  %1032 = vmatpush.bf16.msra.mxu0 %v761
  %1033 = vmatmul.bf16.gmra.mxu0 %v191
  %v1034 = vpop.f32.mrf.mxu0
  %v1035 = vadd.f32 %v1022, %v1034
  %v1036 = vpop.f32.mrf.mxu0
  %1037 = vdwg.mxu0
  %1038 = vmatpush.bf16.msra.mxu0 %v648
  %1039 = vmatpush.bf16.msra.mxu0 %v646
  %1040 = vmatpush.bf16.msra.mxu0 %v644
  %1041 = vmatpush.bf16.msra.mxu0 %v642
  %1042 = vmatpush.bf16.msra.mxu0 %v640
  %1043 = vmatpush.bf16.msra.mxu0 %v638
  %1044 = vmatpush.bf16.msra.mxu0 %v636
  %1045 = vmatpush.bf16.msra.mxu0 %v634
  %1046 = vmatmul.bf16.gmra.mxu0 %v183
  %v1047 = vpop.f32.mrf.mxu0
  %v1048 = vadd.f32 %v166, %v1047
  %v1049 = vpop.f32.mrf.mxu0
  %1050 = vdwg.mxu0
  %1051 = vmatpush.bf16.msra.mxu0 %v664
  %1052 = vmatpush.bf16.msra.mxu0 %v662
  %1053 = vmatpush.bf16.msra.mxu0 %v660
  %1054 = vmatpush.bf16.msra.mxu0 %v658
  %1055 = vmatpush.bf16.msra.mxu0 %v656
  %1056 = vmatpush.bf16.msra.mxu0 %v654
  %1057 = vmatpush.bf16.msra.mxu0 %v652
  %1058 = vmatpush.bf16.msra.mxu0 %v650
  %1059 = vmatmul.bf16.gmra.mxu0 %v184
  %v1060 = vpop.f32.mrf.mxu0
  %v1061 = vadd.f32 %v1048, %v1060
  %v1062 = vpop.f32.mrf.mxu0
  %1063 = vdwg.mxu0
  %1064 = vmatpush.bf16.msra.mxu0 %v680
  %1065 = vmatpush.bf16.msra.mxu0 %v678
  %1066 = vmatpush.bf16.msra.mxu0 %v676
  %1067 = vmatpush.bf16.msra.mxu0 %v674
  %1068 = vmatpush.bf16.msra.mxu0 %v672
  %1069 = vmatpush.bf16.msra.mxu0 %v670
  %1070 = vmatpush.bf16.msra.mxu0 %v668
  %1071 = vmatpush.bf16.msra.mxu0 %v666
  %1072 = vmatmul.bf16.gmra.mxu0 %v185
  %v1073 = vpop.f32.mrf.mxu0
  %v1074 = vadd.f32 %v1061, %v1073
  %v1075 = vpop.f32.mrf.mxu0
  %1076 = vdwg.mxu0
  %1077 = vmatpush.bf16.msra.mxu0 %v696
  %1078 = vmatpush.bf16.msra.mxu0 %v694
  %1079 = vmatpush.bf16.msra.mxu0 %v692
  %1080 = vmatpush.bf16.msra.mxu0 %v690
  %1081 = vmatpush.bf16.msra.mxu0 %v688
  %1082 = vmatpush.bf16.msra.mxu0 %v686
  %1083 = vmatpush.bf16.msra.mxu0 %v684
  %1084 = vmatpush.bf16.msra.mxu0 %v682
  %1085 = vmatmul.bf16.gmra.mxu0 %v186
  %v1086 = vpop.f32.mrf.mxu0
  %v1087 = vadd.f32 %v1074, %v1086
  %v1088 = vpop.f32.mrf.mxu0
  %1089 = vdwg.mxu0
  %1090 = vmatpush.bf16.msra.mxu0 %v712
  %1091 = vmatpush.bf16.msra.mxu0 %v710
  %1092 = vmatpush.bf16.msra.mxu0 %v708
  %1093 = vmatpush.bf16.msra.mxu0 %v706
  %1094 = vmatpush.bf16.msra.mxu0 %v704
  %1095 = vmatpush.bf16.msra.mxu0 %v702
  %1096 = vmatpush.bf16.msra.mxu0 %v700
  %1097 = vmatpush.bf16.msra.mxu0 %v698
  %1098 = vmatmul.bf16.gmra.mxu0 %v187
  %v1099 = vpop.f32.mrf.mxu0
  %v1100 = vadd.f32 %v1087, %v1099
  %v1101 = vpop.f32.mrf.mxu0
  %1102 = vdwg.mxu0
  %1103 = vmatpush.bf16.msra.mxu0 %v728
  %1104 = vmatpush.bf16.msra.mxu0 %v726
  %1105 = vmatpush.bf16.msra.mxu0 %v724
  %1106 = vmatpush.bf16.msra.mxu0 %v722
  %1107 = vmatpush.bf16.msra.mxu0 %v720
  %1108 = vmatpush.bf16.msra.mxu0 %v718
  %1109 = vmatpush.bf16.msra.mxu0 %v716
  %1110 = vmatpush.bf16.msra.mxu0 %v714
  %1111 = vmatmul.bf16.gmra.mxu0 %v188
  %v1112 = vpop.f32.mrf.mxu0
  %v1113 = vadd.f32 %v1100, %v1112
  %v1114 = vpop.f32.mrf.mxu0
  %1115 = vdwg.mxu0
  %1116 = vmatpush.bf16.msra.mxu0 %v744
  %1117 = vmatpush.bf16.msra.mxu0 %v742
  %1118 = vmatpush.bf16.msra.mxu0 %v740
  %1119 = vmatpush.bf16.msra.mxu0 %v738
  %1120 = vmatpush.bf16.msra.mxu0 %v736
  %1121 = vmatpush.bf16.msra.mxu0 %v734
  %1122 = vmatpush.bf16.msra.mxu0 %v732
  %1123 = vmatpush.bf16.msra.mxu0 %v730
  %1124 = vmatmul.bf16.gmra.mxu0 %v189
  %v1125 = vpop.f32.mrf.mxu0
  %v1126 = vadd.f32 %v1113, %v1125
  %v1127 = vpop.f32.mrf.mxu0
  %1128 = vdwg.mxu0
  %1129 = vmatpush.bf16.msra.mxu0 %v760
  %1130 = vmatpush.bf16.msra.mxu0 %v758
  %1131 = vmatpush.bf16.msra.mxu0 %v756
  %1132 = vmatpush.bf16.msra.mxu0 %v754
  %1133 = vmatpush.bf16.msra.mxu0 %v752
  %1134 = vmatpush.bf16.msra.mxu0 %v750
  %1135 = vmatpush.bf16.msra.mxu0 %v748
  %1136 = vmatpush.bf16.msra.mxu0 %v746
  %1137 = vmatmul.bf16.gmra.mxu0 %v190
  %v1138 = vpop.f32.mrf.mxu0
  %v1139 = vadd.f32 %v1126, %v1138
  %v1140 = vpop.f32.mrf.mxu0
  %1141 = vdwg.mxu0
  %1142 = vmatpush.bf16.msra.mxu0 %v776
  %1143 = vmatpush.bf16.msra.mxu0 %v774
  %1144 = vmatpush.bf16.msra.mxu0 %v772
  %1145 = vmatpush.bf16.msra.mxu0 %v770
  %1146 = vmatpush.bf16.msra.mxu0 %v768
  %1147 = vmatpush.bf16.msra.mxu0 %v766
  %1148 = vmatpush.bf16.msra.mxu0 %v764
  %1149 = vmatpush.bf16.msra.mxu0 %v762
  %1150 = vmatmul.bf16.gmra.mxu0 %v191
  %v1151 = vpop.f32.mrf.mxu0
  %v1152 = vadd.f32 %v1139, %v1151
  %v1153 = vpop.f32.mrf.mxu0
  %1154 = vdwg.mxu0
  %v1155 = vmax.f32 %v1035, 0.0
  %v1156 = vmax.f32 %v1152, 0.0
  %v1157 = vpack.c.bf16 %v1156, %v1155
  %1158 = vst [vmem:[%s3] sm:$0xff] %v1157
  // Predicated region
  $region14: #{cnn_forward.21} parent=0 // pred_check
    _
  $region15: #{cnn_forward.21} parent=0 // pred_check_branch
    %1160 = sbr.rel (0) target = $region17
  $region16: #{cnn_forward.21} parent=0 // pred_region
    _
  $region17: #{cnn_forward.21} parent=0 // pred_fallthru
    _
  // Predicated region
  $region18: #{cnn_forward.21} parent=0 // pred_check
    _
  $region19: #{cnn_forward.21} parent=0 // pred_check_branch
    %1162 = sbr.rel (0) target = $region21
  $region20: #{cnn_forward.21} parent=0 // pred_region
    _
  $region21: #{cnn_forward.21} parent=0 // pred_fallthru
    _

// kernel: cnn_forward.23
$region0: #{cnn_forward.23}
  #allocation0 [shape = 'u32[]', space=smem, size = 0x4, offset = 0x4, fixed_abs, tag = 'smem constant byte address 0x4 - core index']
  #allocation1 [shape = 'u32[72,128]{1,0:T(1,128)}', space=vmem, size = 0x9000, scoped, tag = 'internal scratch']
  %s0 = inlined_call_operand.vmem [shape: bf16[2,256], index: 0, kind: input, shape index: {}]
  %s1 = inlined_call_operand.vmem [shape: bf16[256,128], index: 1, kind: input, shape index: {}]
  %s2 = inlined_call_operand.vmem [shape: f32[1,128], index: 2, kind: input, shape index: {}]
  %s3 = inlined_call_operand.hbm [shape: f32[2,128], index: 3, kind: output, shape index: {}]
  %s4 = sld [smem:[#allocation0]]
  $region22: #{cnn_forward.23} parent=0
    _
  %s6 = ssub.s32 1, %s4
  %s7 = scalar_select 0, %s6, %s4
  $region1: #{cnn_forward.23} parent=0
    #allocation2 [shape = 'u8[1024]{0}', space=vmem, size = 0x400, scoped, tag = 'output window, operand 0, single buffered']
    #allocation3 [shape = 's32[1]{0}', space=sflag, size = 0x4, scoped, tag = 'scoped memory for cnn_forward.23']
    %8 = vsyncpa [#allocation3], 0
    // Predicated region
    $region2: #{cnn_forward.23} parent=1 // pred_check
      _
    $region3: #{cnn_forward.23} parent=1 // pred_check_branch
      %10 = sbr.rel (0) target = $region5
    $region4: #{cnn_forward.23} parent=1 // pred_region
      _
    $region5: #{cnn_forward.23} parent=1 // pred_fallthru
      _
    // Predicated region
    $region6: #{cnn_forward.23} parent=1 // pred_check
      _
    $region7: #{cnn_forward.23} parent=1 // pred_check_branch
      %12 = sbr.rel (0) target = $region9
    $region8: #{cnn_forward.23} parent=1 // pred_region
      _
    $region9: #{cnn_forward.23} parent=1 // pred_fallthru
      _
    // Predicated region
    $region10: #{cnn_forward.23} parent=1 // pred_check
      _
    $region11: #{cnn_forward.23} parent=1 // pred_check_branch
      %14 = sbr.rel (0) target = $region13
    $region12: #{cnn_forward.23} parent=1 // pred_region
      _
    $region13: #{cnn_forward.23} parent=1 // pred_fallthru
      _
    %v15 = vld [vmem:[%s0] sm:$0x3]
    %v16 = vld [vmem:[%s1] sm:$0xf]
    %v17 = vld [vmem:[%s1 + $0x4] sm:$0xf]
    %v18 = vld [vmem:[%s1 + $0x8] sm:$0xf]
    %v19 = vld [vmem:[%s1 + $0xc] sm:$0xf]
    %v20 = vld [vmem:[%s1 + $0x10] sm:$0xf]
    %v21 = vld [vmem:[%s1 + $0x14] sm:$0xf]
    %v22 = vld [vmem:[%s1 + $0x18] sm:$0xf]
    %v23 = vld [vmem:[%s1 + $0x1c] sm:$0xf]
    %v24 = vld [vmem:[%s1 + $0x20] sm:$0xf]
    %v25 = vld [vmem:[%s1 + $0x24] sm:$0xf]
    %v26 = vld [vmem:[%s1 + $0x28] sm:$0xf]
    %v27 = vld [vmem:[%s1 + $0x2c] sm:$0xf]
    %v28 = vld [vmem:[%s1 + $0x30] sm:$0xf]
    %v29 = vld [vmem:[%s1 + $0x34] sm:$0xf]
    %v30 = vld [vmem:[%s1 + $0x38] sm:$0xf]
    %v31 = vld [vmem:[%s1 + $0x3c] sm:$0xf]
    %v32 = vld [vmem:[%s1 + $0x40] sm:$0xf]
    %v33 = vld [vmem:[%s1 + $0x44] sm:$0xf]
    %v34 = vld [vmem:[%s1 + $0x48] sm:$0xf]
    %v35 = vld [vmem:[%s1 + $0x4c] sm:$0xf]
    %v36 = vld [vmem:[%s1 + $0x50] sm:$0xf]
    %v37 = vld [vmem:[%s1 + $0x54] sm:$0xf]
    %v38 = vld [vmem:[%s1 + $0x58] sm:$0xf]
    %v39 = vld [vmem:[%s1 + $0x5c] sm:$0xf]
    %v40 = vld [vmem:[%s1 + $0x60] sm:$0xf]
    %v41 = vld [vmem:[%s1 + $0x64] sm:$0xf]
    %v42 = vld [vmem:[%s1 + $0x68] sm:$0xf]
    %v43 = vld [vmem:[%s1 + $0x6c] sm:$0xf]
    %v44 = vld [vmem:[%s1 + $0x70] sm:$0xf]
    %v45 = vld [vmem:[%s1 + $0x74] sm:$0xf]
    %v46 = vld [vmem:[%s1 + $0x78] sm:$0xf]
    %v47 = vld [vmem:[%s1 + $0x7c] sm:$0xf]
    %v48 = vld [vmem:[%s2] sm:$0x1]
    %v50 = vperm.slane %v48, 0
    %53 = vst [vmem:[#allocation1] ss:$9 sm:$0xff] %v15
    %v54 = vld [vmem:[#allocation1] sm:$0xff]
    %v55 = vld [vmem:[#allocation1 + $0x9] sm:$0xff]
    %v90 = vunpack.c.l.b16 %v16
    %v91 = vunpack.c.l.b16 %v17
    %v92 = vunpack.c.l.b16 %v18
    %v93 = vunpack.c.l.b16 %v19
    %v94 = vunpack.c.l.b16 %v20
    %v95 = vunpack.c.l.b16 %v21
    %v96 = vunpack.c.l.b16 %v22
    %v97 = vunpack.c.l.b16 %v23
    %v98 = vunpack.c.l.b16 %v24
    %v99 = vunpack.c.l.b16 %v25
    %v100 = vunpack.c.l.b16 %v26
    %v101 = vunpack.c.l.b16 %v27
    %v102 = vunpack.c.l.b16 %v28
    %v103 = vunpack.c.l.b16 %v29
    %v104 = vunpack.c.l.b16 %v30
    %v105 = vunpack.c.l.b16 %v31
    %v106 = vunpack.c.l.b16 %v32
    %v107 = vunpack.c.l.b16 %v33
    %v108 = vunpack.c.l.b16 %v34
    %v109 = vunpack.c.l.b16 %v35
    %v110 = vunpack.c.l.b16 %v36
    %v111 = vunpack.c.l.b16 %v37
    %v112 = vunpack.c.l.b16 %v38
    %v113 = vunpack.c.l.b16 %v39
    %v114 = vunpack.c.l.b16 %v40
    %v115 = vunpack.c.l.b16 %v41
    %v116 = vunpack.c.l.b16 %v42
    %v117 = vunpack.c.l.b16 %v43
    %v118 = vunpack.c.l.b16 %v44
    %v119 = vunpack.c.l.b16 %v45
    %v120 = vunpack.c.l.b16 %v46
    %v121 = vunpack.c.l.b16 %v47
    %v122 = vpack.c.b16 %v91, %v90
    %v123 = vpack.c.b16 %v93, %v92
    %v124 = vpack.c.b16 %v95, %v94
    %v125 = vpack.c.b16 %v97, %v96
    %v126 = vpack.c.b16 %v99, %v98
    %v127 = vpack.c.b16 %v101, %v100
    %v128 = vpack.c.b16 %v103, %v102
    %v129 = vpack.c.b16 %v105, %v104
    %v130 = vpack.c.b16 %v107, %v106
    %v131 = vpack.c.b16 %v109, %v108
    %v132 = vpack.c.b16 %v111, %v110
    %v133 = vpack.c.b16 %v113, %v112
    %v134 = vpack.c.b16 %v115, %v114
    %v135 = vpack.c.b16 %v117, %v116
    %v136 = vpack.c.b16 %v119, %v118
    %v137 = vpack.c.b16 %v121, %v120
    %154 = vmatpush.bf16.msra.mxu0 %v129
    %155 = vmatpush.bf16.msra.mxu0 %v128
    %156 = vmatpush.bf16.msra.mxu0 %v127
    %157 = vmatpush.bf16.msra.mxu0 %v126
    %158 = vmatpush.bf16.msra.mxu0 %v125
    %159 = vmatpush.bf16.msra.mxu0 %v124
    %160 = vmatpush.bf16.msra.mxu0 %v123
    %161 = vmatpush.bf16.msra.mxu0 %v122
    %162 = vmatmul.bf16.gmra.mxu0 %v54
    %v163 = vpop.f32.mrf.mxu0
    %v164 = vadd.f32 %v50, %v163
    %v165 = vpop.f32.mrf.mxu0
    %166 = vdwg.mxu0
    %167 = vmatpush.bf16.msra.mxu0 %v137
    %168 = vmatpush.bf16.msra.mxu0 %v136
    %169 = vmatpush.bf16.msra.mxu0 %v135
    %170 = vmatpush.bf16.msra.mxu0 %v134
    %171 = vmatpush.bf16.msra.mxu0 %v133
    %172 = vmatpush.bf16.msra.mxu0 %v132
    %173 = vmatpush.bf16.msra.mxu0 %v131
    %174 = vmatpush.bf16.msra.mxu0 %v130
    %175 = vmatmul.bf16.gmra.mxu0 %v55
    %v176 = vpop.f32.mrf.mxu0
    %v177 = vadd.f32 %v164, %v176
    %v178 = vpop.f32.mrf.mxu0
    %179 = vdwg.mxu0
    %180 = vst [vmem:[#allocation2] sm:$0x3] %v177
    // Predicated region
    $region14: #{cnn_forward.23} parent=1 // pred_check
      _
    $region15: #{cnn_forward.23} parent=1 // pred_check_branch
      %182 = sbr.rel (0) target = $region17
    $region16: #{cnn_forward.23} parent=1 // pred_region
      %184 = vsyncadd [#allocation3], 0
      %s186 = sshll.u32 [#allocation2], 4
      %s187 = int_to_ptr.vmem [resolvable:$true] %s186
      %s188 = sshll.u32 %s3, 4
      %s189 = int_to_ptr.hbm [resolvable:$true] %s188
      %191 = dma.vmem_to_hbm [thread:$0]  %s187, 32, %s189, [#allocation3]
    $region17: #{cnn_forward.23} parent=1 // pred_fallthru
      _
    // Predicated region
    $region18: #{cnn_forward.23} parent=1 // pred_check
      _
    $region19: #{cnn_forward.23} parent=1 // pred_check_branch
      %193 = sbr.rel (0) target = $region21
    $region20: #{cnn_forward.23} parent=1 // pred_region
      %195 = dma.done [#allocation3], 32
    $region21: #{cnn_forward.23} parent=1 // pred_fallthru
      _
    %196 = vsyncpa [#allocation3], 1

</llo_original>
